<compile_context>
chip_gen: v7x
topology: tpu7x:2x2x1
jax: 0.10.0
libtpu: 0.0.40
codegen_flags: <defaults>
</compile_context>

<pallas_src>
import jax
import jax.numpy as jnp
import numpy as np
from jax.experimental import pallas as pl
from jax.experimental.pallas import tpu as pltpu


def resnet_block_kernel(x_ref, w1_ref, w2_ref, o_ref, pad_ref):
    # x_ref:   (1, H, W, C)   f32, current batch element (NHWC)
    # w*_ref:  (9*C, C)       bf16 weight matrices (HWIO flattened, rows = (ky,kx,cin))
    # o_ref:   (1, H*W, C)    f32 output block
    # pad_ref: (H+2, Wp, C)   bf16 VMEM scratch, reflection-padded image
    #                         (Wp = W+2 rounded up to 8 sublanes; extra cols unused)
    _, H, W, C = x_ref.shape
    HW = H * W

    def reflect_edges():
        # Interior [1:H+1, 1:W+1] must already hold the image; fill the 1-px border
        # (ReflectionPad2d(1) semantics; corners filled by the column reflections).
        pad_ref[0:1, 1:W + 1, :] = pad_ref[2:3, 1:W + 1, :]
        pad_ref[H + 1:H + 2, 1:W + 1, :] = pad_ref[H - 1:H, 1:W + 1, :]
        pad_ref[:, 0:1, :] = pad_ref[:, 2:3, :]
        pad_ref[:, W + 1:W + 2, :] = pad_ref[:, W - 1:W, :]

    def conv3x3_instance_norm(w_ref):
        # 3x3 conv as 9 accumulating K=C bf16 matmuls from shifted views of the
        # padded image (no im2col slab), f32 accumulation.
        acc = None
        for ky in range(3):
            for kx in range(3):
                k = ky * 3 + kx
                tap = pad_ref[ky:ky + H, kx:kx + W, :].reshape(HW, C)
                part = jnp.dot(tap, w_ref[k * C:(k + 1) * C, :],
                               preferred_element_type=jnp.float32)
                acc = part if acc is None else acc + part
        # Conv bias intentionally omitted: the affine-free InstanceNorm that
        # follows cancels a per-channel constant exactly.
        # Instance norm (biased var, eps=1e-5), centered second pass in f32.
        inv_n = 1.0 / HW
        mean = jnp.sum(acc, axis=0, keepdims=True) * inv_n
        yc = acc - mean
        var = jnp.sum(yc * yc, axis=0, keepdims=True) * inv_n
        return yc * jax.lax.rsqrt(var + 1e-5)

    # --- conv1 path ---
    pad_ref[1:H + 1, 1:W + 1, :] = x_ref[0].astype(pad_ref.dtype)
    reflect_edges()
    h = jnp.maximum(conv3x3_instance_norm(w1_ref), 0.0)          # ReLU
    # TODO(synk): use_dropout=True (training-mode Dropout(0.5)) not implemented.

    # --- conv2 path: write conv1 output straight into the pad interior ---
    pad_ref[1:H + 1, 1:W + 1, :] = h.reshape(H, W, C).astype(pad_ref.dtype)
    reflect_edges()
    h2 = conv3x3_instance_norm(w2_ref)

    # Residual add: re-read x in f32 from the (still VMEM-resident) input block.
    o_ref[0] = (x_ref[0].reshape(HW, C) + h2).astype(o_ref.dtype)


def _round_up(x, m):
    return (x + m - 1) // m * m


def _vmem_bytes_estimate(H, W, C, Wp):
    """Rough per-grid-step resident-set estimate."""
    f32, bf16 = 4, 2
    io_blocks = 2 * 2 * H * W * C * f32        # x + out blocks, double-buffered
    weights = 2 * 2 * 9 * C * C * bf16         # w1 + w2, double-buffered
    pad = (H + 2) * Wp * C * bf16              # reflection-pad scratch (bf16)
    live = 4 * H * W * C * f32                 # conv acc / IN / ReLU temporaries
    return io_blocks + weights + pad + live


def resnet_block_nhwc(x_nhwc, w1_oihw, b1, w2_oihw, b2):
    """Fused ResnetBlock forward in NHWC (preferred: no layout transposes).

    b1/b2 are accepted for API parity with the PyTorch module but are not used:
    InstanceNorm2d(affine=False) right after each conv cancels them exactly.
    Matmuls run in bf16 with f32 accumulation (inference-parity tolerance).
    """
    del b1, b2
    x = x_nhwc.astype(jnp.float32)
    B, H, W, C = x.shape
    Wp = _round_up(W + 2, 8)   # sublane-aligned row pitch for the pad scratch

    # OIHW -> HWIO -> (9*C, C) weight matrix, bf16 for the MXU.
    w1m = jnp.transpose(w1_oihw, (2, 3, 1, 0)).reshape(9 * C, C).astype(jnp.bfloat16)
    w2m = jnp.transpose(w2_oihw, (2, 3, 1, 0)).reshape(9 * C, C).astype(jnp.bfloat16)

    cp = {"dimension_semantics": ("parallel",)}   # batch elements are independent
    vmem_needed = _vmem_bytes_estimate(H, W, C, Wp)
    default_scoped = 16 * 1024 * 1024             # v5e default (smallest generation)
    if vmem_needed > default_scoped:
        # Generation-aware limit: query physical VMEM (128 MiB v5e/v6e, 64 MiB/TC
        # v7x) and cap just below it; request 1.5x the estimate for compiler temps.
        try:
            physical = int(getattr(pltpu.get_tpu_info(), "vmem_capacity_bytes",
                                   64 * 1024 * 1024))
        except Exception:
            physical = 64 * 1024 * 1024           # conservative (v7x per-TC)
        cap = max(physical - 4 * 1024 * 1024, default_scoped)
        cp["vmem_limit_bytes"] = int(min(int(vmem_needed * 1.5), cap))

    out = pl.pallas_call(
        resnet_block_kernel,
        out_shape=jax.ShapeDtypeStruct((B, H * W, C), jnp.float32),
        grid_spec=pltpu.PrefetchScalarGridSpec(
            num_scalar_prefetch=0,
            grid=(B,),
            in_specs=[
                pl.BlockSpec((1, H, W, C), lambda b: (b, 0, 0, 0)),
                pl.BlockSpec((9 * C, C), lambda b: (0, 0)),
                pl.BlockSpec((9 * C, C), lambda b: (0, 0)),
            ],
            out_specs=pl.BlockSpec((1, H * W, C), lambda b: (b, 0, 0)),
            scratch_shapes=[
                pltpu.VMEM((H + 2, Wp, C), jnp.bfloat16),   # reflection-padded image
            ],
        ),
        compiler_params=pltpu.CompilerParams(**cp),
    )(x, w1m, w2m)
    return out.reshape(B, H, W, C)


def resnet_block(x_nchw, b1w, b1b, b2w, b2b):
    """NCHW adapter matching the PyTorch module layout.  For stacked blocks keep
    the model in NHWC and call resnet_block_nhwc directly (saves two HBM-round-trip
    transposes per block)."""
    x = jnp.transpose(x_nchw, (0, 2, 3, 1))
    out = resnet_block_nhwc(x, b1w, b1b, b2w, b2b)
    return jnp.transpose(out, (0, 3, 1, 2))


def reference(x_nchw, w1_oihw, b1, w2_oihw, b2):
    """Pure-JAX f32 reference mirroring the PyTorch module (NCHW)."""
    def refl_pad(x):
        return jnp.pad(x, ((0, 0), (0, 0), (1, 1), (1, 1)), mode="reflect")

    def conv(x, w, b):
        y = jax.lax.conv_general_dilated(
            x, w, window_strides=(1, 1), padding="VALID",
            dimension_numbers=("NCHW", "OIHW", "NCHW"))
        return y + b[None, :, None, None]

    def inorm(x):
        m = jnp.mean(x, axis=(2, 3), keepdims=True)
        v = jnp.mean((x - m) ** 2, axis=(2, 3), keepdims=True)
        return (x - m) * jax.lax.rsqrt(v + 1e-5)

    h = jax.nn.relu(inorm(conv(refl_pad(x_nchw), w1_oihw, b1)))
    h = inorm(conv(refl_pad(h), w2_oihw, b2))
    return x_nchw + h


if __name__ == "__main__":
    B, C, H, W = 2, 4, 16, 16  # dim=4 ResnetBlock, small spatial size
    key = jax.random.PRNGKey(0)
    kx, kw1, kb1, kw2, kb2 = jax.random.split(key, 5)

    x = jax.random.normal(kx, (B, C, H, W), dtype=jnp.float32)
    w1 = 0.1 * jax.random.normal(kw1, (C, C, 3, 3), dtype=jnp.float32)  # OIHW
    b1 = 0.1 * jax.random.normal(kb1, (C,), dtype=jnp.float32)
    w2 = 0.1 * jax.random.normal(kw2, (C, C, 3, 3), dtype=jnp.float32)
    b2 = 0.1 * jax.random.normal(kb2, (C,), dtype=jnp.float32)

    out = resnet_block(x, w1, b1, w2, b2)
    out = jax.block_until_ready(out)

    ref = jax.block_until_ready(reference(x, w1, b1, w2, b2))
    # Tolerance loosened for bf16 MXU inputs (accumulation and IN stats are f32).
    np.testing.assert_allclose(np.asarray(out), np.asarray(ref),
                               rtol=5e-2, atol=5e-2)
    print("KERNEL_OK")
</pallas_src>

<mosaic_0001>
module attributes {stable_mosaic.version = 11 : i64} {
  func.func @resnet_block_kernel(%arg0: i32, %arg1: memref<1x16x16x4xf32, #tpu.memory_space<vmem>>, %arg2: memref<36x4xbf16, #tpu.memory_space<vmem>>, %arg3: memref<36x4xbf16, #tpu.memory_space<vmem>>, %arg4: memref<1x256x4xf32, #tpu.memory_space<vmem>>, %arg5: memref<18x24x4xbf16, #tpu.memory_space<vmem>>) attributes {dimension_semantics = [#tpu.dimension_semantics<parallel>], iteration_bounds = array<i64: 2>, scalar_prefetch = 0 : i64, scratch_operands = 1 : i64, tpu.core_type = #tpu.core_type<tc>, window_params = [{transform_indices = @transform_0, window_bounds = array<i64: 1, 16, 16, 4>}, {pipeline_mode = #tpu.pipeline_mode<synchronous>, transform_indices = @transform_1, window_bounds = array<i64: 36, 4>}, {pipeline_mode = #tpu.pipeline_mode<synchronous>, transform_indices = @transform_2, window_bounds = array<i64: 36, 4>}, {transform_indices = @transform_3, window_bounds = array<i64: 1, 256, 4>}]} {
    %c0 = arith.constant 0 : index
    %c0_0 = arith.constant 0 : index
    %c0_1 = arith.constant 0 : index
    %c0_2 = arith.constant 0 : index
    %0 = vector.load %arg1[%c0, %c0_0, %c0_1, %c0_2] : memref<1x16x16x4xf32, #tpu.memory_space<vmem>>, vector<1x16x16x4xf32>
    %1 = vector.shape_cast %0 : vector<1x16x16x4xf32> to vector<16x16x4xf32>
    %2 = arith.truncf %1 : vector<16x16x4xf32> to vector<16x16x4xbf16>
    %c1 = arith.constant 1 : index
    %c1_3 = arith.constant 1 : index
    %c0_4 = arith.constant 0 : index
    %3 = vector.load %arg5[%c1, %c1_3, %c0_4] : memref<18x24x4xbf16, #tpu.memory_space<vmem>>, vector<16x16x4xbf16>
    tpu.vector_store %arg5[%c1, %c1_3, %c0_4], %2 {strides = array<i32>} : memref<18x24x4xbf16, #tpu.memory_space<vmem>>, vector<16x16x4xbf16>,
    %c2 = arith.constant 2 : index
    %c1_5 = arith.constant 1 : index
    %c0_6 = arith.constant 0 : index
    %4 = vector.load %arg5[%c2, %c1_5, %c0_6] : memref<18x24x4xbf16, #tpu.memory_space<vmem>>, vector<1x16x4xbf16>
    %c0_7 = arith.constant 0 : index
    %c1_8 = arith.constant 1 : index
    %c0_9 = arith.constant 0 : index
    %5 = vector.load %arg5[%c0_7, %c1_8, %c0_9] : memref<18x24x4xbf16, #tpu.memory_space<vmem>>, vector<1x16x4xbf16>
    tpu.vector_store %arg5[%c0_7, %c1_8, %c0_9], %4 {strides = array<i32>} : memref<18x24x4xbf16, #tpu.memory_space<vmem>>, vector<1x16x4xbf16>,
    %c15 = arith.constant 15 : index
    %c1_10 = arith.constant 1 : index
    %c0_11 = arith.constant 0 : index
    %6 = vector.load %arg5[%c15, %c1_10, %c0_11] : memref<18x24x4xbf16, #tpu.memory_space<vmem>>, vector<1x16x4xbf16>
    %c17 = arith.constant 17 : index
    %c1_12 = arith.constant 1 : index
    %c0_13 = arith.constant 0 : index
    %7 = vector.load %arg5[%c17, %c1_12, %c0_13] : memref<18x24x4xbf16, #tpu.memory_space<vmem>>, vector<1x16x4xbf16>
    tpu.vector_store %arg5[%c17, %c1_12, %c0_13], %6 {strides = array<i32>} : memref<18x24x4xbf16, #tpu.memory_space<vmem>>, vector<1x16x4xbf16>,
    %c0_14 = arith.constant 0 : index
    %c2_15 = arith.constant 2 : index
    %c0_16 = arith.constant 0 : index
    %8 = vector.load %arg5[%c0_14, %c2_15, %c0_16] : memref<18x24x4xbf16, #tpu.memory_space<vmem>>, vector<18x1x4xbf16>
    %c0_17 = arith.constant 0 : index
    %c0_18 = arith.constant 0 : index
    %c0_19 = arith.constant 0 : index
    %9 = vector.load %arg5[%c0_17, %c0_18, %c0_19] : memref<18x24x4xbf16, #tpu.memory_space<vmem>>, vector<18x1x4xbf16>
    tpu.vector_store %arg5[%c0_17, %c0_18, %c0_19], %8 {strides = array<i32>} : memref<18x24x4xbf16, #tpu.memory_space<vmem>>, vector<18x1x4xbf16>,
    %c0_20 = arith.constant 0 : index
    %c15_21 = arith.constant 15 : index
    %c0_22 = arith.constant 0 : index
    %10 = vector.load %arg5[%c0_20, %c15_21, %c0_22] : memref<18x24x4xbf16, #tpu.memory_space<vmem>>, vector<18x1x4xbf16>
    %c0_23 = arith.constant 0 : index
    %c17_24 = arith.constant 17 : index
    %c0_25 = arith.constant 0 : index
    %11 = vector.load %arg5[%c0_23, %c17_24, %c0_25] : memref<18x24x4xbf16, #tpu.memory_space<vmem>>, vector<18x1x4xbf16>
    tpu.vector_store %arg5[%c0_23, %c17_24, %c0_25], %10 {strides = array<i32>} : memref<18x24x4xbf16, #tpu.memory_space<vmem>>, vector<18x1x4xbf16>,
    %c0_26 = arith.constant 0 : index
    %c0_27 = arith.constant 0 : index
    %c0_28 = arith.constant 0 : index
    %12 = vector.load %arg5[%c0_26, %c0_27, %c0_28] : memref<18x24x4xbf16, #tpu.memory_space<vmem>>, vector<16x16x4xbf16>
    %13 = vector.shape_cast %12 : vector<16x16x4xbf16> to vector<256x4xbf16>
    %c0_29 = arith.constant 0 : index
    %c0_30 = arith.constant 0 : index
    %14 = vector.load %arg2[%c0_29, %c0_30] : memref<36x4xbf16, #tpu.memory_space<vmem>>, vector<4x4xbf16>
    %cst = arith.constant dense<0.000000e+00> : vector<256x4xf32>
    %15 = tpu.matmul %13, %14, %cst {dimension_numbers = #tpu.dot_dimension_numbers<[1], [0], [0], [1], [0, 0, 1, 1], [], []>} : vector<256x4xbf16>, vector<4x4xbf16>, vector<256x4xf32> -> vector<256x4xf32>
    %c0_31 = arith.constant 0 : index
    %c1_32 = arith.constant 1 : index
    %c0_33 = arith.constant 0 : index
    %16 = vector.load %arg5[%c0_31, %c1_32, %c0_33] : memref<18x24x4xbf16, #tpu.memory_space<vmem>>, vector<16x16x4xbf16>
    %17 = vector.shape_cast %16 : vector<16x16x4xbf16> to vector<256x4xbf16>
    %c4 = arith.constant 4 : index
    %c0_34 = arith.constant 0 : index
    %18 = vector.load %arg2[%c4, %c0_34] : memref<36x4xbf16, #tpu.memory_space<vmem>>, vector<4x4xbf16>
    %cst_35 = arith.constant dense<0.000000e+00> : vector<256x4xf32>
    %19 = tpu.matmul %17, %18, %cst_35 {dimension_numbers = #tpu.dot_dimension_numbers<[1], [0], [0], [1], [0, 0, 1, 1], [], []>} : vector<256x4xbf16>, vector<4x4xbf16>, vector<256x4xf32> -> vector<256x4xf32>
    %20 = arith.addf %15, %19 : vector<256x4xf32>
    %c0_36 = arith.constant 0 : index
    %c2_37 = arith.constant 2 : index
    %c0_38 = arith.constant 0 : index
    %21 = vector.load %arg5[%c0_36, %c2_37, %c0_38] : memref<18x24x4xbf16, #tpu.memory_space<vmem>>, vector<16x16x4xbf16>
    %22 = vector.shape_cast %21 : vector<16x16x4xbf16> to vector<256x4xbf16>
    %c8 = arith.constant 8 : index
    %c0_39 = arith.constant 0 : index
    %23 = vector.load %arg2[%c8, %c0_39] : memref<36x4xbf16, #tpu.memory_space<vmem>>, vector<4x4xbf16>
    %cst_40 = arith.constant dense<0.000000e+00> : vector<256x4xf32>
    %24 = tpu.matmul %22, %23, %cst_40 {dimension_numbers = #tpu.dot_dimension_numbers<[1], [0], [0], [1], [0, 0, 1, 1], [], []>} : vector<256x4xbf16>, vector<4x4xbf16>, vector<256x4xf32> -> vector<256x4xf32>
    %25 = arith.addf %20, %24 : vector<256x4xf32>
    %c1_41 = arith.constant 1 : index
    %c0_42 = arith.constant 0 : index
    %c0_43 = arith.constant 0 : index
    %26 = vector.load %arg5[%c1_41, %c0_42, %c0_43] : memref<18x24x4xbf16, #tpu.memory_space<vmem>>, vector<16x16x4xbf16>
    %27 = vector.shape_cast %26 : vector<16x16x4xbf16> to vector<256x4xbf16>
    %c12 = arith.constant 12 : index
    %c0_44 = arith.constant 0 : index
    %28 = vector.load %arg2[%c12, %c0_44] : memref<36x4xbf16, #tpu.memory_space<vmem>>, vector<4x4xbf16>
    %cst_45 = arith.constant dense<0.000000e+00> : vector<256x4xf32>
    %29 = tpu.matmul %27, %28, %cst_45 {dimension_numbers = #tpu.dot_dimension_numbers<[1], [0], [0], [1], [0, 0, 1, 1], [], []>} : vector<256x4xbf16>, vector<4x4xbf16>, vector<256x4xf32> -> vector<256x4xf32>
    %30 = arith.addf %25, %29 : vector<256x4xf32>
    %c1_46 = arith.constant 1 : index
    %c1_47 = arith.constant 1 : index
    %c0_48 = arith.constant 0 : index
    %31 = vector.load %arg5[%c1_46, %c1_47, %c0_48] : memref<18x24x4xbf16, #tpu.memory_space<vmem>>, vector<16x16x4xbf16>
    %32 = vector.shape_cast %31 : vector<16x16x4xbf16> to vector<256x4xbf16>
    %c16 = arith.constant 16 : index
    %c0_49 = arith.constant 0 : index
    %33 = vector.load %arg2[%c16, %c0_49] : memref<36x4xbf16, #tpu.memory_space<vmem>>, vector<4x4xbf16>
    %cst_50 = arith.constant dense<0.000000e+00> : vector<256x4xf32>
    %34 = tpu.matmul %32, %33, %cst_50 {dimension_numbers = #tpu.dot_dimension_numbers<[1], [0], [0], [1], [0, 0, 1, 1], [], []>} : vector<256x4xbf16>, vector<4x4xbf16>, vector<256x4xf32> -> vector<256x4xf32>
    %35 = arith.addf %30, %34 : vector<256x4xf32>
    %c1_51 = arith.constant 1 : index
    %c2_52 = arith.constant 2 : index
    %c0_53 = arith.constant 0 : index
    %36 = vector.load %arg5[%c1_51, %c2_52, %c0_53] : memref<18x24x4xbf16, #tpu.memory_space<vmem>>, vector<16x16x4xbf16>
    %37 = vector.shape_cast %36 : vector<16x16x4xbf16> to vector<256x4xbf16>
    %c20 = arith.constant 20 : index
    %c0_54 = arith.constant 0 : index
    %38 = vector.load %arg2[%c20, %c0_54] : memref<36x4xbf16, #tpu.memory_space<vmem>>, vector<4x4xbf16>
    %cst_55 = arith.constant dense<0.000000e+00> : vector<256x4xf32>
    %39 = tpu.matmul %37, %38, %cst_55 {dimension_numbers = #tpu.dot_dimension_numbers<[1], [0], [0], [1], [0, 0, 1, 1], [], []>} : vector<256x4xbf16>, vector<4x4xbf16>, vector<256x4xf32> -> vector<256x4xf32>
    %40 = arith.addf %35, %39 : vector<256x4xf32>
    %c2_56 = arith.constant 2 : index
    %c0_57 = arith.constant 0 : index
    %c0_58 = arith.constant 0 : index
    %41 = vector.load %arg5[%c2_56, %c0_57, %c0_58] : memref<18x24x4xbf16, #tpu.memory_space<vmem>>, vector<16x16x4xbf16>
    %42 = vector.shape_cast %41 : vector<16x16x4xbf16> to vector<256x4xbf16>
    %c24 = arith.constant 24 : index
    %c0_59 = arith.constant 0 : index
    %43 = vector.load %arg2[%c24, %c0_59] : memref<36x4xbf16, #tpu.memory_space<vmem>>, vector<4x4xbf16>
    %cst_60 = arith.constant dense<0.000000e+00> : vector<256x4xf32>
    %44 = tpu.matmul %42, %43, %cst_60 {dimension_numbers = #tpu.dot_dimension_numbers<[1], [0], [0], [1], [0, 0, 1, 1], [], []>} : vector<256x4xbf16>, vector<4x4xbf16>, vector<256x4xf32> -> vector<256x4xf32>
    %45 = arith.addf %40, %44 : vector<256x4xf32>
    %c2_61 = arith.constant 2 : index
    %c1_62 = arith.constant 1 : index
    %c0_63 = arith.constant 0 : index
    %46 = vector.load %arg5[%c2_61, %c1_62, %c0_63] : memref<18x24x4xbf16, #tpu.memory_space<vmem>>, vector<16x16x4xbf16>
    %47 = vector.shape_cast %46 : vector<16x16x4xbf16> to vector<256x4xbf16>
    %c28 = arith.constant 28 : index
    %c0_64 = arith.constant 0 : index
    %48 = vector.load %arg2[%c28, %c0_64] : memref<36x4xbf16, #tpu.memory_space<vmem>>, vector<4x4xbf16>
    %cst_65 = arith.constant dense<0.000000e+00> : vector<256x4xf32>
    %49 = tpu.matmul %47, %48, %cst_65 {dimension_numbers = #tpu.dot_dimension_numbers<[1], [0], [0], [1], [0, 0, 1, 1], [], []>} : vector<256x4xbf16>, vector<4x4xbf16>, vector<256x4xf32> -> vector<256x4xf32>
    %50 = arith.addf %45, %49 : vector<256x4xf32>
    %c2_66 = arith.constant 2 : index
    %c2_67 = arith.constant 2 : index
    %c0_68 = arith.constant 0 : index
    %51 = vector.load %arg5[%c2_66, %c2_67, %c0_68] : memref<18x24x4xbf16, #tpu.memory_space<vmem>>, vector<16x16x4xbf16>
    %52 = vector.shape_cast %51 : vector<16x16x4xbf16> to vector<256x4xbf16>
    %c32 = arith.constant 32 : index
    %c0_69 = arith.constant 0 : index
    %53 = vector.load %arg2[%c32, %c0_69] : memref<36x4xbf16, #tpu.memory_space<vmem>>, vector<4x4xbf16>
    %cst_70 = arith.constant dense<0.000000e+00> : vector<256x4xf32>
    %54 = tpu.matmul %52, %53, %cst_70 {dimension_numbers = #tpu.dot_dimension_numbers<[1], [0], [0], [1], [0, 0, 1, 1], [], []>} : vector<256x4xbf16>, vector<4x4xbf16>, vector<256x4xf32> -> vector<256x4xf32>
    %55 = arith.addf %50, %54 : vector<256x4xf32>
    %cst_71 = arith.constant dense<0.000000e+00> : vector<4xf32>
    %56 = vector.multi_reduction <add>, %55, %cst_71 [0] : vector<256x4xf32> to vector<4xf32>
    %57 = vector.shape_cast %56 : vector<4xf32> to vector<1x4xf32>
    %cst_72 = arith.constant 3.906250e-03 : f32
    %58 = vector.broadcast %cst_72 : f32 to vector<1x4xf32>
    %59 = arith.mulf %57, %58 : vector<1x4xf32>
    %60 = vector.broadcast %59 : vector<1x4xf32> to vector<256x4xf32>
    %61 = arith.subf %55, %60 : vector<256x4xf32>
    %62 = arith.mulf %61, %61 : vector<256x4xf32>
    %cst_73 = arith.constant dense<0.000000e+00> : vector<4xf32>
    %63 = vector.multi_reduction <add>, %62, %cst_73 [0] : vector<256x4xf32> to vector<4xf32>
    %64 = vector.shape_cast %63 : vector<4xf32> to vector<1x4xf32>
    %cst_74 = arith.constant 3.906250e-03 : f32
    %65 = vector.broadcast %cst_74 : f32 to vector<1x4xf32>
    %66 = arith.mulf %64, %65 : vector<1x4xf32>
    %cst_75 = arith.constant 9.99999974E-6 : f32
    %67 = vector.broadcast %cst_75 : f32 to vector<1x4xf32>
    %68 = arith.addf %66, %67 : vector<1x4xf32>
    %69 = math.rsqrt %68 : vector<1x4xf32>
    %70 = vector.broadcast %69 : vector<1x4xf32> to vector<256x4xf32>
    %71 = arith.mulf %61, %70 : vector<256x4xf32>
    %cst_76 = arith.constant 0.000000e+00 : f32
    %72 = vector.broadcast %cst_76 : f32 to vector<256x4xf32>
    %73 = arith.maximumf %71, %72 : vector<256x4xf32>
    %74 = vector.shape_cast %73 : vector<256x4xf32> to vector<16x16x4xf32>
    %75 = arith.truncf %74 : vector<16x16x4xf32> to vector<16x16x4xbf16>
    %c1_77 = arith.constant 1 : index
    %c1_78 = arith.constant 1 : index
    %c0_79 = arith.constant 0 : index
    %76 = vector.load %arg5[%c1_77, %c1_78, %c0_79] : memref<18x24x4xbf16, #tpu.memory_space<vmem>>, vector<16x16x4xbf16>
    tpu.vector_store %arg5[%c1_77, %c1_78, %c0_79], %75 {strides = array<i32>} : memref<18x24x4xbf16, #tpu.memory_space<vmem>>, vector<16x16x4xbf16>,
    %c2_80 = arith.constant 2 : index
    %c1_81 = arith.constant 1 : index
    %c0_82 = arith.constant 0 : index
    %77 = vector.load %arg5[%c2_80, %c1_81, %c0_82] : memref<18x24x4xbf16, #tpu.memory_space<vmem>>, vector<1x16x4xbf16>
    %c0_83 = arith.constant 0 : index
    %c1_84 = arith.constant 1 : index
    %c0_85 = arith.constant 0 : index
    %78 = vector.load %arg5[%c0_83, %c1_84, %c0_85] : memref<18x24x4xbf16, #tpu.memory_space<vmem>>, vector<1x16x4xbf16>
    tpu.vector_store %arg5[%c0_83, %c1_84, %c0_85], %77 {strides = array<i32>} : memref<18x24x4xbf16, #tpu.memory_space<vmem>>, vector<1x16x4xbf16>,
    %c15_86 = arith.constant 15 : index
    %c1_87 = arith.constant 1 : index
    %c0_88 = arith.constant 0 : index
    %79 = vector.load %arg5[%c15_86, %c1_87, %c0_88] : memref<18x24x4xbf16, #tpu.memory_space<vmem>>, vector<1x16x4xbf16>
    %c17_89 = arith.constant 17 : index
    %c1_90 = arith.constant 1 : index
    %c0_91 = arith.constant 0 : index
    %80 = vector.load %arg5[%c17_89, %c1_90, %c0_91] : memref<18x24x4xbf16, #tpu.memory_space<vmem>>, vector<1x16x4xbf16>
    tpu.vector_store %arg5[%c17_89, %c1_90, %c0_91], %79 {strides = array<i32>} : memref<18x24x4xbf16, #tpu.memory_space<vmem>>, vector<1x16x4xbf16>,
    %c0_92 = arith.constant 0 : index
    %c2_93 = arith.constant 2 : index
    %c0_94 = arith.constant 0 : index
    %81 = vector.load %arg5[%c0_92, %c2_93, %c0_94] : memref<18x24x4xbf16, #tpu.memory_space<vmem>>, vector<18x1x4xbf16>
    %c0_95 = arith.constant 0 : index
    %c0_96 = arith.constant 0 : index
    %c0_97 = arith.constant 0 : index
    %82 = vector.load %arg5[%c0_95, %c0_96, %c0_97] : memref<18x24x4xbf16, #tpu.memory_space<vmem>>, vector<18x1x4xbf16>
    tpu.vector_store %arg5[%c0_95, %c0_96, %c0_97], %81 {strides = array<i32>} : memref<18x24x4xbf16, #tpu.memory_space<vmem>>, vector<18x1x4xbf16>,
    %c0_98 = arith.constant 0 : index
    %c15_99 = arith.constant 15 : index
    %c0_100 = arith.constant 0 : index
    %83 = vector.load %arg5[%c0_98, %c15_99, %c0_100] : memref<18x24x4xbf16, #tpu.memory_space<vmem>>, vector<18x1x4xbf16>
    %c0_101 = arith.constant 0 : index
    %c17_102 = arith.constant 17 : index
    %c0_103 = arith.constant 0 : index
    %84 = vector.load %arg5[%c0_101, %c17_102, %c0_103] : memref<18x24x4xbf16, #tpu.memory_space<vmem>>, vector<18x1x4xbf16>
    tpu.vector_store %arg5[%c0_101, %c17_102, %c0_103], %83 {strides = array<i32>} : memref<18x24x4xbf16, #tpu.memory_space<vmem>>, vector<18x1x4xbf16>,
    %c0_104 = arith.constant 0 : index
    %c0_105 = arith.constant 0 : index
    %c0_106 = arith.constant 0 : index
    %85 = vector.load %arg5[%c0_104, %c0_105, %c0_106] : memref<18x24x4xbf16, #tpu.memory_space<vmem>>, vector<16x16x4xbf16>
    %86 = vector.shape_cast %85 : vector<16x16x4xbf16> to vector<256x4xbf16>
    %c0_107 = arith.constant 0 : index
    %c0_108 = arith.constant 0 : index
    %87 = vector.load %arg3[%c0_107, %c0_108] : memref<36x4xbf16, #tpu.memory_space<vmem>>, vector<4x4xbf16>
    %cst_109 = arith.constant dense<0.000000e+00> : vector<256x4xf32>
    %88 = tpu.matmul %86, %87, %cst_109 {dimension_numbers = #tpu.dot_dimension_numbers<[1], [0], [0], [1], [0, 0, 1, 1], [], []>} : vector<256x4xbf16>, vector<4x4xbf16>, vector<256x4xf32> -> vector<256x4xf32>
    %c0_110 = arith.constant 0 : index
    %c1_111 = arith.constant 1 : index
    %c0_112 = arith.constant 0 : index
    %89 = vector.load %arg5[%c0_110, %c1_111, %c0_112] : memref<18x24x4xbf16, #tpu.memory_space<vmem>>, vector<16x16x4xbf16>
    %90 = vector.shape_cast %89 : vector<16x16x4xbf16> to vector<256x4xbf16>
    %c4_113 = arith.constant 4 : index
    %c0_114 = arith.constant 0 : index
    %91 = vector.load %arg3[%c4_113, %c0_114] : memref<36x4xbf16, #tpu.memory_space<vmem>>, vector<4x4xbf16>
    %cst_115 = arith.constant dense<0.000000e+00> : vector<256x4xf32>
    %92 = tpu.matmul %90, %91, %cst_115 {dimension_numbers = #tpu.dot_dimension_numbers<[1], [0], [0], [1], [0, 0, 1, 1], [], []>} : vector<256x4xbf16>, vector<4x4xbf16>, vector<256x4xf32> -> vector<256x4xf32>
    %93 = arith.addf %88, %92 : vector<256x4xf32>
    %c0_116 = arith.constant 0 : index
    %c2_117 = arith.constant 2 : index
    %c0_118 = arith.constant 0 : index
    %94 = vector.load %arg5[%c0_116, %c2_117, %c0_118] : memref<18x24x4xbf16, #tpu.memory_space<vmem>>, vector<16x16x4xbf16>
    %95 = vector.shape_cast %94 : vector<16x16x4xbf16> to vector<256x4xbf16>
    %c8_119 = arith.constant 8 : index
    %c0_120 = arith.constant 0 : index
    %96 = vector.load %arg3[%c8_119, %c0_120] : memref<36x4xbf16, #tpu.memory_space<vmem>>, vector<4x4xbf16>
    %cst_121 = arith.constant dense<0.000000e+00> : vector<256x4xf32>
    %97 = tpu.matmul %95, %96, %cst_121 {dimension_numbers = #tpu.dot_dimension_numbers<[1], [0], [0], [1], [0, 0, 1, 1], [], []>} : vector<256x4xbf16>, vector<4x4xbf16>, vector<256x4xf32> -> vector<256x4xf32>
    %98 = arith.addf %93, %97 : vector<256x4xf32>
    %c1_122 = arith.constant 1 : index
    %c0_123 = arith.constant 0 : index
    %c0_124 = arith.constant 0 : index
    %99 = vector.load %arg5[%c1_122, %c0_123, %c0_124] : memref<18x24x4xbf16, #tpu.memory_space<vmem>>, vector<16x16x4xbf16>
    %100 = vector.shape_cast %99 : vector<16x16x4xbf16> to vector<256x4xbf16>
    %c12_125 = arith.constant 12 : index
    %c0_126 = arith.constant 0 : index
    %101 = vector.load %arg3[%c12_125, %c0_126] : memref<36x4xbf16, #tpu.memory_space<vmem>>, vector<4x4xbf16>
    %cst_127 = arith.constant dense<0.000000e+00> : vector<256x4xf32>
    %102 = tpu.matmul %100, %101, %cst_127 {dimension_numbers = #tpu.dot_dimension_numbers<[1], [0], [0], [1], [0, 0, 1, 1], [], []>} : vector<256x4xbf16>, vector<4x4xbf16>, vector<256x4xf32> -> vector<256x4xf32>
    %103 = arith.addf %98, %102 : vector<256x4xf32>
    %c1_128 = arith.constant 1 : index
    %c1_129 = arith.constant 1 : index
    %c0_130 = arith.constant 0 : index
    %104 = vector.load %arg5[%c1_128, %c1_129, %c0_130] : memref<18x24x4xbf16, #tpu.memory_space<vmem>>, vector<16x16x4xbf16>
    %105 = vector.shape_cast %104 : vector<16x16x4xbf16> to vector<256x4xbf16>
    %c16_131 = arith.constant 16 : index
    %c0_132 = arith.constant 0 : index
    %106 = vector.load %arg3[%c16_131, %c0_132] : memref<36x4xbf16, #tpu.memory_space<vmem>>, vector<4x4xbf16>
    %cst_133 = arith.constant dense<0.000000e+00> : vector<256x4xf32>
    %107 = tpu.matmul %105, %106, %cst_133 {dimension_numbers = #tpu.dot_dimension_numbers<[1], [0], [0], [1], [0, 0, 1, 1], [], []>} : vector<256x4xbf16>, vector<4x4xbf16>, vector<256x4xf32> -> vector<256x4xf32>
    %108 = arith.addf %103, %107 : vector<256x4xf32>
    %c1_134 = arith.constant 1 : index
    %c2_135 = arith.constant 2 : index
    %c0_136 = arith.constant 0 : index
    %109 = vector.load %arg5[%c1_134, %c2_135, %c0_136] : memref<18x24x4xbf16, #tpu.memory_space<vmem>>, vector<16x16x4xbf16>
    %110 = vector.shape_cast %109 : vector<16x16x4xbf16> to vector<256x4xbf16>
    %c20_137 = arith.constant 20 : index
    %c0_138 = arith.constant 0 : index
    %111 = vector.load %arg3[%c20_137, %c0_138] : memref<36x4xbf16, #tpu.memory_space<vmem>>, vector<4x4xbf16>
    %cst_139 = arith.constant dense<0.000000e+00> : vector<256x4xf32>
    %112 = tpu.matmul %110, %111, %cst_139 {dimension_numbers = #tpu.dot_dimension_numbers<[1], [0], [0], [1], [0, 0, 1, 1], [], []>} : vector<256x4xbf16>, vector<4x4xbf16>, vector<256x4xf32> -> vector<256x4xf32>
    %113 = arith.addf %108, %112 : vector<256x4xf32>
    %c2_140 = arith.constant 2 : index
    %c0_141 = arith.constant 0 : index
    %c0_142 = arith.constant 0 : index
    %114 = vector.load %arg5[%c2_140, %c0_141, %c0_142] : memref<18x24x4xbf16, #tpu.memory_space<vmem>>, vector<16x16x4xbf16>
    %115 = vector.shape_cast %114 : vector<16x16x4xbf16> to vector<256x4xbf16>
    %c24_143 = arith.constant 24 : index
    %c0_144 = arith.constant 0 : index
    %116 = vector.load %arg3[%c24_143, %c0_144] : memref<36x4xbf16, #tpu.memory_space<vmem>>, vector<4x4xbf16>
    %cst_145 = arith.constant dense<0.000000e+00> : vector<256x4xf32>
    %117 = tpu.matmul %115, %116, %cst_145 {dimension_numbers = #tpu.dot_dimension_numbers<[1], [0], [0], [1], [0, 0, 1, 1], [], []>} : vector<256x4xbf16>, vector<4x4xbf16>, vector<256x4xf32> -> vector<256x4xf32>
    %118 = arith.addf %113, %117 : vector<256x4xf32>
    %c2_146 = arith.constant 2 : index
    %c1_147 = arith.constant 1 : index
    %c0_148 = arith.constant 0 : index
    %119 = vector.load %arg5[%c2_146, %c1_147, %c0_148] : memref<18x24x4xbf16, #tpu.memory_space<vmem>>, vector<16x16x4xbf16>
    %120 = vector.shape_cast %119 : vector<16x16x4xbf16> to vector<256x4xbf16>
    %c28_149 = arith.constant 28 : index
    %c0_150 = arith.constant 0 : index
    %121 = vector.load %arg3[%c28_149, %c0_150] : memref<36x4xbf16, #tpu.memory_space<vmem>>, vector<4x4xbf16>
    %cst_151 = arith.constant dense<0.000000e+00> : vector<256x4xf32>
    %122 = tpu.matmul %120, %121, %cst_151 {dimension_numbers = #tpu.dot_dimension_numbers<[1], [0], [0], [1], [0, 0, 1, 1], [], []>} : vector<256x4xbf16>, vector<4x4xbf16>, vector<256x4xf32> -> vector<256x4xf32>
    %123 = arith.addf %118, %122 : vector<256x4xf32>
    %c2_152 = arith.constant 2 : index
    %c2_153 = arith.constant 2 : index
    %c0_154 = arith.constant 0 : index
    %124 = vector.load %arg5[%c2_152, %c2_153, %c0_154] : memref<18x24x4xbf16, #tpu.memory_space<vmem>>, vector<16x16x4xbf16>
    %125 = vector.shape_cast %124 : vector<16x16x4xbf16> to vector<256x4xbf16>
    %c32_155 = arith.constant 32 : index
    %c0_156 = arith.constant 0 : index
    %126 = vector.load %arg3[%c32_155, %c0_156] : memref<36x4xbf16, #tpu.memory_space<vmem>>, vector<4x4xbf16>
    %cst_157 = arith.constant dense<0.000000e+00> : vector<256x4xf32>
    %127 = tpu.matmul %125, %126, %cst_157 {dimension_numbers = #tpu.dot_dimension_numbers<[1], [0], [0], [1], [0, 0, 1, 1], [], []>} : vector<256x4xbf16>, vector<4x4xbf16>, vector<256x4xf32> -> vector<256x4xf32>
    %128 = arith.addf %123, %127 : vector<256x4xf32>
    %cst_158 = arith.constant dense<0.000000e+00> : vector<4xf32>
    %129 = vector.multi_reduction <add>, %128, %cst_158 [0] : vector<256x4xf32> to vector<4xf32>
    %130 = vector.shape_cast %129 : vector<4xf32> to vector<1x4xf32>
    %cst_159 = arith.constant 3.906250e-03 : f32
    %131 = vector.broadcast %cst_159 : f32 to vector<1x4xf32>
    %132 = arith.mulf %130, %131 : vector<1x4xf32>
    %133 = vector.broadcast %132 : vector<1x4xf32> to vector<256x4xf32>
    %134 = arith.subf %128, %133 : vector<256x4xf32>
    %135 = arith.mulf %134, %134 : vector<256x4xf32>
    %cst_160 = arith.constant dense<0.000000e+00> : vector<4xf32>
    %136 = vector.multi_reduction <add>, %135, %cst_160 [0] : vector<256x4xf32> to vector<4xf32>
    %137 = vector.shape_cast %136 : vector<4xf32> to vector<1x4xf32>
    %cst_161 = arith.constant 3.906250e-03 : f32
    %138 = vector.broadcast %cst_161 : f32 to vector<1x4xf32>
    %139 = arith.mulf %137, %138 : vector<1x4xf32>
    %cst_162 = arith.constant 9.99999974E-6 : f32
    %140 = vector.broadcast %cst_162 : f32 to vector<1x4xf32>
    %141 = arith.addf %139, %140 : vector<1x4xf32>
    %142 = math.rsqrt %141 : vector<1x4xf32>
    %143 = vector.broadcast %142 : vector<1x4xf32> to vector<256x4xf32>
    %144 = arith.mulf %134, %143 : vector<256x4xf32>
    %c0_163 = arith.constant 0 : index
    %c0_164 = arith.constant 0 : index
    %c0_165 = arith.constant 0 : index
    %c0_166 = arith.constant 0 : index
    %145 = vector.load %arg1[%c0_163, %c0_164, %c0_165, %c0_166] : memref<1x16x16x4xf32, #tpu.memory_space<vmem>>, vector<1x16x16x4xf32>
    %146 = vector.shape_cast %145 : vector<1x16x16x4xf32> to vector<16x16x4xf32>
    %147 = vector.shape_cast %146 : vector<16x16x4xf32> to vector<256x4xf32>
    %148 = arith.addf %147, %144 : vector<256x4xf32>
    %c0_167 = arith.constant 0 : index
    %c0_168 = arith.constant 0 : index
    %c0_169 = arith.constant 0 : index
    %149 = vector.load %arg4[%c0_167, %c0_168, %c0_169] : memref<1x256x4xf32, #tpu.memory_space<vmem>>, vector<1x256x4xf32>
    %150 = vector.shape_cast %149 : vector<1x256x4xf32> to vector<256x4xf32>
    %151 = vector.shape_cast %148 : vector<256x4xf32> to vector<1x256x4xf32>
    tpu.vector_store %arg4[%c0_167, %c0_168, %c0_169], %151 {strides = array<i32>} : memref<1x256x4xf32, #tpu.memory_space<vmem>>, vector<1x256x4xf32>,
    return
  }
  func.func @transform_0(%arg0: i32) -> (i32, i32, i32, i32) {
    %c0_i32 = arith.constant 0 : i32
    %c0_i32_0 = arith.constant 0 : i32
    %c0_i32_1 = arith.constant 0 : i32
    %c0_i32_2 = arith.constant 0 : i32
    return %arg0, %c0_i32, %c0_i32_0, %c0_i32_1 : i32, i32, i32, i32
  }
  func.func @transform_1(%arg0: i32) -> (i32, i32) {
    %c0_i32 = arith.constant 0 : i32
    %c0_i32_0 = arith.constant 0 : i32
    %c0_i32_1 = arith.constant 0 : i32
    return %c0_i32, %c0_i32_0 : i32, i32
  }
  func.func @transform_2(%arg0: i32) -> (i32, i32) {
    %c0_i32 = arith.constant 0 : i32
    %c0_i32_0 = arith.constant 0 : i32
    %c0_i32_1 = arith.constant 0 : i32
    return %c0_i32, %c0_i32_0 : i32, i32
  }
  func.func @transform_3(%arg0: i32) -> (i32, i32, i32) {
    %c0_i32 = arith.constant 0 : i32
    %c0_i32_0 = arith.constant 0 : i32
    %c0_i32_1 = arith.constant 0 : i32
    return %arg0, %c0_i32, %c0_i32_0 : i32, i32, i32
  }
}

</mosaic_0001>

<llo_original>
// kernel: tpu_custom_call.1
$region0: #{tpu_custom_call.1}
  #allocation0 [shape = 'u32[]', space=smem, size = 0x4, offset = 0x4, fixed_abs, tag = 'smem constant byte address 0x4 - core index']
  #allocation1 [shape = 'u32[144,128]{1,0:T(1,128)}', space=vmem, size = 0x12000, scoped, tag = 'internal scratch']
  #allocation2 [shape = 'bf16[18,24,4]{2,1,0:T(8,128)(2,1)}', space=vmem, size = 0x1b000, scoped, tag = 'scratch operand']
  %s0 = inlined_call_operand.vmem [shape: f32[2,16,16,4], index: 0, kind: input, shape index: {}]
  %s1 = inlined_call_operand.vmem [shape: bf16[36,4], index: 1, kind: input, shape index: {}]
  %s2 = inlined_call_operand.vmem [shape: bf16[36,4], index: 2, kind: input, shape index: {}]
  %s3 = inlined_call_operand.vmem [shape: f32[2,256,4], index: 3, kind: output, shape index: {}]
  %s4 = sld [smem:[#allocation0]]
  $region45: #{tpu_custom_call.1} parent=0
    _
  %s6 = ssub.s32 1, %s4
  %s7 = scalar_select 0, %s6, %s4
  loop: start=0, step=1, limit=4
  $region2: #{tpu_custom_call.1} parent=0 // loop_pre_header
    _
  $region3: #{tpu_custom_call.1} parent=0 // loop_header
    %s9 = sphi 0, %s13
    %p10 = scmp.ge.s32.totalorder %s9, 4
    %s19 = sphi 0, %s21
    %s22 = sphi 0, %s19
    %s23 = sphi 0, %s22
    %s39 = sphi 0, %s23
    %s43 = sphi 0, %s43
    %s45 = sphi 0, %s43
    %s46 = sphi 0, %s45
    %s60 = sphi 0, %s46
    %s64 = sphi 0, %s64
    %s66 = sphi 0, %s64
    %s67 = sphi 0, %s66
    %s81 = sphi 0, %s67
    %s87 = sphi 0, %s89
    %s90 = sphi 0, %s87
    %s91 = sphi 0, %s90
    %s107 = sphi 0, %s91
  $region4: #{tpu_custom_call.1} parent=0 // loop_header_branch
    %12 = sbr.rel (%p10) target = $region8
  $region5: #{tpu_custom_call.1} parent=0 // loop_body
    %s14 = ssub.s32 %s9, 1
    %s15 = ssub.s32 %s9, 2
    %s16 = sadd.s32 %s9, 1
    %s17 = ssub.s32 %s9, %s16
    %p18 = scmp.eq.s32.totalorder %s17, 0
    %s20 = sadd.s32 %s19, 1
    %s21 = scalar_select %p18, %s19, %s20
    %p24 = pneg %p18
    %p25 = scmp.eq.s32.totalorder %s9, 1
    %p26 = por %p24, %p25
    %p27 = scmp.ne.s32.totalorder %s19, %s22
    %p28 = scmp.eq.s32.totalorder %s9, 0
    %p29 = por %p27, %p28
    %p30 = scmp.ne.s32.totalorder %s19, %s22
    %p31 = scmp.eq.s32.totalorder %s14, 1
    %p32 = por %p30, %p31
    %p33 = scmp.ne.s32.totalorder %s22, %s23
    %p34 = scmp.eq.s32.totalorder %s14, 0
    %p35 = por %p33, %p34
    %p36 = scmp.ne.s32.totalorder %s22, %s23
    %p37 = scmp.eq.s32.totalorder %s15, 1
    %p38 = por %p36, %p37
    %p40 = scmp.ne.s32.totalorder %s23, %s39
    %p41 = scmp.eq.s32.totalorder %s15, 0
    %p42 = por %p40, %p41
    %s44 = sadd.s32 %s43, 1
    %p47 = scmp.eq.s32.totalorder %s9, 1
    %p48 = scmp.ne.s32.totalorder %s43, %s45
    %p49 = scmp.eq.s32.totalorder %s9, 0
    %p50 = por %p48, %p49
    %p51 = scmp.ne.s32.totalorder %s43, %s45
    %p52 = scmp.eq.s32.totalorder %s14, 1
    %p53 = por %p51, %p52
    %p54 = scmp.ne.s32.totalorder %s45, %s46
    %p55 = scmp.eq.s32.totalorder %s14, 0
    %p56 = por %p54, %p55
    %p57 = scmp.ne.s32.totalorder %s45, %s46
    %p58 = scmp.eq.s32.totalorder %s15, 1
    %p59 = por %p57, %p58
    %p61 = scmp.ne.s32.totalorder %s46, %s60
    %p62 = scmp.eq.s32.totalorder %s15, 0
    %p63 = por %p61, %p62
    %s65 = sadd.s32 %s64, 1
    %p68 = scmp.eq.s32.totalorder %s9, 1
    %p69 = scmp.ne.s32.totalorder %s64, %s66
    %p70 = scmp.eq.s32.totalorder %s9, 0
    %p71 = por %p69, %p70
    %p72 = scmp.ne.s32.totalorder %s64, %s66
    %p73 = scmp.eq.s32.totalorder %s14, 1
    %p74 = por %p72, %p73
    %p75 = scmp.ne.s32.totalorder %s66, %s67
    %p76 = scmp.eq.s32.totalorder %s14, 0
    %p77 = por %p75, %p76
    %p78 = scmp.ne.s32.totalorder %s66, %s67
    %p79 = scmp.eq.s32.totalorder %s15, 1
    %p80 = por %p78, %p79
    %p82 = scmp.ne.s32.totalorder %s67, %s81
    %p83 = scmp.eq.s32.totalorder %s15, 0
    %p84 = por %p82, %p83
    %s85 = ssub.s32 %s9, %s16
    %p86 = scmp.eq.s32.totalorder %s85, 0
    %s88 = sadd.s32 %s87, 1
    %s89 = scalar_select %p86, %s87, %s88
    %p92 = pneg %p86
    %p93 = scmp.eq.s32.totalorder %s9, 1
    %p94 = por %p92, %p93
    %p95 = scmp.ne.s32.totalorder %s87, %s90
    %p96 = scmp.eq.s32.totalorder %s9, 0
    %p97 = por %p95, %p96
    %p98 = scmp.ne.s32.totalorder %s87, %s90
    %p99 = scmp.eq.s32.totalorder %s14, 1
    %p100 = por %p98, %p99
    %p101 = scmp.ne.s32.totalorder %s90, %s91
    %p102 = scmp.eq.s32.totalorder %s14, 0
    %p103 = por %p101, %p102
    %p104 = scmp.ne.s32.totalorder %s90, %s91
    %p105 = scmp.eq.s32.totalorder %s15, 1
    %p106 = por %p104, %p105
    %p108 = scmp.ne.s32.totalorder %s91, %s107
    %p109 = scmp.eq.s32.totalorder %s15, 0
    %p110 = por %p108, %p109
    %p111 = scmp.le.s32.totalorder 1, %s9
    %p112 = scmp.lt.s32.totalorder %s9, 3
    %p113 = pnand %p111, %p112
    %p114 = pneg %p113
    // Predicated region
    $region9: #{tpu_custom_call.1} parent=5 // pred_check
      _
    $region10: #{tpu_custom_call.1} parent=5 // pred_check_branch
      %116 = sbr.rel (%p113) target = $region12
    $region11: #{tpu_custom_call.1} parent=5 // pred_region
      %s117 = ssub.s32 %s9, 1
      // Predicated region
      $region13: #{tpu_custom_call.1} parent=11 // pred_check
        %p118 = pneg %p56
      $region14: #{tpu_custom_call.1} parent=11 // pred_check_branch
        %120 = sbr.rel (%p118) target = $region16
      $region15: #{tpu_custom_call.1} parent=11 // pred_region
        _
      $region16: #{tpu_custom_call.1} parent=11 // pred_fallthru
        _
      // Predicated region
      $region17: #{tpu_custom_call.1} parent=11 // pred_check
        %p121 = pneg %p77
      $region18: #{tpu_custom_call.1} parent=11 // pred_check_branch
        %123 = sbr.rel (%p121) target = $region20
      $region19: #{tpu_custom_call.1} parent=11 // pred_region
        _
      $region20: #{tpu_custom_call.1} parent=11 // pred_fallthru
        _
    $region12: #{tpu_custom_call.1} parent=5 // pred_fallthru
      _
    %p124 = scmp.lt.s32.totalorder %s9, 2
    // Predicated region
    $region21: #{tpu_custom_call.1} parent=5 // pred_check
      %p125 = pneg %p124
    $region22: #{tpu_custom_call.1} parent=5 // pred_check_branch
      %127 = sbr.rel (%p125) target = $region24
    $region23: #{tpu_custom_call.1} parent=5 // pred_region
      // Predicated region
      $region25: #{tpu_custom_call.1} parent=23 // pred_check
        %p128 = pneg %p29
      $region26: #{tpu_custom_call.1} parent=23 // pred_check_branch
        %130 = sbr.rel (%p128) target = $region28
      $region27: #{tpu_custom_call.1} parent=23 // pred_region
        %p131 = scmp.lt.s32.totalorder %s9, 1
        %s132 = scalar_select %p131, %s9, 1
        %s133 = smul.addr %s132, 32
        %s134 = smul.addr %s133, 8
        %s135 = scalar_lea.vmem %s0, %s134
      $region28: #{tpu_custom_call.1} parent=23 // pred_fallthru
        _
    $region24: #{tpu_custom_call.1} parent=5 // pred_fallthru
      _
    %p136 = scmp.le.s32.totalorder 1, %s9
    %p137 = scmp.lt.s32.totalorder %s9, 3
    %p138 = pnand %p136, %p137
    %p139 = pneg %p138
    // Predicated region
    $region29: #{tpu_custom_call.1} parent=5 // pred_check
      _
    $region30: #{tpu_custom_call.1} parent=5 // pred_check_branch
      %141 = sbr.rel (%p138) target = $region32
    $region31: #{tpu_custom_call.1} parent=5 // pred_region
      %s142 = ssub.s32 %s9, 1
      %p143 = scmp.lt.s32.totalorder %s14, 1
      %s144 = scalar_select %p143, %s14, 1
      %s145 = smul.addr %s144, 32
      %s146 = smul.addr %s145, 8
      %s147 = scalar_lea.vmem %s0, %s146
      %p148 = pneg %p35
      %p149 = pneg %p32
      %p150 = pneg %p56
      %p151 = pneg %p53
      %p152 = pneg %p77
      %p153 = pneg %p74
      %p154 = pneg %p103
      %p155 = pneg %p100
      %p156 = scmp.lt.s32.totalorder %s14, 1
      %s157 = scalar_select %p156, %s14, 1
      %s158 = smul.addr %s157, 32
      %s159 = smul.addr %s158, 8
      %s160 = scalar_lea.vmem %s3, %s159
      %p161 = scmp.lt.s32.totalorder %s14, 1
      %s162 = scalar_select %p161, %s14, 1
      %s163 = smul.addr %s162, 32
      %s164 = smul.addr %s163, 8
      %s165 = scalar_lea.vmem %s0, %s164
      %p166 = scmp.lt.s32.totalorder %s14, 1
      %s167 = scalar_select %p166, %s14, 1
      %s168 = smul.addr %s167, 32
      %s169 = smul.addr %s168, 8
      %s170 = scalar_lea.vmem %s3, %s169
      %v172 = vld [vmem:[%s165] sm:$0xff]
      %v173 = vld [vmem:[%s165 + $0x8] sm:$0xff]
      %v174 = vld [vmem:[%s165 + $0x10] sm:$0xff]
      %v175 = vld [vmem:[%s165 + $0x18] sm:$0xff]
      %v176 = vld [vmem:[%s165 + $0x20] sm:$0xff]
      %v177 = vld [vmem:[%s165 + $0x28] sm:$0xff]
      %v178 = vld [vmem:[%s165 + $0x30] sm:$0xff]
      %v179 = vld [vmem:[%s165 + $0x38] sm:$0xff]
      %v180 = vld [vmem:[%s165 + $0x40] sm:$0xff]
      %v181 = vld [vmem:[%s165 + $0x48] sm:$0xff]
      %v182 = vld [vmem:[%s165 + $0x50] sm:$0xff]
      %v183 = vld [vmem:[%s165 + $0x58] sm:$0xff]
      %v184 = vld [vmem:[%s165 + $0x60] sm:$0xff]
      %v185 = vld [vmem:[%s165 + $0x68] sm:$0xff]
      %v186 = vld [vmem:[%s165 + $0x70] sm:$0xff]
      %v187 = vld [vmem:[%s165 + $0x78] sm:$0xff]
      %v188 = vld [vmem:[%s165 + $0x80] sm:$0xff]
      %v189 = vld [vmem:[%s165 + $0x88] sm:$0xff]
      %v190 = vld [vmem:[%s165 + $0x90] sm:$0xff]
      %v191 = vld [vmem:[%s165 + $0x98] sm:$0xff]
      %v192 = vld [vmem:[%s165 + $0xa0] sm:$0xff]
      %v193 = vld [vmem:[%s165 + $0xa8] sm:$0xff]
      %v194 = vld [vmem:[%s165 + $0xb0] sm:$0xff]
      %v195 = vld [vmem:[%s165 + $0xb8] sm:$0xff]
      %v196 = vld [vmem:[%s165 + $0xc0] sm:$0xff]
      %v197 = vld [vmem:[%s165 + $0xc8] sm:$0xff]
      %v198 = vld [vmem:[%s165 + $0xd0] sm:$0xff]
      %v199 = vld [vmem:[%s165 + $0xd8] sm:$0xff]
      %v200 = vld [vmem:[%s165 + $0xe0] sm:$0xff]
      %v201 = vld [vmem:[%s165 + $0xe8] sm:$0xff]
      %v202 = vld [vmem:[%s165 + $0xf0] sm:$0xff]
      %v203 = vld [vmem:[%s165 + $0xf8] sm:$0xff]
      %v204 = vpack.c.bf16 %v173, %v172
      %v205 = vpack.c.bf16 %v175, %v174
      %v206 = vpack.c.bf16 %v177, %v176
      %v207 = vpack.c.bf16 %v179, %v178
      %v208 = vpack.c.bf16 %v181, %v180
      %v209 = vpack.c.bf16 %v183, %v182
      %v210 = vpack.c.bf16 %v185, %v184
      %v211 = vpack.c.bf16 %v187, %v186
      %v212 = vpack.c.bf16 %v189, %v188
      %v213 = vpack.c.bf16 %v191, %v190
      %v214 = vpack.c.bf16 %v193, %v192
      %v215 = vpack.c.bf16 %v195, %v194
      %v216 = vpack.c.bf16 %v197, %v196
      %v217 = vpack.c.bf16 %v199, %v198
      %v218 = vpack.c.bf16 %v201, %v200
      %v219 = vpack.c.bf16 %v203, %v202
      %v236 = vunpack.c.l.b16 %v204
      %v237 = vunpack.c.h.b16 %v204
      %v238 = vunpack.c.l.b16 %v205
      %v239 = vunpack.c.h.b16 %v205
      %v240 = vunpack.c.l.b16 %v206
      %v241 = vunpack.c.h.b16 %v206
      %v242 = vunpack.c.l.b16 %v207
      %v243 = vunpack.c.h.b16 %v207
      %v244 = vunpack.c.l.b16 %v208
      %v245 = vunpack.c.h.b16 %v208
      %v246 = vunpack.c.l.b16 %v209
      %v247 = vunpack.c.h.b16 %v209
      %v248 = vunpack.c.l.b16 %v210
      %v249 = vunpack.c.h.b16 %v210
      %v250 = vunpack.c.l.b16 %v211
      %v251 = vunpack.c.h.b16 %v211
      %v252 = vunpack.c.l.b16 %v212
      %v253 = vunpack.c.h.b16 %v212
      %v254 = vunpack.c.l.b16 %v213
      %v255 = vunpack.c.h.b16 %v213
      %v256 = vunpack.c.l.b16 %v214
      %v257 = vunpack.c.h.b16 %v214
      %v258 = vunpack.c.l.b16 %v215
      %v259 = vunpack.c.h.b16 %v215
      %v260 = vunpack.c.l.b16 %v216
      %v261 = vunpack.c.h.b16 %v216
      %v262 = vunpack.c.l.b16 %v217
      %v263 = vunpack.c.h.b16 %v217
      %v264 = vunpack.c.l.b16 %v218
      %v265 = vunpack.c.h.b16 %v218
      %v266 = vunpack.c.l.b16 %v219
      %v267 = vunpack.c.h.b16 %v219
      %v268 = vpack.c.b16 %v236, %v236
      %v269 = vpack.c.b16 %v237, %v237
      %v270 = vpack.c.b16 %v238, %v238
      %v271 = vpack.c.b16 %v239, %v239
      %v272 = vpack.c.b16 %v240, %v240
      %v273 = vpack.c.b16 %v241, %v241
      %v274 = vpack.c.b16 %v242, %v242
      %v275 = vpack.c.b16 %v243, %v243
      %v276 = vpack.c.b16 %v244, %v244
      %v277 = vpack.c.b16 %v245, %v245
      %v278 = vpack.c.b16 %v246, %v246
      %v279 = vpack.c.b16 %v247, %v247
      %v280 = vpack.c.b16 %v248, %v248
      %v281 = vpack.c.b16 %v249, %v249
      %v282 = vpack.c.b16 %v250, %v250
      %v283 = vpack.c.b16 %v251, %v251
      %v284 = vpack.c.b16 %v252, %v252
      %v285 = vpack.c.b16 %v253, %v253
      %v286 = vpack.c.b16 %v254, %v254
      %v287 = vpack.c.b16 %v255, %v255
      %v288 = vpack.c.b16 %v256, %v256
      %v289 = vpack.c.b16 %v257, %v257
      %v290 = vpack.c.b16 %v258, %v258
      %v291 = vpack.c.b16 %v259, %v259
      %v292 = vpack.c.b16 %v260, %v260
      %v293 = vpack.c.b16 %v261, %v261
      %v294 = vpack.c.b16 %v262, %v262
      %v295 = vpack.c.b16 %v263, %v263
      %v296 = vpack.c.b16 %v264, %v264
      %v297 = vpack.c.b16 %v265, %v265
      %v298 = vpack.c.b16 %v266, %v266
      %v299 = vpack.c.b16 %v267, %v267
      %vm300 = vsmask.f32 256
      %vm301 = vsmask.f32 4368
      %vm302 = vmor %vm300, %vm301
      %v304 = vshrl.u32 %v268, 16
      %v306 = vrot.slane %v304, 7
      %v307 = vshll.u32 %v268, 16
      %v309 = vor.u32 %v306, %v307
      %v310 = vrot.slane %v306, 4
      %v312 = vshrl.u32 %v269, 16
      %v314 = vrot.slane %v312, 7
      %v315 = vshll.u32 %v269, 16
      %v317 = vor.u32 %v314, %v315
      %v318 = vsel %vm302, %v310, %v317
      %v319 = vrot.slane %v314, 4
      %v321 = vshrl.u32 %v270, 16
      %v323 = vrot.slane %v321, 7
      %v324 = vshll.u32 %v270, 16
      %v326 = vor.u32 %v323, %v324
      %v327 = vrot.slane %v323, 4
      %v329 = vshrl.u32 %v271, 16
      %v331 = vrot.slane %v329, 7
      %v332 = vshll.u32 %v271, 16
      %v334 = vor.u32 %v331, %v332
      %v335 = vsel %vm302, %v327, %v334
      %v336 = vrot.slane %v331, 4
      %v338 = vshrl.u32 %v272, 16
      %v340 = vrot.slane %v338, 7
      %v341 = vshll.u32 %v272, 16
      %v343 = vor.u32 %v340, %v341
      %v344 = vrot.slane %v340, 4
      %v346 = vshrl.u32 %v273, 16
      %v348 = vrot.slane %v346, 7
      %v349 = vshll.u32 %v273, 16
      %v351 = vor.u32 %v348, %v349
      %v352 = vsel %vm302, %v344, %v351
      %v353 = vrot.slane %v348, 4
      %v355 = vshrl.u32 %v274, 16
      %v357 = vrot.slane %v355, 7
      %v358 = vshll.u32 %v274, 16
      %v360 = vor.u32 %v357, %v358
      %v361 = vrot.slane %v357, 4
      %v363 = vshrl.u32 %v275, 16
      %v365 = vrot.slane %v363, 7
      %v366 = vshll.u32 %v275, 16
      %v368 = vor.u32 %v365, %v366
      %v369 = vsel %vm302, %v361, %v368
      %v370 = vrot.slane %v365, 4
      %v372 = vshrl.u32 %v276, 16
      %v374 = vrot.slane %v372, 7
      %v375 = vshll.u32 %v276, 16
      %v377 = vor.u32 %v374, %v375
      %v378 = vrot.slane %v374, 4
      %v380 = vshrl.u32 %v277, 16
      %v382 = vrot.slane %v380, 7
      %v383 = vshll.u32 %v277, 16
      %v385 = vor.u32 %v382, %v383
      %v386 = vsel %vm302, %v378, %v385
      %v387 = vrot.slane %v382, 4
      %v389 = vshrl.u32 %v278, 16
      %v391 = vrot.slane %v389, 7
      %v392 = vshll.u32 %v278, 16
      %v394 = vor.u32 %v391, %v392
      %v395 = vrot.slane %v391, 4
      %v397 = vshrl.u32 %v279, 16
      %v399 = vrot.slane %v397, 7
      %v400 = vshll.u32 %v279, 16
      %v402 = vor.u32 %v399, %v400
      %v403 = vsel %vm302, %v395, %v402
      %v404 = vrot.slane %v399, 4
      %v406 = vshrl.u32 %v280, 16
      %v408 = vrot.slane %v406, 7
      %v409 = vshll.u32 %v280, 16
      %v411 = vor.u32 %v408, %v409
      %v412 = vrot.slane %v408, 4
      %v414 = vshrl.u32 %v281, 16
      %v416 = vrot.slane %v414, 7
      %v417 = vshll.u32 %v281, 16
      %v419 = vor.u32 %v416, %v417
      %v420 = vsel %vm302, %v412, %v419
      %v421 = vrot.slane %v416, 4
      %v423 = vshrl.u32 %v282, 16
      %v425 = vrot.slane %v423, 7
      %v426 = vshll.u32 %v282, 16
      %v428 = vor.u32 %v425, %v426
      %v429 = vrot.slane %v425, 4
      %v431 = vshrl.u32 %v283, 16
      %v433 = vrot.slane %v431, 7
      %v434 = vshll.u32 %v283, 16
      %v436 = vor.u32 %v433, %v434
      %v437 = vsel %vm302, %v429, %v436
      %v438 = vrot.slane %v433, 4
      %v440 = vshrl.u32 %v284, 16
      %v442 = vrot.slane %v440, 7
      %v443 = vshll.u32 %v284, 16
      %v445 = vor.u32 %v442, %v443
      %v446 = vrot.slane %v442, 4
      %v448 = vshrl.u32 %v285, 16
      %v450 = vrot.slane %v448, 7
      %v451 = vshll.u32 %v285, 16
      %v453 = vor.u32 %v450, %v451
      %v454 = vsel %vm302, %v446, %v453
      %v455 = vrot.slane %v450, 4
      %v457 = vshrl.u32 %v286, 16
      %v459 = vrot.slane %v457, 7
      %v460 = vshll.u32 %v286, 16
      %v462 = vor.u32 %v459, %v460
      %v463 = vrot.slane %v459, 4
      %v465 = vshrl.u32 %v287, 16
      %v467 = vrot.slane %v465, 7
      %v468 = vshll.u32 %v287, 16
      %v470 = vor.u32 %v467, %v468
      %v471 = vsel %vm302, %v463, %v470
      %v472 = vrot.slane %v467, 4
      %v474 = vshrl.u32 %v288, 16
      %v476 = vrot.slane %v474, 7
      %v477 = vshll.u32 %v288, 16
      %v479 = vor.u32 %v476, %v477
      %v480 = vrot.slane %v476, 4
      %v482 = vshrl.u32 %v289, 16
      %v484 = vrot.slane %v482, 7
      %v485 = vshll.u32 %v289, 16
      %v487 = vor.u32 %v484, %v485
      %v488 = vsel %vm302, %v480, %v487
      %v489 = vrot.slane %v484, 4
      %v491 = vshrl.u32 %v290, 16
      %v493 = vrot.slane %v491, 7
      %v494 = vshll.u32 %v290, 16
      %v496 = vor.u32 %v493, %v494
      %v497 = vrot.slane %v493, 4
      %v499 = vshrl.u32 %v291, 16
      %v501 = vrot.slane %v499, 7
      %v502 = vshll.u32 %v291, 16
      %v504 = vor.u32 %v501, %v502
      %v505 = vsel %vm302, %v497, %v504
      %v506 = vrot.slane %v501, 4
      %v508 = vshrl.u32 %v292, 16
      %v510 = vrot.slane %v508, 7
      %v511 = vshll.u32 %v292, 16
      %v513 = vor.u32 %v510, %v511
      %v514 = vrot.slane %v510, 4
      %v516 = vshrl.u32 %v293, 16
      %v518 = vrot.slane %v516, 7
      %v519 = vshll.u32 %v293, 16
      %v521 = vor.u32 %v518, %v519
      %v522 = vsel %vm302, %v514, %v521
      %v523 = vrot.slane %v518, 4
      %v525 = vshrl.u32 %v294, 16
      %v527 = vrot.slane %v525, 7
      %v528 = vshll.u32 %v294, 16
      %v530 = vor.u32 %v527, %v528
      %v531 = vrot.slane %v527, 4
      %v533 = vshrl.u32 %v295, 16
      %v535 = vrot.slane %v533, 7
      %v536 = vshll.u32 %v295, 16
      %v538 = vor.u32 %v535, %v536
      %v539 = vsel %vm302, %v531, %v538
      %v540 = vrot.slane %v535, 4
      %v542 = vshrl.u32 %v296, 16
      %v544 = vrot.slane %v542, 7
      %v545 = vshll.u32 %v296, 16
      %v547 = vor.u32 %v544, %v545
      %v548 = vrot.slane %v544, 4
      %v550 = vshrl.u32 %v297, 16
      %v552 = vrot.slane %v550, 7
      %v553 = vshll.u32 %v297, 16
      %v555 = vor.u32 %v552, %v553
      %v556 = vsel %vm302, %v548, %v555
      %v557 = vrot.slane %v552, 4
      %v559 = vshrl.u32 %v298, 16
      %v561 = vrot.slane %v559, 7
      %v562 = vshll.u32 %v298, 16
      %v564 = vor.u32 %v561, %v562
      %v565 = vrot.slane %v561, 4
      %v567 = vshrl.u32 %v299, 16
      %v569 = vrot.slane %v567, 7
      %v570 = vshll.u32 %v299, 16
      %v572 = vor.u32 %v569, %v570
      %v573 = vsel %vm302, %v565, %v572
      %v574 = vrot.slane %v569, 4
      %s623 = scalar_lea.vmem [#allocation2], 12
      %vm624 = vcmask 27648
      %vm625 = vsmask.f32 7938
      %vm626 = vmand %vm624, %vm625
      %v627 = vld [vmem:[%s623] sm:$0xf]
      %v628 = vsel %vm626, %v309, %v627
      %629 = vst [vmem:[%s623] sm:$0xf] %v628
      %vm630 = vcmask 27648
      %631 = vst.msk [vmem:[%s623 + $0x4] sm:$0xf] %vm630, %v318
      %vm632 = vcmask 24576
      %vm633 = vmand %vm632, %vm300
      %v634 = vld [vmem:[%s623 + $0x8] sm:$0x1]
      %v635 = vsel %vm633, %v319, %v634
      %636 = vst [vmem:[%s623 + $0x8] sm:$0x1] %v635
      %v637 = vld [vmem:[%s623 + $0xc] sm:$0xf]
      %v638 = vsel %vm626, %v326, %v637
      %639 = vst [vmem:[%s623 + $0xc] sm:$0xf] %v638
      %640 = vst.msk [vmem:[%s623 + $0x10] sm:$0xf] %vm630, %v335
      %v641 = vld [vmem:[%s623 + $0x14] sm:$0x1]
      %v642 = vsel %vm633, %v336, %v641
      %643 = vst [vmem:[%s623 + $0x14] sm:$0x1] %v642
      %v644 = vld [vmem:[%s623 + $0x18] sm:$0xf]
      %v645 = vsel %vm626, %v343, %v644
      %646 = vst [vmem:[%s623 + $0x18] sm:$0xf] %v645
      %647 = vst.msk [vmem:[%s623 + $0x1c] sm:$0xf] %vm630, %v352
      %v648 = vld [vmem:[%s623 + $0x20] sm:$0x1]
      %v649 = vsel %vm633, %v353, %v648
      %650 = vst [vmem:[%s623 + $0x20] sm:$0x1] %v649
      %v651 = vld [vmem:[%s623 + $0x24] sm:$0xf]
      %v652 = vsel %vm626, %v360, %v651
      %653 = vst [vmem:[%s623 + $0x24] sm:$0xf] %v652
      %654 = vst.msk [vmem:[%s623 + $0x28] sm:$0xf] %vm630, %v369
      %v655 = vld [vmem:[%s623 + $0x2c] sm:$0x1]
      %v656 = vsel %vm633, %v370, %v655
      %657 = vst [vmem:[%s623 + $0x2c] sm:$0x1] %v656
      %v658 = vld [vmem:[%s623 + $0x30] sm:$0xf]
      %v659 = vsel %vm626, %v377, %v658
      %660 = vst [vmem:[%s623 + $0x30] sm:$0xf] %v659
      %661 = vst.msk [vmem:[%s623 + $0x34] sm:$0xf] %vm630, %v386
      %v662 = vld [vmem:[%s623 + $0x38] sm:$0x1]
      %v663 = vsel %vm633, %v387, %v662
      %664 = vst [vmem:[%s623 + $0x38] sm:$0x1] %v663
      %v665 = vld [vmem:[%s623 + $0x3c] sm:$0xf]
      %v666 = vsel %vm626, %v394, %v665
      %667 = vst [vmem:[%s623 + $0x3c] sm:$0xf] %v666
      %668 = vst.msk [vmem:[%s623 + $0x40] sm:$0xf] %vm630, %v403
      %v669 = vld [vmem:[%s623 + $0x44] sm:$0x1]
      %v670 = vsel %vm633, %v404, %v669
      %671 = vst [vmem:[%s623 + $0x44] sm:$0x1] %v670
      %v672 = vld [vmem:[%s623 + $0x48] sm:$0xf]
      %v673 = vsel %vm626, %v411, %v672
      %674 = vst [vmem:[%s623 + $0x48] sm:$0xf] %v673
      %675 = vst.msk [vmem:[%s623 + $0x4c] sm:$0xf] %vm630, %v420
      %v676 = vld [vmem:[%s623 + $0x50] sm:$0x1]
      %v677 = vsel %vm633, %v421, %v676
      %678 = vst [vmem:[%s623 + $0x50] sm:$0x1] %v677
      %v679 = vld [vmem:[%s623 + $0x54] sm:$0xf]
      %v680 = vsel %vm626, %v428, %v679
      %681 = vst [vmem:[%s623 + $0x54] sm:$0xf] %v680
      %682 = vst.msk [vmem:[%s623 + $0x58] sm:$0xf] %vm630, %v437
      %v683 = vld [vmem:[%s623 + $0x5c] sm:$0x1]
      %v684 = vsel %vm633, %v438, %v683
      %685 = vst [vmem:[%s623 + $0x5c] sm:$0x1] %v684
      %v686 = vld [vmem:[%s623 + $0x60] sm:$0xf]
      %v687 = vsel %vm626, %v445, %v686
      %688 = vst [vmem:[%s623 + $0x60] sm:$0xf] %v687
      %689 = vst.msk [vmem:[%s623 + $0x64] sm:$0xf] %vm630, %v454
      %v690 = vld [vmem:[%s623 + $0x68] sm:$0x1]
      %v691 = vsel %vm633, %v455, %v690
      %692 = vst [vmem:[%s623 + $0x68] sm:$0x1] %v691
      %v693 = vld [vmem:[%s623 + $0x6c] sm:$0xf]
      %v694 = vsel %vm626, %v462, %v693
      %695 = vst [vmem:[%s623 + $0x6c] sm:$0xf] %v694
      %696 = vst.msk [vmem:[%s623 + $0x70] sm:$0xf] %vm630, %v471
      %v697 = vld [vmem:[%s623 + $0x74] sm:$0x1]
      %v698 = vsel %vm633, %v472, %v697
      %699 = vst [vmem:[%s623 + $0x74] sm:$0x1] %v698
      %v700 = vld [vmem:[%s623 + $0x78] sm:$0xf]
      %v701 = vsel %vm626, %v479, %v700
      %702 = vst [vmem:[%s623 + $0x78] sm:$0xf] %v701
      %703 = vst.msk [vmem:[%s623 + $0x7c] sm:$0xf] %vm630, %v488
      %v704 = vld [vmem:[%s623 + $0x80] sm:$0x1]
      %v705 = vsel %vm633, %v489, %v704
      %706 = vst [vmem:[%s623 + $0x80] sm:$0x1] %v705
      %v707 = vld [vmem:[%s623 + $0x84] sm:$0xf]
      %v708 = vsel %vm626, %v496, %v707
      %709 = vst [vmem:[%s623 + $0x84] sm:$0xf] %v708
      %710 = vst.msk [vmem:[%s623 + $0x88] sm:$0xf] %vm630, %v505
      %v711 = vld [vmem:[%s623 + $0x8c] sm:$0x1]
      %v712 = vsel %vm633, %v506, %v711
      %713 = vst [vmem:[%s623 + $0x8c] sm:$0x1] %v712
      %v714 = vld [vmem:[%s623 + $0x90] sm:$0xf]
      %v715 = vsel %vm626, %v513, %v714
      %716 = vst [vmem:[%s623 + $0x90] sm:$0xf] %v715
      %717 = vst.msk [vmem:[%s623 + $0x94] sm:$0xf] %vm630, %v522
      %v718 = vld [vmem:[%s623 + $0x98] sm:$0x1]
      %v719 = vsel %vm633, %v523, %v718
      %720 = vst [vmem:[%s623 + $0x98] sm:$0x1] %v719
      %v721 = vld [vmem:[%s623 + $0x9c] sm:$0xf]
      %v722 = vsel %vm626, %v530, %v721
      %723 = vst [vmem:[%s623 + $0x9c] sm:$0xf] %v722
      %724 = vst.msk [vmem:[%s623 + $0xa0] sm:$0xf] %vm630, %v539
      %v725 = vld [vmem:[%s623 + $0xa4] sm:$0x1]
      %v726 = vsel %vm633, %v540, %v725
      %727 = vst [vmem:[%s623 + $0xa4] sm:$0x1] %v726
      %v728 = vld [vmem:[%s623 + $0xa8] sm:$0xf]
      %v729 = vsel %vm626, %v547, %v728
      %730 = vst [vmem:[%s623 + $0xa8] sm:$0xf] %v729
      %731 = vst.msk [vmem:[%s623 + $0xac] sm:$0xf] %vm630, %v556
      %v732 = vld [vmem:[%s623 + $0xb0] sm:$0x1]
      %v733 = vsel %vm633, %v557, %v732
      %734 = vst [vmem:[%s623 + $0xb0] sm:$0x1] %v733
      %v735 = vld [vmem:[%s623 + $0xb4] sm:$0xf]
      %v736 = vsel %vm626, %v564, %v735
      %737 = vst [vmem:[%s623 + $0xb4] sm:$0xf] %v736
      %738 = vst.msk [vmem:[%s623 + $0xb8] sm:$0xf] %vm630, %v573
      %v739 = vld [vmem:[%s623 + $0xbc] sm:$0x1]
      %v740 = vsel %vm633, %v574, %v739
      %741 = vst [vmem:[%s623 + $0xbc] sm:$0x1] %v740
      %s742 = scalar_lea.vmem [#allocation2], 24
      %v743 = vld [vmem:[%s742] sm:$0xf]
      %v744 = vld [vmem:[%s742 + $0x4] sm:$0xf]
      %v745 = vld [vmem:[%s742 + $0x8] sm:$0x1]
      %v746 = vld [vmem:[#allocation2] sm:$0xf]
      %v747 = vsel %vm626, %v743, %v746
      %748 = vst [vmem:[#allocation2] sm:$0xf] %v747
      %749 = vst.msk [vmem:[#allocation2 + $0x4] sm:$0xf] %vm630, %v744
      %v750 = vld [vmem:[#allocation2 + $0x8] sm:$0x1]
      %v751 = vsel %vm633, %v745, %v750
      %752 = vst [vmem:[#allocation2 + $0x8] sm:$0x1] %v751
      %s753 = scalar_lea.vmem [#allocation2], 180
      %v754 = vld [vmem:[%s753] sm:$0xf]
      %v755 = vld [vmem:[%s753 + $0x4] sm:$0xf]
      %v756 = vld [vmem:[%s753 + $0x8] sm:$0x1]
      %s757 = scalar_lea.vmem [#allocation2], 204
      %v758 = vld [vmem:[%s757] sm:$0xf]
      %v759 = vsel %vm626, %v754, %v758
      %760 = vst [vmem:[%s757] sm:$0xf] %v759
      %761 = vst.msk [vmem:[%s757 + $0x4] sm:$0xf] %vm630, %v755
      %v762 = vld [vmem:[%s757 + $0x8] sm:$0x1]
      %v763 = vsel %vm633, %v756, %v762
      %764 = vst [vmem:[%s757 + $0x8] sm:$0x1] %v763
      %v765 = vld [vmem:[#allocation2] sm:$0x2]
      %v766 = vld [vmem:[#allocation2 + $0xc] sm:$0x2]
      %v767 = vld [vmem:[#allocation2 + $0x18] sm:$0x2]
      %v768 = vld [vmem:[#allocation2 + $0x24] sm:$0x2]
      %v769 = vld [vmem:[#allocation2 + $0x30] sm:$0x2]
      %v770 = vld [vmem:[#allocation2 + $0x3c] sm:$0x2]
      %v771 = vld [vmem:[#allocation2 + $0x48] sm:$0x2]
      %v772 = vld [vmem:[#allocation2 + $0x54] sm:$0x2]
      %v773 = vld [vmem:[#allocation2 + $0x60] sm:$0x2]
      %v774 = vld [vmem:[#allocation2 + $0x6c] sm:$0x2]
      %v775 = vld [vmem:[#allocation2 + $0x78] sm:$0x2]
      %v776 = vld [vmem:[#allocation2 + $0x84] sm:$0x2]
      %v777 = vld [vmem:[#allocation2 + $0x90] sm:$0x2]
      %v778 = vld [vmem:[#allocation2 + $0x9c] sm:$0x2]
      %v779 = vld [vmem:[#allocation2 + $0xa8] sm:$0x2]
      %v780 = vld [vmem:[#allocation2 + $0xb4] sm:$0x2]
      %v781 = vld [vmem:[#allocation2 + $0xc0] sm:$0x2]
      %v782 = vld [vmem:[#allocation2 + $0xcc] sm:$0x2]
      %v801 = vrot.slane %v765, 5
      %v802 = vrot.slane %v801, 4
      %v803 = vrot.slane %v766, 5
      %v804 = vrot.slane %v803, 4
      %v805 = vrot.slane %v767, 5
      %v806 = vrot.slane %v805, 4
      %v807 = vrot.slane %v768, 5
      %v808 = vrot.slane %v807, 4
      %v809 = vrot.slane %v769, 5
      %v810 = vrot.slane %v809, 4
      %v811 = vrot.slane %v770, 5
      %v812 = vrot.slane %v811, 4
      %v813 = vrot.slane %v771, 5
      %v814 = vrot.slane %v813, 4
      %v815 = vrot.slane %v772, 5
      %v816 = vrot.slane %v815, 4
      %v817 = vrot.slane %v773, 5
      %v818 = vrot.slane %v817, 4
      %v819 = vrot.slane %v774, 5
      %v820 = vrot.slane %v819, 4
      %v821 = vrot.slane %v775, 5
      %v822 = vrot.slane %v821, 4
      %v823 = vrot.slane %v776, 5
      %v824 = vrot.slane %v823, 4
      %v825 = vrot.slane %v777, 5
      %v826 = vrot.slane %v825, 4
      %v827 = vrot.slane %v778, 5
      %v828 = vrot.slane %v827, 4
      %v829 = vrot.slane %v779, 5
      %v830 = vrot.slane %v829, 4
      %v831 = vrot.slane %v780, 5
      %v832 = vrot.slane %v831, 4
      %v833 = vrot.slane %v781, 5
      %v834 = vrot.slane %v833, 4
      %v835 = vrot.slane %v782, 5
      %v836 = vrot.slane %v835, 4
      %v855 = vld [vmem:[#allocation2] sm:$0x1]
      %v856 = vsel %vm633, %v802, %v855
      %857 = vst [vmem:[#allocation2] sm:$0x1] %v856
      %v858 = vld [vmem:[#allocation2 + $0xc] sm:$0x1]
      %v859 = vsel %vm633, %v804, %v858
      %860 = vst [vmem:[#allocation2 + $0xc] sm:$0x1] %v859
      %v861 = vld [vmem:[#allocation2 + $0x18] sm:$0x1]
      %v862 = vsel %vm633, %v806, %v861
      %863 = vst [vmem:[#allocation2 + $0x18] sm:$0x1] %v862
      %v864 = vld [vmem:[#allocation2 + $0x24] sm:$0x1]
      %v865 = vsel %vm633, %v808, %v864
      %866 = vst [vmem:[#allocation2 + $0x24] sm:$0x1] %v865
      %v867 = vld [vmem:[#allocation2 + $0x30] sm:$0x1]
      %v868 = vsel %vm633, %v810, %v867
      %869 = vst [vmem:[#allocation2 + $0x30] sm:$0x1] %v868
      %v870 = vld [vmem:[#allocation2 + $0x3c] sm:$0x1]
      %v871 = vsel %vm633, %v812, %v870
      %872 = vst [vmem:[#allocation2 + $0x3c] sm:$0x1] %v871
      %v873 = vld [vmem:[#allocation2 + $0x48] sm:$0x1]
      %v874 = vsel %vm633, %v814, %v873
      %875 = vst [vmem:[#allocation2 + $0x48] sm:$0x1] %v874
      %v876 = vld [vmem:[#allocation2 + $0x54] sm:$0x1]
      %v877 = vsel %vm633, %v816, %v876
      %878 = vst [vmem:[#allocation2 + $0x54] sm:$0x1] %v877
      %v879 = vld [vmem:[#allocation2 + $0x60] sm:$0x1]
      %v880 = vsel %vm633, %v818, %v879
      %881 = vst [vmem:[#allocation2 + $0x60] sm:$0x1] %v880
      %v882 = vld [vmem:[#allocation2 + $0x6c] sm:$0x1]
      %v883 = vsel %vm633, %v820, %v882
      %884 = vst [vmem:[#allocation2 + $0x6c] sm:$0x1] %v883
      %v885 = vld [vmem:[#allocation2 + $0x78] sm:$0x1]
      %v886 = vsel %vm633, %v822, %v885
      %887 = vst [vmem:[#allocation2 + $0x78] sm:$0x1] %v886
      %v888 = vld [vmem:[#allocation2 + $0x84] sm:$0x1]
      %v889 = vsel %vm633, %v824, %v888
      %890 = vst [vmem:[#allocation2 + $0x84] sm:$0x1] %v889
      %v891 = vld [vmem:[#allocation2 + $0x90] sm:$0x1]
      %v892 = vsel %vm633, %v826, %v891
      %893 = vst [vmem:[#allocation2 + $0x90] sm:$0x1] %v892
      %v894 = vld [vmem:[#allocation2 + $0x9c] sm:$0x1]
      %v895 = vsel %vm633, %v828, %v894
      %896 = vst [vmem:[#allocation2 + $0x9c] sm:$0x1] %v895
      %v897 = vld [vmem:[#allocation2 + $0xa8] sm:$0x1]
      %v898 = vsel %vm633, %v830, %v897
      %899 = vst [vmem:[#allocation2 + $0xa8] sm:$0x1] %v898
      %v900 = vld [vmem:[#allocation2 + $0xb4] sm:$0x1]
      %v901 = vsel %vm633, %v832, %v900
      %902 = vst [vmem:[#allocation2 + $0xb4] sm:$0x1] %v901
      %v903 = vld [vmem:[#allocation2 + $0xc0] sm:$0x1]
      %v904 = vsel %vm633, %v834, %v903
      %905 = vst [vmem:[#allocation2 + $0xc0] sm:$0x1] %v904
      %v906 = vld [vmem:[#allocation2 + $0xcc] sm:$0x1]
      %v907 = vsel %vm633, %v836, %v906
      %908 = vst [vmem:[#allocation2 + $0xcc] sm:$0x1] %v907
      %v909 = vld [vmem:[#allocation2 + $0x4] sm:$0x8]
      %v910 = vld [vmem:[#allocation2 + $0x10] sm:$0x8]
      %v911 = vld [vmem:[#allocation2 + $0x1c] sm:$0x8]
      %v912 = vld [vmem:[#allocation2 + $0x28] sm:$0x8]
      %v913 = vld [vmem:[#allocation2 + $0x34] sm:$0x8]
      %v914 = vld [vmem:[#allocation2 + $0x40] sm:$0x8]
      %v915 = vld [vmem:[#allocation2 + $0x4c] sm:$0x8]
      %v916 = vld [vmem:[#allocation2 + $0x58] sm:$0x8]
      %v917 = vld [vmem:[#allocation2 + $0x64] sm:$0x8]
      %v918 = vld [vmem:[#allocation2 + $0x70] sm:$0x8]
      %v919 = vld [vmem:[#allocation2 + $0x7c] sm:$0x8]
      %v920 = vld [vmem:[#allocation2 + $0x88] sm:$0x8]
      %v921 = vld [vmem:[#allocation2 + $0x94] sm:$0x8]
      %v922 = vld [vmem:[#allocation2 + $0xa0] sm:$0x8]
      %v923 = vld [vmem:[#allocation2 + $0xac] sm:$0x8]
      %v924 = vld [vmem:[#allocation2 + $0xb8] sm:$0x8]
      %v925 = vld [vmem:[#allocation2 + $0xc4] sm:$0x8]
      %v926 = vld [vmem:[#allocation2 + $0xd0] sm:$0x8]
      %v945 = vrot.slane %v909, 7
      %v946 = vrot.slane %v945, 4
      %v947 = vrot.slane %v910, 7
      %v948 = vrot.slane %v947, 4
      %v949 = vrot.slane %v911, 7
      %v950 = vrot.slane %v949, 4
      %v951 = vrot.slane %v912, 7
      %v952 = vrot.slane %v951, 4
      %v953 = vrot.slane %v913, 7
      %v954 = vrot.slane %v953, 4
      %v955 = vrot.slane %v914, 7
      %v956 = vrot.slane %v955, 4
      %v957 = vrot.slane %v915, 7
      %v958 = vrot.slane %v957, 4
      %v959 = vrot.slane %v916, 7
      %v960 = vrot.slane %v959, 4
      %v961 = vrot.slane %v917, 7
      %v962 = vrot.slane %v961, 4
      %v963 = vrot.slane %v918, 7
      %v964 = vrot.slane %v963, 4
      %v965 = vrot.slane %v919, 7
      %v966 = vrot.slane %v965, 4
      %v967 = vrot.slane %v920, 7
      %v968 = vrot.slane %v967, 4
      %v969 = vrot.slane %v921, 7
      %v970 = vrot.slane %v969, 4
      %v971 = vrot.slane %v922, 7
      %v972 = vrot.slane %v971, 4
      %v973 = vrot.slane %v923, 7
      %v974 = vrot.slane %v973, 4
      %v975 = vrot.slane %v924, 7
      %v976 = vrot.slane %v975, 4
      %v977 = vrot.slane %v925, 7
      %v978 = vrot.slane %v977, 4
      %v979 = vrot.slane %v926, 7
      %v980 = vrot.slane %v979, 4
      %vm999 = vmand %vm632, %vm625
      %v1000 = vld [vmem:[#allocation2 + $0x8] sm:$0x1]
      %v1001 = vsel %vm999, %v946, %v1000
      %1002 = vst [vmem:[#allocation2 + $0x8] sm:$0x1] %v1001
      %v1003 = vld [vmem:[#allocation2 + $0x14] sm:$0x1]
      %v1004 = vsel %vm999, %v948, %v1003
      %1005 = vst [vmem:[#allocation2 + $0x14] sm:$0x1] %v1004
      %v1006 = vld [vmem:[#allocation2 + $0x20] sm:$0x1]
      %v1007 = vsel %vm999, %v950, %v1006
      %1008 = vst [vmem:[#allocation2 + $0x20] sm:$0x1] %v1007
      %v1009 = vld [vmem:[#allocation2 + $0x2c] sm:$0x1]
      %v1010 = vsel %vm999, %v952, %v1009
      %1011 = vst [vmem:[#allocation2 + $0x2c] sm:$0x1] %v1010
      %v1012 = vld [vmem:[#allocation2 + $0x38] sm:$0x1]
      %v1013 = vsel %vm999, %v954, %v1012
      %1014 = vst [vmem:[#allocation2 + $0x38] sm:$0x1] %v1013
      %v1015 = vld [vmem:[#allocation2 + $0x44] sm:$0x1]
      %v1016 = vsel %vm999, %v956, %v1015
      %1017 = vst [vmem:[#allocation2 + $0x44] sm:$0x1] %v1016
      %v1018 = vld [vmem:[#allocation2 + $0x50] sm:$0x1]
      %v1019 = vsel %vm999, %v958, %v1018
      %1020 = vst [vmem:[#allocation2 + $0x50] sm:$0x1] %v1019
      %v1021 = vld [vmem:[#allocation2 + $0x5c] sm:$0x1]
      %v1022 = vsel %vm999, %v960, %v1021
      %1023 = vst [vmem:[#allocation2 + $0x5c] sm:$0x1] %v1022
      %v1024 = vld [vmem:[#allocation2 + $0x68] sm:$0x1]
      %v1025 = vsel %vm999, %v962, %v1024
      %1026 = vst [vmem:[#allocation2 + $0x68] sm:$0x1] %v1025
      %v1027 = vld [vmem:[#allocation2 + $0x74] sm:$0x1]
      %v1028 = vsel %vm999, %v964, %v1027
      %1029 = vst [vmem:[#allocation2 + $0x74] sm:$0x1] %v1028
      %v1030 = vld [vmem:[#allocation2 + $0x80] sm:$0x1]
      %v1031 = vsel %vm999, %v966, %v1030
      %1032 = vst [vmem:[#allocation2 + $0x80] sm:$0x1] %v1031
      %v1033 = vld [vmem:[#allocation2 + $0x8c] sm:$0x1]
      %v1034 = vsel %vm999, %v968, %v1033
      %1035 = vst [vmem:[#allocation2 + $0x8c] sm:$0x1] %v1034
      %v1036 = vld [vmem:[#allocation2 + $0x98] sm:$0x1]
      %v1037 = vsel %vm999, %v970, %v1036
      %1038 = vst [vmem:[#allocation2 + $0x98] sm:$0x1] %v1037
      %v1039 = vld [vmem:[#allocation2 + $0xa4] sm:$0x1]
      %v1040 = vsel %vm999, %v972, %v1039
      %1041 = vst [vmem:[#allocation2 + $0xa4] sm:$0x1] %v1040
      %v1042 = vld [vmem:[#allocation2 + $0xb0] sm:$0x1]
      %v1043 = vsel %vm999, %v974, %v1042
      %1044 = vst [vmem:[#allocation2 + $0xb0] sm:$0x1] %v1043
      %v1045 = vld [vmem:[#allocation2 + $0xbc] sm:$0x1]
      %v1046 = vsel %vm999, %v976, %v1045
      %1047 = vst [vmem:[#allocation2 + $0xbc] sm:$0x1] %v1046
      %v1048 = vld [vmem:[#allocation2 + $0xc8] sm:$0x1]
      %v1049 = vsel %vm999, %v978, %v1048
      %1050 = vst [vmem:[#allocation2 + $0xc8] sm:$0x1] %v1049
      %v1051 = vld [vmem:[#allocation2 + $0xd4] sm:$0x1]
      %v1052 = vsel %vm999, %v980, %v1051
      %1053 = vst [vmem:[#allocation2 + $0xd4] sm:$0x1] %v1052
      %v1054 = vld [vmem:[#allocation2] sm:$0xf]
      %v1055 = vld [vmem:[#allocation2 + $0x4] sm:$0xf]
      %v1056 = vld [vmem:[#allocation2 + $0xc] sm:$0xf]
      %v1057 = vld [vmem:[#allocation2 + $0x10] sm:$0xf]
      %v1058 = vld [vmem:[#allocation2 + $0x18] sm:$0xf]
      %v1059 = vld [vmem:[#allocation2 + $0x1c] sm:$0xf]
      %v1060 = vld [vmem:[#allocation2 + $0x24] sm:$0xf]
      %v1061 = vld [vmem:[#allocation2 + $0x28] sm:$0xf]
      %v1062 = vld [vmem:[#allocation2 + $0x30] sm:$0xf]
      %v1063 = vld [vmem:[#allocation2 + $0x34] sm:$0xf]
      %v1064 = vld [vmem:[#allocation2 + $0x3c] sm:$0xf]
      %v1065 = vld [vmem:[#allocation2 + $0x40] sm:$0xf]
      %v1066 = vld [vmem:[#allocation2 + $0x48] sm:$0xf]
      %v1067 = vld [vmem:[#allocation2 + $0x4c] sm:$0xf]
      %v1068 = vld [vmem:[#allocation2 + $0x54] sm:$0xf]
      %v1069 = vld [vmem:[#allocation2 + $0x58] sm:$0xf]
      %v1070 = vld [vmem:[#allocation2 + $0x60] sm:$0xf]
      %v1071 = vld [vmem:[#allocation2 + $0x64] sm:$0xf]
      %v1072 = vld [vmem:[#allocation2 + $0x6c] sm:$0xf]
      %v1073 = vld [vmem:[#allocation2 + $0x70] sm:$0xf]
      %v1074 = vld [vmem:[#allocation2 + $0x78] sm:$0xf]
      %v1075 = vld [vmem:[#allocation2 + $0x7c] sm:$0xf]
      %v1076 = vld [vmem:[#allocation2 + $0x84] sm:$0xf]
      %v1077 = vld [vmem:[#allocation2 + $0x88] sm:$0xf]
      %v1078 = vld [vmem:[#allocation2 + $0x90] sm:$0xf]
      %v1079 = vld [vmem:[#allocation2 + $0x94] sm:$0xf]
      %v1080 = vld [vmem:[#allocation2 + $0x9c] sm:$0xf]
      %v1081 = vld [vmem:[#allocation2 + $0xa0] sm:$0xf]
      %v1082 = vld [vmem:[#allocation2 + $0xa8] sm:$0xf]
      %v1083 = vld [vmem:[#allocation2 + $0xac] sm:$0xf]
      %v1084 = vld [vmem:[#allocation2 + $0xb4] sm:$0xf]
      %v1085 = vld [vmem:[#allocation2 + $0xb8] sm:$0xf]
      %v1086 = vld [vmem:[%s1] sm:$0x3]
      %v1087 = vld [vmem:[#allocation2 + $0x8] sm:$0x1]
      %v1088 = vld [vmem:[#allocation2 + $0x14] sm:$0x1]
      %v1089 = vld [vmem:[#allocation2 + $0x20] sm:$0x1]
      %v1090 = vld [vmem:[#allocation2 + $0x2c] sm:$0x1]
      %v1091 = vld [vmem:[#allocation2 + $0x38] sm:$0x1]
      %v1092 = vld [vmem:[#allocation2 + $0x44] sm:$0x1]
      %v1093 = vld [vmem:[#allocation2 + $0x50] sm:$0x1]
      %v1094 = vld [vmem:[#allocation2 + $0x5c] sm:$0x1]
      %v1095 = vld [vmem:[#allocation2 + $0x68] sm:$0x1]
      %v1096 = vld [vmem:[#allocation2 + $0x74] sm:$0x1]
      %v1097 = vld [vmem:[#allocation2 + $0x80] sm:$0x1]
      %v1098 = vld [vmem:[#allocation2 + $0x8c] sm:$0x1]
      %v1099 = vld [vmem:[#allocation2 + $0x98] sm:$0x1]
      %v1100 = vld [vmem:[#allocation2 + $0xa4] sm:$0x1]
      %v1101 = vld [vmem:[#allocation2 + $0xb0] sm:$0x1]
      %v1102 = vld [vmem:[#allocation2 + $0xbc] sm:$0x1]
      %vm1103 = vsmask.f32 3328
      %vm1104 = vsmask.f32 7440
      %vm1105 = vmor %vm1103, %vm1104
      %v1107 = vshrl.u32 %v1054, 16
      %v1109 = vrot.slane %v1107, 4
      %v1110 = vshll.u32 %v1054, 16
      %v1112 = vrot.slane %v1110, 5
      %v1113 = vor.u32 %v1109, %v1112
      %v1114 = vrot.slane %v1113, 4
      %v1116 = vshll.u32 %v1055, 16
      %v1118 = vrot.slane %v1116, 5
      %v1119 = vsel %vm1105, %v1114, %v1118
      %v1120 = vshrl.u32 %v1055, 16
      %v1122 = vrot.slane %v1120, 4
      %v1123 = vor.u32 %v1122, %v1118
      %v1124 = vrot.slane %v1123, 4
      %v1126 = vshll.u32 %v1087, 16
      %v1128 = vrot.slane %v1126, 5
      %v1129 = vsel %vm1105, %v1124, %v1128
      %v1131 = vshrl.u32 %v1056, 16
      %v1133 = vrot.slane %v1131, 4
      %v1134 = vshll.u32 %v1056, 16
      %v1136 = vrot.slane %v1134, 5
      %v1137 = vor.u32 %v1133, %v1136
      %v1138 = vrot.slane %v1137, 4
      %v1140 = vshll.u32 %v1057, 16
      %v1142 = vrot.slane %v1140, 5
      %v1143 = vsel %vm1105, %v1138, %v1142
      %v1144 = vshrl.u32 %v1057, 16
      %v1146 = vrot.slane %v1144, 4
      %v1147 = vor.u32 %v1146, %v1142
      %v1148 = vrot.slane %v1147, 4
      %v1150 = vshll.u32 %v1088, 16
      %v1152 = vrot.slane %v1150, 5
      %v1153 = vsel %vm1105, %v1148, %v1152
      %v1155 = vshrl.u32 %v1058, 16
      %v1157 = vrot.slane %v1155, 4
      %v1158 = vshll.u32 %v1058, 16
      %v1160 = vrot.slane %v1158, 5
      %v1161 = vor.u32 %v1157, %v1160
      %v1162 = vrot.slane %v1161, 4
      %v1164 = vshll.u32 %v1059, 16
      %v1166 = vrot.slane %v1164, 5
      %v1167 = vsel %vm1105, %v1162, %v1166
      %v1168 = vshrl.u32 %v1059, 16
      %v1170 = vrot.slane %v1168, 4
      %v1171 = vor.u32 %v1170, %v1166
      %v1172 = vrot.slane %v1171, 4
      %v1174 = vshll.u32 %v1089, 16
      %v1176 = vrot.slane %v1174, 5
      %v1177 = vsel %vm1105, %v1172, %v1176
      %v1179 = vshrl.u32 %v1060, 16
      %v1181 = vrot.slane %v1179, 4
      %v1182 = vshll.u32 %v1060, 16
      %v1184 = vrot.slane %v1182, 5
      %v1185 = vor.u32 %v1181, %v1184
      %v1186 = vrot.slane %v1185, 4
      %v1188 = vshll.u32 %v1061, 16
      %v1190 = vrot.slane %v1188, 5
      %v1191 = vsel %vm1105, %v1186, %v1190
      %v1192 = vshrl.u32 %v1061, 16
      %v1194 = vrot.slane %v1192, 4
      %v1195 = vor.u32 %v1194, %v1190
      %v1196 = vrot.slane %v1195, 4
      %v1198 = vshll.u32 %v1090, 16
      %v1200 = vrot.slane %v1198, 5
      %v1201 = vsel %vm1105, %v1196, %v1200
      %v1203 = vshrl.u32 %v1062, 16
      %v1205 = vrot.slane %v1203, 4
      %v1206 = vshll.u32 %v1062, 16
      %v1208 = vrot.slane %v1206, 5
      %v1209 = vor.u32 %v1205, %v1208
      %v1210 = vrot.slane %v1209, 4
      %v1212 = vshll.u32 %v1063, 16
      %v1214 = vrot.slane %v1212, 5
      %v1215 = vsel %vm1105, %v1210, %v1214
      %v1216 = vshrl.u32 %v1063, 16
      %v1218 = vrot.slane %v1216, 4
      %v1219 = vor.u32 %v1218, %v1214
      %v1220 = vrot.slane %v1219, 4
      %v1222 = vshll.u32 %v1091, 16
      %v1224 = vrot.slane %v1222, 5
      %v1225 = vsel %vm1105, %v1220, %v1224
      %v1227 = vshrl.u32 %v1064, 16
      %v1229 = vrot.slane %v1227, 4
      %v1230 = vshll.u32 %v1064, 16
      %v1232 = vrot.slane %v1230, 5
      %v1233 = vor.u32 %v1229, %v1232
      %v1234 = vrot.slane %v1233, 4
      %v1236 = vshll.u32 %v1065, 16
      %v1238 = vrot.slane %v1236, 5
      %v1239 = vsel %vm1105, %v1234, %v1238
      %v1240 = vshrl.u32 %v1065, 16
      %v1242 = vrot.slane %v1240, 4
      %v1243 = vor.u32 %v1242, %v1238
      %v1244 = vrot.slane %v1243, 4
      %v1246 = vshll.u32 %v1092, 16
      %v1248 = vrot.slane %v1246, 5
      %v1249 = vsel %vm1105, %v1244, %v1248
      %v1251 = vshrl.u32 %v1066, 16
      %v1253 = vrot.slane %v1251, 4
      %v1254 = vshll.u32 %v1066, 16
      %v1256 = vrot.slane %v1254, 5
      %v1257 = vor.u32 %v1253, %v1256
      %v1258 = vrot.slane %v1257, 4
      %v1260 = vshll.u32 %v1067, 16
      %v1262 = vrot.slane %v1260, 5
      %v1263 = vsel %vm1105, %v1258, %v1262
      %v1264 = vshrl.u32 %v1067, 16
      %v1266 = vrot.slane %v1264, 4
      %v1267 = vor.u32 %v1266, %v1262
      %v1268 = vrot.slane %v1267, 4
      %v1270 = vshll.u32 %v1093, 16
      %v1272 = vrot.slane %v1270, 5
      %v1273 = vsel %vm1105, %v1268, %v1272
      %v1275 = vshrl.u32 %v1068, 16
      %v1277 = vrot.slane %v1275, 4
      %v1278 = vshll.u32 %v1068, 16
      %v1280 = vrot.slane %v1278, 5
      %v1281 = vor.u32 %v1277, %v1280
      %v1282 = vrot.slane %v1281, 4
      %v1284 = vshll.u32 %v1069, 16
      %v1286 = vrot.slane %v1284, 5
      %v1287 = vsel %vm1105, %v1282, %v1286
      %v1288 = vshrl.u32 %v1069, 16
      %v1290 = vrot.slane %v1288, 4
      %v1291 = vor.u32 %v1290, %v1286
      %v1292 = vrot.slane %v1291, 4
      %v1294 = vshll.u32 %v1094, 16
      %v1296 = vrot.slane %v1294, 5
      %v1297 = vsel %vm1105, %v1292, %v1296
      %v1299 = vshrl.u32 %v1070, 16
      %v1301 = vrot.slane %v1299, 4
      %v1302 = vshll.u32 %v1070, 16
      %v1304 = vrot.slane %v1302, 5
      %v1305 = vor.u32 %v1301, %v1304
      %v1306 = vrot.slane %v1305, 4
      %v1308 = vshll.u32 %v1071, 16
      %v1310 = vrot.slane %v1308, 5
      %v1311 = vsel %vm1105, %v1306, %v1310
      %v1312 = vshrl.u32 %v1071, 16
      %v1314 = vrot.slane %v1312, 4
      %v1315 = vor.u32 %v1314, %v1310
      %v1316 = vrot.slane %v1315, 4
      %v1318 = vshll.u32 %v1095, 16
      %v1320 = vrot.slane %v1318, 5
      %v1321 = vsel %vm1105, %v1316, %v1320
      %v1323 = vshrl.u32 %v1072, 16
      %v1325 = vrot.slane %v1323, 4
      %v1326 = vshll.u32 %v1072, 16
      %v1328 = vrot.slane %v1326, 5
      %v1329 = vor.u32 %v1325, %v1328
      %v1330 = vrot.slane %v1329, 4
      %v1332 = vshll.u32 %v1073, 16
      %v1334 = vrot.slane %v1332, 5
      %v1335 = vsel %vm1105, %v1330, %v1334
      %v1336 = vshrl.u32 %v1073, 16
      %v1338 = vrot.slane %v1336, 4
      %v1339 = vor.u32 %v1338, %v1334
      %v1340 = vrot.slane %v1339, 4
      %v1342 = vshll.u32 %v1096, 16
      %v1344 = vrot.slane %v1342, 5
      %v1345 = vsel %vm1105, %v1340, %v1344
      %v1347 = vshrl.u32 %v1074, 16
      %v1349 = vrot.slane %v1347, 4
      %v1350 = vshll.u32 %v1074, 16
      %v1352 = vrot.slane %v1350, 5
      %v1353 = vor.u32 %v1349, %v1352
      %v1354 = vrot.slane %v1353, 4
      %v1356 = vshll.u32 %v1075, 16
      %v1358 = vrot.slane %v1356, 5
      %v1359 = vsel %vm1105, %v1354, %v1358
      %v1360 = vshrl.u32 %v1075, 16
      %v1362 = vrot.slane %v1360, 4
      %v1363 = vor.u32 %v1362, %v1358
      %v1364 = vrot.slane %v1363, 4
      %v1366 = vshll.u32 %v1097, 16
      %v1368 = vrot.slane %v1366, 5
      %v1369 = vsel %vm1105, %v1364, %v1368
      %v1371 = vshrl.u32 %v1076, 16
      %v1373 = vrot.slane %v1371, 4
      %v1374 = vshll.u32 %v1076, 16
      %v1376 = vrot.slane %v1374, 5
      %v1377 = vor.u32 %v1373, %v1376
      %v1378 = vrot.slane %v1377, 4
      %v1380 = vshll.u32 %v1077, 16
      %v1382 = vrot.slane %v1380, 5
      %v1383 = vsel %vm1105, %v1378, %v1382
      %v1384 = vshrl.u32 %v1077, 16
      %v1386 = vrot.slane %v1384, 4
      %v1387 = vor.u32 %v1386, %v1382
      %v1388 = vrot.slane %v1387, 4
      %v1390 = vshll.u32 %v1098, 16
      %v1392 = vrot.slane %v1390, 5
      %v1393 = vsel %vm1105, %v1388, %v1392
      %v1395 = vshrl.u32 %v1078, 16
      %v1397 = vrot.slane %v1395, 4
      %v1398 = vshll.u32 %v1078, 16
      %v1400 = vrot.slane %v1398, 5
      %v1401 = vor.u32 %v1397, %v1400
      %v1402 = vrot.slane %v1401, 4
      %v1404 = vshll.u32 %v1079, 16
      %v1406 = vrot.slane %v1404, 5
      %v1407 = vsel %vm1105, %v1402, %v1406
      %v1408 = vshrl.u32 %v1079, 16
      %v1410 = vrot.slane %v1408, 4
      %v1411 = vor.u32 %v1410, %v1406
      %v1412 = vrot.slane %v1411, 4
      %v1414 = vshll.u32 %v1099, 16
      %v1416 = vrot.slane %v1414, 5
      %v1417 = vsel %vm1105, %v1412, %v1416
      %v1419 = vshrl.u32 %v1080, 16
      %v1421 = vrot.slane %v1419, 4
      %v1422 = vshll.u32 %v1080, 16
      %v1424 = vrot.slane %v1422, 5
      %v1425 = vor.u32 %v1421, %v1424
      %v1426 = vrot.slane %v1425, 4
      %v1428 = vshll.u32 %v1081, 16
      %v1430 = vrot.slane %v1428, 5
      %v1431 = vsel %vm1105, %v1426, %v1430
      %v1432 = vshrl.u32 %v1081, 16
      %v1434 = vrot.slane %v1432, 4
      %v1435 = vor.u32 %v1434, %v1430
      %v1436 = vrot.slane %v1435, 4
      %v1438 = vshll.u32 %v1100, 16
      %v1440 = vrot.slane %v1438, 5
      %v1441 = vsel %vm1105, %v1436, %v1440
      %v1443 = vshrl.u32 %v1082, 16
      %v1445 = vrot.slane %v1443, 4
      %v1446 = vshll.u32 %v1082, 16
      %v1448 = vrot.slane %v1446, 5
      %v1449 = vor.u32 %v1445, %v1448
      %v1450 = vrot.slane %v1449, 4
      %v1452 = vshll.u32 %v1083, 16
      %v1454 = vrot.slane %v1452, 5
      %v1455 = vsel %vm1105, %v1450, %v1454
      %v1456 = vshrl.u32 %v1083, 16
      %v1458 = vrot.slane %v1456, 4
      %v1459 = vor.u32 %v1458, %v1454
      %v1460 = vrot.slane %v1459, 4
      %v1462 = vshll.u32 %v1101, 16
      %v1464 = vrot.slane %v1462, 5
      %v1465 = vsel %vm1105, %v1460, %v1464
      %v1467 = vshrl.u32 %v1084, 16
      %v1469 = vrot.slane %v1467, 4
      %v1470 = vshll.u32 %v1084, 16
      %v1472 = vrot.slane %v1470, 5
      %v1473 = vor.u32 %v1469, %v1472
      %v1474 = vrot.slane %v1473, 4
      %v1476 = vshll.u32 %v1085, 16
      %v1478 = vrot.slane %v1476, 5
      %v1479 = vsel %vm1105, %v1474, %v1478
      %v1480 = vshrl.u32 %v1085, 16
      %v1482 = vrot.slane %v1480, 4
      %v1483 = vor.u32 %v1482, %v1478
      %v1484 = vrot.slane %v1483, 4
      %v1486 = vshll.u32 %v1102, 16
      %v1488 = vrot.slane %v1486, 5
      %v1489 = vsel %vm1105, %v1484, %v1488
      %v1490 = vld [vmem:[%s1] sm:$0xc]
      %v1491 = vunpack.c.l.b16 %v1119
      %v1492 = vunpack.c.l.b16 %v1129
      %v1493 = vunpack.c.l.b16 %v1143
      %v1494 = vunpack.c.l.b16 %v1153
      %v1495 = vunpack.c.l.b16 %v1167
      %v1496 = vunpack.c.l.b16 %v1177
      %v1497 = vunpack.c.l.b16 %v1191
      %v1498 = vunpack.c.l.b16 %v1201
      %v1499 = vunpack.c.l.b16 %v1215
      %v1500 = vunpack.c.l.b16 %v1225
      %v1501 = vunpack.c.l.b16 %v1239
      %v1502 = vunpack.c.l.b16 %v1249
      %v1503 = vunpack.c.l.b16 %v1263
      %v1504 = vunpack.c.l.b16 %v1273
      %v1505 = vunpack.c.l.b16 %v1287
      %v1506 = vunpack.c.l.b16 %v1297
      %v1507 = vunpack.c.l.b16 %v1311
      %v1508 = vunpack.c.l.b16 %v1321
      %v1509 = vunpack.c.l.b16 %v1335
      %v1510 = vunpack.c.l.b16 %v1345
      %v1511 = vunpack.c.l.b16 %v1359
      %v1512 = vunpack.c.l.b16 %v1369
      %v1513 = vunpack.c.l.b16 %v1383
      %v1514 = vunpack.c.l.b16 %v1393
      %v1515 = vunpack.c.l.b16 %v1407
      %v1516 = vunpack.c.l.b16 %v1417
      %v1517 = vunpack.c.l.b16 %v1431
      %v1518 = vunpack.c.l.b16 %v1441
      %v1519 = vunpack.c.l.b16 %v1455
      %v1520 = vunpack.c.l.b16 %v1465
      %v1521 = vunpack.c.l.b16 %v1479
      %v1522 = vunpack.c.l.b16 %v1489
      %v1523 = vpack.c.b16 %v1492, %v1491
      %v1524 = vpack.c.b16 %v1494, %v1493
      %v1525 = vpack.c.b16 %v1496, %v1495
      %v1526 = vpack.c.b16 %v1498, %v1497
      %v1527 = vpack.c.b16 %v1500, %v1499
      %v1528 = vpack.c.b16 %v1502, %v1501
      %v1529 = vpack.c.b16 %v1504, %v1503
      %v1530 = vpack.c.b16 %v1506, %v1505
      %v1531 = vpack.c.b16 %v1508, %v1507
      %v1532 = vpack.c.b16 %v1510, %v1509
      %v1533 = vpack.c.b16 %v1512, %v1511
      %v1534 = vpack.c.b16 %v1514, %v1513
      %v1535 = vpack.c.b16 %v1516, %v1515
      %v1536 = vpack.c.b16 %v1518, %v1517
      %v1537 = vpack.c.b16 %v1520, %v1519
      %v1538 = vpack.c.b16 %v1522, %v1521
      %v1540 = vunpack.c.l.b16 %v1490
      %v1541 = vpack.c.b16 %v1540, %v1540
      %v1542 = vrot.slane %v1541, 2
      %vm1543 = vcmask 31744
      %v1545 = vsel %vm1543, %v1523, 0
      %v1548 = vsel %vm1543, %v1524, 0
      %v1551 = vsel %vm1543, %v1525, 0
      %v1554 = vsel %vm1543, %v1526, 0
      %v1557 = vsel %vm1543, %v1527, 0
      %v1560 = vsel %vm1543, %v1528, 0
      %v1563 = vsel %vm1543, %v1529, 0
      %v1566 = vsel %vm1543, %v1530, 0
      %v1569 = vsel %vm1543, %v1531, 0
      %v1572 = vsel %vm1543, %v1532, 0
      %v1575 = vsel %vm1543, %v1533, 0
      %v1578 = vsel %vm1543, %v1534, 0
      %v1581 = vsel %vm1543, %v1535, 0
      %v1584 = vsel %vm1543, %v1536, 0
      %v1587 = vsel %vm1543, %v1537, 0
      %v1590 = vsel %vm1543, %v1538, 0
      %vm1592 = vcmask 1041408
      %v1594 = vsel %vm1592, %v1542, 0
      %1596 = vmatprep.subr.bf16.mxu0 0
      %1597 = vmatpush1.bf16.msra.mxu0 %v1594
      %1598 = vmatprep.subr.bf16.mxu0 0
      %1599 = vmatpush1.bf16.msra.mxu0 0
      %1600 = vmatprep.subr.bf16.mxu0 0
      %1601 = vmatpush1.bf16.msra.mxu0 0
      %1602 = vmatprep.subr.bf16.mxu0 0
      %1603 = vmatpush1.bf16.msra.mxu0 0
      %1604 = vmatprep.subr.bf16.mxu0 0
      %1605 = vmatpush1.bf16.msra.mxu0 0
      %1606 = vmatprep.subr.bf16.mxu0 0
      %1607 = vmatpush1.bf16.msra.mxu0 0
      %1608 = vmatprep.subr.bf16.mxu0 0
      %1609 = vmatpush1.bf16.msra.mxu0 0
      %1610 = vmatprep.subr.bf16.mxu0 0
      %1611 = vmatpush1.bf16.msra.mxu0 0
      %1612 = vmatprep.subr.bf16.mxu0 0
      %1613 = vmatpush1.bf16.msra.mxu0 0
      %1614 = vmatprep.subr.bf16.mxu0 0
      %1615 = vmatpush1.bf16.msra.mxu0 0
      %1616 = vmatprep.subr.bf16.mxu0 0
      %1617 = vmatpush1.bf16.msra.mxu0 0
      %1618 = vmatprep.subr.bf16.mxu0 0
      %1619 = vmatpush1.bf16.msra.mxu0 0
      %1620 = vmatprep.subr.bf16.mxu0 0
      %1621 = vmatpush1.bf16.msra.mxu0 0
      %1622 = vmatprep.subr.bf16.mxu0 0
      %1623 = vmatpush1.bf16.msra.mxu0 0
      %1624 = vmatprep.subr.bf16.mxu0 0
      %1625 = vmatpush1.bf16.msra.mxu0 0
      %1626 = vmatprep.subr.bf16.mxu0 0
      %1627 = vmatpush1.bf16.msra.mxu0 0
      %1628 = vmatprep.mubr.bf16.mxu0 0
      %1629 = vmatmul.mubr.bf16.gmra.mrb[0].mxu0 %v1545
      %v1630 = vpop.f32.mrb[0].mxu0
      %v1631 = vadd.f32 0.0, %v1630
      %v1632 = vpop.f32.mrb[0].mxu0
      %v1633 = vpop.f32.mrb[0].mxu0
      %v1634 = vadd.f32 0.0, %v1633
      %v1635 = vpop.f32.mrb[0].mxu0
      %1636 = vmatprep.mubr.bf16.mxu0 0
      %1637 = vmatmul.mubr.bf16.gmra.mrb[0].mxu0 %v1548
      %v1638 = vpop.f32.mrb[0].mxu0
      %v1639 = vadd.f32 0.0, %v1638
      %v1640 = vpop.f32.mrb[0].mxu0
      %v1641 = vpop.f32.mrb[0].mxu0
      %v1642 = vadd.f32 0.0, %v1641
      %v1643 = vpop.f32.mrb[0].mxu0
      %1644 = vmatprep.mubr.bf16.mxu0 0
      %1645 = vmatmul.mubr.bf16.gmra.mrb[0].mxu0 %v1551
      %v1646 = vpop.f32.mrb[0].mxu0
      %v1647 = vadd.f32 0.0, %v1646
      %v1648 = vpop.f32.mrb[0].mxu0
      %v1649 = vpop.f32.mrb[0].mxu0
      %v1650 = vadd.f32 0.0, %v1649
      %v1651 = vpop.f32.mrb[0].mxu0
      %1652 = vmatprep.mubr.bf16.mxu0 0
      %1653 = vmatmul.mubr.bf16.gmra.mrb[0].mxu0 %v1554
      %v1654 = vpop.f32.mrb[0].mxu0
      %v1655 = vadd.f32 0.0, %v1654
      %v1656 = vpop.f32.mrb[0].mxu0
      %v1657 = vpop.f32.mrb[0].mxu0
      %v1658 = vadd.f32 0.0, %v1657
      %v1659 = vpop.f32.mrb[0].mxu0
      %1660 = vmatprep.mubr.bf16.mxu0 0
      %1661 = vmatmul.mubr.bf16.gmra.mrb[0].mxu0 %v1557
      %v1662 = vpop.f32.mrb[0].mxu0
      %v1663 = vadd.f32 0.0, %v1662
      %v1664 = vpop.f32.mrb[0].mxu0
      %v1665 = vpop.f32.mrb[0].mxu0
      %v1666 = vadd.f32 0.0, %v1665
      %v1667 = vpop.f32.mrb[0].mxu0
      %1668 = vmatprep.mubr.bf16.mxu0 0
      %1669 = vmatmul.mubr.bf16.gmra.mrb[0].mxu0 %v1560
      %v1670 = vpop.f32.mrb[0].mxu0
      %v1671 = vadd.f32 0.0, %v1670
      %v1672 = vpop.f32.mrb[0].mxu0
      %v1673 = vpop.f32.mrb[0].mxu0
      %v1674 = vadd.f32 0.0, %v1673
      %v1675 = vpop.f32.mrb[0].mxu0
      %1676 = vmatprep.mubr.bf16.mxu0 0
      %1677 = vmatmul.mubr.bf16.gmra.mrb[0].mxu0 %v1563
      %v1678 = vpop.f32.mrb[0].mxu0
      %v1679 = vadd.f32 0.0, %v1678
      %v1680 = vpop.f32.mrb[0].mxu0
      %v1681 = vpop.f32.mrb[0].mxu0
      %v1682 = vadd.f32 0.0, %v1681
      %v1683 = vpop.f32.mrb[0].mxu0
      %1684 = vmatprep.mubr.bf16.mxu0 0
      %1685 = vmatmul.mubr.bf16.gmra.mrb[0].mxu0 %v1566
      %v1686 = vpop.f32.mrb[0].mxu0
      %v1687 = vadd.f32 0.0, %v1686
      %v1688 = vpop.f32.mrb[0].mxu0
      %v1689 = vpop.f32.mrb[0].mxu0
      %v1690 = vadd.f32 0.0, %v1689
      %v1691 = vpop.f32.mrb[0].mxu0
      %1692 = vmatprep.mubr.bf16.mxu0 0
      %1693 = vmatmul.mubr.bf16.gmra.mrb[0].mxu0 %v1569
      %v1694 = vpop.f32.mrb[0].mxu0
      %v1695 = vadd.f32 0.0, %v1694
      %v1696 = vpop.f32.mrb[0].mxu0
      %v1697 = vpop.f32.mrb[0].mxu0
      %v1698 = vadd.f32 0.0, %v1697
      %v1699 = vpop.f32.mrb[0].mxu0
      %1700 = vmatprep.mubr.bf16.mxu0 0
      %1701 = vmatmul.mubr.bf16.gmra.mrb[0].mxu0 %v1572
      %v1702 = vpop.f32.mrb[0].mxu0
      %v1703 = vadd.f32 0.0, %v1702
      %v1704 = vpop.f32.mrb[0].mxu0
      %v1705 = vpop.f32.mrb[0].mxu0
      %v1706 = vadd.f32 0.0, %v1705
      %v1707 = vpop.f32.mrb[0].mxu0
      %1708 = vmatprep.mubr.bf16.mxu0 0
      %1709 = vmatmul.mubr.bf16.gmra.mrb[0].mxu0 %v1575
      %v1710 = vpop.f32.mrb[0].mxu0
      %v1711 = vadd.f32 0.0, %v1710
      %v1712 = vpop.f32.mrb[0].mxu0
      %v1713 = vpop.f32.mrb[0].mxu0
      %v1714 = vadd.f32 0.0, %v1713
      %v1715 = vpop.f32.mrb[0].mxu0
      %1716 = vmatprep.mubr.bf16.mxu0 0
      %1717 = vmatmul.mubr.bf16.gmra.mrb[0].mxu0 %v1578
      %v1718 = vpop.f32.mrb[0].mxu0
      %v1719 = vadd.f32 0.0, %v1718
      %v1720 = vpop.f32.mrb[0].mxu0
      %v1721 = vpop.f32.mrb[0].mxu0
      %v1722 = vadd.f32 0.0, %v1721
      %v1723 = vpop.f32.mrb[0].mxu0
      %1724 = vmatprep.mubr.bf16.mxu0 0
      %1725 = vmatmul.mubr.bf16.gmra.mrb[0].mxu0 %v1581
      %v1726 = vpop.f32.mrb[0].mxu0
      %v1727 = vadd.f32 0.0, %v1726
      %v1728 = vpop.f32.mrb[0].mxu0
      %v1729 = vpop.f32.mrb[0].mxu0
      %v1730 = vadd.f32 0.0, %v1729
      %v1731 = vpop.f32.mrb[0].mxu0
      %1732 = vmatprep.mubr.bf16.mxu0 0
      %1733 = vmatmul.mubr.bf16.gmra.mrb[0].mxu0 %v1584
      %v1734 = vpop.f32.mrb[0].mxu0
      %v1735 = vadd.f32 0.0, %v1734
      %v1736 = vpop.f32.mrb[0].mxu0
      %v1737 = vpop.f32.mrb[0].mxu0
      %v1738 = vadd.f32 0.0, %v1737
      %v1739 = vpop.f32.mrb[0].mxu0
      %1740 = vmatprep.mubr.bf16.mxu0 0
      %1741 = vmatmul.mubr.bf16.gmra.mrb[0].mxu0 %v1587
      %v1742 = vpop.f32.mrb[0].mxu0
      %v1743 = vadd.f32 0.0, %v1742
      %v1744 = vpop.f32.mrb[0].mxu0
      %v1745 = vpop.f32.mrb[0].mxu0
      %v1746 = vadd.f32 0.0, %v1745
      %v1747 = vpop.f32.mrb[0].mxu0
      %1748 = vmatprep.mubr.bf16.mxu0 0
      %1749 = vmatmul.mubr.bf16.gmra.mrb[0].mxu0 %v1590
      %v1750 = vpop.f32.mrb[0].mxu0
      %v1751 = vadd.f32 0.0, %v1750
      %v1752 = vpop.f32.mrb[0].mxu0
      %v1753 = vpop.f32.mrb[0].mxu0
      %v1754 = vadd.f32 0.0, %v1753
      %v1755 = vpop.f32.mrb[0].mxu0
      %1756 = vdwg.mxu0
      %v1789 = vunpack.c.l.b16 %v1054
      %v1790 = vunpack.c.l.b16 %v1055
      %v1791 = vunpack.c.l.b16 %v1056
      %v1792 = vunpack.c.l.b16 %v1057
      %v1793 = vunpack.c.l.b16 %v1058
      %v1794 = vunpack.c.l.b16 %v1059
      %v1795 = vunpack.c.l.b16 %v1060
      %v1796 = vunpack.c.l.b16 %v1061
      %v1797 = vunpack.c.l.b16 %v1062
      %v1798 = vunpack.c.l.b16 %v1063
      %v1799 = vunpack.c.l.b16 %v1064
      %v1800 = vunpack.c.l.b16 %v1065
      %v1801 = vunpack.c.l.b16 %v1066
      %v1802 = vunpack.c.l.b16 %v1067
      %v1803 = vunpack.c.l.b16 %v1068
      %v1804 = vunpack.c.l.b16 %v1069
      %v1805 = vunpack.c.l.b16 %v1070
      %v1806 = vunpack.c.l.b16 %v1071
      %v1807 = vunpack.c.l.b16 %v1072
      %v1808 = vunpack.c.l.b16 %v1073
      %v1809 = vunpack.c.l.b16 %v1074
      %v1810 = vunpack.c.l.b16 %v1075
      %v1811 = vunpack.c.l.b16 %v1076
      %v1812 = vunpack.c.l.b16 %v1077
      %v1813 = vunpack.c.l.b16 %v1078
      %v1814 = vunpack.c.l.b16 %v1079
      %v1815 = vunpack.c.l.b16 %v1080
      %v1816 = vunpack.c.l.b16 %v1081
      %v1817 = vunpack.c.l.b16 %v1082
      %v1818 = vunpack.c.l.b16 %v1083
      %v1819 = vunpack.c.l.b16 %v1084
      %v1820 = vunpack.c.l.b16 %v1085
      %v1821 = vpack.c.b16 %v1790, %v1789
      %v1822 = vpack.c.b16 %v1792, %v1791
      %v1823 = vpack.c.b16 %v1794, %v1793
      %v1824 = vpack.c.b16 %v1796, %v1795
      %v1825 = vpack.c.b16 %v1798, %v1797
      %v1826 = vpack.c.b16 %v1800, %v1799
      %v1827 = vpack.c.b16 %v1802, %v1801
      %v1828 = vpack.c.b16 %v1804, %v1803
      %v1829 = vpack.c.b16 %v1806, %v1805
      %v1830 = vpack.c.b16 %v1808, %v1807
      %v1831 = vpack.c.b16 %v1810, %v1809
      %v1832 = vpack.c.b16 %v1812, %v1811
      %v1833 = vpack.c.b16 %v1814, %v1813
      %v1834 = vpack.c.b16 %v1816, %v1815
      %v1835 = vpack.c.b16 %v1818, %v1817
      %v1836 = vpack.c.b16 %v1820, %v1819
      %v1838 = vsel %vm1543, %v1821, 0
      %v1841 = vsel %vm1543, %v1822, 0
      %v1844 = vsel %vm1543, %v1823, 0
      %v1847 = vsel %vm1543, %v1824, 0
      %v1850 = vsel %vm1543, %v1825, 0
      %v1853 = vsel %vm1543, %v1826, 0
      %v1856 = vsel %vm1543, %v1827, 0
      %v1859 = vsel %vm1543, %v1828, 0
      %v1862 = vsel %vm1543, %v1829, 0
      %v1865 = vsel %vm1543, %v1830, 0
      %v1868 = vsel %vm1543, %v1831, 0
      %v1871 = vsel %vm1543, %v1832, 0
      %v1874 = vsel %vm1543, %v1833, 0
      %v1877 = vsel %vm1543, %v1834, 0
      %v1880 = vsel %vm1543, %v1835, 0
      %v1883 = vsel %vm1543, %v1836, 0
      %v1886 = vsel %vm1592, %v1086, 0
      %1888 = vmatprep.subr.bf16.mxu0 0
      %1889 = vmatpush1.bf16.msra.mxu0 %v1886
      %1890 = vmatprep.subr.bf16.mxu0 0
      %1891 = vmatpush1.bf16.msra.mxu0 0
      %1892 = vmatprep.subr.bf16.mxu0 0
      %1893 = vmatpush1.bf16.msra.mxu0 0
      %1894 = vmatprep.subr.bf16.mxu0 0
      %1895 = vmatpush1.bf16.msra.mxu0 0
      %1896 = vmatprep.subr.bf16.mxu0 0
      %1897 = vmatpush1.bf16.msra.mxu0 0
      %1898 = vmatprep.subr.bf16.mxu0 0
      %1899 = vmatpush1.bf16.msra.mxu0 0
      %1900 = vmatprep.subr.bf16.mxu0 0
      %1901 = vmatpush1.bf16.msra.mxu0 0
      %1902 = vmatprep.subr.bf16.mxu0 0
      %1903 = vmatpush1.bf16.msra.mxu0 0
      %1904 = vmatprep.subr.bf16.mxu0 0
      %1905 = vmatpush1.bf16.msra.mxu0 0
      %1906 = vmatprep.subr.bf16.mxu0 0
      %1907 = vmatpush1.bf16.msra.mxu0 0
      %1908 = vmatprep.subr.bf16.mxu0 0
      %1909 = vmatpush1.bf16.msra.mxu0 0
      %1910 = vmatprep.subr.bf16.mxu0 0
      %1911 = vmatpush1.bf16.msra.mxu0 0
      %1912 = vmatprep.subr.bf16.mxu0 0
      %1913 = vmatpush1.bf16.msra.mxu0 0
      %1914 = vmatprep.subr.bf16.mxu0 0
      %1915 = vmatpush1.bf16.msra.mxu0 0
      %1916 = vmatprep.subr.bf16.mxu0 0
      %1917 = vmatpush1.bf16.msra.mxu0 0
      %1918 = vmatprep.subr.bf16.mxu0 0
      %1919 = vmatpush1.bf16.msra.mxu0 0
      %1920 = vmatprep.mubr.bf16.mxu0 0
      %1921 = vmatmul.mubr.bf16.gmra.mrb[0].mxu0 %v1838
      %v1922 = vpop.f32.mrb[0].mxu0
      %v1923 = vadd.f32 %v1631, %v1922
      %v1924 = vpop.f32.mrb[0].mxu0
      %v1925 = vpop.f32.mrb[0].mxu0
      %v1926 = vadd.f32 %v1634, %v1925
      %v1927 = vpop.f32.mrb[0].mxu0
      %1928 = vmatprep.mubr.bf16.mxu0 0
      %1929 = vmatmul.mubr.bf16.gmra.mrb[0].mxu0 %v1841
      %v1930 = vpop.f32.mrb[0].mxu0
      %v1931 = vadd.f32 %v1639, %v1930
      %v1932 = vpop.f32.mrb[0].mxu0
      %v1933 = vpop.f32.mrb[0].mxu0
      %v1934 = vadd.f32 %v1642, %v1933
      %v1935 = vpop.f32.mrb[0].mxu0
      %1936 = vmatprep.mubr.bf16.mxu0 0
      %1937 = vmatmul.mubr.bf16.gmra.mrb[0].mxu0 %v1844
      %v1938 = vpop.f32.mrb[0].mxu0
      %v1939 = vadd.f32 %v1647, %v1938
      %v1940 = vpop.f32.mrb[0].mxu0
      %v1941 = vpop.f32.mrb[0].mxu0
      %v1942 = vadd.f32 %v1650, %v1941
      %v1943 = vpop.f32.mrb[0].mxu0
      %1944 = vmatprep.mubr.bf16.mxu0 0
      %1945 = vmatmul.mubr.bf16.gmra.mrb[0].mxu0 %v1847
      %v1946 = vpop.f32.mrb[0].mxu0
      %v1947 = vadd.f32 %v1655, %v1946
      %v1948 = vpop.f32.mrb[0].mxu0
      %v1949 = vpop.f32.mrb[0].mxu0
      %v1950 = vadd.f32 %v1658, %v1949
      %v1951 = vpop.f32.mrb[0].mxu0
      %1952 = vmatprep.mubr.bf16.mxu0 0
      %1953 = vmatmul.mubr.bf16.gmra.mrb[0].mxu0 %v1850
      %v1954 = vpop.f32.mrb[0].mxu0
      %v1955 = vadd.f32 %v1663, %v1954
      %v1956 = vpop.f32.mrb[0].mxu0
      %v1957 = vpop.f32.mrb[0].mxu0
      %v1958 = vadd.f32 %v1666, %v1957
      %v1959 = vpop.f32.mrb[0].mxu0
      %1960 = vmatprep.mubr.bf16.mxu0 0
      %1961 = vmatmul.mubr.bf16.gmra.mrb[0].mxu0 %v1853
      %v1962 = vpop.f32.mrb[0].mxu0
      %v1963 = vadd.f32 %v1671, %v1962
      %v1964 = vpop.f32.mrb[0].mxu0
      %v1965 = vpop.f32.mrb[0].mxu0
      %v1966 = vadd.f32 %v1674, %v1965
      %v1967 = vpop.f32.mrb[0].mxu0
      %1968 = vmatprep.mubr.bf16.mxu0 0
      %1969 = vmatmul.mubr.bf16.gmra.mrb[0].mxu0 %v1856
      %v1970 = vpop.f32.mrb[0].mxu0
      %v1971 = vadd.f32 %v1679, %v1970
      %v1972 = vpop.f32.mrb[0].mxu0
      %v1973 = vpop.f32.mrb[0].mxu0
      %v1974 = vadd.f32 %v1682, %v1973
      %v1975 = vpop.f32.mrb[0].mxu0
      %1976 = vmatprep.mubr.bf16.mxu0 0
      %1977 = vmatmul.mubr.bf16.gmra.mrb[0].mxu0 %v1859
      %v1978 = vpop.f32.mrb[0].mxu0
      %v1979 = vadd.f32 %v1687, %v1978
      %v1980 = vpop.f32.mrb[0].mxu0
      %v1981 = vpop.f32.mrb[0].mxu0
      %v1982 = vadd.f32 %v1690, %v1981
      %v1983 = vpop.f32.mrb[0].mxu0
      %1984 = vmatprep.mubr.bf16.mxu0 0
      %1985 = vmatmul.mubr.bf16.gmra.mrb[0].mxu0 %v1862
      %v1986 = vpop.f32.mrb[0].mxu0
      %v1987 = vadd.f32 %v1695, %v1986
      %v1988 = vpop.f32.mrb[0].mxu0
      %v1989 = vpop.f32.mrb[0].mxu0
      %v1990 = vadd.f32 %v1698, %v1989
      %v1991 = vpop.f32.mrb[0].mxu0
      %1992 = vmatprep.mubr.bf16.mxu0 0
      %1993 = vmatmul.mubr.bf16.gmra.mrb[0].mxu0 %v1865
      %v1994 = vpop.f32.mrb[0].mxu0
      %v1995 = vadd.f32 %v1703, %v1994
      %v1996 = vpop.f32.mrb[0].mxu0
      %v1997 = vpop.f32.mrb[0].mxu0
      %v1998 = vadd.f32 %v1706, %v1997
      %v1999 = vpop.f32.mrb[0].mxu0
      %2000 = vmatprep.mubr.bf16.mxu0 0
      %2001 = vmatmul.mubr.bf16.gmra.mrb[0].mxu0 %v1868
      %v2002 = vpop.f32.mrb[0].mxu0
      %v2003 = vadd.f32 %v1711, %v2002
      %v2004 = vpop.f32.mrb[0].mxu0
      %v2005 = vpop.f32.mrb[0].mxu0
      %v2006 = vadd.f32 %v1714, %v2005
      %v2007 = vpop.f32.mrb[0].mxu0
      %2008 = vmatprep.mubr.bf16.mxu0 0
      %2009 = vmatmul.mubr.bf16.gmra.mrb[0].mxu0 %v1871
      %v2010 = vpop.f32.mrb[0].mxu0
      %v2011 = vadd.f32 %v1719, %v2010
      %v2012 = vpop.f32.mrb[0].mxu0
      %v2013 = vpop.f32.mrb[0].mxu0
      %v2014 = vadd.f32 %v1722, %v2013
      %v2015 = vpop.f32.mrb[0].mxu0
      %2016 = vmatprep.mubr.bf16.mxu0 0
      %2017 = vmatmul.mubr.bf16.gmra.mrb[0].mxu0 %v1874
      %v2018 = vpop.f32.mrb[0].mxu0
      %v2019 = vadd.f32 %v1727, %v2018
      %v2020 = vpop.f32.mrb[0].mxu0
      %v2021 = vpop.f32.mrb[0].mxu0
      %v2022 = vadd.f32 %v1730, %v2021
      %v2023 = vpop.f32.mrb[0].mxu0
      %2024 = vmatprep.mubr.bf16.mxu0 0
      %2025 = vmatmul.mubr.bf16.gmra.mrb[0].mxu0 %v1877
      %v2026 = vpop.f32.mrb[0].mxu0
      %v2027 = vadd.f32 %v1735, %v2026
      %v2028 = vpop.f32.mrb[0].mxu0
      %v2029 = vpop.f32.mrb[0].mxu0
      %v2030 = vadd.f32 %v1738, %v2029
      %v2031 = vpop.f32.mrb[0].mxu0
      %2032 = vmatprep.mubr.bf16.mxu0 0
      %2033 = vmatmul.mubr.bf16.gmra.mrb[0].mxu0 %v1880
      %v2034 = vpop.f32.mrb[0].mxu0
      %v2035 = vadd.f32 %v1743, %v2034
      %v2036 = vpop.f32.mrb[0].mxu0
      %v2037 = vpop.f32.mrb[0].mxu0
      %v2038 = vadd.f32 %v1746, %v2037
      %v2039 = vpop.f32.mrb[0].mxu0
      %2040 = vmatprep.mubr.bf16.mxu0 0
      %2041 = vmatmul.mubr.bf16.gmra.mrb[0].mxu0 %v1883
      %v2042 = vpop.f32.mrb[0].mxu0
      %v2043 = vadd.f32 %v1751, %v2042
      %v2044 = vpop.f32.mrb[0].mxu0
      %v2045 = vpop.f32.mrb[0].mxu0
      %v2046 = vadd.f32 %v1754, %v2045
      %v2047 = vpop.f32.mrb[0].mxu0
      %2048 = vdwg.mxu0
      %v2049 = vld [vmem:[#allocation2] sm:$0xe]
      %v2050 = vld [vmem:[#allocation2 + $0xc] sm:$0xe]
      %v2051 = vld [vmem:[#allocation2 + $0x18] sm:$0xe]
      %v2052 = vld [vmem:[#allocation2 + $0x24] sm:$0xe]
      %v2053 = vld [vmem:[#allocation2 + $0x30] sm:$0xe]
      %v2054 = vld [vmem:[#allocation2 + $0x3c] sm:$0xe]
      %v2055 = vld [vmem:[#allocation2 + $0x48] sm:$0xe]
      %v2056 = vld [vmem:[#allocation2 + $0x54] sm:$0xe]
      %v2057 = vld [vmem:[#allocation2 + $0x60] sm:$0xe]
      %v2058 = vld [vmem:[#allocation2 + $0x6c] sm:$0xe]
      %v2059 = vld [vmem:[#allocation2 + $0x78] sm:$0xe]
      %v2060 = vld [vmem:[#allocation2 + $0x84] sm:$0xe]
      %v2061 = vld [vmem:[#allocation2 + $0x90] sm:$0xe]
      %v2062 = vld [vmem:[#allocation2 + $0x9c] sm:$0xe]
      %v2063 = vld [vmem:[#allocation2 + $0xa8] sm:$0xe]
      %v2064 = vld [vmem:[#allocation2 + $0xb4] sm:$0xe]
      %vm2097 = vcmask 1042432
      %vm2098 = vcmask 1046532
      %vm2099 = vmor %vm2097, %vm2098
      %v2100 = vrot.slane %v2049, 5
      %v2101 = vrot.slane %v2100, 4
      %v2102 = vrot.slane %v1055, 5
      %v2103 = vsel %vm2099, %v2101, %v2102
      %v2104 = vrot.slane %v2102, 4
      %v2105 = vrot.slane %v1087, 5
      %v2106 = vsel %vm2099, %v2104, %v2105
      %v2107 = vrot.slane %v2050, 5
      %v2108 = vrot.slane %v2107, 4
      %v2109 = vrot.slane %v1057, 5
      %v2110 = vsel %vm2099, %v2108, %v2109
      %v2111 = vrot.slane %v2109, 4
      %v2112 = vrot.slane %v1088, 5
      %v2113 = vsel %vm2099, %v2111, %v2112
      %v2114 = vrot.slane %v2051, 5
      %v2115 = vrot.slane %v2114, 4
      %v2116 = vrot.slane %v1059, 5
      %v2117 = vsel %vm2099, %v2115, %v2116
      %v2118 = vrot.slane %v2116, 4
      %v2119 = vrot.slane %v1089, 5
      %v2120 = vsel %vm2099, %v2118, %v2119
      %v2121 = vrot.slane %v2052, 5
      %v2122 = vrot.slane %v2121, 4
      %v2123 = vrot.slane %v1061, 5
      %v2124 = vsel %vm2099, %v2122, %v2123
      %v2125 = vrot.slane %v2123, 4
      %v2126 = vrot.slane %v1090, 5
      %v2127 = vsel %vm2099, %v2125, %v2126
      %v2128 = vrot.slane %v2053, 5
      %v2129 = vrot.slane %v2128, 4
      %v2130 = vrot.slane %v1063, 5
      %v2131 = vsel %vm2099, %v2129, %v2130
      %v2132 = vrot.slane %v2130, 4
      %v2133 = vrot.slane %v1091, 5
      %v2134 = vsel %vm2099, %v2132, %v2133
      %v2135 = vrot.slane %v2054, 5
      %v2136 = vrot.slane %v2135, 4
      %v2137 = vrot.slane %v1065, 5
      %v2138 = vsel %vm2099, %v2136, %v2137
      %v2139 = vrot.slane %v2137, 4
      %v2140 = vrot.slane %v1092, 5
      %v2141 = vsel %vm2099, %v2139, %v2140
      %v2142 = vrot.slane %v2055, 5
      %v2143 = vrot.slane %v2142, 4
      %v2144 = vrot.slane %v1067, 5
      %v2145 = vsel %vm2099, %v2143, %v2144
      %v2146 = vrot.slane %v2144, 4
      %v2147 = vrot.slane %v1093, 5
      %v2148 = vsel %vm2099, %v2146, %v2147
      %v2149 = vrot.slane %v2056, 5
      %v2150 = vrot.slane %v2149, 4
      %v2151 = vrot.slane %v1069, 5
      %v2152 = vsel %vm2099, %v2150, %v2151
      %v2153 = vrot.slane %v2151, 4
      %v2154 = vrot.slane %v1094, 5
      %v2155 = vsel %vm2099, %v2153, %v2154
      %v2156 = vrot.slane %v2057, 5
      %v2157 = vrot.slane %v2156, 4
      %v2158 = vrot.slane %v1071, 5
      %v2159 = vsel %vm2099, %v2157, %v2158
      %v2160 = vrot.slane %v2158, 4
      %v2161 = vrot.slane %v1095, 5
      %v2162 = vsel %vm2099, %v2160, %v2161
      %v2163 = vrot.slane %v2058, 5
      %v2164 = vrot.slane %v2163, 4
      %v2165 = vrot.slane %v1073, 5
      %v2166 = vsel %vm2099, %v2164, %v2165
      %v2167 = vrot.slane %v2165, 4
      %v2168 = vrot.slane %v1096, 5
      %v2169 = vsel %vm2099, %v2167, %v2168
      %v2170 = vrot.slane %v2059, 5
      %v2171 = vrot.slane %v2170, 4
      %v2172 = vrot.slane %v1075, 5
      %v2173 = vsel %vm2099, %v2171, %v2172
      %v2174 = vrot.slane %v2172, 4
      %v2175 = vrot.slane %v1097, 5
      %v2176 = vsel %vm2099, %v2174, %v2175
      %v2177 = vrot.slane %v2060, 5
      %v2178 = vrot.slane %v2177, 4
      %v2179 = vrot.slane %v1077, 5
      %v2180 = vsel %vm2099, %v2178, %v2179
      %v2181 = vrot.slane %v2179, 4
      %v2182 = vrot.slane %v1098, 5
      %v2183 = vsel %vm2099, %v2181, %v2182
      %v2184 = vrot.slane %v2061, 5
      %v2185 = vrot.slane %v2184, 4
      %v2186 = vrot.slane %v1079, 5
      %v2187 = vsel %vm2099, %v2185, %v2186
      %v2188 = vrot.slane %v2186, 4
      %v2189 = vrot.slane %v1099, 5
      %v2190 = vsel %vm2099, %v2188, %v2189
      %v2191 = vrot.slane %v2062, 5
      %v2192 = vrot.slane %v2191, 4
      %v2193 = vrot.slane %v1081, 5
      %v2194 = vsel %vm2099, %v2192, %v2193
      %v2195 = vrot.slane %v2193, 4
      %v2196 = vrot.slane %v1100, 5
      %v2197 = vsel %vm2099, %v2195, %v2196
      %v2198 = vrot.slane %v2063, 5
      %v2199 = vrot.slane %v2198, 4
      %v2200 = vrot.slane %v1083, 5
      %v2201 = vsel %vm2099, %v2199, %v2200
      %v2202 = vrot.slane %v2200, 4
      %v2203 = vrot.slane %v1101, 5
      %v2204 = vsel %vm2099, %v2202, %v2203
      %v2205 = vrot.slane %v2064, 5
      %v2206 = vrot.slane %v2205, 4
      %v2207 = vrot.slane %v1085, 5
      %v2208 = vsel %vm2099, %v2206, %v2207
      %v2209 = vrot.slane %v2207, 4
      %v2210 = vrot.slane %v1102, 5
      %v2211 = vsel %vm2099, %v2209, %v2210
      %v2212 = vld [vmem:[%s1 + $0x4] sm:$0x3]
      %v2213 = vunpack.c.l.b16 %v2103
      %v2214 = vunpack.c.l.b16 %v2106
      %v2215 = vunpack.c.l.b16 %v2110
      %v2216 = vunpack.c.l.b16 %v2113
      %v2217 = vunpack.c.l.b16 %v2117
      %v2218 = vunpack.c.l.b16 %v2120
      %v2219 = vunpack.c.l.b16 %v2124
      %v2220 = vunpack.c.l.b16 %v2127
      %v2221 = vunpack.c.l.b16 %v2131
      %v2222 = vunpack.c.l.b16 %v2134
      %v2223 = vunpack.c.l.b16 %v2138
      %v2224 = vunpack.c.l.b16 %v2141
      %v2225 = vunpack.c.l.b16 %v2145
      %v2226 = vunpack.c.l.b16 %v2148
      %v2227 = vunpack.c.l.b16 %v2152
      %v2228 = vunpack.c.l.b16 %v2155
      %v2229 = vunpack.c.l.b16 %v2159
      %v2230 = vunpack.c.l.b16 %v2162
      %v2231 = vunpack.c.l.b16 %v2166
      %v2232 = vunpack.c.l.b16 %v2169
      %v2233 = vunpack.c.l.b16 %v2173
      %v2234 = vunpack.c.l.b16 %v2176
      %v2235 = vunpack.c.l.b16 %v2180
      %v2236 = vunpack.c.l.b16 %v2183
      %v2237 = vunpack.c.l.b16 %v2187
      %v2238 = vunpack.c.l.b16 %v2190
      %v2239 = vunpack.c.l.b16 %v2194
      %v2240 = vunpack.c.l.b16 %v2197
      %v2241 = vunpack.c.l.b16 %v2201
      %v2242 = vunpack.c.l.b16 %v2204
      %v2243 = vunpack.c.l.b16 %v2208
      %v2244 = vunpack.c.l.b16 %v2211
      %v2245 = vpack.c.b16 %v2214, %v2213
      %v2246 = vpack.c.b16 %v2216, %v2215
      %v2247 = vpack.c.b16 %v2218, %v2217
      %v2248 = vpack.c.b16 %v2220, %v2219
      %v2249 = vpack.c.b16 %v2222, %v2221
      %v2250 = vpack.c.b16 %v2224, %v2223
      %v2251 = vpack.c.b16 %v2226, %v2225
      %v2252 = vpack.c.b16 %v2228, %v2227
      %v2253 = vpack.c.b16 %v2230, %v2229
      %v2254 = vpack.c.b16 %v2232, %v2231
      %v2255 = vpack.c.b16 %v2234, %v2233
      %v2256 = vpack.c.b16 %v2236, %v2235
      %v2257 = vpack.c.b16 %v2238, %v2237
      %v2258 = vpack.c.b16 %v2240, %v2239
      %v2259 = vpack.c.b16 %v2242, %v2241
      %v2260 = vpack.c.b16 %v2244, %v2243
      %v2262 = vsel %vm1543, %v2245, 0
      %v2265 = vsel %vm1543, %v2246, 0
      %v2268 = vsel %vm1543, %v2247, 0
      %v2271 = vsel %vm1543, %v2248, 0
      %v2274 = vsel %vm1543, %v2249, 0
      %v2277 = vsel %vm1543, %v2250, 0
      %v2280 = vsel %vm1543, %v2251, 0
      %v2283 = vsel %vm1543, %v2252, 0
      %v2286 = vsel %vm1543, %v2253, 0
      %v2289 = vsel %vm1543, %v2254, 0
      %v2292 = vsel %vm1543, %v2255, 0
      %v2295 = vsel %vm1543, %v2256, 0
      %v2298 = vsel %vm1543, %v2257, 0
      %v2301 = vsel %vm1543, %v2258, 0
      %v2304 = vsel %vm1543, %v2259, 0
      %v2307 = vsel %vm1543, %v2260, 0
      %v2310 = vsel %vm1592, %v2212, 0
      %2312 = vmatprep.subr.bf16.mxu0 0
      %2313 = vmatpush1.bf16.msra.mxu0 %v2310
      %2314 = vmatprep.subr.bf16.mxu0 0
      %2315 = vmatpush1.bf16.msra.mxu0 0
      %2316 = vmatprep.subr.bf16.mxu0 0
      %2317 = vmatpush1.bf16.msra.mxu0 0
      %2318 = vmatprep.subr.bf16.mxu0 0
      %2319 = vmatpush1.bf16.msra.mxu0 0
      %2320 = vmatprep.subr.bf16.mxu0 0
      %2321 = vmatpush1.bf16.msra.mxu0 0
      %2322 = vmatprep.subr.bf16.mxu0 0
      %2323 = vmatpush1.bf16.msra.mxu0 0
      %2324 = vmatprep.subr.bf16.mxu0 0
      %2325 = vmatpush1.bf16.msra.mxu0 0
      %2326 = vmatprep.subr.bf16.mxu0 0
      %2327 = vmatpush1.bf16.msra.mxu0 0
      %2328 = vmatprep.subr.bf16.mxu0 0
      %2329 = vmatpush1.bf16.msra.mxu0 0
      %2330 = vmatprep.subr.bf16.mxu0 0
      %2331 = vmatpush1.bf16.msra.mxu0 0
      %2332 = vmatprep.subr.bf16.mxu0 0
      %2333 = vmatpush1.bf16.msra.mxu0 0
      %2334 = vmatprep.subr.bf16.mxu0 0
      %2335 = vmatpush1.bf16.msra.mxu0 0
      %2336 = vmatprep.subr.bf16.mxu0 0
      %2337 = vmatpush1.bf16.msra.mxu0 0
      %2338 = vmatprep.subr.bf16.mxu0 0
      %2339 = vmatpush1.bf16.msra.mxu0 0
      %2340 = vmatprep.subr.bf16.mxu0 0
      %2341 = vmatpush1.bf16.msra.mxu0 0
      %2342 = vmatprep.subr.bf16.mxu0 0
      %2343 = vmatpush1.bf16.msra.mxu0 0
      %2344 = vmatprep.mubr.bf16.mxu0 0
      %2345 = vmatmul.mubr.bf16.gmra.mrb[0].mxu0 %v2262
      %v2346 = vpop.f32.mrb[0].mxu0
      %v2347 = vadd.f32 0.0, %v2346
      %v2348 = vpop.f32.mrb[0].mxu0
      %v2349 = vpop.f32.mrb[0].mxu0
      %v2350 = vadd.f32 0.0, %v2349
      %v2351 = vpop.f32.mrb[0].mxu0
      %2352 = vmatprep.mubr.bf16.mxu0 0
      %2353 = vmatmul.mubr.bf16.gmra.mrb[0].mxu0 %v2265
      %v2354 = vpop.f32.mrb[0].mxu0
      %v2355 = vadd.f32 0.0, %v2354
      %v2356 = vpop.f32.mrb[0].mxu0
      %v2357 = vpop.f32.mrb[0].mxu0
      %v2358 = vadd.f32 0.0, %v2357
      %v2359 = vpop.f32.mrb[0].mxu0
      %2360 = vmatprep.mubr.bf16.mxu0 0
      %2361 = vmatmul.mubr.bf16.gmra.mrb[0].mxu0 %v2268
      %v2362 = vpop.f32.mrb[0].mxu0
      %v2363 = vadd.f32 0.0, %v2362
      %v2364 = vpop.f32.mrb[0].mxu0
      %v2365 = vpop.f32.mrb[0].mxu0
      %v2366 = vadd.f32 0.0, %v2365
      %v2367 = vpop.f32.mrb[0].mxu0
      %2368 = vmatprep.mubr.bf16.mxu0 0
      %2369 = vmatmul.mubr.bf16.gmra.mrb[0].mxu0 %v2271
      %v2370 = vpop.f32.mrb[0].mxu0
      %v2371 = vadd.f32 0.0, %v2370
      %v2372 = vpop.f32.mrb[0].mxu0
      %v2373 = vpop.f32.mrb[0].mxu0
      %v2374 = vadd.f32 0.0, %v2373
      %v2375 = vpop.f32.mrb[0].mxu0
      %2376 = vmatprep.mubr.bf16.mxu0 0
      %2377 = vmatmul.mubr.bf16.gmra.mrb[0].mxu0 %v2274
      %v2378 = vpop.f32.mrb[0].mxu0
      %v2379 = vadd.f32 0.0, %v2378
      %v2380 = vpop.f32.mrb[0].mxu0
      %v2381 = vpop.f32.mrb[0].mxu0
      %v2382 = vadd.f32 0.0, %v2381
      %v2383 = vpop.f32.mrb[0].mxu0
      %2384 = vmatprep.mubr.bf16.mxu0 0
      %2385 = vmatmul.mubr.bf16.gmra.mrb[0].mxu0 %v2277
      %v2386 = vpop.f32.mrb[0].mxu0
      %v2387 = vadd.f32 0.0, %v2386
      %v2388 = vpop.f32.mrb[0].mxu0
      %v2389 = vpop.f32.mrb[0].mxu0
      %v2390 = vadd.f32 0.0, %v2389
      %v2391 = vpop.f32.mrb[0].mxu0
      %2392 = vmatprep.mubr.bf16.mxu0 0
      %2393 = vmatmul.mubr.bf16.gmra.mrb[0].mxu0 %v2280
      %v2394 = vpop.f32.mrb[0].mxu0
      %v2395 = vadd.f32 0.0, %v2394
      %v2396 = vpop.f32.mrb[0].mxu0
      %v2397 = vpop.f32.mrb[0].mxu0
      %v2398 = vadd.f32 0.0, %v2397
      %v2399 = vpop.f32.mrb[0].mxu0
      %2400 = vmatprep.mubr.bf16.mxu0 0
      %2401 = vmatmul.mubr.bf16.gmra.mrb[0].mxu0 %v2283
      %v2402 = vpop.f32.mrb[0].mxu0
      %v2403 = vadd.f32 0.0, %v2402
      %v2404 = vpop.f32.mrb[0].mxu0
      %v2405 = vpop.f32.mrb[0].mxu0
      %v2406 = vadd.f32 0.0, %v2405
      %v2407 = vpop.f32.mrb[0].mxu0
      %2408 = vmatprep.mubr.bf16.mxu0 0
      %2409 = vmatmul.mubr.bf16.gmra.mrb[0].mxu0 %v2286
      %v2410 = vpop.f32.mrb[0].mxu0
      %v2411 = vadd.f32 0.0, %v2410
      %v2412 = vpop.f32.mrb[0].mxu0
      %v2413 = vpop.f32.mrb[0].mxu0
      %v2414 = vadd.f32 0.0, %v2413
      %v2415 = vpop.f32.mrb[0].mxu0
      %2416 = vmatprep.mubr.bf16.mxu0 0
      %2417 = vmatmul.mubr.bf16.gmra.mrb[0].mxu0 %v2289
      %v2418 = vpop.f32.mrb[0].mxu0
      %v2419 = vadd.f32 0.0, %v2418
      %v2420 = vpop.f32.mrb[0].mxu0
      %v2421 = vpop.f32.mrb[0].mxu0
      %v2422 = vadd.f32 0.0, %v2421
      %v2423 = vpop.f32.mrb[0].mxu0
      %2424 = vmatprep.mubr.bf16.mxu0 0
      %2425 = vmatmul.mubr.bf16.gmra.mrb[0].mxu0 %v2292
      %v2426 = vpop.f32.mrb[0].mxu0
      %v2427 = vadd.f32 0.0, %v2426
      %v2428 = vpop.f32.mrb[0].mxu0
      %v2429 = vpop.f32.mrb[0].mxu0
      %v2430 = vadd.f32 0.0, %v2429
      %v2431 = vpop.f32.mrb[0].mxu0
      %2432 = vmatprep.mubr.bf16.mxu0 0
      %2433 = vmatmul.mubr.bf16.gmra.mrb[0].mxu0 %v2295
      %v2434 = vpop.f32.mrb[0].mxu0
      %v2435 = vadd.f32 0.0, %v2434
      %v2436 = vpop.f32.mrb[0].mxu0
      %v2437 = vpop.f32.mrb[0].mxu0
      %v2438 = vadd.f32 0.0, %v2437
      %v2439 = vpop.f32.mrb[0].mxu0
      %2440 = vmatprep.mubr.bf16.mxu0 0
      %2441 = vmatmul.mubr.bf16.gmra.mrb[0].mxu0 %v2298
      %v2442 = vpop.f32.mrb[0].mxu0
      %v2443 = vadd.f32 0.0, %v2442
      %v2444 = vpop.f32.mrb[0].mxu0
      %v2445 = vpop.f32.mrb[0].mxu0
      %v2446 = vadd.f32 0.0, %v2445
      %v2447 = vpop.f32.mrb[0].mxu0
      %2448 = vmatprep.mubr.bf16.mxu0 0
      %2449 = vmatmul.mubr.bf16.gmra.mrb[0].mxu0 %v2301
      %v2450 = vpop.f32.mrb[0].mxu0
      %v2451 = vadd.f32 0.0, %v2450
      %v2452 = vpop.f32.mrb[0].mxu0
      %v2453 = vpop.f32.mrb[0].mxu0
      %v2454 = vadd.f32 0.0, %v2453
      %v2455 = vpop.f32.mrb[0].mxu0
      %2456 = vmatprep.mubr.bf16.mxu0 0
      %2457 = vmatmul.mubr.bf16.gmra.mrb[0].mxu0 %v2304
      %v2458 = vpop.f32.mrb[0].mxu0
      %v2459 = vadd.f32 0.0, %v2458
      %v2460 = vpop.f32.mrb[0].mxu0
      %v2461 = vpop.f32.mrb[0].mxu0
      %v2462 = vadd.f32 0.0, %v2461
      %v2463 = vpop.f32.mrb[0].mxu0
      %2464 = vmatprep.mubr.bf16.mxu0 0
      %2465 = vmatmul.mubr.bf16.gmra.mrb[0].mxu0 %v2307
      %v2466 = vpop.f32.mrb[0].mxu0
      %v2467 = vadd.f32 0.0, %v2466
      %v2468 = vpop.f32.mrb[0].mxu0
      %v2469 = vpop.f32.mrb[0].mxu0
      %v2470 = vadd.f32 0.0, %v2469
      %v2471 = vpop.f32.mrb[0].mxu0
      %2472 = vdwg.mxu0
      %v2473 = vadd.f32 %v1923, %v2347
      %v2474 = vadd.f32 %v1926, %v2350
      %v2475 = vadd.f32 %v1931, %v2355
      %v2476 = vadd.f32 %v1934, %v2358
      %v2477 = vadd.f32 %v1939, %v2363
      %v2478 = vadd.f32 %v1942, %v2366
      %v2479 = vadd.f32 %v1947, %v2371
      %v2480 = vadd.f32 %v1950, %v2374
      %v2481 = vadd.f32 %v1955, %v2379
      %v2482 = vadd.f32 %v1958, %v2382
      %v2483 = vadd.f32 %v1963, %v2387
      %v2484 = vadd.f32 %v1966, %v2390
      %v2485 = vadd.f32 %v1971, %v2395
      %v2486 = vadd.f32 %v1974, %v2398
      %v2487 = vadd.f32 %v1979, %v2403
      %v2488 = vadd.f32 %v1982, %v2406
      %v2489 = vadd.f32 %v1987, %v2411
      %v2490 = vadd.f32 %v1990, %v2414
      %v2491 = vadd.f32 %v1995, %v2419
      %v2492 = vadd.f32 %v1998, %v2422
      %v2493 = vadd.f32 %v2003, %v2427
      %v2494 = vadd.f32 %v2006, %v2430
      %v2495 = vadd.f32 %v2011, %v2435
      %v2496 = vadd.f32 %v2014, %v2438
      %v2497 = vadd.f32 %v2019, %v2443
      %v2498 = vadd.f32 %v2022, %v2446
      %v2499 = vadd.f32 %v2027, %v2451
      %v2500 = vadd.f32 %v2030, %v2454
      %v2501 = vadd.f32 %v2035, %v2459
      %v2502 = vadd.f32 %v2038, %v2462
      %v2503 = vadd.f32 %v2043, %v2467
      %v2504 = vadd.f32 %v2046, %v2470
      %v2505 = vld [vmem:[%s623] sm:$0xf]
      %v2506 = vld [vmem:[%s623 + $0x4] sm:$0xf]
      %v2507 = vld [vmem:[%s623 + $0xc] sm:$0xf]
      %v2508 = vld [vmem:[%s623 + $0x10] sm:$0xf]
      %v2509 = vld [vmem:[%s623 + $0x18] sm:$0xf]
      %v2510 = vld [vmem:[%s623 + $0x1c] sm:$0xf]
      %v2511 = vld [vmem:[%s623 + $0x24] sm:$0xf]
      %v2512 = vld [vmem:[%s623 + $0x28] sm:$0xf]
      %v2513 = vld [vmem:[%s623 + $0x30] sm:$0xf]
      %v2514 = vld [vmem:[%s623 + $0x34] sm:$0xf]
      %v2515 = vld [vmem:[%s623 + $0x3c] sm:$0xf]
      %v2516 = vld [vmem:[%s623 + $0x40] sm:$0xf]
      %v2517 = vld [vmem:[%s623 + $0x48] sm:$0xf]
      %v2518 = vld [vmem:[%s623 + $0x4c] sm:$0xf]
      %v2519 = vld [vmem:[%s623 + $0x54] sm:$0xf]
      %v2520 = vld [vmem:[%s623 + $0x58] sm:$0xf]
      %v2521 = vld [vmem:[%s623 + $0x60] sm:$0xf]
      %v2522 = vld [vmem:[%s623 + $0x64] sm:$0xf]
      %v2523 = vld [vmem:[%s623 + $0x6c] sm:$0xf]
      %v2524 = vld [vmem:[%s623 + $0x70] sm:$0xf]
      %v2525 = vld [vmem:[%s623 + $0x78] sm:$0xf]
      %v2526 = vld [vmem:[%s623 + $0x7c] sm:$0xf]
      %v2527 = vld [vmem:[%s623 + $0x84] sm:$0xf]
      %v2528 = vld [vmem:[%s623 + $0x88] sm:$0xf]
      %v2529 = vld [vmem:[%s623 + $0x90] sm:$0xf]
      %v2530 = vld [vmem:[%s623 + $0x94] sm:$0xf]
      %v2531 = vld [vmem:[%s623 + $0x9c] sm:$0xf]
      %v2532 = vld [vmem:[%s623 + $0xa0] sm:$0xf]
      %v2533 = vld [vmem:[%s623 + $0xa8] sm:$0xf]
      %v2534 = vld [vmem:[%s623 + $0xac] sm:$0xf]
      %v2535 = vld [vmem:[%s623 + $0xb4] sm:$0xf]
      %v2536 = vld [vmem:[%s623 + $0xb8] sm:$0xf]
      %v2537 = vld [vmem:[%s1 + $0x4] sm:$0xc]
      %v2570 = vunpack.c.l.b16 %v2505
      %v2571 = vunpack.c.l.b16 %v2506
      %v2572 = vunpack.c.l.b16 %v2507
      %v2573 = vunpack.c.l.b16 %v2508
      %v2574 = vunpack.c.l.b16 %v2509
      %v2575 = vunpack.c.l.b16 %v2510
      %v2576 = vunpack.c.l.b16 %v2511
      %v2577 = vunpack.c.l.b16 %v2512
      %v2578 = vunpack.c.l.b16 %v2513
      %v2579 = vunpack.c.l.b16 %v2514
      %v2580 = vunpack.c.l.b16 %v2515
      %v2581 = vunpack.c.l.b16 %v2516
      %v2582 = vunpack.c.l.b16 %v2517
      %v2583 = vunpack.c.l.b16 %v2518
      %v2584 = vunpack.c.l.b16 %v2519
      %v2585 = vunpack.c.l.b16 %v2520
      %v2586 = vunpack.c.l.b16 %v2521
      %v2587 = vunpack.c.l.b16 %v2522
      %v2588 = vunpack.c.l.b16 %v2523
      %v2589 = vunpack.c.l.b16 %v2524
      %v2590 = vunpack.c.l.b16 %v2525
      %v2591 = vunpack.c.l.b16 %v2526
      %v2592 = vunpack.c.l.b16 %v2527
      %v2593 = vunpack.c.l.b16 %v2528
      %v2594 = vunpack.c.l.b16 %v2529
      %v2595 = vunpack.c.l.b16 %v2530
      %v2596 = vunpack.c.l.b16 %v2531
      %v2597 = vunpack.c.l.b16 %v2532
      %v2598 = vunpack.c.l.b16 %v2533
      %v2599 = vunpack.c.l.b16 %v2534
      %v2600 = vunpack.c.l.b16 %v2535
      %v2601 = vunpack.c.l.b16 %v2536
      %v2602 = vpack.c.b16 %v2571, %v2570
      %v2603 = vpack.c.b16 %v2573, %v2572
      %v2604 = vpack.c.b16 %v2575, %v2574
      %v2605 = vpack.c.b16 %v2577, %v2576
      %v2606 = vpack.c.b16 %v2579, %v2578
      %v2607 = vpack.c.b16 %v2581, %v2580
      %v2608 = vpack.c.b16 %v2583, %v2582
      %v2609 = vpack.c.b16 %v2585, %v2584
      %v2610 = vpack.c.b16 %v2587, %v2586
      %v2611 = vpack.c.b16 %v2589, %v2588
      %v2612 = vpack.c.b16 %v2591, %v2590
      %v2613 = vpack.c.b16 %v2593, %v2592
      %v2614 = vpack.c.b16 %v2595, %v2594
      %v2615 = vpack.c.b16 %v2597, %v2596
      %v2616 = vpack.c.b16 %v2599, %v2598
      %v2617 = vpack.c.b16 %v2601, %v2600
      %v2619 = vunpack.c.l.b16 %v2537
      %v2620 = vpack.c.b16 %v2619, %v2619
      %v2621 = vrot.slane %v2620, 2
      %v2623 = vsel %vm1543, %v2602, 0
      %v2626 = vsel %vm1543, %v2603, 0
      %v2629 = vsel %vm1543, %v2604, 0
      %v2632 = vsel %vm1543, %v2605, 0
      %v2635 = vsel %vm1543, %v2606, 0
      %v2638 = vsel %vm1543, %v2607, 0
      %v2641 = vsel %vm1543, %v2608, 0
      %v2644 = vsel %vm1543, %v2609, 0
      %v2647 = vsel %vm1543, %v2610, 0
      %v2650 = vsel %vm1543, %v2611, 0
      %v2653 = vsel %vm1543, %v2612, 0
      %v2656 = vsel %vm1543, %v2613, 0
      %v2659 = vsel %vm1543, %v2614, 0
      %v2662 = vsel %vm1543, %v2615, 0
      %v2665 = vsel %vm1543, %v2616, 0
      %v2668 = vsel %vm1543, %v2617, 0
      %v2671 = vsel %vm1592, %v2621, 0
      %2673 = vmatprep.subr.bf16.mxu0 0
      %2674 = vmatpush1.bf16.msra.mxu0 %v2671
      %2675 = vmatprep.subr.bf16.mxu0 0
      %2676 = vmatpush1.bf16.msra.mxu0 0
      %2677 = vmatprep.subr.bf16.mxu0 0
      %2678 = vmatpush1.bf16.msra.mxu0 0
      %2679 = vmatprep.subr.bf16.mxu0 0
      %2680 = vmatpush1.bf16.msra.mxu0 0
      %2681 = vmatprep.subr.bf16.mxu0 0
      %2682 = vmatpush1.bf16.msra.mxu0 0
      %2683 = vmatprep.subr.bf16.mxu0 0
      %2684 = vmatpush1.bf16.msra.mxu0 0
      %2685 = vmatprep.subr.bf16.mxu0 0
      %2686 = vmatpush1.bf16.msra.mxu0 0
      %2687 = vmatprep.subr.bf16.mxu0 0
      %2688 = vmatpush1.bf16.msra.mxu0 0
      %2689 = vmatprep.subr.bf16.mxu0 0
      %2690 = vmatpush1.bf16.msra.mxu0 0
      %2691 = vmatprep.subr.bf16.mxu0 0
      %2692 = vmatpush1.bf16.msra.mxu0 0
      %2693 = vmatprep.subr.bf16.mxu0 0
      %2694 = vmatpush1.bf16.msra.mxu0 0
      %2695 = vmatprep.subr.bf16.mxu0 0
      %2696 = vmatpush1.bf16.msra.mxu0 0
      %2697 = vmatprep.subr.bf16.mxu0 0
      %2698 = vmatpush1.bf16.msra.mxu0 0
      %2699 = vmatprep.subr.bf16.mxu0 0
      %2700 = vmatpush1.bf16.msra.mxu0 0
      %2701 = vmatprep.subr.bf16.mxu0 0
      %2702 = vmatpush1.bf16.msra.mxu0 0
      %2703 = vmatprep.subr.bf16.mxu0 0
      %2704 = vmatpush1.bf16.msra.mxu0 0
      %2705 = vmatprep.mubr.bf16.mxu0 0
      %2706 = vmatmul.mubr.bf16.gmra.mrb[0].mxu0 %v2623
      %v2707 = vpop.f32.mrb[0].mxu0
      %v2708 = vadd.f32 0.0, %v2707
      %v2709 = vpop.f32.mrb[0].mxu0
      %v2710 = vpop.f32.mrb[0].mxu0
      %v2711 = vadd.f32 0.0, %v2710
      %v2712 = vpop.f32.mrb[0].mxu0
      %2713 = vmatprep.mubr.bf16.mxu0 0
      %2714 = vmatmul.mubr.bf16.gmra.mrb[0].mxu0 %v2626
      %v2715 = vpop.f32.mrb[0].mxu0
      %v2716 = vadd.f32 0.0, %v2715
      %v2717 = vpop.f32.mrb[0].mxu0
      %v2718 = vpop.f32.mrb[0].mxu0
      %v2719 = vadd.f32 0.0, %v2718
      %v2720 = vpop.f32.mrb[0].mxu0
      %2721 = vmatprep.mubr.bf16.mxu0 0
      %2722 = vmatmul.mubr.bf16.gmra.mrb[0].mxu0 %v2629
      %v2723 = vpop.f32.mrb[0].mxu0
      %v2724 = vadd.f32 0.0, %v2723
      %v2725 = vpop.f32.mrb[0].mxu0
      %v2726 = vpop.f32.mrb[0].mxu0
      %v2727 = vadd.f32 0.0, %v2726
      %v2728 = vpop.f32.mrb[0].mxu0
      %2729 = vmatprep.mubr.bf16.mxu0 0
      %2730 = vmatmul.mubr.bf16.gmra.mrb[0].mxu0 %v2632
      %v2731 = vpop.f32.mrb[0].mxu0
      %v2732 = vadd.f32 0.0, %v2731
      %v2733 = vpop.f32.mrb[0].mxu0
      %v2734 = vpop.f32.mrb[0].mxu0
      %v2735 = vadd.f32 0.0, %v2734
      %v2736 = vpop.f32.mrb[0].mxu0
      %2737 = vmatprep.mubr.bf16.mxu0 0
      %2738 = vmatmul.mubr.bf16.gmra.mrb[0].mxu0 %v2635
      %v2739 = vpop.f32.mrb[0].mxu0
      %v2740 = vadd.f32 0.0, %v2739
      %v2741 = vpop.f32.mrb[0].mxu0
      %v2742 = vpop.f32.mrb[0].mxu0
      %v2743 = vadd.f32 0.0, %v2742
      %v2744 = vpop.f32.mrb[0].mxu0
      %2745 = vmatprep.mubr.bf16.mxu0 0
      %2746 = vmatmul.mubr.bf16.gmra.mrb[0].mxu0 %v2638
      %v2747 = vpop.f32.mrb[0].mxu0
      %v2748 = vadd.f32 0.0, %v2747
      %v2749 = vpop.f32.mrb[0].mxu0
      %v2750 = vpop.f32.mrb[0].mxu0
      %v2751 = vadd.f32 0.0, %v2750
      %v2752 = vpop.f32.mrb[0].mxu0
      %2753 = vmatprep.mubr.bf16.mxu0 0
      %2754 = vmatmul.mubr.bf16.gmra.mrb[0].mxu0 %v2641
      %v2755 = vpop.f32.mrb[0].mxu0
      %v2756 = vadd.f32 0.0, %v2755
      %v2757 = vpop.f32.mrb[0].mxu0
      %v2758 = vpop.f32.mrb[0].mxu0
      %v2759 = vadd.f32 0.0, %v2758
      %v2760 = vpop.f32.mrb[0].mxu0
      %2761 = vmatprep.mubr.bf16.mxu0 0
      %2762 = vmatmul.mubr.bf16.gmra.mrb[0].mxu0 %v2644
      %v2763 = vpop.f32.mrb[0].mxu0
      %v2764 = vadd.f32 0.0, %v2763
      %v2765 = vpop.f32.mrb[0].mxu0
      %v2766 = vpop.f32.mrb[0].mxu0
      %v2767 = vadd.f32 0.0, %v2766
      %v2768 = vpop.f32.mrb[0].mxu0
      %2769 = vmatprep.mubr.bf16.mxu0 0
      %2770 = vmatmul.mubr.bf16.gmra.mrb[0].mxu0 %v2647
      %v2771 = vpop.f32.mrb[0].mxu0
      %v2772 = vadd.f32 0.0, %v2771
      %v2773 = vpop.f32.mrb[0].mxu0
      %v2774 = vpop.f32.mrb[0].mxu0
      %v2775 = vadd.f32 0.0, %v2774
      %v2776 = vpop.f32.mrb[0].mxu0
      %2777 = vmatprep.mubr.bf16.mxu0 0
      %2778 = vmatmul.mubr.bf16.gmra.mrb[0].mxu0 %v2650
      %v2779 = vpop.f32.mrb[0].mxu0
      %v2780 = vadd.f32 0.0, %v2779
      %v2781 = vpop.f32.mrb[0].mxu0
      %v2782 = vpop.f32.mrb[0].mxu0
      %v2783 = vadd.f32 0.0, %v2782
      %v2784 = vpop.f32.mrb[0].mxu0
      %2785 = vmatprep.mubr.bf16.mxu0 0
      %2786 = vmatmul.mubr.bf16.gmra.mrb[0].mxu0 %v2653
      %v2787 = vpop.f32.mrb[0].mxu0
      %v2788 = vadd.f32 0.0, %v2787
      %v2789 = vpop.f32.mrb[0].mxu0
      %v2790 = vpop.f32.mrb[0].mxu0
      %v2791 = vadd.f32 0.0, %v2790
      %v2792 = vpop.f32.mrb[0].mxu0
      %2793 = vmatprep.mubr.bf16.mxu0 0
      %2794 = vmatmul.mubr.bf16.gmra.mrb[0].mxu0 %v2656
      %v2795 = vpop.f32.mrb[0].mxu0
      %v2796 = vadd.f32 0.0, %v2795
      %v2797 = vpop.f32.mrb[0].mxu0
      %v2798 = vpop.f32.mrb[0].mxu0
      %v2799 = vadd.f32 0.0, %v2798
      %v2800 = vpop.f32.mrb[0].mxu0
      %2801 = vmatprep.mubr.bf16.mxu0 0
      %2802 = vmatmul.mubr.bf16.gmra.mrb[0].mxu0 %v2659
      %v2803 = vpop.f32.mrb[0].mxu0
      %v2804 = vadd.f32 0.0, %v2803
      %v2805 = vpop.f32.mrb[0].mxu0
      %v2806 = vpop.f32.mrb[0].mxu0
      %v2807 = vadd.f32 0.0, %v2806
      %v2808 = vpop.f32.mrb[0].mxu0
      %2809 = vmatprep.mubr.bf16.mxu0 0
      %2810 = vmatmul.mubr.bf16.gmra.mrb[0].mxu0 %v2662
      %v2811 = vpop.f32.mrb[0].mxu0
      %v2812 = vadd.f32 0.0, %v2811
      %v2813 = vpop.f32.mrb[0].mxu0
      %v2814 = vpop.f32.mrb[0].mxu0
      %v2815 = vadd.f32 0.0, %v2814
      %v2816 = vpop.f32.mrb[0].mxu0
      %2817 = vmatprep.mubr.bf16.mxu0 0
      %2818 = vmatmul.mubr.bf16.gmra.mrb[0].mxu0 %v2665
      %v2819 = vpop.f32.mrb[0].mxu0
      %v2820 = vadd.f32 0.0, %v2819
      %v2821 = vpop.f32.mrb[0].mxu0
      %v2822 = vpop.f32.mrb[0].mxu0
      %v2823 = vadd.f32 0.0, %v2822
      %v2824 = vpop.f32.mrb[0].mxu0
      %2825 = vmatprep.mubr.bf16.mxu0 0
      %2826 = vmatmul.mubr.bf16.gmra.mrb[0].mxu0 %v2668
      %v2827 = vpop.f32.mrb[0].mxu0
      %v2828 = vadd.f32 0.0, %v2827
      %v2829 = vpop.f32.mrb[0].mxu0
      %v2830 = vpop.f32.mrb[0].mxu0
      %v2831 = vadd.f32 0.0, %v2830
      %v2832 = vpop.f32.mrb[0].mxu0
      %2833 = vdwg.mxu0
      %v2834 = vadd.f32 %v2473, %v2708
      %v2835 = vadd.f32 %v2474, %v2711
      %v2836 = vadd.f32 %v2475, %v2716
      %v2837 = vadd.f32 %v2476, %v2719
      %v2838 = vadd.f32 %v2477, %v2724
      %v2839 = vadd.f32 %v2478, %v2727
      %v2840 = vadd.f32 %v2479, %v2732
      %v2841 = vadd.f32 %v2480, %v2735
      %v2842 = vadd.f32 %v2481, %v2740
      %v2843 = vadd.f32 %v2482, %v2743
      %v2844 = vadd.f32 %v2483, %v2748
      %v2845 = vadd.f32 %v2484, %v2751
      %v2846 = vadd.f32 %v2485, %v2756
      %v2847 = vadd.f32 %v2486, %v2759
      %v2848 = vadd.f32 %v2487, %v2764
      %v2849 = vadd.f32 %v2488, %v2767
      %v2850 = vadd.f32 %v2489, %v2772
      %v2851 = vadd.f32 %v2490, %v2775
      %v2852 = vadd.f32 %v2491, %v2780
      %v2853 = vadd.f32 %v2492, %v2783
      %v2854 = vadd.f32 %v2493, %v2788
      %v2855 = vadd.f32 %v2494, %v2791
      %v2856 = vadd.f32 %v2495, %v2796
      %v2857 = vadd.f32 %v2496, %v2799
      %v2858 = vadd.f32 %v2497, %v2804
      %v2859 = vadd.f32 %v2498, %v2807
      %v2860 = vadd.f32 %v2499, %v2812
      %v2861 = vadd.f32 %v2500, %v2815
      %v2862 = vadd.f32 %v2501, %v2820
      %v2863 = vadd.f32 %v2502, %v2823
      %v2864 = vadd.f32 %v2503, %v2828
      %v2865 = vadd.f32 %v2504, %v2831
      %v2866 = vld [vmem:[%s623] sm:$0xf]
      %v2867 = vld [vmem:[%s623 + $0x4] sm:$0xf]
      %v2868 = vld [vmem:[%s623 + $0x8] sm:$0x1]
      %v2869 = vld [vmem:[%s623 + $0xc] sm:$0xf]
      %v2870 = vld [vmem:[%s623 + $0x10] sm:$0xf]
      %v2871 = vld [vmem:[%s623 + $0x14] sm:$0x1]
      %v2872 = vld [vmem:[%s623 + $0x18] sm:$0xf]
      %v2873 = vld [vmem:[%s623 + $0x1c] sm:$0xf]
      %v2874 = vld [vmem:[%s623 + $0x20] sm:$0x1]
      %v2875 = vld [vmem:[%s623 + $0x24] sm:$0xf]
      %v2876 = vld [vmem:[%s623 + $0x28] sm:$0xf]
      %v2877 = vld [vmem:[%s623 + $0x2c] sm:$0x1]
      %v2878 = vld [vmem:[%s623 + $0x30] sm:$0xf]
      %v2879 = vld [vmem:[%s623 + $0x34] sm:$0xf]
      %v2880 = vld [vmem:[%s623 + $0x38] sm:$0x1]
      %v2881 = vld [vmem:[%s623 + $0x3c] sm:$0xf]
      %v2882 = vld [vmem:[%s623 + $0x40] sm:$0xf]
      %v2883 = vld [vmem:[%s623 + $0x44] sm:$0x1]
      %v2884 = vld [vmem:[%s623 + $0x48] sm:$0xf]
      %v2885 = vld [vmem:[%s623 + $0x4c] sm:$0xf]
      %v2886 = vld [vmem:[%s623 + $0x50] sm:$0x1]
      %v2887 = vld [vmem:[%s623 + $0x54] sm:$0xf]
      %v2888 = vld [vmem:[%s623 + $0x58] sm:$0xf]
      %v2889 = vld [vmem:[%s623 + $0x5c] sm:$0x1]
      %v2890 = vld [vmem:[%s623 + $0x60] sm:$0xf]
      %v2891 = vld [vmem:[%s623 + $0x64] sm:$0xf]
      %v2892 = vld [vmem:[%s623 + $0x68] sm:$0x1]
      %v2893 = vld [vmem:[%s623 + $0x6c] sm:$0xf]
      %v2894 = vld [vmem:[%s623 + $0x70] sm:$0xf]
      %v2895 = vld [vmem:[%s623 + $0x74] sm:$0x1]
      %v2896 = vld [vmem:[%s623 + $0x78] sm:$0xf]
      %v2897 = vld [vmem:[%s623 + $0x7c] sm:$0xf]
      %v2898 = vld [vmem:[%s623 + $0x80] sm:$0x1]
      %v2899 = vld [vmem:[%s623 + $0x84] sm:$0xf]
      %v2900 = vld [vmem:[%s623 + $0x88] sm:$0xf]
      %v2901 = vld [vmem:[%s623 + $0x8c] sm:$0x1]
      %v2902 = vld [vmem:[%s623 + $0x90] sm:$0xf]
      %v2903 = vld [vmem:[%s623 + $0x94] sm:$0xf]
      %v2904 = vld [vmem:[%s623 + $0x98] sm:$0x1]
      %v2905 = vld [vmem:[%s623 + $0x9c] sm:$0xf]
      %v2906 = vld [vmem:[%s623 + $0xa0] sm:$0xf]
      %v2907 = vld [vmem:[%s623 + $0xa4] sm:$0x1]
      %v2908 = vld [vmem:[%s623 + $0xa8] sm:$0xf]
      %v2909 = vld [vmem:[%s623 + $0xac] sm:$0xf]
      %v2910 = vld [vmem:[%s623 + $0xb0] sm:$0x1]
      %v2911 = vld [vmem:[%s623 + $0xb4] sm:$0xf]
      %v2912 = vld [vmem:[%s623 + $0xb8] sm:$0xf]
      %v2913 = vld [vmem:[%s623 + $0xbc] sm:$0x1]
      %v2915 = vshrl.u32 %v2866, 16
      %v2917 = vrot.slane %v2915, 4
      %v2918 = vshll.u32 %v2866, 16
      %v2920 = vrot.slane %v2918, 5
      %v2921 = vor.u32 %v2917, %v2920
      %v2922 = vrot.slane %v2921, 4
      %v2924 = vshll.u32 %v2867, 16
      %v2926 = vrot.slane %v2924, 5
      %v2927 = vsel %vm1105, %v2922, %v2926
      %v2928 = vshrl.u32 %v2867, 16
      %v2930 = vrot.slane %v2928, 4
      %v2931 = vor.u32 %v2930, %v2926
      %v2932 = vrot.slane %v2931, 4
      %v2934 = vshll.u32 %v2868, 16
      %v2936 = vrot.slane %v2934, 5
      %v2937 = vsel %vm1105, %v2932, %v2936
      %v2939 = vshrl.u32 %v2869, 16
      %v2941 = vrot.slane %v2939, 4
      %v2942 = vshll.u32 %v2869, 16
      %v2944 = vrot.slane %v2942, 5
      %v2945 = vor.u32 %v2941, %v2944
      %v2946 = vrot.slane %v2945, 4
      %v2948 = vshll.u32 %v2870, 16
      %v2950 = vrot.slane %v2948, 5
      %v2951 = vsel %vm1105, %v2946, %v2950
      %v2952 = vshrl.u32 %v2870, 16
      %v2954 = vrot.slane %v2952, 4
      %v2955 = vor.u32 %v2954, %v2950
      %v2956 = vrot.slane %v2955, 4
      %v2958 = vshll.u32 %v2871, 16
      %v2960 = vrot.slane %v2958, 5
      %v2961 = vsel %vm1105, %v2956, %v2960
      %v2963 = vshrl.u32 %v2872, 16
      %v2965 = vrot.slane %v2963, 4
      %v2966 = vshll.u32 %v2872, 16
      %v2968 = vrot.slane %v2966, 5
      %v2969 = vor.u32 %v2965, %v2968
      %v2970 = vrot.slane %v2969, 4
      %v2972 = vshll.u32 %v2873, 16
      %v2974 = vrot.slane %v2972, 5
      %v2975 = vsel %vm1105, %v2970, %v2974
      %v2976 = vshrl.u32 %v2873, 16
      %v2978 = vrot.slane %v2976, 4
      %v2979 = vor.u32 %v2978, %v2974
      %v2980 = vrot.slane %v2979, 4
      %v2982 = vshll.u32 %v2874, 16
      %v2984 = vrot.slane %v2982, 5
      %v2985 = vsel %vm1105, %v2980, %v2984
      %v2987 = vshrl.u32 %v2875, 16
      %v2989 = vrot.slane %v2987, 4
      %v2990 = vshll.u32 %v2875, 16
      %v2992 = vrot.slane %v2990, 5
      %v2993 = vor.u32 %v2989, %v2992
      %v2994 = vrot.slane %v2993, 4
      %v2996 = vshll.u32 %v2876, 16
      %v2998 = vrot.slane %v2996, 5
      %v2999 = vsel %vm1105, %v2994, %v2998
      %v3000 = vshrl.u32 %v2876, 16
      %v3002 = vrot.slane %v3000, 4
      %v3003 = vor.u32 %v3002, %v2998
      %v3004 = vrot.slane %v3003, 4
      %v3006 = vshll.u32 %v2877, 16
      %v3008 = vrot.slane %v3006, 5
      %v3009 = vsel %vm1105, %v3004, %v3008
      %v3011 = vshrl.u32 %v2878, 16
      %v3013 = vrot.slane %v3011, 4
      %v3014 = vshll.u32 %v2878, 16
      %v3016 = vrot.slane %v3014, 5
      %v3017 = vor.u32 %v3013, %v3016
      %v3018 = vrot.slane %v3017, 4
      %v3020 = vshll.u32 %v2879, 16
      %v3022 = vrot.slane %v3020, 5
      %v3023 = vsel %vm1105, %v3018, %v3022
      %v3024 = vshrl.u32 %v2879, 16
      %v3026 = vrot.slane %v3024, 4
      %v3027 = vor.u32 %v3026, %v3022
      %v3028 = vrot.slane %v3027, 4
      %v3030 = vshll.u32 %v2880, 16
      %v3032 = vrot.slane %v3030, 5
      %v3033 = vsel %vm1105, %v3028, %v3032
      %v3035 = vshrl.u32 %v2881, 16
      %v3037 = vrot.slane %v3035, 4
      %v3038 = vshll.u32 %v2881, 16
      %v3040 = vrot.slane %v3038, 5
      %v3041 = vor.u32 %v3037, %v3040
      %v3042 = vrot.slane %v3041, 4
      %v3044 = vshll.u32 %v2882, 16
      %v3046 = vrot.slane %v3044, 5
      %v3047 = vsel %vm1105, %v3042, %v3046
      %v3048 = vshrl.u32 %v2882, 16
      %v3050 = vrot.slane %v3048, 4
      %v3051 = vor.u32 %v3050, %v3046
      %v3052 = vrot.slane %v3051, 4
      %v3054 = vshll.u32 %v2883, 16
      %v3056 = vrot.slane %v3054, 5
      %v3057 = vsel %vm1105, %v3052, %v3056
      %v3059 = vshrl.u32 %v2884, 16
      %v3061 = vrot.slane %v3059, 4
      %v3062 = vshll.u32 %v2884, 16
      %v3064 = vrot.slane %v3062, 5
      %v3065 = vor.u32 %v3061, %v3064
      %v3066 = vrot.slane %v3065, 4
      %v3068 = vshll.u32 %v2885, 16
      %v3070 = vrot.slane %v3068, 5
      %v3071 = vsel %vm1105, %v3066, %v3070
      %v3072 = vshrl.u32 %v2885, 16
      %v3074 = vrot.slane %v3072, 4
      %v3075 = vor.u32 %v3074, %v3070
      %v3076 = vrot.slane %v3075, 4
      %v3078 = vshll.u32 %v2886, 16
      %v3080 = vrot.slane %v3078, 5
      %v3081 = vsel %vm1105, %v3076, %v3080
      %v3083 = vshrl.u32 %v2887, 16
      %v3085 = vrot.slane %v3083, 4
      %v3086 = vshll.u32 %v2887, 16
      %v3088 = vrot.slane %v3086, 5
      %v3089 = vor.u32 %v3085, %v3088
      %v3090 = vrot.slane %v3089, 4
      %v3092 = vshll.u32 %v2888, 16
      %v3094 = vrot.slane %v3092, 5
      %v3095 = vsel %vm1105, %v3090, %v3094
      %v3096 = vshrl.u32 %v2888, 16
      %v3098 = vrot.slane %v3096, 4
      %v3099 = vor.u32 %v3098, %v3094
      %v3100 = vrot.slane %v3099, 4
      %v3102 = vshll.u32 %v2889, 16
      %v3104 = vrot.slane %v3102, 5
      %v3105 = vsel %vm1105, %v3100, %v3104
      %v3107 = vshrl.u32 %v2890, 16
      %v3109 = vrot.slane %v3107, 4
      %v3110 = vshll.u32 %v2890, 16
      %v3112 = vrot.slane %v3110, 5
      %v3113 = vor.u32 %v3109, %v3112
      %v3114 = vrot.slane %v3113, 4
      %v3116 = vshll.u32 %v2891, 16
      %v3118 = vrot.slane %v3116, 5
      %v3119 = vsel %vm1105, %v3114, %v3118
      %v3120 = vshrl.u32 %v2891, 16
      %v3122 = vrot.slane %v3120, 4
      %v3123 = vor.u32 %v3122, %v3118
      %v3124 = vrot.slane %v3123, 4
      %v3126 = vshll.u32 %v2892, 16
      %v3128 = vrot.slane %v3126, 5
      %v3129 = vsel %vm1105, %v3124, %v3128
      %v3131 = vshrl.u32 %v2893, 16
      %v3133 = vrot.slane %v3131, 4
      %v3134 = vshll.u32 %v2893, 16
      %v3136 = vrot.slane %v3134, 5
      %v3137 = vor.u32 %v3133, %v3136
      %v3138 = vrot.slane %v3137, 4
      %v3140 = vshll.u32 %v2894, 16
      %v3142 = vrot.slane %v3140, 5
      %v3143 = vsel %vm1105, %v3138, %v3142
      %v3144 = vshrl.u32 %v2894, 16
      %v3146 = vrot.slane %v3144, 4
      %v3147 = vor.u32 %v3146, %v3142
      %v3148 = vrot.slane %v3147, 4
      %v3150 = vshll.u32 %v2895, 16
      %v3152 = vrot.slane %v3150, 5
      %v3153 = vsel %vm1105, %v3148, %v3152
      %v3155 = vshrl.u32 %v2896, 16
      %v3157 = vrot.slane %v3155, 4
      %v3158 = vshll.u32 %v2896, 16
      %v3160 = vrot.slane %v3158, 5
      %v3161 = vor.u32 %v3157, %v3160
      %v3162 = vrot.slane %v3161, 4
      %v3164 = vshll.u32 %v2897, 16
      %v3166 = vrot.slane %v3164, 5
      %v3167 = vsel %vm1105, %v3162, %v3166
      %v3168 = vshrl.u32 %v2897, 16
      %v3170 = vrot.slane %v3168, 4
      %v3171 = vor.u32 %v3170, %v3166
      %v3172 = vrot.slane %v3171, 4
      %v3174 = vshll.u32 %v2898, 16
      %v3176 = vrot.slane %v3174, 5
      %v3177 = vsel %vm1105, %v3172, %v3176
      %v3179 = vshrl.u32 %v2899, 16
      %v3181 = vrot.slane %v3179, 4
      %v3182 = vshll.u32 %v2899, 16
      %v3184 = vrot.slane %v3182, 5
      %v3185 = vor.u32 %v3181, %v3184
      %v3186 = vrot.slane %v3185, 4
      %v3188 = vshll.u32 %v2900, 16
      %v3190 = vrot.slane %v3188, 5
      %v3191 = vsel %vm1105, %v3186, %v3190
      %v3192 = vshrl.u32 %v2900, 16
      %v3194 = vrot.slane %v3192, 4
      %v3195 = vor.u32 %v3194, %v3190
      %v3196 = vrot.slane %v3195, 4
      %v3198 = vshll.u32 %v2901, 16
      %v3200 = vrot.slane %v3198, 5
      %v3201 = vsel %vm1105, %v3196, %v3200
      %v3203 = vshrl.u32 %v2902, 16
      %v3205 = vrot.slane %v3203, 4
      %v3206 = vshll.u32 %v2902, 16
      %v3208 = vrot.slane %v3206, 5
      %v3209 = vor.u32 %v3205, %v3208
      %v3210 = vrot.slane %v3209, 4
      %v3212 = vshll.u32 %v2903, 16
      %v3214 = vrot.slane %v3212, 5
      %v3215 = vsel %vm1105, %v3210, %v3214
      %v3216 = vshrl.u32 %v2903, 16
      %v3218 = vrot.slane %v3216, 4
      %v3219 = vor.u32 %v3218, %v3214
      %v3220 = vrot.slane %v3219, 4
      %v3222 = vshll.u32 %v2904, 16
      %v3224 = vrot.slane %v3222, 5
      %v3225 = vsel %vm1105, %v3220, %v3224
      %v3227 = vshrl.u32 %v2905, 16
      %v3229 = vrot.slane %v3227, 4
      %v3230 = vshll.u32 %v2905, 16
      %v3232 = vrot.slane %v3230, 5
      %v3233 = vor.u32 %v3229, %v3232
      %v3234 = vrot.slane %v3233, 4
      %v3236 = vshll.u32 %v2906, 16
      %v3238 = vrot.slane %v3236, 5
      %v3239 = vsel %vm1105, %v3234, %v3238
      %v3240 = vshrl.u32 %v2906, 16
      %v3242 = vrot.slane %v3240, 4
      %v3243 = vor.u32 %v3242, %v3238
      %v3244 = vrot.slane %v3243, 4
      %v3246 = vshll.u32 %v2907, 16
      %v3248 = vrot.slane %v3246, 5
      %v3249 = vsel %vm1105, %v3244, %v3248
      %v3251 = vshrl.u32 %v2908, 16
      %v3253 = vrot.slane %v3251, 4
      %v3254 = vshll.u32 %v2908, 16
      %v3256 = vrot.slane %v3254, 5
      %v3257 = vor.u32 %v3253, %v3256
      %v3258 = vrot.slane %v3257, 4
      %v3260 = vshll.u32 %v2909, 16
      %v3262 = vrot.slane %v3260, 5
      %v3263 = vsel %vm1105, %v3258, %v3262
      %v3264 = vshrl.u32 %v2909, 16
      %v3266 = vrot.slane %v3264, 4
      %v3267 = vor.u32 %v3266, %v3262
      %v3268 = vrot.slane %v3267, 4
      %v3270 = vshll.u32 %v2910, 16
      %v3272 = vrot.slane %v3270, 5
      %v3273 = vsel %vm1105, %v3268, %v3272
      %v3275 = vshrl.u32 %v2911, 16
      %v3277 = vrot.slane %v3275, 4
      %v3278 = vshll.u32 %v2911, 16
      %v3280 = vrot.slane %v3278, 5
      %v3281 = vor.u32 %v3277, %v3280
      %v3282 = vrot.slane %v3281, 4
      %v3284 = vshll.u32 %v2912, 16
      %v3286 = vrot.slane %v3284, 5
      %v3287 = vsel %vm1105, %v3282, %v3286
      %v3288 = vshrl.u32 %v2912, 16
      %v3290 = vrot.slane %v3288, 4
      %v3291 = vor.u32 %v3290, %v3286
      %v3292 = vrot.slane %v3291, 4
      %v3294 = vshll.u32 %v2913, 16
      %v3296 = vrot.slane %v3294, 5
      %v3297 = vsel %vm1105, %v3292, %v3296
      %v3298 = vld [vmem:[%s1 + $0x8] sm:$0x3]
      %v3299 = vunpack.c.l.b16 %v2927
      %v3300 = vunpack.c.l.b16 %v2937
      %v3301 = vunpack.c.l.b16 %v2951
      %v3302 = vunpack.c.l.b16 %v2961
      %v3303 = vunpack.c.l.b16 %v2975
      %v3304 = vunpack.c.l.b16 %v2985
      %v3305 = vunpack.c.l.b16 %v2999
      %v3306 = vunpack.c.l.b16 %v3009
      %v3307 = vunpack.c.l.b16 %v3023
      %v3308 = vunpack.c.l.b16 %v3033
      %v3309 = vunpack.c.l.b16 %v3047
      %v3310 = vunpack.c.l.b16 %v3057
      %v3311 = vunpack.c.l.b16 %v3071
      %v3312 = vunpack.c.l.b16 %v3081
      %v3313 = vunpack.c.l.b16 %v3095
      %v3314 = vunpack.c.l.b16 %v3105
      %v3315 = vunpack.c.l.b16 %v3119
      %v3316 = vunpack.c.l.b16 %v3129
      %v3317 = vunpack.c.l.b16 %v3143
      %v3318 = vunpack.c.l.b16 %v3153
      %v3319 = vunpack.c.l.b16 %v3167
      %v3320 = vunpack.c.l.b16 %v3177
      %v3321 = vunpack.c.l.b16 %v3191
      %v3322 = vunpack.c.l.b16 %v3201
      %v3323 = vunpack.c.l.b16 %v3215
      %v3324 = vunpack.c.l.b16 %v3225
      %v3325 = vunpack.c.l.b16 %v3239
      %v3326 = vunpack.c.l.b16 %v3249
      %v3327 = vunpack.c.l.b16 %v3263
      %v3328 = vunpack.c.l.b16 %v3273
      %v3329 = vunpack.c.l.b16 %v3287
      %v3330 = vunpack.c.l.b16 %v3297
      %v3331 = vpack.c.b16 %v3300, %v3299
      %v3332 = vpack.c.b16 %v3302, %v3301
      %v3333 = vpack.c.b16 %v3304, %v3303
      %v3334 = vpack.c.b16 %v3306, %v3305
      %v3335 = vpack.c.b16 %v3308, %v3307
      %v3336 = vpack.c.b16 %v3310, %v3309
      %v3337 = vpack.c.b16 %v3312, %v3311
      %v3338 = vpack.c.b16 %v3314, %v3313
      %v3339 = vpack.c.b16 %v3316, %v3315
      %v3340 = vpack.c.b16 %v3318, %v3317
      %v3341 = vpack.c.b16 %v3320, %v3319
      %v3342 = vpack.c.b16 %v3322, %v3321
      %v3343 = vpack.c.b16 %v3324, %v3323
      %v3344 = vpack.c.b16 %v3326, %v3325
      %v3345 = vpack.c.b16 %v3328, %v3327
      %v3346 = vpack.c.b16 %v3330, %v3329
      %v3348 = vsel %vm1543, %v3331, 0
      %v3351 = vsel %vm1543, %v3332, 0
      %v3354 = vsel %vm1543, %v3333, 0
      %v3357 = vsel %vm1543, %v3334, 0
      %v3360 = vsel %vm1543, %v3335, 0
      %v3363 = vsel %vm1543, %v3336, 0
      %v3366 = vsel %vm1543, %v3337, 0
      %v3369 = vsel %vm1543, %v3338, 0
      %v3372 = vsel %vm1543, %v3339, 0
      %v3375 = vsel %vm1543, %v3340, 0
      %v3378 = vsel %vm1543, %v3341, 0
      %v3381 = vsel %vm1543, %v3342, 0
      %v3384 = vsel %vm1543, %v3343, 0
      %v3387 = vsel %vm1543, %v3344, 0
      %v3390 = vsel %vm1543, %v3345, 0
      %v3393 = vsel %vm1543, %v3346, 0
      %v3396 = vsel %vm1592, %v3298, 0
      %3398 = vmatprep.subr.bf16.mxu0 0
      %3399 = vmatpush1.bf16.msra.mxu0 %v3396
      %3400 = vmatprep.subr.bf16.mxu0 0
      %3401 = vmatpush1.bf16.msra.mxu0 0
      %3402 = vmatprep.subr.bf16.mxu0 0
      %3403 = vmatpush1.bf16.msra.mxu0 0
      %3404 = vmatprep.subr.bf16.mxu0 0
      %3405 = vmatpush1.bf16.msra.mxu0 0
      %3406 = vmatprep.subr.bf16.mxu0 0
      %3407 = vmatpush1.bf16.msra.mxu0 0
      %3408 = vmatprep.subr.bf16.mxu0 0
      %3409 = vmatpush1.bf16.msra.mxu0 0
      %3410 = vmatprep.subr.bf16.mxu0 0
      %3411 = vmatpush1.bf16.msra.mxu0 0
      %3412 = vmatprep.subr.bf16.mxu0 0
      %3413 = vmatpush1.bf16.msra.mxu0 0
      %3414 = vmatprep.subr.bf16.mxu0 0
      %3415 = vmatpush1.bf16.msra.mxu0 0
      %3416 = vmatprep.subr.bf16.mxu0 0
      %3417 = vmatpush1.bf16.msra.mxu0 0
      %3418 = vmatprep.subr.bf16.mxu0 0
      %3419 = vmatpush1.bf16.msra.mxu0 0
      %3420 = vmatprep.subr.bf16.mxu0 0
      %3421 = vmatpush1.bf16.msra.mxu0 0
      %3422 = vmatprep.subr.bf16.mxu0 0
      %3423 = vmatpush1.bf16.msra.mxu0 0
      %3424 = vmatprep.subr.bf16.mxu0 0
      %3425 = vmatpush1.bf16.msra.mxu0 0
      %3426 = vmatprep.subr.bf16.mxu0 0
      %3427 = vmatpush1.bf16.msra.mxu0 0
      %3428 = vmatprep.subr.bf16.mxu0 0
      %3429 = vmatpush1.bf16.msra.mxu0 0
      %3430 = vmatprep.mubr.bf16.mxu0 0
      %3431 = vmatmul.mubr.bf16.gmra.mrb[0].mxu0 %v3348
      %v3432 = vpop.f32.mrb[0].mxu0
      %v3433 = vadd.f32 0.0, %v3432
      %v3434 = vpop.f32.mrb[0].mxu0
      %v3435 = vpop.f32.mrb[0].mxu0
      %v3436 = vadd.f32 0.0, %v3435
      %v3437 = vpop.f32.mrb[0].mxu0
      %3438 = vmatprep.mubr.bf16.mxu0 0
      %3439 = vmatmul.mubr.bf16.gmra.mrb[0].mxu0 %v3351
      %v3440 = vpop.f32.mrb[0].mxu0
      %v3441 = vadd.f32 0.0, %v3440
      %v3442 = vpop.f32.mrb[0].mxu0
      %v3443 = vpop.f32.mrb[0].mxu0
      %v3444 = vadd.f32 0.0, %v3443
      %v3445 = vpop.f32.mrb[0].mxu0
      %3446 = vmatprep.mubr.bf16.mxu0 0
      %3447 = vmatmul.mubr.bf16.gmra.mrb[0].mxu0 %v3354
      %v3448 = vpop.f32.mrb[0].mxu0
      %v3449 = vadd.f32 0.0, %v3448
      %v3450 = vpop.f32.mrb[0].mxu0
      %v3451 = vpop.f32.mrb[0].mxu0
      %v3452 = vadd.f32 0.0, %v3451
      %v3453 = vpop.f32.mrb[0].mxu0
      %3454 = vmatprep.mubr.bf16.mxu0 0
      %3455 = vmatmul.mubr.bf16.gmra.mrb[0].mxu0 %v3357
      %v3456 = vpop.f32.mrb[0].mxu0
      %v3457 = vadd.f32 0.0, %v3456
      %v3458 = vpop.f32.mrb[0].mxu0
      %v3459 = vpop.f32.mrb[0].mxu0
      %v3460 = vadd.f32 0.0, %v3459
      %v3461 = vpop.f32.mrb[0].mxu0
      %3462 = vmatprep.mubr.bf16.mxu0 0
      %3463 = vmatmul.mubr.bf16.gmra.mrb[0].mxu0 %v3360
      %v3464 = vpop.f32.mrb[0].mxu0
      %v3465 = vadd.f32 0.0, %v3464
      %v3466 = vpop.f32.mrb[0].mxu0
      %v3467 = vpop.f32.mrb[0].mxu0
      %v3468 = vadd.f32 0.0, %v3467
      %v3469 = vpop.f32.mrb[0].mxu0
      %3470 = vmatprep.mubr.bf16.mxu0 0
      %3471 = vmatmul.mubr.bf16.gmra.mrb[0].mxu0 %v3363
      %v3472 = vpop.f32.mrb[0].mxu0
      %v3473 = vadd.f32 0.0, %v3472
      %v3474 = vpop.f32.mrb[0].mxu0
      %v3475 = vpop.f32.mrb[0].mxu0
      %v3476 = vadd.f32 0.0, %v3475
      %v3477 = vpop.f32.mrb[0].mxu0
      %3478 = vmatprep.mubr.bf16.mxu0 0
      %3479 = vmatmul.mubr.bf16.gmra.mrb[0].mxu0 %v3366
      %v3480 = vpop.f32.mrb[0].mxu0
      %v3481 = vadd.f32 0.0, %v3480
      %v3482 = vpop.f32.mrb[0].mxu0
      %v3483 = vpop.f32.mrb[0].mxu0
      %v3484 = vadd.f32 0.0, %v3483
      %v3485 = vpop.f32.mrb[0].mxu0
      %3486 = vmatprep.mubr.bf16.mxu0 0
      %3487 = vmatmul.mubr.bf16.gmra.mrb[0].mxu0 %v3369
      %v3488 = vpop.f32.mrb[0].mxu0
      %v3489 = vadd.f32 0.0, %v3488
      %v3490 = vpop.f32.mrb[0].mxu0
      %v3491 = vpop.f32.mrb[0].mxu0
      %v3492 = vadd.f32 0.0, %v3491
      %v3493 = vpop.f32.mrb[0].mxu0
      %3494 = vmatprep.mubr.bf16.mxu0 0
      %3495 = vmatmul.mubr.bf16.gmra.mrb[0].mxu0 %v3372
      %v3496 = vpop.f32.mrb[0].mxu0
      %v3497 = vadd.f32 0.0, %v3496
      %v3498 = vpop.f32.mrb[0].mxu0
      %v3499 = vpop.f32.mrb[0].mxu0
      %v3500 = vadd.f32 0.0, %v3499
      %v3501 = vpop.f32.mrb[0].mxu0
      %3502 = vmatprep.mubr.bf16.mxu0 0
      %3503 = vmatmul.mubr.bf16.gmra.mrb[0].mxu0 %v3375
      %v3504 = vpop.f32.mrb[0].mxu0
      %v3505 = vadd.f32 0.0, %v3504
      %v3506 = vpop.f32.mrb[0].mxu0
      %v3507 = vpop.f32.mrb[0].mxu0
      %v3508 = vadd.f32 0.0, %v3507
      %v3509 = vpop.f32.mrb[0].mxu0
      %3510 = vmatprep.mubr.bf16.mxu0 0
      %3511 = vmatmul.mubr.bf16.gmra.mrb[0].mxu0 %v3378
      %v3512 = vpop.f32.mrb[0].mxu0
      %v3513 = vadd.f32 0.0, %v3512
      %v3514 = vpop.f32.mrb[0].mxu0
      %v3515 = vpop.f32.mrb[0].mxu0
      %v3516 = vadd.f32 0.0, %v3515
      %v3517 = vpop.f32.mrb[0].mxu0
      %3518 = vmatprep.mubr.bf16.mxu0 0
      %3519 = vmatmul.mubr.bf16.gmra.mrb[0].mxu0 %v3381
      %v3520 = vpop.f32.mrb[0].mxu0
      %v3521 = vadd.f32 0.0, %v3520
      %v3522 = vpop.f32.mrb[0].mxu0
      %v3523 = vpop.f32.mrb[0].mxu0
      %v3524 = vadd.f32 0.0, %v3523
      %v3525 = vpop.f32.mrb[0].mxu0
      %3526 = vmatprep.mubr.bf16.mxu0 0
      %3527 = vmatmul.mubr.bf16.gmra.mrb[0].mxu0 %v3384
      %v3528 = vpop.f32.mrb[0].mxu0
      %v3529 = vadd.f32 0.0, %v3528
      %v3530 = vpop.f32.mrb[0].mxu0
      %v3531 = vpop.f32.mrb[0].mxu0
      %v3532 = vadd.f32 0.0, %v3531
      %v3533 = vpop.f32.mrb[0].mxu0
      %3534 = vmatprep.mubr.bf16.mxu0 0
      %3535 = vmatmul.mubr.bf16.gmra.mrb[0].mxu0 %v3387
      %v3536 = vpop.f32.mrb[0].mxu0
      %v3537 = vadd.f32 0.0, %v3536
      %v3538 = vpop.f32.mrb[0].mxu0
      %v3539 = vpop.f32.mrb[0].mxu0
      %v3540 = vadd.f32 0.0, %v3539
      %v3541 = vpop.f32.mrb[0].mxu0
      %3542 = vmatprep.mubr.bf16.mxu0 0
      %3543 = vmatmul.mubr.bf16.gmra.mrb[0].mxu0 %v3390
      %v3544 = vpop.f32.mrb[0].mxu0
      %v3545 = vadd.f32 0.0, %v3544
      %v3546 = vpop.f32.mrb[0].mxu0
      %v3547 = vpop.f32.mrb[0].mxu0
      %v3548 = vadd.f32 0.0, %v3547
      %v3549 = vpop.f32.mrb[0].mxu0
      %3550 = vmatprep.mubr.bf16.mxu0 0
      %3551 = vmatmul.mubr.bf16.gmra.mrb[0].mxu0 %v3393
      %v3552 = vpop.f32.mrb[0].mxu0
      %v3553 = vadd.f32 0.0, %v3552
      %v3554 = vpop.f32.mrb[0].mxu0
      %v3555 = vpop.f32.mrb[0].mxu0
      %v3556 = vadd.f32 0.0, %v3555
      %v3557 = vpop.f32.mrb[0].mxu0
      %3558 = vdwg.mxu0
      %v3559 = vadd.f32 %v2834, %v3433
      %v3560 = vadd.f32 %v2835, %v3436
      %v3561 = vadd.f32 %v2836, %v3441
      %v3562 = vadd.f32 %v2837, %v3444
      %v3563 = vadd.f32 %v2838, %v3449
      %v3564 = vadd.f32 %v2839, %v3452
      %v3565 = vadd.f32 %v2840, %v3457
      %v3566 = vadd.f32 %v2841, %v3460
      %v3567 = vadd.f32 %v2842, %v3465
      %v3568 = vadd.f32 %v2843, %v3468
      %v3569 = vadd.f32 %v2844, %v3473
      %v3570 = vadd.f32 %v2845, %v3476
      %v3571 = vadd.f32 %v2846, %v3481
      %v3572 = vadd.f32 %v2847, %v3484
      %v3573 = vadd.f32 %v2848, %v3489
      %v3574 = vadd.f32 %v2849, %v3492
      %v3575 = vadd.f32 %v2850, %v3497
      %v3576 = vadd.f32 %v2851, %v3500
      %v3577 = vadd.f32 %v2852, %v3505
      %v3578 = vadd.f32 %v2853, %v3508
      %v3579 = vadd.f32 %v2854, %v3513
      %v3580 = vadd.f32 %v2855, %v3516
      %v3581 = vadd.f32 %v2856, %v3521
      %v3582 = vadd.f32 %v2857, %v3524
      %v3583 = vadd.f32 %v2858, %v3529
      %v3584 = vadd.f32 %v2859, %v3532
      %v3585 = vadd.f32 %v2860, %v3537
      %v3586 = vadd.f32 %v2861, %v3540
      %v3587 = vadd.f32 %v2862, %v3545
      %v3588 = vadd.f32 %v2863, %v3548
      %v3589 = vadd.f32 %v2864, %v3553
      %v3590 = vadd.f32 %v2865, %v3556
      %v3591 = vld [vmem:[%s623] sm:$0xe]
      %v3592 = vld [vmem:[%s623 + $0xc] sm:$0xe]
      %v3593 = vld [vmem:[%s623 + $0x18] sm:$0xe]
      %v3594 = vld [vmem:[%s623 + $0x24] sm:$0xe]
      %v3595 = vld [vmem:[%s623 + $0x30] sm:$0xe]
      %v3596 = vld [vmem:[%s623 + $0x3c] sm:$0xe]
      %v3597 = vld [vmem:[%s623 + $0x48] sm:$0xe]
      %v3598 = vld [vmem:[%s623 + $0x54] sm:$0xe]
      %v3599 = vld [vmem:[%s623 + $0x60] sm:$0xe]
      %v3600 = vld [vmem:[%s623 + $0x6c] sm:$0xe]
      %v3601 = vld [vmem:[%s623 + $0x78] sm:$0xe]
      %v3602 = vld [vmem:[%s623 + $0x84] sm:$0xe]
      %v3603 = vld [vmem:[%s623 + $0x90] sm:$0xe]
      %v3604 = vld [vmem:[%s623 + $0x9c] sm:$0xe]
      %v3605 = vld [vmem:[%s623 + $0xa8] sm:$0xe]
      %v3606 = vld [vmem:[%s623 + $0xb4] sm:$0xe]
      %v3655 = vrot.slane %v3591, 5
      %v3656 = vrot.slane %v3655, 4
      %v3657 = vrot.slane %v2867, 5
      %v3658 = vsel %vm2099, %v3656, %v3657
      %v3659 = vrot.slane %v3657, 4
      %v3660 = vrot.slane %v2868, 5
      %v3661 = vsel %vm2099, %v3659, %v3660
      %v3662 = vrot.slane %v3592, 5
      %v3663 = vrot.slane %v3662, 4
      %v3664 = vrot.slane %v2870, 5
      %v3665 = vsel %vm2099, %v3663, %v3664
      %v3666 = vrot.slane %v3664, 4
      %v3667 = vrot.slane %v2871, 5
      %v3668 = vsel %vm2099, %v3666, %v3667
      %v3669 = vrot.slane %v3593, 5
      %v3670 = vrot.slane %v3669, 4
      %v3671 = vrot.slane %v2873, 5
      %v3672 = vsel %vm2099, %v3670, %v3671
      %v3673 = vrot.slane %v3671, 4
      %v3674 = vrot.slane %v2874, 5
      %v3675 = vsel %vm2099, %v3673, %v3674
      %v3676 = vrot.slane %v3594, 5
      %v3677 = vrot.slane %v3676, 4
      %v3678 = vrot.slane %v2876, 5
      %v3679 = vsel %vm2099, %v3677, %v3678
      %v3680 = vrot.slane %v3678, 4
      %v3681 = vrot.slane %v2877, 5
      %v3682 = vsel %vm2099, %v3680, %v3681
      %v3683 = vrot.slane %v3595, 5
      %v3684 = vrot.slane %v3683, 4
      %v3685 = vrot.slane %v2879, 5
      %v3686 = vsel %vm2099, %v3684, %v3685
      %v3687 = vrot.slane %v3685, 4
      %v3688 = vrot.slane %v2880, 5
      %v3689 = vsel %vm2099, %v3687, %v3688
      %v3690 = vrot.slane %v3596, 5
      %v3691 = vrot.slane %v3690, 4
      %v3692 = vrot.slane %v2882, 5
      %v3693 = vsel %vm2099, %v3691, %v3692
      %v3694 = vrot.slane %v3692, 4
      %v3695 = vrot.slane %v2883, 5
      %v3696 = vsel %vm2099, %v3694, %v3695
      %v3697 = vrot.slane %v3597, 5
      %v3698 = vrot.slane %v3697, 4
      %v3699 = vrot.slane %v2885, 5
      %v3700 = vsel %vm2099, %v3698, %v3699
      %v3701 = vrot.slane %v3699, 4
      %v3702 = vrot.slane %v2886, 5
      %v3703 = vsel %vm2099, %v3701, %v3702
      %v3704 = vrot.slane %v3598, 5
      %v3705 = vrot.slane %v3704, 4
      %v3706 = vrot.slane %v2888, 5
      %v3707 = vsel %vm2099, %v3705, %v3706
      %v3708 = vrot.slane %v3706, 4
      %v3709 = vrot.slane %v2889, 5
      %v3710 = vsel %vm2099, %v3708, %v3709
      %v3711 = vrot.slane %v3599, 5
      %v3712 = vrot.slane %v3711, 4
      %v3713 = vrot.slane %v2891, 5
      %v3714 = vsel %vm2099, %v3712, %v3713
      %v3715 = vrot.slane %v3713, 4
      %v3716 = vrot.slane %v2892, 5
      %v3717 = vsel %vm2099, %v3715, %v3716
      %v3718 = vrot.slane %v3600, 5
      %v3719 = vrot.slane %v3718, 4
      %v3720 = vrot.slane %v2894, 5
      %v3721 = vsel %vm2099, %v3719, %v3720
      %v3722 = vrot.slane %v3720, 4
      %v3723 = vrot.slane %v2895, 5
      %v3724 = vsel %vm2099, %v3722, %v3723
      %v3725 = vrot.slane %v3601, 5
      %v3726 = vrot.slane %v3725, 4
      %v3727 = vrot.slane %v2897, 5
      %v3728 = vsel %vm2099, %v3726, %v3727
      %v3729 = vrot.slane %v3727, 4
      %v3730 = vrot.slane %v2898, 5
      %v3731 = vsel %vm2099, %v3729, %v3730
      %v3732 = vrot.slane %v3602, 5
      %v3733 = vrot.slane %v3732, 4
      %v3734 = vrot.slane %v2900, 5
      %v3735 = vsel %vm2099, %v3733, %v3734
      %v3736 = vrot.slane %v3734, 4
      %v3737 = vrot.slane %v2901, 5
      %v3738 = vsel %vm2099, %v3736, %v3737
      %v3739 = vrot.slane %v3603, 5
      %v3740 = vrot.slane %v3739, 4
      %v3741 = vrot.slane %v2903, 5
      %v3742 = vsel %vm2099, %v3740, %v3741
      %v3743 = vrot.slane %v3741, 4
      %v3744 = vrot.slane %v2904, 5
      %v3745 = vsel %vm2099, %v3743, %v3744
      %v3746 = vrot.slane %v3604, 5
      %v3747 = vrot.slane %v3746, 4
      %v3748 = vrot.slane %v2906, 5
      %v3749 = vsel %vm2099, %v3747, %v3748
      %v3750 = vrot.slane %v3748, 4
      %v3751 = vrot.slane %v2907, 5
      %v3752 = vsel %vm2099, %v3750, %v3751
      %v3753 = vrot.slane %v3605, 5
      %v3754 = vrot.slane %v3753, 4
      %v3755 = vrot.slane %v2909, 5
      %v3756 = vsel %vm2099, %v3754, %v3755
      %v3757 = vrot.slane %v3755, 4
      %v3758 = vrot.slane %v2910, 5
      %v3759 = vsel %vm2099, %v3757, %v3758
      %v3760 = vrot.slane %v3606, 5
      %v3761 = vrot.slane %v3760, 4
      %v3762 = vrot.slane %v2912, 5
      %v3763 = vsel %vm2099, %v3761, %v3762
      %v3764 = vrot.slane %v3762, 4
      %v3765 = vrot.slane %v2913, 5
      %v3766 = vsel %vm2099, %v3764, %v3765
      %v3767 = vld [vmem:[%s1 + $0x8] sm:$0xc]
      %v3768 = vunpack.c.l.b16 %v3658
      %v3769 = vunpack.c.l.b16 %v3661
      %v3770 = vunpack.c.l.b16 %v3665
      %v3771 = vunpack.c.l.b16 %v3668
      %v3772 = vunpack.c.l.b16 %v3672
      %v3773 = vunpack.c.l.b16 %v3675
      %v3774 = vunpack.c.l.b16 %v3679
      %v3775 = vunpack.c.l.b16 %v3682
      %v3776 = vunpack.c.l.b16 %v3686
      %v3777 = vunpack.c.l.b16 %v3689
      %v3778 = vunpack.c.l.b16 %v3693
      %v3779 = vunpack.c.l.b16 %v3696
      %v3780 = vunpack.c.l.b16 %v3700
      %v3781 = vunpack.c.l.b16 %v3703
      %v3782 = vunpack.c.l.b16 %v3707
      %v3783 = vunpack.c.l.b16 %v3710
      %v3784 = vunpack.c.l.b16 %v3714
      %v3785 = vunpack.c.l.b16 %v3717
      %v3786 = vunpack.c.l.b16 %v3721
      %v3787 = vunpack.c.l.b16 %v3724
      %v3788 = vunpack.c.l.b16 %v3728
      %v3789 = vunpack.c.l.b16 %v3731
      %v3790 = vunpack.c.l.b16 %v3735
      %v3791 = vunpack.c.l.b16 %v3738
      %v3792 = vunpack.c.l.b16 %v3742
      %v3793 = vunpack.c.l.b16 %v3745
      %v3794 = vunpack.c.l.b16 %v3749
      %v3795 = vunpack.c.l.b16 %v3752
      %v3796 = vunpack.c.l.b16 %v3756
      %v3797 = vunpack.c.l.b16 %v3759
      %v3798 = vunpack.c.l.b16 %v3763
      %v3799 = vunpack.c.l.b16 %v3766
      %v3800 = vpack.c.b16 %v3769, %v3768
      %v3801 = vpack.c.b16 %v3771, %v3770
      %v3802 = vpack.c.b16 %v3773, %v3772
      %v3803 = vpack.c.b16 %v3775, %v3774
      %v3804 = vpack.c.b16 %v3777, %v3776
      %v3805 = vpack.c.b16 %v3779, %v3778
      %v3806 = vpack.c.b16 %v3781, %v3780
      %v3807 = vpack.c.b16 %v3783, %v3782
      %v3808 = vpack.c.b16 %v3785, %v3784
      %v3809 = vpack.c.b16 %v3787, %v3786
      %v3810 = vpack.c.b16 %v3789, %v3788
      %v3811 = vpack.c.b16 %v3791, %v3790
      %v3812 = vpack.c.b16 %v3793, %v3792
      %v3813 = vpack.c.b16 %v3795, %v3794
      %v3814 = vpack.c.b16 %v3797, %v3796
      %v3815 = vpack.c.b16 %v3799, %v3798
      %v3817 = vunpack.c.l.b16 %v3767
      %v3818 = vpack.c.b16 %v3817, %v3817
      %v3819 = vrot.slane %v3818, 2
      %v3821 = vsel %vm1543, %v3800, 0
      %v3824 = vsel %vm1543, %v3801, 0
      %v3827 = vsel %vm1543, %v3802, 0
      %v3830 = vsel %vm1543, %v3803, 0
      %v3833 = vsel %vm1543, %v3804, 0
      %v3836 = vsel %vm1543, %v3805, 0
      %v3839 = vsel %vm1543, %v3806, 0
      %v3842 = vsel %vm1543, %v3807, 0
      %v3845 = vsel %vm1543, %v3808, 0
      %v3848 = vsel %vm1543, %v3809, 0
      %v3851 = vsel %vm1543, %v3810, 0
      %v3854 = vsel %vm1543, %v3811, 0
      %v3857 = vsel %vm1543, %v3812, 0
      %v3860 = vsel %vm1543, %v3813, 0
      %v3863 = vsel %vm1543, %v3814, 0
      %v3866 = vsel %vm1543, %v3815, 0
      %v3869 = vsel %vm1592, %v3819, 0
      %3871 = vmatprep.subr.bf16.mxu0 0
      %3872 = vmatpush1.bf16.msra.mxu0 %v3869
      %3873 = vmatprep.subr.bf16.mxu0 0
      %3874 = vmatpush1.bf16.msra.mxu0 0
      %3875 = vmatprep.subr.bf16.mxu0 0
      %3876 = vmatpush1.bf16.msra.mxu0 0
      %3877 = vmatprep.subr.bf16.mxu0 0
      %3878 = vmatpush1.bf16.msra.mxu0 0
      %3879 = vmatprep.subr.bf16.mxu0 0
      %3880 = vmatpush1.bf16.msra.mxu0 0
      %3881 = vmatprep.subr.bf16.mxu0 0
      %3882 = vmatpush1.bf16.msra.mxu0 0
      %3883 = vmatprep.subr.bf16.mxu0 0
      %3884 = vmatpush1.bf16.msra.mxu0 0
      %3885 = vmatprep.subr.bf16.mxu0 0
      %3886 = vmatpush1.bf16.msra.mxu0 0
      %3887 = vmatprep.subr.bf16.mxu0 0
      %3888 = vmatpush1.bf16.msra.mxu0 0
      %3889 = vmatprep.subr.bf16.mxu0 0
      %3890 = vmatpush1.bf16.msra.mxu0 0
      %3891 = vmatprep.subr.bf16.mxu0 0
      %3892 = vmatpush1.bf16.msra.mxu0 0
      %3893 = vmatprep.subr.bf16.mxu0 0
      %3894 = vmatpush1.bf16.msra.mxu0 0
      %3895 = vmatprep.subr.bf16.mxu0 0
      %3896 = vmatpush1.bf16.msra.mxu0 0
      %3897 = vmatprep.subr.bf16.mxu0 0
      %3898 = vmatpush1.bf16.msra.mxu0 0
      %3899 = vmatprep.subr.bf16.mxu0 0
      %3900 = vmatpush1.bf16.msra.mxu0 0
      %3901 = vmatprep.subr.bf16.mxu0 0
      %3902 = vmatpush1.bf16.msra.mxu0 0
      %3903 = vmatprep.mubr.bf16.mxu0 0
      %3904 = vmatmul.mubr.bf16.gmra.mrb[0].mxu0 %v3821
      %v3905 = vpop.f32.mrb[0].mxu0
      %v3906 = vadd.f32 0.0, %v3905
      %v3907 = vpop.f32.mrb[0].mxu0
      %v3908 = vpop.f32.mrb[0].mxu0
      %v3909 = vadd.f32 0.0, %v3908
      %v3910 = vpop.f32.mrb[0].mxu0
      %3911 = vmatprep.mubr.bf16.mxu0 0
      %3912 = vmatmul.mubr.bf16.gmra.mrb[0].mxu0 %v3824
      %v3913 = vpop.f32.mrb[0].mxu0
      %v3914 = vadd.f32 0.0, %v3913
      %v3915 = vpop.f32.mrb[0].mxu0
      %v3916 = vpop.f32.mrb[0].mxu0
      %v3917 = vadd.f32 0.0, %v3916
      %v3918 = vpop.f32.mrb[0].mxu0
      %3919 = vmatprep.mubr.bf16.mxu0 0
      %3920 = vmatmul.mubr.bf16.gmra.mrb[0].mxu0 %v3827
      %v3921 = vpop.f32.mrb[0].mxu0
      %v3922 = vadd.f32 0.0, %v3921
      %v3923 = vpop.f32.mrb[0].mxu0
      %v3924 = vpop.f32.mrb[0].mxu0
      %v3925 = vadd.f32 0.0, %v3924
      %v3926 = vpop.f32.mrb[0].mxu0
      %3927 = vmatprep.mubr.bf16.mxu0 0
      %3928 = vmatmul.mubr.bf16.gmra.mrb[0].mxu0 %v3830
      %v3929 = vpop.f32.mrb[0].mxu0
      %v3930 = vadd.f32 0.0, %v3929
      %v3931 = vpop.f32.mrb[0].mxu0
      %v3932 = vpop.f32.mrb[0].mxu0
      %v3933 = vadd.f32 0.0, %v3932
      %v3934 = vpop.f32.mrb[0].mxu0
      %3935 = vmatprep.mubr.bf16.mxu0 0
      %3936 = vmatmul.mubr.bf16.gmra.mrb[0].mxu0 %v3833
      %v3937 = vpop.f32.mrb[0].mxu0
      %v3938 = vadd.f32 0.0, %v3937
      %v3939 = vpop.f32.mrb[0].mxu0
      %v3940 = vpop.f32.mrb[0].mxu0
      %v3941 = vadd.f32 0.0, %v3940
      %v3942 = vpop.f32.mrb[0].mxu0
      %3943 = vmatprep.mubr.bf16.mxu0 0
      %3944 = vmatmul.mubr.bf16.gmra.mrb[0].mxu0 %v3836
      %v3945 = vpop.f32.mrb[0].mxu0
      %v3946 = vadd.f32 0.0, %v3945
      %v3947 = vpop.f32.mrb[0].mxu0
      %v3948 = vpop.f32.mrb[0].mxu0
      %v3949 = vadd.f32 0.0, %v3948
      %v3950 = vpop.f32.mrb[0].mxu0
      %3951 = vmatprep.mubr.bf16.mxu0 0
      %3952 = vmatmul.mubr.bf16.gmra.mrb[0].mxu0 %v3839
      %v3953 = vpop.f32.mrb[0].mxu0
      %v3954 = vadd.f32 0.0, %v3953
      %v3955 = vpop.f32.mrb[0].mxu0
      %v3956 = vpop.f32.mrb[0].mxu0
      %v3957 = vadd.f32 0.0, %v3956
      %v3958 = vpop.f32.mrb[0].mxu0
      %3959 = vmatprep.mubr.bf16.mxu0 0
      %3960 = vmatmul.mubr.bf16.gmra.mrb[0].mxu0 %v3842
      %v3961 = vpop.f32.mrb[0].mxu0
      %v3962 = vadd.f32 0.0, %v3961
      %v3963 = vpop.f32.mrb[0].mxu0
      %v3964 = vpop.f32.mrb[0].mxu0
      %v3965 = vadd.f32 0.0, %v3964
      %v3966 = vpop.f32.mrb[0].mxu0
      %3967 = vmatprep.mubr.bf16.mxu0 0
      %3968 = vmatmul.mubr.bf16.gmra.mrb[0].mxu0 %v3845
      %v3969 = vpop.f32.mrb[0].mxu0
      %v3970 = vadd.f32 0.0, %v3969
      %v3971 = vpop.f32.mrb[0].mxu0
      %v3972 = vpop.f32.mrb[0].mxu0
      %v3973 = vadd.f32 0.0, %v3972
      %v3974 = vpop.f32.mrb[0].mxu0
      %3975 = vmatprep.mubr.bf16.mxu0 0
      %3976 = vmatmul.mubr.bf16.gmra.mrb[0].mxu0 %v3848
      %v3977 = vpop.f32.mrb[0].mxu0
      %v3978 = vadd.f32 0.0, %v3977
      %v3979 = vpop.f32.mrb[0].mxu0
      %v3980 = vpop.f32.mrb[0].mxu0
      %v3981 = vadd.f32 0.0, %v3980
      %v3982 = vpop.f32.mrb[0].mxu0
      %3983 = vmatprep.mubr.bf16.mxu0 0
      %3984 = vmatmul.mubr.bf16.gmra.mrb[0].mxu0 %v3851
      %v3985 = vpop.f32.mrb[0].mxu0
      %v3986 = vadd.f32 0.0, %v3985
      %v3987 = vpop.f32.mrb[0].mxu0
      %v3988 = vpop.f32.mrb[0].mxu0
      %v3989 = vadd.f32 0.0, %v3988
      %v3990 = vpop.f32.mrb[0].mxu0
      %3991 = vmatprep.mubr.bf16.mxu0 0
      %3992 = vmatmul.mubr.bf16.gmra.mrb[0].mxu0 %v3854
      %v3993 = vpop.f32.mrb[0].mxu0
      %v3994 = vadd.f32 0.0, %v3993
      %v3995 = vpop.f32.mrb[0].mxu0
      %v3996 = vpop.f32.mrb[0].mxu0
      %v3997 = vadd.f32 0.0, %v3996
      %v3998 = vpop.f32.mrb[0].mxu0
      %3999 = vmatprep.mubr.bf16.mxu0 0
      %4000 = vmatmul.mubr.bf16.gmra.mrb[0].mxu0 %v3857
      %v4001 = vpop.f32.mrb[0].mxu0
      %v4002 = vadd.f32 0.0, %v4001
      %v4003 = vpop.f32.mrb[0].mxu0
      %v4004 = vpop.f32.mrb[0].mxu0
      %v4005 = vadd.f32 0.0, %v4004
      %v4006 = vpop.f32.mrb[0].mxu0
      %4007 = vmatprep.mubr.bf16.mxu0 0
      %4008 = vmatmul.mubr.bf16.gmra.mrb[0].mxu0 %v3860
      %v4009 = vpop.f32.mrb[0].mxu0
      %v4010 = vadd.f32 0.0, %v4009
      %v4011 = vpop.f32.mrb[0].mxu0
      %v4012 = vpop.f32.mrb[0].mxu0
      %v4013 = vadd.f32 0.0, %v4012
      %v4014 = vpop.f32.mrb[0].mxu0
      %4015 = vmatprep.mubr.bf16.mxu0 0
      %4016 = vmatmul.mubr.bf16.gmra.mrb[0].mxu0 %v3863
      %v4017 = vpop.f32.mrb[0].mxu0
      %v4018 = vadd.f32 0.0, %v4017
      %v4019 = vpop.f32.mrb[0].mxu0
      %v4020 = vpop.f32.mrb[0].mxu0
      %v4021 = vadd.f32 0.0, %v4020
      %v4022 = vpop.f32.mrb[0].mxu0
      %4023 = vmatprep.mubr.bf16.mxu0 0
      %4024 = vmatmul.mubr.bf16.gmra.mrb[0].mxu0 %v3866
      %v4025 = vpop.f32.mrb[0].mxu0
      %v4026 = vadd.f32 0.0, %v4025
      %v4027 = vpop.f32.mrb[0].mxu0
      %v4028 = vpop.f32.mrb[0].mxu0
      %v4029 = vadd.f32 0.0, %v4028
      %v4030 = vpop.f32.mrb[0].mxu0
      %4031 = vdwg.mxu0
      %v4032 = vadd.f32 %v3559, %v3906
      %v4033 = vadd.f32 %v3560, %v3909
      %v4034 = vadd.f32 %v3561, %v3914
      %v4035 = vadd.f32 %v3562, %v3917
      %v4036 = vadd.f32 %v3563, %v3922
      %v4037 = vadd.f32 %v3564, %v3925
      %v4038 = vadd.f32 %v3565, %v3930
      %v4039 = vadd.f32 %v3566, %v3933
      %v4040 = vadd.f32 %v3567, %v3938
      %v4041 = vadd.f32 %v3568, %v3941
      %v4042 = vadd.f32 %v3569, %v3946
      %v4043 = vadd.f32 %v3570, %v3949
      %v4044 = vadd.f32 %v3571, %v3954
      %v4045 = vadd.f32 %v3572, %v3957
      %v4046 = vadd.f32 %v3573, %v3962
      %v4047 = vadd.f32 %v3574, %v3965
      %v4048 = vadd.f32 %v3575, %v3970
      %v4049 = vadd.f32 %v3576, %v3973
      %v4050 = vadd.f32 %v3577, %v3978
      %v4051 = vadd.f32 %v3578, %v3981
      %v4052 = vadd.f32 %v3579, %v3986
      %v4053 = vadd.f32 %v3580, %v3989
      %v4054 = vadd.f32 %v3581, %v3994
      %v4055 = vadd.f32 %v3582, %v3997
      %v4056 = vadd.f32 %v3583, %v4002
      %v4057 = vadd.f32 %v3584, %v4005
      %v4058 = vadd.f32 %v3585, %v4010
      %v4059 = vadd.f32 %v3586, %v4013
      %v4060 = vadd.f32 %v3587, %v4018
      %v4061 = vadd.f32 %v3588, %v4021
      %v4062 = vadd.f32 %v3589, %v4026
      %v4063 = vadd.f32 %v3590, %v4029
      %v4064 = vld [vmem:[%s742] sm:$0xf]
      %v4065 = vld [vmem:[%s742 + $0x4] sm:$0xf]
      %v4066 = vld [vmem:[%s742 + $0xc] sm:$0xf]
      %v4067 = vld [vmem:[%s742 + $0x10] sm:$0xf]
      %v4068 = vld [vmem:[%s742 + $0x18] sm:$0xf]
      %v4069 = vld [vmem:[%s742 + $0x1c] sm:$0xf]
      %v4070 = vld [vmem:[%s742 + $0x24] sm:$0xf]
      %v4071 = vld [vmem:[%s742 + $0x28] sm:$0xf]
      %v4072 = vld [vmem:[%s742 + $0x30] sm:$0xf]
      %v4073 = vld [vmem:[%s742 + $0x34] sm:$0xf]
      %v4074 = vld [vmem:[%s742 + $0x3c] sm:$0xf]
      %v4075 = vld [vmem:[%s742 + $0x40] sm:$0xf]
      %v4076 = vld [vmem:[%s742 + $0x48] sm:$0xf]
      %v4077 = vld [vmem:[%s742 + $0x4c] sm:$0xf]
      %v4078 = vld [vmem:[%s742 + $0x54] sm:$0xf]
      %v4079 = vld [vmem:[%s742 + $0x58] sm:$0xf]
      %v4080 = vld [vmem:[%s742 + $0x60] sm:$0xf]
      %v4081 = vld [vmem:[%s742 + $0x64] sm:$0xf]
      %v4082 = vld [vmem:[%s742 + $0x6c] sm:$0xf]
      %v4083 = vld [vmem:[%s742 + $0x70] sm:$0xf]
      %v4084 = vld [vmem:[%s742 + $0x78] sm:$0xf]
      %v4085 = vld [vmem:[%s742 + $0x7c] sm:$0xf]
      %v4086 = vld [vmem:[%s742 + $0x84] sm:$0xf]
      %v4087 = vld [vmem:[%s742 + $0x88] sm:$0xf]
      %v4088 = vld [vmem:[%s742 + $0x90] sm:$0xf]
      %v4089 = vld [vmem:[%s742 + $0x94] sm:$0xf]
      %v4090 = vld [vmem:[%s742 + $0x9c] sm:$0xf]
      %v4091 = vld [vmem:[%s742 + $0xa0] sm:$0xf]
      %v4092 = vld [vmem:[%s742 + $0xa8] sm:$0xf]
      %v4093 = vld [vmem:[%s742 + $0xac] sm:$0xf]
      %v4094 = vld [vmem:[%s742 + $0xb4] sm:$0xf]
      %v4095 = vld [vmem:[%s742 + $0xb8] sm:$0xf]
      %v4096 = vld [vmem:[%s1 + $0xc] sm:$0x3]
      %v4129 = vunpack.c.l.b16 %v4064
      %v4130 = vunpack.c.l.b16 %v4065
      %v4131 = vunpack.c.l.b16 %v4066
      %v4132 = vunpack.c.l.b16 %v4067
      %v4133 = vunpack.c.l.b16 %v4068
      %v4134 = vunpack.c.l.b16 %v4069
      %v4135 = vunpack.c.l.b16 %v4070
      %v4136 = vunpack.c.l.b16 %v4071
      %v4137 = vunpack.c.l.b16 %v4072
      %v4138 = vunpack.c.l.b16 %v4073
      %v4139 = vunpack.c.l.b16 %v4074
      %v4140 = vunpack.c.l.b16 %v4075
      %v4141 = vunpack.c.l.b16 %v4076
      %v4142 = vunpack.c.l.b16 %v4077
      %v4143 = vunpack.c.l.b16 %v4078
      %v4144 = vunpack.c.l.b16 %v4079
      %v4145 = vunpack.c.l.b16 %v4080
      %v4146 = vunpack.c.l.b16 %v4081
      %v4147 = vunpack.c.l.b16 %v4082
      %v4148 = vunpack.c.l.b16 %v4083
      %v4149 = vunpack.c.l.b16 %v4084
      %v4150 = vunpack.c.l.b16 %v4085
      %v4151 = vunpack.c.l.b16 %v4086
      %v4152 = vunpack.c.l.b16 %v4087
      %v4153 = vunpack.c.l.b16 %v4088
      %v4154 = vunpack.c.l.b16 %v4089
      %v4155 = vunpack.c.l.b16 %v4090
      %v4156 = vunpack.c.l.b16 %v4091
      %v4157 = vunpack.c.l.b16 %v4092
      %v4158 = vunpack.c.l.b16 %v4093
      %v4159 = vunpack.c.l.b16 %v4094
      %v4160 = vunpack.c.l.b16 %v4095
      %v4161 = vpack.c.b16 %v4130, %v4129
      %v4162 = vpack.c.b16 %v4132, %v4131
      %v4163 = vpack.c.b16 %v4134, %v4133
      %v4164 = vpack.c.b16 %v4136, %v4135
      %v4165 = vpack.c.b16 %v4138, %v4137
      %v4166 = vpack.c.b16 %v4140, %v4139
      %v4167 = vpack.c.b16 %v4142, %v4141
      %v4168 = vpack.c.b16 %v4144, %v4143
      %v4169 = vpack.c.b16 %v4146, %v4145
      %v4170 = vpack.c.b16 %v4148, %v4147
      %v4171 = vpack.c.b16 %v4150, %v4149
      %v4172 = vpack.c.b16 %v4152, %v4151
      %v4173 = vpack.c.b16 %v4154, %v4153
      %v4174 = vpack.c.b16 %v4156, %v4155
      %v4175 = vpack.c.b16 %v4158, %v4157
      %v4176 = vpack.c.b16 %v4160, %v4159
      %v4178 = vsel %vm1543, %v4161, 0
      %v4181 = vsel %vm1543, %v4162, 0
      %v4184 = vsel %vm1543, %v4163, 0
      %v4187 = vsel %vm1543, %v4164, 0
      %v4190 = vsel %vm1543, %v4165, 0
      %v4193 = vsel %vm1543, %v4166, 0
      %v4196 = vsel %vm1543, %v4167, 0
      %v4199 = vsel %vm1543, %v4168, 0
      %v4202 = vsel %vm1543, %v4169, 0
      %v4205 = vsel %vm1543, %v4170, 0
      %v4208 = vsel %vm1543, %v4171, 0
      %v4211 = vsel %vm1543, %v4172, 0
      %v4214 = vsel %vm1543, %v4173, 0
      %v4217 = vsel %vm1543, %v4174, 0
      %v4220 = vsel %vm1543, %v4175, 0
      %v4223 = vsel %vm1543, %v4176, 0
      %v4226 = vsel %vm1592, %v4096, 0
      %4228 = vmatprep.subr.bf16.mxu0 0
      %4229 = vmatpush1.bf16.msra.mxu0 %v4226
      %4230 = vmatprep.subr.bf16.mxu0 0
      %4231 = vmatpush1.bf16.msra.mxu0 0
      %4232 = vmatprep.subr.bf16.mxu0 0
      %4233 = vmatpush1.bf16.msra.mxu0 0
      %4234 = vmatprep.subr.bf16.mxu0 0
      %4235 = vmatpush1.bf16.msra.mxu0 0
      %4236 = vmatprep.subr.bf16.mxu0 0
      %4237 = vmatpush1.bf16.msra.mxu0 0
      %4238 = vmatprep.subr.bf16.mxu0 0
      %4239 = vmatpush1.bf16.msra.mxu0 0
      %4240 = vmatprep.subr.bf16.mxu0 0
      %4241 = vmatpush1.bf16.msra.mxu0 0
      %4242 = vmatprep.subr.bf16.mxu0 0
      %4243 = vmatpush1.bf16.msra.mxu0 0
      %4244 = vmatprep.subr.bf16.mxu0 0
      %4245 = vmatpush1.bf16.msra.mxu0 0
      %4246 = vmatprep.subr.bf16.mxu0 0
      %4247 = vmatpush1.bf16.msra.mxu0 0
      %4248 = vmatprep.subr.bf16.mxu0 0
      %4249 = vmatpush1.bf16.msra.mxu0 0
      %4250 = vmatprep.subr.bf16.mxu0 0
      %4251 = vmatpush1.bf16.msra.mxu0 0
      %4252 = vmatprep.subr.bf16.mxu0 0
      %4253 = vmatpush1.bf16.msra.mxu0 0
      %4254 = vmatprep.subr.bf16.mxu0 0
      %4255 = vmatpush1.bf16.msra.mxu0 0
      %4256 = vmatprep.subr.bf16.mxu0 0
      %4257 = vmatpush1.bf16.msra.mxu0 0
      %4258 = vmatprep.subr.bf16.mxu0 0
      %4259 = vmatpush1.bf16.msra.mxu0 0
      %4260 = vmatprep.mubr.bf16.mxu0 0
      %4261 = vmatmul.mubr.bf16.gmra.mrb[0].mxu0 %v4178
      %v4262 = vpop.f32.mrb[0].mxu0
      %v4263 = vadd.f32 0.0, %v4262
      %v4264 = vpop.f32.mrb[0].mxu0
      %v4265 = vpop.f32.mrb[0].mxu0
      %v4266 = vadd.f32 0.0, %v4265
      %v4267 = vpop.f32.mrb[0].mxu0
      %4268 = vmatprep.mubr.bf16.mxu0 0
      %4269 = vmatmul.mubr.bf16.gmra.mrb[0].mxu0 %v4181
      %v4270 = vpop.f32.mrb[0].mxu0
      %v4271 = vadd.f32 0.0, %v4270
      %v4272 = vpop.f32.mrb[0].mxu0
      %v4273 = vpop.f32.mrb[0].mxu0
      %v4274 = vadd.f32 0.0, %v4273
      %v4275 = vpop.f32.mrb[0].mxu0
      %4276 = vmatprep.mubr.bf16.mxu0 0
      %4277 = vmatmul.mubr.bf16.gmra.mrb[0].mxu0 %v4184
      %v4278 = vpop.f32.mrb[0].mxu0
      %v4279 = vadd.f32 0.0, %v4278
      %v4280 = vpop.f32.mrb[0].mxu0
      %v4281 = vpop.f32.mrb[0].mxu0
      %v4282 = vadd.f32 0.0, %v4281
      %v4283 = vpop.f32.mrb[0].mxu0
      %4284 = vmatprep.mubr.bf16.mxu0 0
      %4285 = vmatmul.mubr.bf16.gmra.mrb[0].mxu0 %v4187
      %v4286 = vpop.f32.mrb[0].mxu0
      %v4287 = vadd.f32 0.0, %v4286
      %v4288 = vpop.f32.mrb[0].mxu0
      %v4289 = vpop.f32.mrb[0].mxu0
      %v4290 = vadd.f32 0.0, %v4289
      %v4291 = vpop.f32.mrb[0].mxu0
      %4292 = vmatprep.mubr.bf16.mxu0 0
      %4293 = vmatmul.mubr.bf16.gmra.mrb[0].mxu0 %v4190
      %v4294 = vpop.f32.mrb[0].mxu0
      %v4295 = vadd.f32 0.0, %v4294
      %v4296 = vpop.f32.mrb[0].mxu0
      %v4297 = vpop.f32.mrb[0].mxu0
      %v4298 = vadd.f32 0.0, %v4297
      %v4299 = vpop.f32.mrb[0].mxu0
      %4300 = vmatprep.mubr.bf16.mxu0 0
      %4301 = vmatmul.mubr.bf16.gmra.mrb[0].mxu0 %v4193
      %v4302 = vpop.f32.mrb[0].mxu0
      %v4303 = vadd.f32 0.0, %v4302
      %v4304 = vpop.f32.mrb[0].mxu0
      %v4305 = vpop.f32.mrb[0].mxu0
      %v4306 = vadd.f32 0.0, %v4305
      %v4307 = vpop.f32.mrb[0].mxu0
      %4308 = vmatprep.mubr.bf16.mxu0 0
      %4309 = vmatmul.mubr.bf16.gmra.mrb[0].mxu0 %v4196
      %v4310 = vpop.f32.mrb[0].mxu0
      %v4311 = vadd.f32 0.0, %v4310
      %v4312 = vpop.f32.mrb[0].mxu0
      %v4313 = vpop.f32.mrb[0].mxu0
      %v4314 = vadd.f32 0.0, %v4313
      %v4315 = vpop.f32.mrb[0].mxu0
      %4316 = vmatprep.mubr.bf16.mxu0 0
      %4317 = vmatmul.mubr.bf16.gmra.mrb[0].mxu0 %v4199
      %v4318 = vpop.f32.mrb[0].mxu0
      %v4319 = vadd.f32 0.0, %v4318
      %v4320 = vpop.f32.mrb[0].mxu0
      %v4321 = vpop.f32.mrb[0].mxu0
      %v4322 = vadd.f32 0.0, %v4321
      %v4323 = vpop.f32.mrb[0].mxu0
      %4324 = vmatprep.mubr.bf16.mxu0 0
      %4325 = vmatmul.mubr.bf16.gmra.mrb[0].mxu0 %v4202
      %v4326 = vpop.f32.mrb[0].mxu0
      %v4327 = vadd.f32 0.0, %v4326
      %v4328 = vpop.f32.mrb[0].mxu0
      %v4329 = vpop.f32.mrb[0].mxu0
      %v4330 = vadd.f32 0.0, %v4329
      %v4331 = vpop.f32.mrb[0].mxu0
      %4332 = vmatprep.mubr.bf16.mxu0 0
      %4333 = vmatmul.mubr.bf16.gmra.mrb[0].mxu0 %v4205
      %v4334 = vpop.f32.mrb[0].mxu0
      %v4335 = vadd.f32 0.0, %v4334
      %v4336 = vpop.f32.mrb[0].mxu0
      %v4337 = vpop.f32.mrb[0].mxu0
      %v4338 = vadd.f32 0.0, %v4337
      %v4339 = vpop.f32.mrb[0].mxu0
      %4340 = vmatprep.mubr.bf16.mxu0 0
      %4341 = vmatmul.mubr.bf16.gmra.mrb[0].mxu0 %v4208
      %v4342 = vpop.f32.mrb[0].mxu0
      %v4343 = vadd.f32 0.0, %v4342
      %v4344 = vpop.f32.mrb[0].mxu0
      %v4345 = vpop.f32.mrb[0].mxu0
      %v4346 = vadd.f32 0.0, %v4345
      %v4347 = vpop.f32.mrb[0].mxu0
      %4348 = vmatprep.mubr.bf16.mxu0 0
      %4349 = vmatmul.mubr.bf16.gmra.mrb[0].mxu0 %v4211
      %v4350 = vpop.f32.mrb[0].mxu0
      %v4351 = vadd.f32 0.0, %v4350
      %v4352 = vpop.f32.mrb[0].mxu0
      %v4353 = vpop.f32.mrb[0].mxu0
      %v4354 = vadd.f32 0.0, %v4353
      %v4355 = vpop.f32.mrb[0].mxu0
      %4356 = vmatprep.mubr.bf16.mxu0 0
      %4357 = vmatmul.mubr.bf16.gmra.mrb[0].mxu0 %v4214
      %v4358 = vpop.f32.mrb[0].mxu0
      %v4359 = vadd.f32 0.0, %v4358
      %v4360 = vpop.f32.mrb[0].mxu0
      %v4361 = vpop.f32.mrb[0].mxu0
      %v4362 = vadd.f32 0.0, %v4361
      %v4363 = vpop.f32.mrb[0].mxu0
      %4364 = vmatprep.mubr.bf16.mxu0 0
      %4365 = vmatmul.mubr.bf16.gmra.mrb[0].mxu0 %v4217
      %v4366 = vpop.f32.mrb[0].mxu0
      %v4367 = vadd.f32 0.0, %v4366
      %v4368 = vpop.f32.mrb[0].mxu0
      %v4369 = vpop.f32.mrb[0].mxu0
      %v4370 = vadd.f32 0.0, %v4369
      %v4371 = vpop.f32.mrb[0].mxu0
      %4372 = vmatprep.mubr.bf16.mxu0 0
      %4373 = vmatmul.mubr.bf16.gmra.mrb[0].mxu0 %v4220
      %v4374 = vpop.f32.mrb[0].mxu0
      %v4375 = vadd.f32 0.0, %v4374
      %v4376 = vpop.f32.mrb[0].mxu0
      %v4377 = vpop.f32.mrb[0].mxu0
      %v4378 = vadd.f32 0.0, %v4377
      %v4379 = vpop.f32.mrb[0].mxu0
      %4380 = vmatprep.mubr.bf16.mxu0 0
      %4381 = vmatmul.mubr.bf16.gmra.mrb[0].mxu0 %v4223
      %v4382 = vpop.f32.mrb[0].mxu0
      %v4383 = vadd.f32 0.0, %v4382
      %v4384 = vpop.f32.mrb[0].mxu0
      %v4385 = vpop.f32.mrb[0].mxu0
      %v4386 = vadd.f32 0.0, %v4385
      %v4387 = vpop.f32.mrb[0].mxu0
      %4388 = vdwg.mxu0
      %v4389 = vadd.f32 %v4032, %v4263
      %v4390 = vadd.f32 %v4033, %v4266
      %v4391 = vadd.f32 %v4034, %v4271
      %v4392 = vadd.f32 %v4035, %v4274
      %v4393 = vadd.f32 %v4036, %v4279
      %v4394 = vadd.f32 %v4037, %v4282
      %v4395 = vadd.f32 %v4038, %v4287
      %v4396 = vadd.f32 %v4039, %v4290
      %v4397 = vadd.f32 %v4040, %v4295
      %v4398 = vadd.f32 %v4041, %v4298
      %v4399 = vadd.f32 %v4042, %v4303
      %v4400 = vadd.f32 %v4043, %v4306
      %v4401 = vadd.f32 %v4044, %v4311
      %v4402 = vadd.f32 %v4045, %v4314
      %v4403 = vadd.f32 %v4046, %v4319
      %v4404 = vadd.f32 %v4047, %v4322
      %v4405 = vadd.f32 %v4048, %v4327
      %v4406 = vadd.f32 %v4049, %v4330
      %v4407 = vadd.f32 %v4050, %v4335
      %v4408 = vadd.f32 %v4051, %v4338
      %v4409 = vadd.f32 %v4052, %v4343
      %v4410 = vadd.f32 %v4053, %v4346
      %v4411 = vadd.f32 %v4054, %v4351
      %v4412 = vadd.f32 %v4055, %v4354
      %v4413 = vadd.f32 %v4056, %v4359
      %v4414 = vadd.f32 %v4057, %v4362
      %v4415 = vadd.f32 %v4058, %v4367
      %v4416 = vadd.f32 %v4059, %v4370
      %v4417 = vadd.f32 %v4060, %v4375
      %v4418 = vadd.f32 %v4061, %v4378
      %v4419 = vadd.f32 %v4062, %v4383
      %v4420 = vadd.f32 %v4063, %v4386
      %v4421 = vld [vmem:[%s742] sm:$0xf]
      %v4422 = vld [vmem:[%s742 + $0x4] sm:$0xf]
      %v4423 = vld [vmem:[%s742 + $0x8] sm:$0x1]
      %v4424 = vld [vmem:[%s742 + $0xc] sm:$0xf]
      %v4425 = vld [vmem:[%s742 + $0x10] sm:$0xf]
      %v4426 = vld [vmem:[%s742 + $0x14] sm:$0x1]
      %v4427 = vld [vmem:[%s742 + $0x18] sm:$0xf]
      %v4428 = vld [vmem:[%s742 + $0x1c] sm:$0xf]
      %v4429 = vld [vmem:[%s742 + $0x20] sm:$0x1]
      %v4430 = vld [vmem:[%s742 + $0x24] sm:$0xf]
      %v4431 = vld [vmem:[%s742 + $0x28] sm:$0xf]
      %v4432 = vld [vmem:[%s742 + $0x2c] sm:$0x1]
      %v4433 = vld [vmem:[%s742 + $0x30] sm:$0xf]
      %v4434 = vld [vmem:[%s742 + $0x34] sm:$0xf]
      %v4435 = vld [vmem:[%s742 + $0x38] sm:$0x1]
      %v4436 = vld [vmem:[%s742 + $0x3c] sm:$0xf]
      %v4437 = vld [vmem:[%s742 + $0x40] sm:$0xf]
      %v4438 = vld [vmem:[%s742 + $0x44] sm:$0x1]
      %v4439 = vld [vmem:[%s742 + $0x48] sm:$0xf]
      %v4440 = vld [vmem:[%s742 + $0x4c] sm:$0xf]
      %v4441 = vld [vmem:[%s742 + $0x50] sm:$0x1]
      %v4442 = vld [vmem:[%s742 + $0x54] sm:$0xf]
      %v4443 = vld [vmem:[%s742 + $0x58] sm:$0xf]
      %v4444 = vld [vmem:[%s742 + $0x5c] sm:$0x1]
      %v4445 = vld [vmem:[%s742 + $0x60] sm:$0xf]
      %v4446 = vld [vmem:[%s742 + $0x64] sm:$0xf]
      %v4447 = vld [vmem:[%s742 + $0x68] sm:$0x1]
      %v4448 = vld [vmem:[%s742 + $0x6c] sm:$0xf]
      %v4449 = vld [vmem:[%s742 + $0x70] sm:$0xf]
      %v4450 = vld [vmem:[%s742 + $0x74] sm:$0x1]
      %v4451 = vld [vmem:[%s742 + $0x78] sm:$0xf]
      %v4452 = vld [vmem:[%s742 + $0x7c] sm:$0xf]
      %v4453 = vld [vmem:[%s742 + $0x80] sm:$0x1]
      %v4454 = vld [vmem:[%s742 + $0x84] sm:$0xf]
      %v4455 = vld [vmem:[%s742 + $0x88] sm:$0xf]
      %v4456 = vld [vmem:[%s742 + $0x8c] sm:$0x1]
      %v4457 = vld [vmem:[%s742 + $0x90] sm:$0xf]
      %v4458 = vld [vmem:[%s742 + $0x94] sm:$0xf]
      %v4459 = vld [vmem:[%s742 + $0x98] sm:$0x1]
      %v4460 = vld [vmem:[%s742 + $0x9c] sm:$0xf]
      %v4461 = vld [vmem:[%s742 + $0xa0] sm:$0xf]
      %v4462 = vld [vmem:[%s742 + $0xa4] sm:$0x1]
      %v4463 = vld [vmem:[%s742 + $0xa8] sm:$0xf]
      %v4464 = vld [vmem:[%s742 + $0xac] sm:$0xf]
      %v4465 = vld [vmem:[%s742 + $0xb0] sm:$0x1]
      %v4466 = vld [vmem:[%s742 + $0xb4] sm:$0xf]
      %v4467 = vld [vmem:[%s742 + $0xb8] sm:$0xf]
      %v4468 = vld [vmem:[%s742 + $0xbc] sm:$0x1]
      %v4470 = vshrl.u32 %v4421, 16
      %v4472 = vrot.slane %v4470, 4
      %v4473 = vshll.u32 %v4421, 16
      %v4475 = vrot.slane %v4473, 5
      %v4476 = vor.u32 %v4472, %v4475
      %v4477 = vrot.slane %v4476, 4
      %v4479 = vshll.u32 %v4422, 16
      %v4481 = vrot.slane %v4479, 5
      %v4482 = vsel %vm1105, %v4477, %v4481
      %v4483 = vshrl.u32 %v4422, 16
      %v4485 = vrot.slane %v4483, 4
      %v4486 = vor.u32 %v4485, %v4481
      %v4487 = vrot.slane %v4486, 4
      %v4489 = vshll.u32 %v4423, 16
      %v4491 = vrot.slane %v4489, 5
      %v4492 = vsel %vm1105, %v4487, %v4491
      %v4494 = vshrl.u32 %v4424, 16
      %v4496 = vrot.slane %v4494, 4
      %v4497 = vshll.u32 %v4424, 16
      %v4499 = vrot.slane %v4497, 5
      %v4500 = vor.u32 %v4496, %v4499
      %v4501 = vrot.slane %v4500, 4
      %v4503 = vshll.u32 %v4425, 16
      %v4505 = vrot.slane %v4503, 5
      %v4506 = vsel %vm1105, %v4501, %v4505
      %v4507 = vshrl.u32 %v4425, 16
      %v4509 = vrot.slane %v4507, 4
      %v4510 = vor.u32 %v4509, %v4505
      %v4511 = vrot.slane %v4510, 4
      %v4513 = vshll.u32 %v4426, 16
      %v4515 = vrot.slane %v4513, 5
      %v4516 = vsel %vm1105, %v4511, %v4515
      %v4518 = vshrl.u32 %v4427, 16
      %v4520 = vrot.slane %v4518, 4
      %v4521 = vshll.u32 %v4427, 16
      %v4523 = vrot.slane %v4521, 5
      %v4524 = vor.u32 %v4520, %v4523
      %v4525 = vrot.slane %v4524, 4
      %v4527 = vshll.u32 %v4428, 16
      %v4529 = vrot.slane %v4527, 5
      %v4530 = vsel %vm1105, %v4525, %v4529
      %v4531 = vshrl.u32 %v4428, 16
      %v4533 = vrot.slane %v4531, 4
      %v4534 = vor.u32 %v4533, %v4529
      %v4535 = vrot.slane %v4534, 4
      %v4537 = vshll.u32 %v4429, 16
      %v4539 = vrot.slane %v4537, 5
      %v4540 = vsel %vm1105, %v4535, %v4539
      %v4542 = vshrl.u32 %v4430, 16
      %v4544 = vrot.slane %v4542, 4
      %v4545 = vshll.u32 %v4430, 16
      %v4547 = vrot.slane %v4545, 5
      %v4548 = vor.u32 %v4544, %v4547
      %v4549 = vrot.slane %v4548, 4
      %v4551 = vshll.u32 %v4431, 16
      %v4553 = vrot.slane %v4551, 5
      %v4554 = vsel %vm1105, %v4549, %v4553
      %v4555 = vshrl.u32 %v4431, 16
      %v4557 = vrot.slane %v4555, 4
      %v4558 = vor.u32 %v4557, %v4553
      %v4559 = vrot.slane %v4558, 4
      %v4561 = vshll.u32 %v4432, 16
      %v4563 = vrot.slane %v4561, 5
      %v4564 = vsel %vm1105, %v4559, %v4563
      %v4566 = vshrl.u32 %v4433, 16
      %v4568 = vrot.slane %v4566, 4
      %v4569 = vshll.u32 %v4433, 16
      %v4571 = vrot.slane %v4569, 5
      %v4572 = vor.u32 %v4568, %v4571
      %v4573 = vrot.slane %v4572, 4
      %v4575 = vshll.u32 %v4434, 16
      %v4577 = vrot.slane %v4575, 5
      %v4578 = vsel %vm1105, %v4573, %v4577
      %v4579 = vshrl.u32 %v4434, 16
      %v4581 = vrot.slane %v4579, 4
      %v4582 = vor.u32 %v4581, %v4577
      %v4583 = vrot.slane %v4582, 4
      %v4585 = vshll.u32 %v4435, 16
      %v4587 = vrot.slane %v4585, 5
      %v4588 = vsel %vm1105, %v4583, %v4587
      %v4590 = vshrl.u32 %v4436, 16
      %v4592 = vrot.slane %v4590, 4
      %v4593 = vshll.u32 %v4436, 16
      %v4595 = vrot.slane %v4593, 5
      %v4596 = vor.u32 %v4592, %v4595
      %v4597 = vrot.slane %v4596, 4
      %v4599 = vshll.u32 %v4437, 16
      %v4601 = vrot.slane %v4599, 5
      %v4602 = vsel %vm1105, %v4597, %v4601
      %v4603 = vshrl.u32 %v4437, 16
      %v4605 = vrot.slane %v4603, 4
      %v4606 = vor.u32 %v4605, %v4601
      %v4607 = vrot.slane %v4606, 4
      %v4609 = vshll.u32 %v4438, 16
      %v4611 = vrot.slane %v4609, 5
      %v4612 = vsel %vm1105, %v4607, %v4611
      %v4614 = vshrl.u32 %v4439, 16
      %v4616 = vrot.slane %v4614, 4
      %v4617 = vshll.u32 %v4439, 16
      %v4619 = vrot.slane %v4617, 5
      %v4620 = vor.u32 %v4616, %v4619
      %v4621 = vrot.slane %v4620, 4
      %v4623 = vshll.u32 %v4440, 16
      %v4625 = vrot.slane %v4623, 5
      %v4626 = vsel %vm1105, %v4621, %v4625
      %v4627 = vshrl.u32 %v4440, 16
      %v4629 = vrot.slane %v4627, 4
      %v4630 = vor.u32 %v4629, %v4625
      %v4631 = vrot.slane %v4630, 4
      %v4633 = vshll.u32 %v4441, 16
      %v4635 = vrot.slane %v4633, 5
      %v4636 = vsel %vm1105, %v4631, %v4635
      %v4638 = vshrl.u32 %v4442, 16
      %v4640 = vrot.slane %v4638, 4
      %v4641 = vshll.u32 %v4442, 16
      %v4643 = vrot.slane %v4641, 5
      %v4644 = vor.u32 %v4640, %v4643
      %v4645 = vrot.slane %v4644, 4
      %v4647 = vshll.u32 %v4443, 16
      %v4649 = vrot.slane %v4647, 5
      %v4650 = vsel %vm1105, %v4645, %v4649
      %v4651 = vshrl.u32 %v4443, 16
      %v4653 = vrot.slane %v4651, 4
      %v4654 = vor.u32 %v4653, %v4649
      %v4655 = vrot.slane %v4654, 4
      %v4657 = vshll.u32 %v4444, 16
      %v4659 = vrot.slane %v4657, 5
      %v4660 = vsel %vm1105, %v4655, %v4659
      %v4662 = vshrl.u32 %v4445, 16
      %v4664 = vrot.slane %v4662, 4
      %v4665 = vshll.u32 %v4445, 16
      %v4667 = vrot.slane %v4665, 5
      %v4668 = vor.u32 %v4664, %v4667
      %v4669 = vrot.slane %v4668, 4
      %v4671 = vshll.u32 %v4446, 16
      %v4673 = vrot.slane %v4671, 5
      %v4674 = vsel %vm1105, %v4669, %v4673
      %v4675 = vshrl.u32 %v4446, 16
      %v4677 = vrot.slane %v4675, 4
      %v4678 = vor.u32 %v4677, %v4673
      %v4679 = vrot.slane %v4678, 4
      %v4681 = vshll.u32 %v4447, 16
      %v4683 = vrot.slane %v4681, 5
      %v4684 = vsel %vm1105, %v4679, %v4683
      %v4686 = vshrl.u32 %v4448, 16
      %v4688 = vrot.slane %v4686, 4
      %v4689 = vshll.u32 %v4448, 16
      %v4691 = vrot.slane %v4689, 5
      %v4692 = vor.u32 %v4688, %v4691
      %v4693 = vrot.slane %v4692, 4
      %v4695 = vshll.u32 %v4449, 16
      %v4697 = vrot.slane %v4695, 5
      %v4698 = vsel %vm1105, %v4693, %v4697
      %v4699 = vshrl.u32 %v4449, 16
      %v4701 = vrot.slane %v4699, 4
      %v4702 = vor.u32 %v4701, %v4697
      %v4703 = vrot.slane %v4702, 4
      %v4705 = vshll.u32 %v4450, 16
      %v4707 = vrot.slane %v4705, 5
      %v4708 = vsel %vm1105, %v4703, %v4707
      %v4710 = vshrl.u32 %v4451, 16
      %v4712 = vrot.slane %v4710, 4
      %v4713 = vshll.u32 %v4451, 16
      %v4715 = vrot.slane %v4713, 5
      %v4716 = vor.u32 %v4712, %v4715
      %v4717 = vrot.slane %v4716, 4
      %v4719 = vshll.u32 %v4452, 16
      %v4721 = vrot.slane %v4719, 5
      %v4722 = vsel %vm1105, %v4717, %v4721
      %v4723 = vshrl.u32 %v4452, 16
      %v4725 = vrot.slane %v4723, 4
      %v4726 = vor.u32 %v4725, %v4721
      %v4727 = vrot.slane %v4726, 4
      %v4729 = vshll.u32 %v4453, 16
      %v4731 = vrot.slane %v4729, 5
      %v4732 = vsel %vm1105, %v4727, %v4731
      %v4734 = vshrl.u32 %v4454, 16
      %v4736 = vrot.slane %v4734, 4
      %v4737 = vshll.u32 %v4454, 16
      %v4739 = vrot.slane %v4737, 5
      %v4740 = vor.u32 %v4736, %v4739
      %v4741 = vrot.slane %v4740, 4
      %v4743 = vshll.u32 %v4455, 16
      %v4745 = vrot.slane %v4743, 5
      %v4746 = vsel %vm1105, %v4741, %v4745
      %v4747 = vshrl.u32 %v4455, 16
      %v4749 = vrot.slane %v4747, 4
      %v4750 = vor.u32 %v4749, %v4745
      %v4751 = vrot.slane %v4750, 4
      %v4753 = vshll.u32 %v4456, 16
      %v4755 = vrot.slane %v4753, 5
      %v4756 = vsel %vm1105, %v4751, %v4755
      %v4758 = vshrl.u32 %v4457, 16
      %v4760 = vrot.slane %v4758, 4
      %v4761 = vshll.u32 %v4457, 16
      %v4763 = vrot.slane %v4761, 5
      %v4764 = vor.u32 %v4760, %v4763
      %v4765 = vrot.slane %v4764, 4
      %v4767 = vshll.u32 %v4458, 16
      %v4769 = vrot.slane %v4767, 5
      %v4770 = vsel %vm1105, %v4765, %v4769
      %v4771 = vshrl.u32 %v4458, 16
      %v4773 = vrot.slane %v4771, 4
      %v4774 = vor.u32 %v4773, %v4769
      %v4775 = vrot.slane %v4774, 4
      %v4777 = vshll.u32 %v4459, 16
      %v4779 = vrot.slane %v4777, 5
      %v4780 = vsel %vm1105, %v4775, %v4779
      %v4782 = vshrl.u32 %v4460, 16
      %v4784 = vrot.slane %v4782, 4
      %v4785 = vshll.u32 %v4460, 16
      %v4787 = vrot.slane %v4785, 5
      %v4788 = vor.u32 %v4784, %v4787
      %v4789 = vrot.slane %v4788, 4
      %v4791 = vshll.u32 %v4461, 16
      %v4793 = vrot.slane %v4791, 5
      %v4794 = vsel %vm1105, %v4789, %v4793
      %v4795 = vshrl.u32 %v4461, 16
      %v4797 = vrot.slane %v4795, 4
      %v4798 = vor.u32 %v4797, %v4793
      %v4799 = vrot.slane %v4798, 4
      %v4801 = vshll.u32 %v4462, 16
      %v4803 = vrot.slane %v4801, 5
      %v4804 = vsel %vm1105, %v4799, %v4803
      %v4806 = vshrl.u32 %v4463, 16
      %v4808 = vrot.slane %v4806, 4
      %v4809 = vshll.u32 %v4463, 16
      %v4811 = vrot.slane %v4809, 5
      %v4812 = vor.u32 %v4808, %v4811
      %v4813 = vrot.slane %v4812, 4
      %v4815 = vshll.u32 %v4464, 16
      %v4817 = vrot.slane %v4815, 5
      %v4818 = vsel %vm1105, %v4813, %v4817
      %v4819 = vshrl.u32 %v4464, 16
      %v4821 = vrot.slane %v4819, 4
      %v4822 = vor.u32 %v4821, %v4817
      %v4823 = vrot.slane %v4822, 4
      %v4825 = vshll.u32 %v4465, 16
      %v4827 = vrot.slane %v4825, 5
      %v4828 = vsel %vm1105, %v4823, %v4827
      %v4830 = vshrl.u32 %v4466, 16
      %v4832 = vrot.slane %v4830, 4
      %v4833 = vshll.u32 %v4466, 16
      %v4835 = vrot.slane %v4833, 5
      %v4836 = vor.u32 %v4832, %v4835
      %v4837 = vrot.slane %v4836, 4
      %v4839 = vshll.u32 %v4467, 16
      %v4841 = vrot.slane %v4839, 5
      %v4842 = vsel %vm1105, %v4837, %v4841
      %v4843 = vshrl.u32 %v4467, 16
      %v4845 = vrot.slane %v4843, 4
      %v4846 = vor.u32 %v4845, %v4841
      %v4847 = vrot.slane %v4846, 4
      %v4849 = vshll.u32 %v4468, 16
      %v4851 = vrot.slane %v4849, 5
      %v4852 = vsel %vm1105, %v4847, %v4851
      %v4853 = vld [vmem:[%s1 + $0xc] sm:$0xc]
      %v4854 = vunpack.c.l.b16 %v4482
      %v4855 = vunpack.c.l.b16 %v4492
      %v4856 = vunpack.c.l.b16 %v4506
      %v4857 = vunpack.c.l.b16 %v4516
      %v4858 = vunpack.c.l.b16 %v4530
      %v4859 = vunpack.c.l.b16 %v4540
      %v4860 = vunpack.c.l.b16 %v4554
      %v4861 = vunpack.c.l.b16 %v4564
      %v4862 = vunpack.c.l.b16 %v4578
      %v4863 = vunpack.c.l.b16 %v4588
      %v4864 = vunpack.c.l.b16 %v4602
      %v4865 = vunpack.c.l.b16 %v4612
      %v4866 = vunpack.c.l.b16 %v4626
      %v4867 = vunpack.c.l.b16 %v4636
      %v4868 = vunpack.c.l.b16 %v4650
      %v4869 = vunpack.c.l.b16 %v4660
      %v4870 = vunpack.c.l.b16 %v4674
      %v4871 = vunpack.c.l.b16 %v4684
      %v4872 = vunpack.c.l.b16 %v4698
      %v4873 = vunpack.c.l.b16 %v4708
      %v4874 = vunpack.c.l.b16 %v4722
      %v4875 = vunpack.c.l.b16 %v4732
      %v4876 = vunpack.c.l.b16 %v4746
      %v4877 = vunpack.c.l.b16 %v4756
      %v4878 = vunpack.c.l.b16 %v4770
      %v4879 = vunpack.c.l.b16 %v4780
      %v4880 = vunpack.c.l.b16 %v4794
      %v4881 = vunpack.c.l.b16 %v4804
      %v4882 = vunpack.c.l.b16 %v4818
      %v4883 = vunpack.c.l.b16 %v4828
      %v4884 = vunpack.c.l.b16 %v4842
      %v4885 = vunpack.c.l.b16 %v4852
      %v4886 = vpack.c.b16 %v4855, %v4854
      %v4887 = vpack.c.b16 %v4857, %v4856
      %v4888 = vpack.c.b16 %v4859, %v4858
      %v4889 = vpack.c.b16 %v4861, %v4860
      %v4890 = vpack.c.b16 %v4863, %v4862
      %v4891 = vpack.c.b16 %v4865, %v4864
      %v4892 = vpack.c.b16 %v4867, %v4866
      %v4893 = vpack.c.b16 %v4869, %v4868
      %v4894 = vpack.c.b16 %v4871, %v4870
      %v4895 = vpack.c.b16 %v4873, %v4872
      %v4896 = vpack.c.b16 %v4875, %v4874
      %v4897 = vpack.c.b16 %v4877, %v4876
      %v4898 = vpack.c.b16 %v4879, %v4878
      %v4899 = vpack.c.b16 %v4881, %v4880
      %v4900 = vpack.c.b16 %v4883, %v4882
      %v4901 = vpack.c.b16 %v4885, %v4884
      %v4903 = vunpack.c.l.b16 %v4853
      %v4904 = vpack.c.b16 %v4903, %v4903
      %v4905 = vrot.slane %v4904, 2
      %v4907 = vsel %vm1543, %v4886, 0
      %v4910 = vsel %vm1543, %v4887, 0
      %v4913 = vsel %vm1543, %v4888, 0
      %v4916 = vsel %vm1543, %v4889, 0
      %v4919 = vsel %vm1543, %v4890, 0
      %v4922 = vsel %vm1543, %v4891, 0
      %v4925 = vsel %vm1543, %v4892, 0
      %v4928 = vsel %vm1543, %v4893, 0
      %v4931 = vsel %vm1543, %v4894, 0
      %v4934 = vsel %vm1543, %v4895, 0
      %v4937 = vsel %vm1543, %v4896, 0
      %v4940 = vsel %vm1543, %v4897, 0
      %v4943 = vsel %vm1543, %v4898, 0
      %v4946 = vsel %vm1543, %v4899, 0
      %v4949 = vsel %vm1543, %v4900, 0
      %v4952 = vsel %vm1543, %v4901, 0
      %v4955 = vsel %vm1592, %v4905, 0
      %4957 = vmatprep.subr.bf16.mxu0 0
      %4958 = vmatpush1.bf16.msra.mxu0 %v4955
      %4959 = vmatprep.subr.bf16.mxu0 0
      %4960 = vmatpush1.bf16.msra.mxu0 0
      %4961 = vmatprep.subr.bf16.mxu0 0
      %4962 = vmatpush1.bf16.msra.mxu0 0
      %4963 = vmatprep.subr.bf16.mxu0 0
      %4964 = vmatpush1.bf16.msra.mxu0 0
      %4965 = vmatprep.subr.bf16.mxu0 0
      %4966 = vmatpush1.bf16.msra.mxu0 0
      %4967 = vmatprep.subr.bf16.mxu0 0
      %4968 = vmatpush1.bf16.msra.mxu0 0
      %4969 = vmatprep.subr.bf16.mxu0 0
      %4970 = vmatpush1.bf16.msra.mxu0 0
      %4971 = vmatprep.subr.bf16.mxu0 0
      %4972 = vmatpush1.bf16.msra.mxu0 0
      %4973 = vmatprep.subr.bf16.mxu0 0
      %4974 = vmatpush1.bf16.msra.mxu0 0
      %4975 = vmatprep.subr.bf16.mxu0 0
      %4976 = vmatpush1.bf16.msra.mxu0 0
      %4977 = vmatprep.subr.bf16.mxu0 0
      %4978 = vmatpush1.bf16.msra.mxu0 0
      %4979 = vmatprep.subr.bf16.mxu0 0
      %4980 = vmatpush1.bf16.msra.mxu0 0
      %4981 = vmatprep.subr.bf16.mxu0 0
      %4982 = vmatpush1.bf16.msra.mxu0 0
      %4983 = vmatprep.subr.bf16.mxu0 0
      %4984 = vmatpush1.bf16.msra.mxu0 0
      %4985 = vmatprep.subr.bf16.mxu0 0
      %4986 = vmatpush1.bf16.msra.mxu0 0
      %4987 = vmatprep.subr.bf16.mxu0 0
      %4988 = vmatpush1.bf16.msra.mxu0 0
      %4989 = vmatprep.mubr.bf16.mxu0 0
      %4990 = vmatmul.mubr.bf16.gmra.mrb[0].mxu0 %v4907
      %v4991 = vpop.f32.mrb[0].mxu0
      %v4992 = vadd.f32 0.0, %v4991
      %v4993 = vpop.f32.mrb[0].mxu0
      %v4994 = vpop.f32.mrb[0].mxu0
      %v4995 = vadd.f32 0.0, %v4994
      %v4996 = vpop.f32.mrb[0].mxu0
      %4997 = vmatprep.mubr.bf16.mxu0 0
      %4998 = vmatmul.mubr.bf16.gmra.mrb[0].mxu0 %v4910
      %v4999 = vpop.f32.mrb[0].mxu0
      %v5000 = vadd.f32 0.0, %v4999
      %v5001 = vpop.f32.mrb[0].mxu0
      %v5002 = vpop.f32.mrb[0].mxu0
      %v5003 = vadd.f32 0.0, %v5002
      %v5004 = vpop.f32.mrb[0].mxu0
      %5005 = vmatprep.mubr.bf16.mxu0 0
      %5006 = vmatmul.mubr.bf16.gmra.mrb[0].mxu0 %v4913
      %v5007 = vpop.f32.mrb[0].mxu0
      %v5008 = vadd.f32 0.0, %v5007
      %v5009 = vpop.f32.mrb[0].mxu0
      %v5010 = vpop.f32.mrb[0].mxu0
      %v5011 = vadd.f32 0.0, %v5010
      %v5012 = vpop.f32.mrb[0].mxu0
      %5013 = vmatprep.mubr.bf16.mxu0 0
      %5014 = vmatmul.mubr.bf16.gmra.mrb[0].mxu0 %v4916
      %v5015 = vpop.f32.mrb[0].mxu0
      %v5016 = vadd.f32 0.0, %v5015
      %v5017 = vpop.f32.mrb[0].mxu0
      %v5018 = vpop.f32.mrb[0].mxu0
      %v5019 = vadd.f32 0.0, %v5018
      %v5020 = vpop.f32.mrb[0].mxu0
      %5021 = vmatprep.mubr.bf16.mxu0 0
      %5022 = vmatmul.mubr.bf16.gmra.mrb[0].mxu0 %v4919
      %v5023 = vpop.f32.mrb[0].mxu0
      %v5024 = vadd.f32 0.0, %v5023
      %v5025 = vpop.f32.mrb[0].mxu0
      %v5026 = vpop.f32.mrb[0].mxu0
      %v5027 = vadd.f32 0.0, %v5026
      %v5028 = vpop.f32.mrb[0].mxu0
      %5029 = vmatprep.mubr.bf16.mxu0 0
      %5030 = vmatmul.mubr.bf16.gmra.mrb[0].mxu0 %v4922
      %v5031 = vpop.f32.mrb[0].mxu0
      %v5032 = vadd.f32 0.0, %v5031
      %v5033 = vpop.f32.mrb[0].mxu0
      %v5034 = vpop.f32.mrb[0].mxu0
      %v5035 = vadd.f32 0.0, %v5034
      %v5036 = vpop.f32.mrb[0].mxu0
      %5037 = vmatprep.mubr.bf16.mxu0 0
      %5038 = vmatmul.mubr.bf16.gmra.mrb[0].mxu0 %v4925
      %v5039 = vpop.f32.mrb[0].mxu0
      %v5040 = vadd.f32 0.0, %v5039
      %v5041 = vpop.f32.mrb[0].mxu0
      %v5042 = vpop.f32.mrb[0].mxu0
      %v5043 = vadd.f32 0.0, %v5042
      %v5044 = vpop.f32.mrb[0].mxu0
      %5045 = vmatprep.mubr.bf16.mxu0 0
      %5046 = vmatmul.mubr.bf16.gmra.mrb[0].mxu0 %v4928
      %v5047 = vpop.f32.mrb[0].mxu0
      %v5048 = vadd.f32 0.0, %v5047
      %v5049 = vpop.f32.mrb[0].mxu0
      %v5050 = vpop.f32.mrb[0].mxu0
      %v5051 = vadd.f32 0.0, %v5050
      %v5052 = vpop.f32.mrb[0].mxu0
      %5053 = vmatprep.mubr.bf16.mxu0 0
      %5054 = vmatmul.mubr.bf16.gmra.mrb[0].mxu0 %v4931
      %v5055 = vpop.f32.mrb[0].mxu0
      %v5056 = vadd.f32 0.0, %v5055
      %v5057 = vpop.f32.mrb[0].mxu0
      %v5058 = vpop.f32.mrb[0].mxu0
      %v5059 = vadd.f32 0.0, %v5058
      %v5060 = vpop.f32.mrb[0].mxu0
      %5061 = vmatprep.mubr.bf16.mxu0 0
      %5062 = vmatmul.mubr.bf16.gmra.mrb[0].mxu0 %v4934
      %v5063 = vpop.f32.mrb[0].mxu0
      %v5064 = vadd.f32 0.0, %v5063
      %v5065 = vpop.f32.mrb[0].mxu0
      %v5066 = vpop.f32.mrb[0].mxu0
      %v5067 = vadd.f32 0.0, %v5066
      %v5068 = vpop.f32.mrb[0].mxu0
      %5069 = vmatprep.mubr.bf16.mxu0 0
      %5070 = vmatmul.mubr.bf16.gmra.mrb[0].mxu0 %v4937
      %v5071 = vpop.f32.mrb[0].mxu0
      %v5072 = vadd.f32 0.0, %v5071
      %v5073 = vpop.f32.mrb[0].mxu0
      %v5074 = vpop.f32.mrb[0].mxu0
      %v5075 = vadd.f32 0.0, %v5074
      %v5076 = vpop.f32.mrb[0].mxu0
      %5077 = vmatprep.mubr.bf16.mxu0 0
      %5078 = vmatmul.mubr.bf16.gmra.mrb[0].mxu0 %v4940
      %v5079 = vpop.f32.mrb[0].mxu0
      %v5080 = vadd.f32 0.0, %v5079
      %v5081 = vpop.f32.mrb[0].mxu0
      %v5082 = vpop.f32.mrb[0].mxu0
      %v5083 = vadd.f32 0.0, %v5082
      %v5084 = vpop.f32.mrb[0].mxu0
      %5085 = vmatprep.mubr.bf16.mxu0 0
      %5086 = vmatmul.mubr.bf16.gmra.mrb[0].mxu0 %v4943
      %v5087 = vpop.f32.mrb[0].mxu0
      %v5088 = vadd.f32 0.0, %v5087
      %v5089 = vpop.f32.mrb[0].mxu0
      %v5090 = vpop.f32.mrb[0].mxu0
      %v5091 = vadd.f32 0.0, %v5090
      %v5092 = vpop.f32.mrb[0].mxu0
      %5093 = vmatprep.mubr.bf16.mxu0 0
      %5094 = vmatmul.mubr.bf16.gmra.mrb[0].mxu0 %v4946
      %v5095 = vpop.f32.mrb[0].mxu0
      %v5096 = vadd.f32 0.0, %v5095
      %v5097 = vpop.f32.mrb[0].mxu0
      %v5098 = vpop.f32.mrb[0].mxu0
      %v5099 = vadd.f32 0.0, %v5098
      %v5100 = vpop.f32.mrb[0].mxu0
      %5101 = vmatprep.mubr.bf16.mxu0 0
      %5102 = vmatmul.mubr.bf16.gmra.mrb[0].mxu0 %v4949
      %v5103 = vpop.f32.mrb[0].mxu0
      %v5104 = vadd.f32 0.0, %v5103
      %v5105 = vpop.f32.mrb[0].mxu0
      %v5106 = vpop.f32.mrb[0].mxu0
      %v5107 = vadd.f32 0.0, %v5106
      %v5108 = vpop.f32.mrb[0].mxu0
      %5109 = vmatprep.mubr.bf16.mxu0 0
      %5110 = vmatmul.mubr.bf16.gmra.mrb[0].mxu0 %v4952
      %v5111 = vpop.f32.mrb[0].mxu0
      %v5112 = vadd.f32 0.0, %v5111
      %v5113 = vpop.f32.mrb[0].mxu0
      %v5114 = vpop.f32.mrb[0].mxu0
      %v5115 = vadd.f32 0.0, %v5114
      %v5116 = vpop.f32.mrb[0].mxu0
      %5117 = vdwg.mxu0
      %v5118 = vadd.f32 %v4389, %v4992
      %v5119 = vadd.f32 %v4390, %v4995
      %v5120 = vadd.f32 %v4391, %v5000
      %v5121 = vadd.f32 %v4392, %v5003
      %v5122 = vadd.f32 %v4393, %v5008
      %v5123 = vadd.f32 %v4394, %v5011
      %v5124 = vadd.f32 %v4395, %v5016
      %v5125 = vadd.f32 %v4396, %v5019
      %v5126 = vadd.f32 %v4397, %v5024
      %v5127 = vadd.f32 %v4398, %v5027
      %v5128 = vadd.f32 %v4399, %v5032
      %v5129 = vadd.f32 %v4400, %v5035
      %v5130 = vadd.f32 %v4401, %v5040
      %v5131 = vadd.f32 %v4402, %v5043
      %v5132 = vadd.f32 %v4403, %v5048
      %v5133 = vadd.f32 %v4404, %v5051
      %v5134 = vadd.f32 %v4405, %v5056
      %v5135 = vadd.f32 %v4406, %v5059
      %v5136 = vadd.f32 %v4407, %v5064
      %v5137 = vadd.f32 %v4408, %v5067
      %v5138 = vadd.f32 %v4409, %v5072
      %v5139 = vadd.f32 %v4410, %v5075
      %v5140 = vadd.f32 %v4411, %v5080
      %v5141 = vadd.f32 %v4412, %v5083
      %v5142 = vadd.f32 %v4413, %v5088
      %v5143 = vadd.f32 %v4414, %v5091
      %v5144 = vadd.f32 %v4415, %v5096
      %v5145 = vadd.f32 %v4416, %v5099
      %v5146 = vadd.f32 %v4417, %v5104
      %v5147 = vadd.f32 %v4418, %v5107
      %v5148 = vadd.f32 %v4419, %v5112
      %v5149 = vadd.f32 %v4420, %v5115
      %v5150 = vld [vmem:[%s742] sm:$0xe]
      %v5151 = vld [vmem:[%s742 + $0xc] sm:$0xe]
      %v5152 = vld [vmem:[%s742 + $0x18] sm:$0xe]
      %v5153 = vld [vmem:[%s742 + $0x24] sm:$0xe]
      %v5154 = vld [vmem:[%s742 + $0x30] sm:$0xe]
      %v5155 = vld [vmem:[%s742 + $0x3c] sm:$0xe]
      %v5156 = vld [vmem:[%s742 + $0x48] sm:$0xe]
      %v5157 = vld [vmem:[%s742 + $0x54] sm:$0xe]
      %v5158 = vld [vmem:[%s742 + $0x60] sm:$0xe]
      %v5159 = vld [vmem:[%s742 + $0x6c] sm:$0xe]
      %v5160 = vld [vmem:[%s742 + $0x78] sm:$0xe]
      %v5161 = vld [vmem:[%s742 + $0x84] sm:$0xe]
      %v5162 = vld [vmem:[%s742 + $0x90] sm:$0xe]
      %v5163 = vld [vmem:[%s742 + $0x9c] sm:$0xe]
      %v5164 = vld [vmem:[%s742 + $0xa8] sm:$0xe]
      %v5165 = vld [vmem:[%s742 + $0xb4] sm:$0xe]
      %v5214 = vrot.slane %v5150, 5
      %v5215 = vrot.slane %v5214, 4
      %v5216 = vrot.slane %v4422, 5
      %v5217 = vsel %vm2099, %v5215, %v5216
      %v5218 = vrot.slane %v5216, 4
      %v5219 = vrot.slane %v4423, 5
      %v5220 = vsel %vm2099, %v5218, %v5219
      %v5221 = vrot.slane %v5151, 5
      %v5222 = vrot.slane %v5221, 4
      %v5223 = vrot.slane %v4425, 5
      %v5224 = vsel %vm2099, %v5222, %v5223
      %v5225 = vrot.slane %v5223, 4
      %v5226 = vrot.slane %v4426, 5
      %v5227 = vsel %vm2099, %v5225, %v5226
      %v5228 = vrot.slane %v5152, 5
      %v5229 = vrot.slane %v5228, 4
      %v5230 = vrot.slane %v4428, 5
      %v5231 = vsel %vm2099, %v5229, %v5230
      %v5232 = vrot.slane %v5230, 4
      %v5233 = vrot.slane %v4429, 5
      %v5234 = vsel %vm2099, %v5232, %v5233
      %v5235 = vrot.slane %v5153, 5
      %v5236 = vrot.slane %v5235, 4
      %v5237 = vrot.slane %v4431, 5
      %v5238 = vsel %vm2099, %v5236, %v5237
      %v5239 = vrot.slane %v5237, 4
      %v5240 = vrot.slane %v4432, 5
      %v5241 = vsel %vm2099, %v5239, %v5240
      %v5242 = vrot.slane %v5154, 5
      %v5243 = vrot.slane %v5242, 4
      %v5244 = vrot.slane %v4434, 5
      %v5245 = vsel %vm2099, %v5243, %v5244
      %v5246 = vrot.slane %v5244, 4
      %v5247 = vrot.slane %v4435, 5
      %v5248 = vsel %vm2099, %v5246, %v5247
      %v5249 = vrot.slane %v5155, 5
      %v5250 = vrot.slane %v5249, 4
      %v5251 = vrot.slane %v4437, 5
      %v5252 = vsel %vm2099, %v5250, %v5251
      %v5253 = vrot.slane %v5251, 4
      %v5254 = vrot.slane %v4438, 5
      %v5255 = vsel %vm2099, %v5253, %v5254
      %v5256 = vrot.slane %v5156, 5
      %v5257 = vrot.slane %v5256, 4
      %v5258 = vrot.slane %v4440, 5
      %v5259 = vsel %vm2099, %v5257, %v5258
      %v5260 = vrot.slane %v5258, 4
      %v5261 = vrot.slane %v4441, 5
      %v5262 = vsel %vm2099, %v5260, %v5261
      %v5263 = vrot.slane %v5157, 5
      %v5264 = vrot.slane %v5263, 4
      %v5265 = vrot.slane %v4443, 5
      %v5266 = vsel %vm2099, %v5264, %v5265
      %v5267 = vrot.slane %v5265, 4
      %v5268 = vrot.slane %v4444, 5
      %v5269 = vsel %vm2099, %v5267, %v5268
      %v5270 = vrot.slane %v5158, 5
      %v5271 = vrot.slane %v5270, 4
      %v5272 = vrot.slane %v4446, 5
      %v5273 = vsel %vm2099, %v5271, %v5272
      %v5274 = vrot.slane %v5272, 4
      %v5275 = vrot.slane %v4447, 5
      %v5276 = vsel %vm2099, %v5274, %v5275
      %v5277 = vrot.slane %v5159, 5
      %v5278 = vrot.slane %v5277, 4
      %v5279 = vrot.slane %v4449, 5
      %v5280 = vsel %vm2099, %v5278, %v5279
      %v5281 = vrot.slane %v5279, 4
      %v5282 = vrot.slane %v4450, 5
      %v5283 = vsel %vm2099, %v5281, %v5282
      %v5284 = vrot.slane %v5160, 5
      %v5285 = vrot.slane %v5284, 4
      %v5286 = vrot.slane %v4452, 5
      %v5287 = vsel %vm2099, %v5285, %v5286
      %v5288 = vrot.slane %v5286, 4
      %v5289 = vrot.slane %v4453, 5
      %v5290 = vsel %vm2099, %v5288, %v5289
      %v5291 = vrot.slane %v5161, 5
      %v5292 = vrot.slane %v5291, 4
      %v5293 = vrot.slane %v4455, 5
      %v5294 = vsel %vm2099, %v5292, %v5293
      %v5295 = vrot.slane %v5293, 4
      %v5296 = vrot.slane %v4456, 5
      %v5297 = vsel %vm2099, %v5295, %v5296
      %v5298 = vrot.slane %v5162, 5
      %v5299 = vrot.slane %v5298, 4
      %v5300 = vrot.slane %v4458, 5
      %v5301 = vsel %vm2099, %v5299, %v5300
      %v5302 = vrot.slane %v5300, 4
      %v5303 = vrot.slane %v4459, 5
      %v5304 = vsel %vm2099, %v5302, %v5303
      %v5305 = vrot.slane %v5163, 5
      %v5306 = vrot.slane %v5305, 4
      %v5307 = vrot.slane %v4461, 5
      %v5308 = vsel %vm2099, %v5306, %v5307
      %v5309 = vrot.slane %v5307, 4
      %v5310 = vrot.slane %v4462, 5
      %v5311 = vsel %vm2099, %v5309, %v5310
      %v5312 = vrot.slane %v5164, 5
      %v5313 = vrot.slane %v5312, 4
      %v5314 = vrot.slane %v4464, 5
      %v5315 = vsel %vm2099, %v5313, %v5314
      %v5316 = vrot.slane %v5314, 4
      %v5317 = vrot.slane %v4465, 5
      %v5318 = vsel %vm2099, %v5316, %v5317
      %v5319 = vrot.slane %v5165, 5
      %v5320 = vrot.slane %v5319, 4
      %v5321 = vrot.slane %v4467, 5
      %v5322 = vsel %vm2099, %v5320, %v5321
      %v5323 = vrot.slane %v5321, 4
      %v5324 = vrot.slane %v4468, 5
      %v5325 = vsel %vm2099, %v5323, %v5324
      %v5326 = vld [vmem:[%s1 + $0x10] sm:$0x3]
      %v5327 = vunpack.c.l.b16 %v5217
      %v5328 = vunpack.c.l.b16 %v5220
      %v5329 = vunpack.c.l.b16 %v5224
      %v5330 = vunpack.c.l.b16 %v5227
      %v5331 = vunpack.c.l.b16 %v5231
      %v5332 = vunpack.c.l.b16 %v5234
      %v5333 = vunpack.c.l.b16 %v5238
      %v5334 = vunpack.c.l.b16 %v5241
      %v5335 = vunpack.c.l.b16 %v5245
      %v5336 = vunpack.c.l.b16 %v5248
      %v5337 = vunpack.c.l.b16 %v5252
      %v5338 = vunpack.c.l.b16 %v5255
      %v5339 = vunpack.c.l.b16 %v5259
      %v5340 = vunpack.c.l.b16 %v5262
      %v5341 = vunpack.c.l.b16 %v5266
      %v5342 = vunpack.c.l.b16 %v5269
      %v5343 = vunpack.c.l.b16 %v5273
      %v5344 = vunpack.c.l.b16 %v5276
      %v5345 = vunpack.c.l.b16 %v5280
      %v5346 = vunpack.c.l.b16 %v5283
      %v5347 = vunpack.c.l.b16 %v5287
      %v5348 = vunpack.c.l.b16 %v5290
      %v5349 = vunpack.c.l.b16 %v5294
      %v5350 = vunpack.c.l.b16 %v5297
      %v5351 = vunpack.c.l.b16 %v5301
      %v5352 = vunpack.c.l.b16 %v5304
      %v5353 = vunpack.c.l.b16 %v5308
      %v5354 = vunpack.c.l.b16 %v5311
      %v5355 = vunpack.c.l.b16 %v5315
      %v5356 = vunpack.c.l.b16 %v5318
      %v5357 = vunpack.c.l.b16 %v5322
      %v5358 = vunpack.c.l.b16 %v5325
      %v5359 = vpack.c.b16 %v5328, %v5327
      %v5360 = vpack.c.b16 %v5330, %v5329
      %v5361 = vpack.c.b16 %v5332, %v5331
      %v5362 = vpack.c.b16 %v5334, %v5333
      %v5363 = vpack.c.b16 %v5336, %v5335
      %v5364 = vpack.c.b16 %v5338, %v5337
      %v5365 = vpack.c.b16 %v5340, %v5339
      %v5366 = vpack.c.b16 %v5342, %v5341
      %v5367 = vpack.c.b16 %v5344, %v5343
      %v5368 = vpack.c.b16 %v5346, %v5345
      %v5369 = vpack.c.b16 %v5348, %v5347
      %v5370 = vpack.c.b16 %v5350, %v5349
      %v5371 = vpack.c.b16 %v5352, %v5351
      %v5372 = vpack.c.b16 %v5354, %v5353
      %v5373 = vpack.c.b16 %v5356, %v5355
      %v5374 = vpack.c.b16 %v5358, %v5357
      %v5376 = vsel %vm1543, %v5359, 0
      %v5379 = vsel %vm1543, %v5360, 0
      %v5382 = vsel %vm1543, %v5361, 0
      %v5385 = vsel %vm1543, %v5362, 0
      %v5388 = vsel %vm1543, %v5363, 0
      %v5391 = vsel %vm1543, %v5364, 0
      %v5394 = vsel %vm1543, %v5365, 0
      %v5397 = vsel %vm1543, %v5366, 0
      %v5400 = vsel %vm1543, %v5367, 0
      %v5403 = vsel %vm1543, %v5368, 0
      %v5406 = vsel %vm1543, %v5369, 0
      %v5409 = vsel %vm1543, %v5370, 0
      %v5412 = vsel %vm1543, %v5371, 0
      %v5415 = vsel %vm1543, %v5372, 0
      %v5418 = vsel %vm1543, %v5373, 0
      %v5421 = vsel %vm1543, %v5374, 0
      %v5424 = vsel %vm1592, %v5326, 0
      %5426 = vmatprep.subr.bf16.mxu0 0
      %5427 = vmatpush1.bf16.msra.mxu0 %v5424
      %5428 = vmatprep.subr.bf16.mxu0 0
      %5429 = vmatpush1.bf16.msra.mxu0 0
      %5430 = vmatprep.subr.bf16.mxu0 0
      %5431 = vmatpush1.bf16.msra.mxu0 0
      %5432 = vmatprep.subr.bf16.mxu0 0
      %5433 = vmatpush1.bf16.msra.mxu0 0
      %5434 = vmatprep.subr.bf16.mxu0 0
      %5435 = vmatpush1.bf16.msra.mxu0 0
      %5436 = vmatprep.subr.bf16.mxu0 0
      %5437 = vmatpush1.bf16.msra.mxu0 0
      %5438 = vmatprep.subr.bf16.mxu0 0
      %5439 = vmatpush1.bf16.msra.mxu0 0
      %5440 = vmatprep.subr.bf16.mxu0 0
      %5441 = vmatpush1.bf16.msra.mxu0 0
      %5442 = vmatprep.subr.bf16.mxu0 0
      %5443 = vmatpush1.bf16.msra.mxu0 0
      %5444 = vmatprep.subr.bf16.mxu0 0
      %5445 = vmatpush1.bf16.msra.mxu0 0
      %5446 = vmatprep.subr.bf16.mxu0 0
      %5447 = vmatpush1.bf16.msra.mxu0 0
      %5448 = vmatprep.subr.bf16.mxu0 0
      %5449 = vmatpush1.bf16.msra.mxu0 0
      %5450 = vmatprep.subr.bf16.mxu0 0
      %5451 = vmatpush1.bf16.msra.mxu0 0
      %5452 = vmatprep.subr.bf16.mxu0 0
      %5453 = vmatpush1.bf16.msra.mxu0 0
      %5454 = vmatprep.subr.bf16.mxu0 0
      %5455 = vmatpush1.bf16.msra.mxu0 0
      %5456 = vmatprep.subr.bf16.mxu0 0
      %5457 = vmatpush1.bf16.msra.mxu0 0
      %5458 = vmatprep.mubr.bf16.mxu0 0
      %5459 = vmatmul.mubr.bf16.gmra.mrb[0].mxu0 %v5376
      %v5460 = vpop.f32.mrb[0].mxu0
      %v5461 = vadd.f32 0.0, %v5460
      %v5462 = vpop.f32.mrb[0].mxu0
      %v5463 = vpop.f32.mrb[0].mxu0
      %v5464 = vadd.f32 0.0, %v5463
      %v5465 = vpop.f32.mrb[0].mxu0
      %5466 = vmatprep.mubr.bf16.mxu0 0
      %5467 = vmatmul.mubr.bf16.gmra.mrb[0].mxu0 %v5379
      %v5468 = vpop.f32.mrb[0].mxu0
      %v5469 = vadd.f32 0.0, %v5468
      %v5470 = vpop.f32.mrb[0].mxu0
      %v5471 = vpop.f32.mrb[0].mxu0
      %v5472 = vadd.f32 0.0, %v5471
      %v5473 = vpop.f32.mrb[0].mxu0
      %5474 = vmatprep.mubr.bf16.mxu0 0
      %5475 = vmatmul.mubr.bf16.gmra.mrb[0].mxu0 %v5382
      %v5476 = vpop.f32.mrb[0].mxu0
      %v5477 = vadd.f32 0.0, %v5476
      %v5478 = vpop.f32.mrb[0].mxu0
      %v5479 = vpop.f32.mrb[0].mxu0
      %v5480 = vadd.f32 0.0, %v5479
      %v5481 = vpop.f32.mrb[0].mxu0
      %5482 = vmatprep.mubr.bf16.mxu0 0
      %5483 = vmatmul.mubr.bf16.gmra.mrb[0].mxu0 %v5385
      %v5484 = vpop.f32.mrb[0].mxu0
      %v5485 = vadd.f32 0.0, %v5484
      %v5486 = vpop.f32.mrb[0].mxu0
      %v5487 = vpop.f32.mrb[0].mxu0
      %v5488 = vadd.f32 0.0, %v5487
      %v5489 = vpop.f32.mrb[0].mxu0
      %5490 = vmatprep.mubr.bf16.mxu0 0
      %5491 = vmatmul.mubr.bf16.gmra.mrb[0].mxu0 %v5388
      %v5492 = vpop.f32.mrb[0].mxu0
      %v5493 = vadd.f32 0.0, %v5492
      %v5494 = vpop.f32.mrb[0].mxu0
      %v5495 = vpop.f32.mrb[0].mxu0
      %v5496 = vadd.f32 0.0, %v5495
      %v5497 = vpop.f32.mrb[0].mxu0
      %5498 = vmatprep.mubr.bf16.mxu0 0
      %5499 = vmatmul.mubr.bf16.gmra.mrb[0].mxu0 %v5391
      %v5500 = vpop.f32.mrb[0].mxu0
      %v5501 = vadd.f32 0.0, %v5500
      %v5502 = vpop.f32.mrb[0].mxu0
      %v5503 = vpop.f32.mrb[0].mxu0
      %v5504 = vadd.f32 0.0, %v5503
      %v5505 = vpop.f32.mrb[0].mxu0
      %5506 = vmatprep.mubr.bf16.mxu0 0
      %5507 = vmatmul.mubr.bf16.gmra.mrb[0].mxu0 %v5394
      %v5508 = vpop.f32.mrb[0].mxu0
      %v5509 = vadd.f32 0.0, %v5508
      %v5510 = vpop.f32.mrb[0].mxu0
      %v5511 = vpop.f32.mrb[0].mxu0
      %v5512 = vadd.f32 0.0, %v5511
      %v5513 = vpop.f32.mrb[0].mxu0
      %5514 = vmatprep.mubr.bf16.mxu0 0
      %5515 = vmatmul.mubr.bf16.gmra.mrb[0].mxu0 %v5397
      %v5516 = vpop.f32.mrb[0].mxu0
      %v5517 = vadd.f32 0.0, %v5516
      %v5518 = vpop.f32.mrb[0].mxu0
      %v5519 = vpop.f32.mrb[0].mxu0
      %v5520 = vadd.f32 0.0, %v5519
      %v5521 = vpop.f32.mrb[0].mxu0
      %5522 = vmatprep.mubr.bf16.mxu0 0
      %5523 = vmatmul.mubr.bf16.gmra.mrb[0].mxu0 %v5400
      %v5524 = vpop.f32.mrb[0].mxu0
      %v5525 = vadd.f32 0.0, %v5524
      %v5526 = vpop.f32.mrb[0].mxu0
      %v5527 = vpop.f32.mrb[0].mxu0
      %v5528 = vadd.f32 0.0, %v5527
      %v5529 = vpop.f32.mrb[0].mxu0
      %5530 = vmatprep.mubr.bf16.mxu0 0
      %5531 = vmatmul.mubr.bf16.gmra.mrb[0].mxu0 %v5403
      %v5532 = vpop.f32.mrb[0].mxu0
      %v5533 = vadd.f32 0.0, %v5532
      %v5534 = vpop.f32.mrb[0].mxu0
      %v5535 = vpop.f32.mrb[0].mxu0
      %v5536 = vadd.f32 0.0, %v5535
      %v5537 = vpop.f32.mrb[0].mxu0
      %5538 = vmatprep.mubr.bf16.mxu0 0
      %5539 = vmatmul.mubr.bf16.gmra.mrb[0].mxu0 %v5406
      %v5540 = vpop.f32.mrb[0].mxu0
      %v5541 = vadd.f32 0.0, %v5540
      %v5542 = vpop.f32.mrb[0].mxu0
      %v5543 = vpop.f32.mrb[0].mxu0
      %v5544 = vadd.f32 0.0, %v5543
      %v5545 = vpop.f32.mrb[0].mxu0
      %5546 = vmatprep.mubr.bf16.mxu0 0
      %5547 = vmatmul.mubr.bf16.gmra.mrb[0].mxu0 %v5409
      %v5548 = vpop.f32.mrb[0].mxu0
      %v5549 = vadd.f32 0.0, %v5548
      %v5550 = vpop.f32.mrb[0].mxu0
      %v5551 = vpop.f32.mrb[0].mxu0
      %v5552 = vadd.f32 0.0, %v5551
      %v5553 = vpop.f32.mrb[0].mxu0
      %5554 = vmatprep.mubr.bf16.mxu0 0
      %5555 = vmatmul.mubr.bf16.gmra.mrb[0].mxu0 %v5412
      %v5556 = vpop.f32.mrb[0].mxu0
      %v5557 = vadd.f32 0.0, %v5556
      %v5558 = vpop.f32.mrb[0].mxu0
      %v5559 = vpop.f32.mrb[0].mxu0
      %v5560 = vadd.f32 0.0, %v5559
      %v5561 = vpop.f32.mrb[0].mxu0
      %5562 = vmatprep.mubr.bf16.mxu0 0
      %5563 = vmatmul.mubr.bf16.gmra.mrb[0].mxu0 %v5415
      %v5564 = vpop.f32.mrb[0].mxu0
      %v5565 = vadd.f32 0.0, %v5564
      %v5566 = vpop.f32.mrb[0].mxu0
      %v5567 = vpop.f32.mrb[0].mxu0
      %v5568 = vadd.f32 0.0, %v5567
      %v5569 = vpop.f32.mrb[0].mxu0
      %5570 = vmatprep.mubr.bf16.mxu0 0
      %5571 = vmatmul.mubr.bf16.gmra.mrb[0].mxu0 %v5418
      %v5572 = vpop.f32.mrb[0].mxu0
      %v5573 = vadd.f32 0.0, %v5572
      %v5574 = vpop.f32.mrb[0].mxu0
      %v5575 = vpop.f32.mrb[0].mxu0
      %v5576 = vadd.f32 0.0, %v5575
      %v5577 = vpop.f32.mrb[0].mxu0
      %5578 = vmatprep.mubr.bf16.mxu0 0
      %5579 = vmatmul.mubr.bf16.gmra.mrb[0].mxu0 %v5421
      %v5580 = vpop.f32.mrb[0].mxu0
      %v5581 = vadd.f32 0.0, %v5580
      %v5582 = vpop.f32.mrb[0].mxu0
      %v5583 = vpop.f32.mrb[0].mxu0
      %v5584 = vadd.f32 0.0, %v5583
      %v5585 = vpop.f32.mrb[0].mxu0
      %5586 = vdwg.mxu0
      %v5587 = vadd.f32 %v5118, %v5461
      %v5588 = vadd.f32 %v5119, %v5464
      %v5589 = vadd.f32 %v5120, %v5469
      %v5590 = vadd.f32 %v5121, %v5472
      %v5591 = vadd.f32 %v5122, %v5477
      %v5592 = vadd.f32 %v5123, %v5480
      %v5593 = vadd.f32 %v5124, %v5485
      %v5594 = vadd.f32 %v5125, %v5488
      %v5595 = vadd.f32 %v5126, %v5493
      %v5596 = vadd.f32 %v5127, %v5496
      %v5597 = vadd.f32 %v5128, %v5501
      %v5598 = vadd.f32 %v5129, %v5504
      %v5599 = vadd.f32 %v5130, %v5509
      %v5600 = vadd.f32 %v5131, %v5512
      %v5601 = vadd.f32 %v5132, %v5517
      %v5602 = vadd.f32 %v5133, %v5520
      %v5603 = vadd.f32 %v5134, %v5525
      %v5604 = vadd.f32 %v5135, %v5528
      %v5605 = vadd.f32 %v5136, %v5533
      %v5606 = vadd.f32 %v5137, %v5536
      %v5607 = vadd.f32 %v5138, %v5541
      %v5608 = vadd.f32 %v5139, %v5544
      %v5609 = vadd.f32 %v5140, %v5549
      %v5610 = vadd.f32 %v5141, %v5552
      %v5611 = vadd.f32 %v5142, %v5557
      %v5612 = vadd.f32 %v5143, %v5560
      %v5613 = vadd.f32 %v5144, %v5565
      %v5614 = vadd.f32 %v5145, %v5568
      %v5615 = vadd.f32 %v5146, %v5573
      %v5616 = vadd.f32 %v5147, %v5576
      %v5617 = vadd.f32 %v5148, %v5581
      %v5618 = vadd.f32 %v5149, %v5584
      %v5619 = vsel %vm1543, %v5587, 0.0
      %v5620 = vsel %vm1543, %v5588, 0.0
      %v5621 = vadd.f32 %v5619, %v5620
      %v5622 = vsel %vm1543, %v5589, 0.0
      %v5623 = vadd.f32 %v5621, %v5622
      %v5624 = vsel %vm1543, %v5590, 0.0
      %v5625 = vadd.f32 %v5623, %v5624
      %v5626 = vsel %vm1543, %v5591, 0.0
      %v5627 = vadd.f32 %v5625, %v5626
      %v5628 = vsel %vm1543, %v5592, 0.0
      %v5629 = vadd.f32 %v5627, %v5628
      %v5630 = vsel %vm1543, %v5593, 0.0
      %v5631 = vadd.f32 %v5629, %v5630
      %v5632 = vsel %vm1543, %v5594, 0.0
      %v5633 = vadd.f32 %v5631, %v5632
      %v5634 = vsel %vm1543, %v5595, 0.0
      %v5635 = vadd.f32 %v5633, %v5634
      %v5636 = vsel %vm1543, %v5596, 0.0
      %v5637 = vadd.f32 %v5635, %v5636
      %v5638 = vsel %vm1543, %v5597, 0.0
      %v5639 = vadd.f32 %v5637, %v5638
      %v5640 = vsel %vm1543, %v5598, 0.0
      %v5641 = vadd.f32 %v5639, %v5640
      %v5642 = vsel %vm1543, %v5599, 0.0
      %v5643 = vadd.f32 %v5641, %v5642
      %v5644 = vsel %vm1543, %v5600, 0.0
      %v5645 = vadd.f32 %v5643, %v5644
      %v5646 = vsel %vm1543, %v5601, 0.0
      %v5647 = vadd.f32 %v5645, %v5646
      %v5648 = vsel %vm1543, %v5602, 0.0
      %v5649 = vadd.f32 %v5647, %v5648
      %v5650 = vsel %vm1543, %v5603, 0.0
      %v5651 = vadd.f32 %v5649, %v5650
      %v5652 = vsel %vm1543, %v5604, 0.0
      %v5653 = vadd.f32 %v5651, %v5652
      %v5654 = vsel %vm1543, %v5605, 0.0
      %v5655 = vadd.f32 %v5653, %v5654
      %v5656 = vsel %vm1543, %v5606, 0.0
      %v5657 = vadd.f32 %v5655, %v5656
      %v5658 = vsel %vm1543, %v5607, 0.0
      %v5659 = vadd.f32 %v5657, %v5658
      %v5660 = vsel %vm1543, %v5608, 0.0
      %v5661 = vadd.f32 %v5659, %v5660
      %v5662 = vsel %vm1543, %v5609, 0.0
      %v5663 = vadd.f32 %v5661, %v5662
      %v5664 = vsel %vm1543, %v5610, 0.0
      %v5665 = vadd.f32 %v5663, %v5664
      %v5666 = vsel %vm1543, %v5611, 0.0
      %v5667 = vadd.f32 %v5665, %v5666
      %v5668 = vsel %vm1543, %v5612, 0.0
      %v5669 = vadd.f32 %v5667, %v5668
      %v5670 = vsel %vm1543, %v5613, 0.0
      %v5671 = vadd.f32 %v5669, %v5670
      %v5672 = vsel %vm1543, %v5614, 0.0
      %v5673 = vadd.f32 %v5671, %v5672
      %v5674 = vsel %vm1543, %v5615, 0.0
      %v5675 = vadd.f32 %v5673, %v5674
      %v5676 = vsel %vm1543, %v5616, 0.0
      %v5677 = vadd.f32 %v5675, %v5676
      %v5678 = vsel %vm1543, %v5617, 0.0
      %v5679 = vadd.f32 %v5677, %v5678
      %v5680 = vsel %vm1543, %v5618, 0.0
      %v5681 = vadd.f32 %v5679, %v5680
      %v5682 = vrot.slane %v5681, 4
      %v5683 = vadd.f32 %v5681, %v5682
      %v5684 = vrot.slane %v5683, 2
      %v5685 = vadd.f32 %v5683, %v5684
      %v5686 = vrot.slane %v5685, 1
      %v5687 = vadd.f32 %v5685, %v5686
      %v5688 = vmul.f32 %v5687, 0.00390625
      %v5689 = vsub.f32 %v5587, %v5688
      %v5690 = vsub.f32 %v5588, %v5688
      %v5691 = vsub.f32 %v5589, %v5688
      %v5692 = vsub.f32 %v5590, %v5688
      %v5693 = vsub.f32 %v5591, %v5688
      %v5694 = vsub.f32 %v5592, %v5688
      %v5695 = vsub.f32 %v5593, %v5688
      %v5696 = vsub.f32 %v5594, %v5688
      %v5697 = vsub.f32 %v5595, %v5688
      %v5698 = vsub.f32 %v5596, %v5688
      %v5699 = vsub.f32 %v5597, %v5688
      %v5700 = vsub.f32 %v5598, %v5688
      %v5701 = vsub.f32 %v5599, %v5688
      %v5702 = vsub.f32 %v5600, %v5688
      %v5703 = vsub.f32 %v5601, %v5688
      %v5704 = vsub.f32 %v5602, %v5688
      %v5705 = vsub.f32 %v5603, %v5688
      %v5706 = vsub.f32 %v5604, %v5688
      %v5707 = vsub.f32 %v5605, %v5688
      %v5708 = vsub.f32 %v5606, %v5688
      %v5709 = vsub.f32 %v5607, %v5688
      %v5710 = vsub.f32 %v5608, %v5688
      %v5711 = vsub.f32 %v5609, %v5688
      %v5712 = vsub.f32 %v5610, %v5688
      %v5713 = vsub.f32 %v5611, %v5688
      %v5714 = vsub.f32 %v5612, %v5688
      %v5715 = vsub.f32 %v5613, %v5688
      %v5716 = vsub.f32 %v5614, %v5688
      %v5717 = vsub.f32 %v5615, %v5688
      %v5718 = vsub.f32 %v5616, %v5688
      %v5719 = vsub.f32 %v5617, %v5688
      %v5720 = vsub.f32 %v5618, %v5688
      %v5721 = vmul.f32 %v5689, %v5689
      %v5722 = vmul.f32 %v5690, %v5690
      %v5723 = vmul.f32 %v5691, %v5691
      %v5724 = vmul.f32 %v5692, %v5692
      %v5725 = vmul.f32 %v5693, %v5693
      %v5726 = vmul.f32 %v5694, %v5694
      %v5727 = vmul.f32 %v5695, %v5695
      %v5728 = vmul.f32 %v5696, %v5696
      %v5729 = vmul.f32 %v5697, %v5697
      %v5730 = vmul.f32 %v5698, %v5698
      %v5731 = vmul.f32 %v5699, %v5699
      %v5732 = vmul.f32 %v5700, %v5700
      %v5733 = vmul.f32 %v5701, %v5701
      %v5734 = vmul.f32 %v5702, %v5702
      %v5735 = vmul.f32 %v5703, %v5703
      %v5736 = vmul.f32 %v5704, %v5704
      %v5737 = vmul.f32 %v5705, %v5705
      %v5738 = vmul.f32 %v5706, %v5706
      %v5739 = vmul.f32 %v5707, %v5707
      %v5740 = vmul.f32 %v5708, %v5708
      %v5741 = vmul.f32 %v5709, %v5709
      %v5742 = vmul.f32 %v5710, %v5710
      %v5743 = vmul.f32 %v5711, %v5711
      %v5744 = vmul.f32 %v5712, %v5712
      %v5745 = vmul.f32 %v5713, %v5713
      %v5746 = vmul.f32 %v5714, %v5714
      %v5747 = vmul.f32 %v5715, %v5715
      %v5748 = vmul.f32 %v5716, %v5716
      %v5749 = vmul.f32 %v5717, %v5717
      %v5750 = vmul.f32 %v5718, %v5718
      %v5751 = vmul.f32 %v5719, %v5719
      %v5752 = vmul.f32 %v5720, %v5720
      %v5753 = vsel %vm1543, %v5721, 0.0
      %v5754 = vsel %vm1543, %v5722, 0.0
      %v5755 = vadd.f32 %v5753, %v5754
      %v5756 = vsel %vm1543, %v5723, 0.0
      %v5757 = vadd.f32 %v5755, %v5756
      %v5758 = vsel %vm1543, %v5724, 0.0
      %v5759 = vadd.f32 %v5757, %v5758
      %v5760 = vsel %vm1543, %v5725, 0.0
      %v5761 = vadd.f32 %v5759, %v5760
      %v5762 = vsel %vm1543, %v5726, 0.0
      %v5763 = vadd.f32 %v5761, %v5762
      %v5764 = vsel %vm1543, %v5727, 0.0
      %v5765 = vadd.f32 %v5763, %v5764
      %v5766 = vsel %vm1543, %v5728, 0.0
      %v5767 = vadd.f32 %v5765, %v5766
      %v5768 = vsel %vm1543, %v5729, 0.0
      %v5769 = vadd.f32 %v5767, %v5768
      %v5770 = vsel %vm1543, %v5730, 0.0
      %v5771 = vadd.f32 %v5769, %v5770
      %v5772 = vsel %vm1543, %v5731, 0.0
      %v5773 = vadd.f32 %v5771, %v5772
      %v5774 = vsel %vm1543, %v5732, 0.0
      %v5775 = vadd.f32 %v5773, %v5774
      %v5776 = vsel %vm1543, %v5733, 0.0
      %v5777 = vadd.f32 %v5775, %v5776
      %v5778 = vsel %vm1543, %v5734, 0.0
      %v5779 = vadd.f32 %v5777, %v5778
      %v5780 = vsel %vm1543, %v5735, 0.0
      %v5781 = vadd.f32 %v5779, %v5780
      %v5782 = vsel %vm1543, %v5736, 0.0
      %v5783 = vadd.f32 %v5781, %v5782
      %v5784 = vsel %vm1543, %v5737, 0.0
      %v5785 = vadd.f32 %v5783, %v5784
      %v5786 = vsel %vm1543, %v5738, 0.0
      %v5787 = vadd.f32 %v5785, %v5786
      %v5788 = vsel %vm1543, %v5739, 0.0
      %v5789 = vadd.f32 %v5787, %v5788
      %v5790 = vsel %vm1543, %v5740, 0.0
      %v5791 = vadd.f32 %v5789, %v5790
      %v5792 = vsel %vm1543, %v5741, 0.0
      %v5793 = vadd.f32 %v5791, %v5792
      %v5794 = vsel %vm1543, %v5742, 0.0
      %v5795 = vadd.f32 %v5793, %v5794
      %v5796 = vsel %vm1543, %v5743, 0.0
      %v5797 = vadd.f32 %v5795, %v5796
      %v5798 = vsel %vm1543, %v5744, 0.0
      %v5799 = vadd.f32 %v5797, %v5798
      %v5800 = vsel %vm1543, %v5745, 0.0
      %v5801 = vadd.f32 %v5799, %v5800
      %v5802 = vsel %vm1543, %v5746, 0.0
      %v5803 = vadd.f32 %v5801, %v5802
      %v5804 = vsel %vm1543, %v5747, 0.0
      %v5805 = vadd.f32 %v5803, %v5804
      %v5806 = vsel %vm1543, %v5748, 0.0
      %v5807 = vadd.f32 %v5805, %v5806
      %v5808 = vsel %vm1543, %v5749, 0.0
      %v5809 = vadd.f32 %v5807, %v5808
      %v5810 = vsel %vm1543, %v5750, 0.0
      %v5811 = vadd.f32 %v5809, %v5810
      %v5812 = vsel %vm1543, %v5751, 0.0
      %v5813 = vadd.f32 %v5811, %v5812
      %v5814 = vsel %vm1543, %v5752, 0.0
      %v5815 = vadd.f32 %v5813, %v5814
      %v5816 = vrot.slane %v5815, 4
      %v5817 = vadd.f32 %v5815, %v5816
      %v5818 = vrot.slane %v5817, 2
      %v5819 = vadd.f32 %v5817, %v5818
      %v5820 = vrot.slane %v5819, 1
      %v5821 = vadd.f32 %v5819, %v5820
      %v5822 = vmul.f32 %v5821, 0.00390625
      %v5823 = vadd.f32 %v5822, 1e-05
      %v5824 = vrsqrt.pop %v5823
      %v5825 = vmul.f32 %v5689, %v5824
      %v5826 = vmul.f32 %v5690, %v5824
      %v5827 = vmul.f32 %v5691, %v5824
      %v5828 = vmul.f32 %v5692, %v5824
      %v5829 = vmul.f32 %v5693, %v5824
      %v5830 = vmul.f32 %v5694, %v5824
      %v5831 = vmul.f32 %v5695, %v5824
      %v5832 = vmul.f32 %v5696, %v5824
      %v5833 = vmul.f32 %v5697, %v5824
      %v5834 = vmul.f32 %v5698, %v5824
      %v5835 = vmul.f32 %v5699, %v5824
      %v5836 = vmul.f32 %v5700, %v5824
      %v5837 = vmul.f32 %v5701, %v5824
      %v5838 = vmul.f32 %v5702, %v5824
      %v5839 = vmul.f32 %v5703, %v5824
      %v5840 = vmul.f32 %v5704, %v5824
      %v5841 = vmul.f32 %v5705, %v5824
      %v5842 = vmul.f32 %v5706, %v5824
      %v5843 = vmul.f32 %v5707, %v5824
      %v5844 = vmul.f32 %v5708, %v5824
      %v5845 = vmul.f32 %v5709, %v5824
      %v5846 = vmul.f32 %v5710, %v5824
      %v5847 = vmul.f32 %v5711, %v5824
      %v5848 = vmul.f32 %v5712, %v5824
      %v5849 = vmul.f32 %v5713, %v5824
      %v5850 = vmul.f32 %v5714, %v5824
      %v5851 = vmul.f32 %v5715, %v5824
      %v5852 = vmul.f32 %v5716, %v5824
      %v5853 = vmul.f32 %v5717, %v5824
      %v5854 = vmul.f32 %v5718, %v5824
      %v5855 = vmul.f32 %v5719, %v5824
      %v5856 = vmul.f32 %v5720, %v5824
      %v5857 = vmax.f32 %v5825, 0.0
      %v5858 = vmax.f32 %v5826, 0.0
      %v5859 = vmax.f32 %v5827, 0.0
      %v5860 = vmax.f32 %v5828, 0.0
      %v5861 = vmax.f32 %v5829, 0.0
      %v5862 = vmax.f32 %v5830, 0.0
      %v5863 = vmax.f32 %v5831, 0.0
      %v5864 = vmax.f32 %v5832, 0.0
      %v5865 = vmax.f32 %v5833, 0.0
      %v5866 = vmax.f32 %v5834, 0.0
      %v5867 = vmax.f32 %v5835, 0.0
      %v5868 = vmax.f32 %v5836, 0.0
      %v5869 = vmax.f32 %v5837, 0.0
      %v5870 = vmax.f32 %v5838, 0.0
      %v5871 = vmax.f32 %v5839, 0.0
      %v5872 = vmax.f32 %v5840, 0.0
      %v5873 = vmax.f32 %v5841, 0.0
      %v5874 = vmax.f32 %v5842, 0.0
      %v5875 = vmax.f32 %v5843, 0.0
      %v5876 = vmax.f32 %v5844, 0.0
      %v5877 = vmax.f32 %v5845, 0.0
      %v5878 = vmax.f32 %v5846, 0.0
      %v5879 = vmax.f32 %v5847, 0.0
      %v5880 = vmax.f32 %v5848, 0.0
      %v5881 = vmax.f32 %v5849, 0.0
      %v5882 = vmax.f32 %v5850, 0.0
      %v5883 = vmax.f32 %v5851, 0.0
      %v5884 = vmax.f32 %v5852, 0.0
      %v5885 = vmax.f32 %v5853, 0.0
      %v5886 = vmax.f32 %v5854, 0.0
      %v5887 = vmax.f32 %v5855, 0.0
      %v5888 = vmax.f32 %v5856, 0.0
      %v5889 = vpack.c.bf16 %v5858, %v5857
      %v5890 = vpack.c.bf16 %v5860, %v5859
      %v5891 = vpack.c.bf16 %v5862, %v5861
      %v5892 = vpack.c.bf16 %v5864, %v5863
      %v5893 = vpack.c.bf16 %v5866, %v5865
      %v5894 = vpack.c.bf16 %v5868, %v5867
      %v5895 = vpack.c.bf16 %v5870, %v5869
      %v5896 = vpack.c.bf16 %v5872, %v5871
      %v5897 = vpack.c.bf16 %v5874, %v5873
      %v5898 = vpack.c.bf16 %v5876, %v5875
      %v5899 = vpack.c.bf16 %v5878, %v5877
      %v5900 = vpack.c.bf16 %v5880, %v5879
      %v5901 = vpack.c.bf16 %v5882, %v5881
      %v5902 = vpack.c.bf16 %v5884, %v5883
      %v5903 = vpack.c.bf16 %v5886, %v5885
      %v5904 = vpack.c.bf16 %v5888, %v5887
      %v5921 = vunpack.c.l.b16 %v5889
      %v5922 = vunpack.c.h.b16 %v5889
      %v5923 = vunpack.c.l.b16 %v5890
      %v5924 = vunpack.c.h.b16 %v5890
      %v5925 = vunpack.c.l.b16 %v5891
      %v5926 = vunpack.c.h.b16 %v5891
      %v5927 = vunpack.c.l.b16 %v5892
      %v5928 = vunpack.c.h.b16 %v5892
      %v5929 = vunpack.c.l.b16 %v5893
      %v5930 = vunpack.c.h.b16 %v5893
      %v5931 = vunpack.c.l.b16 %v5894
      %v5932 = vunpack.c.h.b16 %v5894
      %v5933 = vunpack.c.l.b16 %v5895
      %v5934 = vunpack.c.h.b16 %v5895
      %v5935 = vunpack.c.l.b16 %v5896
      %v5936 = vunpack.c.h.b16 %v5896
      %v5937 = vunpack.c.l.b16 %v5897
      %v5938 = vunpack.c.h.b16 %v5897
      %v5939 = vunpack.c.l.b16 %v5898
      %v5940 = vunpack.c.h.b16 %v5898
      %v5941 = vunpack.c.l.b16 %v5899
      %v5942 = vunpack.c.h.b16 %v5899
      %v5943 = vunpack.c.l.b16 %v5900
      %v5944 = vunpack.c.h.b16 %v5900
      %v5945 = vunpack.c.l.b16 %v5901
      %v5946 = vunpack.c.h.b16 %v5901
      %v5947 = vunpack.c.l.b16 %v5902
      %v5948 = vunpack.c.h.b16 %v5902
      %v5949 = vunpack.c.l.b16 %v5903
      %v5950 = vunpack.c.h.b16 %v5903
      %v5951 = vunpack.c.l.b16 %v5904
      %v5952 = vunpack.c.h.b16 %v5904
      %v5953 = vpack.c.b16 %v5921, %v5921
      %v5954 = vpack.c.b16 %v5922, %v5922
      %v5955 = vpack.c.b16 %v5923, %v5923
      %v5956 = vpack.c.b16 %v5924, %v5924
      %v5957 = vpack.c.b16 %v5925, %v5925
      %v5958 = vpack.c.b16 %v5926, %v5926
      %v5959 = vpack.c.b16 %v5927, %v5927
      %v5960 = vpack.c.b16 %v5928, %v5928
      %v5961 = vpack.c.b16 %v5929, %v5929
      %v5962 = vpack.c.b16 %v5930, %v5930
      %v5963 = vpack.c.b16 %v5931, %v5931
      %v5964 = vpack.c.b16 %v5932, %v5932
      %v5965 = vpack.c.b16 %v5933, %v5933
      %v5966 = vpack.c.b16 %v5934, %v5934
      %v5967 = vpack.c.b16 %v5935, %v5935
      %v5968 = vpack.c.b16 %v5936, %v5936
      %v5969 = vpack.c.b16 %v5937, %v5937
      %v5970 = vpack.c.b16 %v5938, %v5938
      %v5971 = vpack.c.b16 %v5939, %v5939
      %v5972 = vpack.c.b16 %v5940, %v5940
      %v5973 = vpack.c.b16 %v5941, %v5941
      %v5974 = vpack.c.b16 %v5942, %v5942
      %v5975 = vpack.c.b16 %v5943, %v5943
      %v5976 = vpack.c.b16 %v5944, %v5944
      %v5977 = vpack.c.b16 %v5945, %v5945
      %v5978 = vpack.c.b16 %v5946, %v5946
      %v5979 = vpack.c.b16 %v5947, %v5947
      %v5980 = vpack.c.b16 %v5948, %v5948
      %v5981 = vpack.c.b16 %v5949, %v5949
      %v5982 = vpack.c.b16 %v5950, %v5950
      %v5983 = vpack.c.b16 %v5951, %v5951
      %v5984 = vpack.c.b16 %v5952, %v5952
      %v5986 = vshrl.u32 %v5953, 16
      %v5988 = vrot.slane %v5986, 7
      %v5989 = vshll.u32 %v5953, 16
      %v5991 = vor.u32 %v5988, %v5989
      %v5992 = vrot.slane %v5988, 4
      %v5994 = vshrl.u32 %v5954, 16
      %v5996 = vrot.slane %v5994, 7
      %v5997 = vshll.u32 %v5954, 16
      %v5999 = vor.u32 %v5996, %v5997
      %v6000 = vsel %vm302, %v5992, %v5999
      %v6001 = vrot.slane %v5996, 4
      %v6003 = vshrl.u32 %v5955, 16
      %v6005 = vrot.slane %v6003, 7
      %v6006 = vshll.u32 %v5955, 16
      %v6008 = vor.u32 %v6005, %v6006
      %v6009 = vrot.slane %v6005, 4
      %v6011 = vshrl.u32 %v5956, 16
      %v6013 = vrot.slane %v6011, 7
      %v6014 = vshll.u32 %v5956, 16
      %v6016 = vor.u32 %v6013, %v6014
      %v6017 = vsel %vm302, %v6009, %v6016
      %v6018 = vrot.slane %v6013, 4
      %v6020 = vshrl.u32 %v5957, 16
      %v6022 = vrot.slane %v6020, 7
      %v6023 = vshll.u32 %v5957, 16
      %v6025 = vor.u32 %v6022, %v6023
      %v6026 = vrot.slane %v6022, 4
      %v6028 = vshrl.u32 %v5958, 16
      %v6030 = vrot.slane %v6028, 7
      %v6031 = vshll.u32 %v5958, 16
      %v6033 = vor.u32 %v6030, %v6031
      %v6034 = vsel %vm302, %v6026, %v6033
      %v6035 = vrot.slane %v6030, 4
      %v6037 = vshrl.u32 %v5959, 16
      %v6039 = vrot.slane %v6037, 7
      %v6040 = vshll.u32 %v5959, 16
      %v6042 = vor.u32 %v6039, %v6040
      %v6043 = vrot.slane %v6039, 4
      %v6045 = vshrl.u32 %v5960, 16
      %v6047 = vrot.slane %v6045, 7
      %v6048 = vshll.u32 %v5960, 16
      %v6050 = vor.u32 %v6047, %v6048
      %v6051 = vsel %vm302, %v6043, %v6050
      %v6052 = vrot.slane %v6047, 4
      %v6054 = vshrl.u32 %v5961, 16
      %v6056 = vrot.slane %v6054, 7
      %v6057 = vshll.u32 %v5961, 16
      %v6059 = vor.u32 %v6056, %v6057
      %v6060 = vrot.slane %v6056, 4
      %v6062 = vshrl.u32 %v5962, 16
      %v6064 = vrot.slane %v6062, 7
      %v6065 = vshll.u32 %v5962, 16
      %v6067 = vor.u32 %v6064, %v6065
      %v6068 = vsel %vm302, %v6060, %v6067
      %v6069 = vrot.slane %v6064, 4
      %v6071 = vshrl.u32 %v5963, 16
      %v6073 = vrot.slane %v6071, 7
      %v6074 = vshll.u32 %v5963, 16
      %v6076 = vor.u32 %v6073, %v6074
      %v6077 = vrot.slane %v6073, 4
      %v6079 = vshrl.u32 %v5964, 16
      %v6081 = vrot.slane %v6079, 7
      %v6082 = vshll.u32 %v5964, 16
      %v6084 = vor.u32 %v6081, %v6082
      %v6085 = vsel %vm302, %v6077, %v6084
      %v6086 = vrot.slane %v6081, 4
      %v6088 = vshrl.u32 %v5965, 16
      %v6090 = vrot.slane %v6088, 7
      %v6091 = vshll.u32 %v5965, 16
      %v6093 = vor.u32 %v6090, %v6091
      %v6094 = vrot.slane %v6090, 4
      %v6096 = vshrl.u32 %v5966, 16
      %v6098 = vrot.slane %v6096, 7
      %v6099 = vshll.u32 %v5966, 16
      %v6101 = vor.u32 %v6098, %v6099
      %v6102 = vsel %vm302, %v6094, %v6101
      %v6103 = vrot.slane %v6098, 4
      %v6105 = vshrl.u32 %v5967, 16
      %v6107 = vrot.slane %v6105, 7
      %v6108 = vshll.u32 %v5967, 16
      %v6110 = vor.u32 %v6107, %v6108
      %v6111 = vrot.slane %v6107, 4
      %v6113 = vshrl.u32 %v5968, 16
      %v6115 = vrot.slane %v6113, 7
      %v6116 = vshll.u32 %v5968, 16
      %v6118 = vor.u32 %v6115, %v6116
      %v6119 = vsel %vm302, %v6111, %v6118
      %v6120 = vrot.slane %v6115, 4
      %v6122 = vshrl.u32 %v5969, 16
      %v6124 = vrot.slane %v6122, 7
      %v6125 = vshll.u32 %v5969, 16
      %v6127 = vor.u32 %v6124, %v6125
      %v6128 = vrot.slane %v6124, 4
      %v6130 = vshrl.u32 %v5970, 16
      %v6132 = vrot.slane %v6130, 7
      %v6133 = vshll.u32 %v5970, 16
      %v6135 = vor.u32 %v6132, %v6133
      %v6136 = vsel %vm302, %v6128, %v6135
      %v6137 = vrot.slane %v6132, 4
      %v6139 = vshrl.u32 %v5971, 16
      %v6141 = vrot.slane %v6139, 7
      %v6142 = vshll.u32 %v5971, 16
      %v6144 = vor.u32 %v6141, %v6142
      %v6145 = vrot.slane %v6141, 4
      %v6147 = vshrl.u32 %v5972, 16
      %v6149 = vrot.slane %v6147, 7
      %v6150 = vshll.u32 %v5972, 16
      %v6152 = vor.u32 %v6149, %v6150
      %v6153 = vsel %vm302, %v6145, %v6152
      %v6154 = vrot.slane %v6149, 4
      %v6156 = vshrl.u32 %v5973, 16
      %v6158 = vrot.slane %v6156, 7
      %v6159 = vshll.u32 %v5973, 16
      %v6161 = vor.u32 %v6158, %v6159
      %v6162 = vrot.slane %v6158, 4
      %v6164 = vshrl.u32 %v5974, 16
      %v6166 = vrot.slane %v6164, 7
      %v6167 = vshll.u32 %v5974, 16
      %v6169 = vor.u32 %v6166, %v6167
      %v6170 = vsel %vm302, %v6162, %v6169
      %v6171 = vrot.slane %v6166, 4
      %v6173 = vshrl.u32 %v5975, 16
      %v6175 = vrot.slane %v6173, 7
      %v6176 = vshll.u32 %v5975, 16
      %v6178 = vor.u32 %v6175, %v6176
      %v6179 = vrot.slane %v6175, 4
      %v6181 = vshrl.u32 %v5976, 16
      %v6183 = vrot.slane %v6181, 7
      %v6184 = vshll.u32 %v5976, 16
      %v6186 = vor.u32 %v6183, %v6184
      %v6187 = vsel %vm302, %v6179, %v6186
      %v6188 = vrot.slane %v6183, 4
      %v6190 = vshrl.u32 %v5977, 16
      %v6192 = vrot.slane %v6190, 7
      %v6193 = vshll.u32 %v5977, 16
      %v6195 = vor.u32 %v6192, %v6193
      %v6196 = vrot.slane %v6192, 4
      %v6198 = vshrl.u32 %v5978, 16
      %v6200 = vrot.slane %v6198, 7
      %v6201 = vshll.u32 %v5978, 16
      %v6203 = vor.u32 %v6200, %v6201
      %v6204 = vsel %vm302, %v6196, %v6203
      %v6205 = vrot.slane %v6200, 4
      %v6207 = vshrl.u32 %v5979, 16
      %v6209 = vrot.slane %v6207, 7
      %v6210 = vshll.u32 %v5979, 16
      %v6212 = vor.u32 %v6209, %v6210
      %v6213 = vrot.slane %v6209, 4
      %v6215 = vshrl.u32 %v5980, 16
      %v6217 = vrot.slane %v6215, 7
      %v6218 = vshll.u32 %v5980, 16
      %v6220 = vor.u32 %v6217, %v6218
      %v6221 = vsel %vm302, %v6213, %v6220
      %v6222 = vrot.slane %v6217, 4
      %v6224 = vshrl.u32 %v5981, 16
      %v6226 = vrot.slane %v6224, 7
      %v6227 = vshll.u32 %v5981, 16
      %v6229 = vor.u32 %v6226, %v6227
      %v6230 = vrot.slane %v6226, 4
      %v6232 = vshrl.u32 %v5982, 16
      %v6234 = vrot.slane %v6232, 7
      %v6235 = vshll.u32 %v5982, 16
      %v6237 = vor.u32 %v6234, %v6235
      %v6238 = vsel %vm302, %v6230, %v6237
      %v6239 = vrot.slane %v6234, 4
      %v6241 = vshrl.u32 %v5983, 16
      %v6243 = vrot.slane %v6241, 7
      %v6244 = vshll.u32 %v5983, 16
      %v6246 = vor.u32 %v6243, %v6244
      %v6247 = vrot.slane %v6243, 4
      %v6249 = vshrl.u32 %v5984, 16
      %v6251 = vrot.slane %v6249, 7
      %v6252 = vshll.u32 %v5984, 16
      %v6254 = vor.u32 %v6251, %v6252
      %v6255 = vsel %vm302, %v6247, %v6254
      %v6256 = vrot.slane %v6251, 4
      %v6305 = vsel %vm626, %v5991, %v2866
      %6306 = vst [vmem:[%s623] sm:$0xf] %v6305
      %6307 = vst.msk [vmem:[%s623 + $0x4] sm:$0xf] %vm630, %v6000
      %v6308 = vld [vmem:[%s623 + $0x8] sm:$0x1]
      %v6309 = vsel %vm633, %v6001, %v6308
      %6310 = vst [vmem:[%s623 + $0x8] sm:$0x1] %v6309
      %v6311 = vld [vmem:[%s623 + $0xc] sm:$0xf]
      %v6312 = vsel %vm626, %v6008, %v6311
      %6313 = vst [vmem:[%s623 + $0xc] sm:$0xf] %v6312
      %6314 = vst.msk [vmem:[%s623 + $0x10] sm:$0xf] %vm630, %v6017
      %v6315 = vld [vmem:[%s623 + $0x14] sm:$0x1]
      %v6316 = vsel %vm633, %v6018, %v6315
      %6317 = vst [vmem:[%s623 + $0x14] sm:$0x1] %v6316
      %v6318 = vld [vmem:[%s623 + $0x18] sm:$0xf]
      %v6319 = vsel %vm626, %v6025, %v6318
      %6320 = vst [vmem:[%s623 + $0x18] sm:$0xf] %v6319
      %6321 = vst.msk [vmem:[%s623 + $0x1c] sm:$0xf] %vm630, %v6034
      %v6322 = vld [vmem:[%s623 + $0x20] sm:$0x1]
      %v6323 = vsel %vm633, %v6035, %v6322
      %6324 = vst [vmem:[%s623 + $0x20] sm:$0x1] %v6323
      %v6325 = vld [vmem:[%s623 + $0x24] sm:$0xf]
      %v6326 = vsel %vm626, %v6042, %v6325
      %6327 = vst [vmem:[%s623 + $0x24] sm:$0xf] %v6326
      %6328 = vst.msk [vmem:[%s623 + $0x28] sm:$0xf] %vm630, %v6051
      %v6329 = vld [vmem:[%s623 + $0x2c] sm:$0x1]
      %v6330 = vsel %vm633, %v6052, %v6329
      %6331 = vst [vmem:[%s623 + $0x2c] sm:$0x1] %v6330
      %v6332 = vld [vmem:[%s623 + $0x30] sm:$0xf]
      %v6333 = vsel %vm626, %v6059, %v6332
      %6334 = vst [vmem:[%s623 + $0x30] sm:$0xf] %v6333
      %6335 = vst.msk [vmem:[%s623 + $0x34] sm:$0xf] %vm630, %v6068
      %v6336 = vld [vmem:[%s623 + $0x38] sm:$0x1]
      %v6337 = vsel %vm633, %v6069, %v6336
      %6338 = vst [vmem:[%s623 + $0x38] sm:$0x1] %v6337
      %v6339 = vld [vmem:[%s623 + $0x3c] sm:$0xf]
      %v6340 = vsel %vm626, %v6076, %v6339
      %6341 = vst [vmem:[%s623 + $0x3c] sm:$0xf] %v6340
      %6342 = vst.msk [vmem:[%s623 + $0x40] sm:$0xf] %vm630, %v6085
      %v6343 = vld [vmem:[%s623 + $0x44] sm:$0x1]
      %v6344 = vsel %vm633, %v6086, %v6343
      %6345 = vst [vmem:[%s623 + $0x44] sm:$0x1] %v6344
      %v6346 = vld [vmem:[%s623 + $0x48] sm:$0xf]
      %v6347 = vsel %vm626, %v6093, %v6346
      %6348 = vst [vmem:[%s623 + $0x48] sm:$0xf] %v6347
      %6349 = vst.msk [vmem:[%s623 + $0x4c] sm:$0xf] %vm630, %v6102
      %v6350 = vld [vmem:[%s623 + $0x50] sm:$0x1]
      %v6351 = vsel %vm633, %v6103, %v6350
      %6352 = vst [vmem:[%s623 + $0x50] sm:$0x1] %v6351
      %v6353 = vld [vmem:[%s623 + $0x54] sm:$0xf]
      %v6354 = vsel %vm626, %v6110, %v6353
      %6355 = vst [vmem:[%s623 + $0x54] sm:$0xf] %v6354
      %6356 = vst.msk [vmem:[%s623 + $0x58] sm:$0xf] %vm630, %v6119
      %v6357 = vld [vmem:[%s623 + $0x5c] sm:$0x1]
      %v6358 = vsel %vm633, %v6120, %v6357
      %6359 = vst [vmem:[%s623 + $0x5c] sm:$0x1] %v6358
      %v6360 = vld [vmem:[%s623 + $0x60] sm:$0xf]
      %v6361 = vsel %vm626, %v6127, %v6360
      %6362 = vst [vmem:[%s623 + $0x60] sm:$0xf] %v6361
      %6363 = vst.msk [vmem:[%s623 + $0x64] sm:$0xf] %vm630, %v6136
      %v6364 = vld [vmem:[%s623 + $0x68] sm:$0x1]
      %v6365 = vsel %vm633, %v6137, %v6364
      %6366 = vst [vmem:[%s623 + $0x68] sm:$0x1] %v6365
      %v6367 = vld [vmem:[%s623 + $0x6c] sm:$0xf]
      %v6368 = vsel %vm626, %v6144, %v6367
      %6369 = vst [vmem:[%s623 + $0x6c] sm:$0xf] %v6368
      %6370 = vst.msk [vmem:[%s623 + $0x70] sm:$0xf] %vm630, %v6153
      %v6371 = vld [vmem:[%s623 + $0x74] sm:$0x1]
      %v6372 = vsel %vm633, %v6154, %v6371
      %6373 = vst [vmem:[%s623 + $0x74] sm:$0x1] %v6372
      %v6374 = vld [vmem:[%s623 + $0x78] sm:$0xf]
      %v6375 = vsel %vm626, %v6161, %v6374
      %6376 = vst [vmem:[%s623 + $0x78] sm:$0xf] %v6375
      %6377 = vst.msk [vmem:[%s623 + $0x7c] sm:$0xf] %vm630, %v6170
      %v6378 = vld [vmem:[%s623 + $0x80] sm:$0x1]
      %v6379 = vsel %vm633, %v6171, %v6378
      %6380 = vst [vmem:[%s623 + $0x80] sm:$0x1] %v6379
      %v6381 = vld [vmem:[%s623 + $0x84] sm:$0xf]
      %v6382 = vsel %vm626, %v6178, %v6381
      %6383 = vst [vmem:[%s623 + $0x84] sm:$0xf] %v6382
      %6384 = vst.msk [vmem:[%s623 + $0x88] sm:$0xf] %vm630, %v6187
      %v6385 = vld [vmem:[%s623 + $0x8c] sm:$0x1]
      %v6386 = vsel %vm633, %v6188, %v6385
      %6387 = vst [vmem:[%s623 + $0x8c] sm:$0x1] %v6386
      %v6388 = vld [vmem:[%s623 + $0x90] sm:$0xf]
      %v6389 = vsel %vm626, %v6195, %v6388
      %6390 = vst [vmem:[%s623 + $0x90] sm:$0xf] %v6389
      %6391 = vst.msk [vmem:[%s623 + $0x94] sm:$0xf] %vm630, %v6204
      %v6392 = vld [vmem:[%s623 + $0x98] sm:$0x1]
      %v6393 = vsel %vm633, %v6205, %v6392
      %6394 = vst [vmem:[%s623 + $0x98] sm:$0x1] %v6393
      %v6395 = vld [vmem:[%s623 + $0x9c] sm:$0xf]
      %v6396 = vsel %vm626, %v6212, %v6395
      %6397 = vst [vmem:[%s623 + $0x9c] sm:$0xf] %v6396
      %6398 = vst.msk [vmem:[%s623 + $0xa0] sm:$0xf] %vm630, %v6221
      %v6399 = vld [vmem:[%s623 + $0xa4] sm:$0x1]
      %v6400 = vsel %vm633, %v6222, %v6399
      %6401 = vst [vmem:[%s623 + $0xa4] sm:$0x1] %v6400
      %v6402 = vld [vmem:[%s623 + $0xa8] sm:$0xf]
      %v6403 = vsel %vm626, %v6229, %v6402
      %6404 = vst [vmem:[%s623 + $0xa8] sm:$0xf] %v6403
      %6405 = vst.msk [vmem:[%s623 + $0xac] sm:$0xf] %vm630, %v6238
      %v6406 = vld [vmem:[%s623 + $0xb0] sm:$0x1]
      %v6407 = vsel %vm633, %v6239, %v6406
      %6408 = vst [vmem:[%s623 + $0xb0] sm:$0x1] %v6407
      %v6409 = vld [vmem:[%s623 + $0xb4] sm:$0xf]
      %v6410 = vsel %vm626, %v6246, %v6409
      %6411 = vst [vmem:[%s623 + $0xb4] sm:$0xf] %v6410
      %6412 = vst.msk [vmem:[%s623 + $0xb8] sm:$0xf] %vm630, %v6255
      %v6413 = vld [vmem:[%s623 + $0xbc] sm:$0x1]
      %v6414 = vsel %vm633, %v6256, %v6413
      %6415 = vst [vmem:[%s623 + $0xbc] sm:$0x1] %v6414
      %v6416 = vld [vmem:[%s742] sm:$0xf]
      %v6417 = vld [vmem:[%s742 + $0x4] sm:$0xf]
      %v6418 = vld [vmem:[%s742 + $0x8] sm:$0x1]
      %v6419 = vld [vmem:[#allocation2] sm:$0xf]
      %v6420 = vsel %vm626, %v6416, %v6419
      %6421 = vst [vmem:[#allocation2] sm:$0xf] %v6420
      %6422 = vst.msk [vmem:[#allocation2 + $0x4] sm:$0xf] %vm630, %v6417
      %v6423 = vld [vmem:[#allocation2 + $0x8] sm:$0x1]
      %v6424 = vsel %vm633, %v6418, %v6423
      %6425 = vst [vmem:[#allocation2 + $0x8] sm:$0x1] %v6424
      %v6426 = vld [vmem:[%s753] sm:$0xf]
      %v6427 = vld [vmem:[%s753 + $0x4] sm:$0xf]
      %v6428 = vld [vmem:[%s753 + $0x8] sm:$0x1]
      %v6429 = vld [vmem:[%s757] sm:$0xf]
      %v6430 = vsel %vm626, %v6426, %v6429
      %6431 = vst [vmem:[%s757] sm:$0xf] %v6430
      %6432 = vst.msk [vmem:[%s757 + $0x4] sm:$0xf] %vm630, %v6427
      %v6433 = vld [vmem:[%s757 + $0x8] sm:$0x1]
      %v6434 = vsel %vm633, %v6428, %v6433
      %6435 = vst [vmem:[%s757 + $0x8] sm:$0x1] %v6434
      %v6436 = vld [vmem:[#allocation2] sm:$0x2]
      %v6437 = vld [vmem:[#allocation2 + $0xc] sm:$0x2]
      %v6438 = vld [vmem:[#allocation2 + $0x18] sm:$0x2]
      %v6439 = vld [vmem:[#allocation2 + $0x24] sm:$0x2]
      %v6440 = vld [vmem:[#allocation2 + $0x30] sm:$0x2]
      %v6441 = vld [vmem:[#allocation2 + $0x3c] sm:$0x2]
      %v6442 = vld [vmem:[#allocation2 + $0x48] sm:$0x2]
      %v6443 = vld [vmem:[#allocation2 + $0x54] sm:$0x2]
      %v6444 = vld [vmem:[#allocation2 + $0x60] sm:$0x2]
      %v6445 = vld [vmem:[#allocation2 + $0x6c] sm:$0x2]
      %v6446 = vld [vmem:[#allocation2 + $0x78] sm:$0x2]
      %v6447 = vld [vmem:[#allocation2 + $0x84] sm:$0x2]
      %v6448 = vld [vmem:[#allocation2 + $0x90] sm:$0x2]
      %v6449 = vld [vmem:[#allocation2 + $0x9c] sm:$0x2]
      %v6450 = vld [vmem:[#allocation2 + $0xa8] sm:$0x2]
      %v6451 = vld [vmem:[#allocation2 + $0xb4] sm:$0x2]
      %v6452 = vld [vmem:[#allocation2 + $0xc0] sm:$0x2]
      %v6453 = vld [vmem:[#allocation2 + $0xcc] sm:$0x2]
      %v6472 = vrot.slane %v6436, 5
      %v6473 = vrot.slane %v6472, 4
      %v6474 = vrot.slane %v6437, 5
      %v6475 = vrot.slane %v6474, 4
      %v6476 = vrot.slane %v6438, 5
      %v6477 = vrot.slane %v6476, 4
      %v6478 = vrot.slane %v6439, 5
      %v6479 = vrot.slane %v6478, 4
      %v6480 = vrot.slane %v6440, 5
      %v6481 = vrot.slane %v6480, 4
      %v6482 = vrot.slane %v6441, 5
      %v6483 = vrot.slane %v6482, 4
      %v6484 = vrot.slane %v6442, 5
      %v6485 = vrot.slane %v6484, 4
      %v6486 = vrot.slane %v6443, 5
      %v6487 = vrot.slane %v6486, 4
      %v6488 = vrot.slane %v6444, 5
      %v6489 = vrot.slane %v6488, 4
      %v6490 = vrot.slane %v6445, 5
      %v6491 = vrot.slane %v6490, 4
      %v6492 = vrot.slane %v6446, 5
      %v6493 = vrot.slane %v6492, 4
      %v6494 = vrot.slane %v6447, 5
      %v6495 = vrot.slane %v6494, 4
      %v6496 = vrot.slane %v6448, 5
      %v6497 = vrot.slane %v6496, 4
      %v6498 = vrot.slane %v6449, 5
      %v6499 = vrot.slane %v6498, 4
      %v6500 = vrot.slane %v6450, 5
      %v6501 = vrot.slane %v6500, 4
      %v6502 = vrot.slane %v6451, 5
      %v6503 = vrot.slane %v6502, 4
      %v6504 = vrot.slane %v6452, 5
      %v6505 = vrot.slane %v6504, 4
      %v6506 = vrot.slane %v6453, 5
      %v6507 = vrot.slane %v6506, 4
      %v6526 = vld [vmem:[#allocation2] sm:$0x1]
      %v6527 = vsel %vm633, %v6473, %v6526
      %6528 = vst [vmem:[#allocation2] sm:$0x1] %v6527
      %v6529 = vld [vmem:[#allocation2 + $0xc] sm:$0x1]
      %v6530 = vsel %vm633, %v6475, %v6529
      %6531 = vst [vmem:[#allocation2 + $0xc] sm:$0x1] %v6530
      %v6532 = vld [vmem:[#allocation2 + $0x18] sm:$0x1]
      %v6533 = vsel %vm633, %v6477, %v6532
      %6534 = vst [vmem:[#allocation2 + $0x18] sm:$0x1] %v6533
      %v6535 = vld [vmem:[#allocation2 + $0x24] sm:$0x1]
      %v6536 = vsel %vm633, %v6479, %v6535
      %6537 = vst [vmem:[#allocation2 + $0x24] sm:$0x1] %v6536
      %v6538 = vld [vmem:[#allocation2 + $0x30] sm:$0x1]
      %v6539 = vsel %vm633, %v6481, %v6538
      %6540 = vst [vmem:[#allocation2 + $0x30] sm:$0x1] %v6539
      %v6541 = vld [vmem:[#allocation2 + $0x3c] sm:$0x1]
      %v6542 = vsel %vm633, %v6483, %v6541
      %6543 = vst [vmem:[#allocation2 + $0x3c] sm:$0x1] %v6542
      %v6544 = vld [vmem:[#allocation2 + $0x48] sm:$0x1]
      %v6545 = vsel %vm633, %v6485, %v6544
      %6546 = vst [vmem:[#allocation2 + $0x48] sm:$0x1] %v6545
      %v6547 = vld [vmem:[#allocation2 + $0x54] sm:$0x1]
      %v6548 = vsel %vm633, %v6487, %v6547
      %6549 = vst [vmem:[#allocation2 + $0x54] sm:$0x1] %v6548
      %v6550 = vld [vmem:[#allocation2 + $0x60] sm:$0x1]
      %v6551 = vsel %vm633, %v6489, %v6550
      %6552 = vst [vmem:[#allocation2 + $0x60] sm:$0x1] %v6551
      %v6553 = vld [vmem:[#allocation2 + $0x6c] sm:$0x1]
      %v6554 = vsel %vm633, %v6491, %v6553
      %6555 = vst [vmem:[#allocation2 + $0x6c] sm:$0x1] %v6554
      %v6556 = vld [vmem:[#allocation2 + $0x78] sm:$0x1]
      %v6557 = vsel %vm633, %v6493, %v6556
      %6558 = vst [vmem:[#allocation2 + $0x78] sm:$0x1] %v6557
      %v6559 = vld [vmem:[#allocation2 + $0x84] sm:$0x1]
      %v6560 = vsel %vm633, %v6495, %v6559
      %6561 = vst [vmem:[#allocation2 + $0x84] sm:$0x1] %v6560
      %v6562 = vld [vmem:[#allocation2 + $0x90] sm:$0x1]
      %v6563 = vsel %vm633, %v6497, %v6562
      %6564 = vst [vmem:[#allocation2 + $0x90] sm:$0x1] %v6563
      %v6565 = vld [vmem:[#allocation2 + $0x9c] sm:$0x1]
      %v6566 = vsel %vm633, %v6499, %v6565
      %6567 = vst [vmem:[#allocation2 + $0x9c] sm:$0x1] %v6566
      %v6568 = vld [vmem:[#allocation2 + $0xa8] sm:$0x1]
      %v6569 = vsel %vm633, %v6501, %v6568
      %6570 = vst [vmem:[#allocation2 + $0xa8] sm:$0x1] %v6569
      %v6571 = vld [vmem:[#allocation2 + $0xb4] sm:$0x1]
      %v6572 = vsel %vm633, %v6503, %v6571
      %6573 = vst [vmem:[#allocation2 + $0xb4] sm:$0x1] %v6572
      %v6574 = vld [vmem:[#allocation2 + $0xc0] sm:$0x1]
      %v6575 = vsel %vm633, %v6505, %v6574
      %6576 = vst [vmem:[#allocation2 + $0xc0] sm:$0x1] %v6575
      %v6577 = vld [vmem:[#allocation2 + $0xcc] sm:$0x1]
      %v6578 = vsel %vm633, %v6507, %v6577
      %6579 = vst [vmem:[#allocation2 + $0xcc] sm:$0x1] %v6578
      %v6580 = vld [vmem:[#allocation2 + $0x4] sm:$0x8]
      %v6581 = vld [vmem:[#allocation2 + $0x10] sm:$0x8]
      %v6582 = vld [vmem:[#allocation2 + $0x1c] sm:$0x8]
      %v6583 = vld [vmem:[#allocation2 + $0x28] sm:$0x8]
      %v6584 = vld [vmem:[#allocation2 + $0x34] sm:$0x8]
      %v6585 = vld [vmem:[#allocation2 + $0x40] sm:$0x8]
      %v6586 = vld [vmem:[#allocation2 + $0x4c] sm:$0x8]
      %v6587 = vld [vmem:[#allocation2 + $0x58] sm:$0x8]
      %v6588 = vld [vmem:[#allocation2 + $0x64] sm:$0x8]
      %v6589 = vld [vmem:[#allocation2 + $0x70] sm:$0x8]
      %v6590 = vld [vmem:[#allocation2 + $0x7c] sm:$0x8]
      %v6591 = vld [vmem:[#allocation2 + $0x88] sm:$0x8]
      %v6592 = vld [vmem:[#allocation2 + $0x94] sm:$0x8]
      %v6593 = vld [vmem:[#allocation2 + $0xa0] sm:$0x8]
      %v6594 = vld [vmem:[#allocation2 + $0xac] sm:$0x8]
      %v6595 = vld [vmem:[#allocation2 + $0xb8] sm:$0x8]
      %v6596 = vld [vmem:[#allocation2 + $0xc4] sm:$0x8]
      %v6597 = vld [vmem:[#allocation2 + $0xd0] sm:$0x8]
      %v6616 = vrot.slane %v6580, 7
      %v6617 = vrot.slane %v6616, 4
      %v6618 = vrot.slane %v6581, 7
      %v6619 = vrot.slane %v6618, 4
      %v6620 = vrot.slane %v6582, 7
      %v6621 = vrot.slane %v6620, 4
      %v6622 = vrot.slane %v6583, 7
      %v6623 = vrot.slane %v6622, 4
      %v6624 = vrot.slane %v6584, 7
      %v6625 = vrot.slane %v6624, 4
      %v6626 = vrot.slane %v6585, 7
      %v6627 = vrot.slane %v6626, 4
      %v6628 = vrot.slane %v6586, 7
      %v6629 = vrot.slane %v6628, 4
      %v6630 = vrot.slane %v6587, 7
      %v6631 = vrot.slane %v6630, 4
      %v6632 = vrot.slane %v6588, 7
      %v6633 = vrot.slane %v6632, 4
      %v6634 = vrot.slane %v6589, 7
      %v6635 = vrot.slane %v6634, 4
      %v6636 = vrot.slane %v6590, 7
      %v6637 = vrot.slane %v6636, 4
      %v6638 = vrot.slane %v6591, 7
      %v6639 = vrot.slane %v6638, 4
      %v6640 = vrot.slane %v6592, 7
      %v6641 = vrot.slane %v6640, 4
      %v6642 = vrot.slane %v6593, 7
      %v6643 = vrot.slane %v6642, 4
      %v6644 = vrot.slane %v6594, 7
      %v6645 = vrot.slane %v6644, 4
      %v6646 = vrot.slane %v6595, 7
      %v6647 = vrot.slane %v6646, 4
      %v6648 = vrot.slane %v6596, 7
      %v6649 = vrot.slane %v6648, 4
      %v6650 = vrot.slane %v6597, 7
      %v6651 = vrot.slane %v6650, 4
      %v6670 = vld [vmem:[#allocation2 + $0x8] sm:$0x1]
      %v6671 = vsel %vm999, %v6617, %v6670
      %6672 = vst [vmem:[#allocation2 + $0x8] sm:$0x1] %v6671
      %v6673 = vld [vmem:[#allocation2 + $0x14] sm:$0x1]
      %v6674 = vsel %vm999, %v6619, %v6673
      %6675 = vst [vmem:[#allocation2 + $0x14] sm:$0x1] %v6674
      %v6676 = vld [vmem:[#allocation2 + $0x20] sm:$0x1]
      %v6677 = vsel %vm999, %v6621, %v6676
      %6678 = vst [vmem:[#allocation2 + $0x20] sm:$0x1] %v6677
      %v6679 = vld [vmem:[#allocation2 + $0x2c] sm:$0x1]
      %v6680 = vsel %vm999, %v6623, %v6679
      %6681 = vst [vmem:[#allocation2 + $0x2c] sm:$0x1] %v6680
      %v6682 = vld [vmem:[#allocation2 + $0x38] sm:$0x1]
      %v6683 = vsel %vm999, %v6625, %v6682
      %6684 = vst [vmem:[#allocation2 + $0x38] sm:$0x1] %v6683
      %v6685 = vld [vmem:[#allocation2 + $0x44] sm:$0x1]
      %v6686 = vsel %vm999, %v6627, %v6685
      %6687 = vst [vmem:[#allocation2 + $0x44] sm:$0x1] %v6686
      %v6688 = vld [vmem:[#allocation2 + $0x50] sm:$0x1]
      %v6689 = vsel %vm999, %v6629, %v6688
      %6690 = vst [vmem:[#allocation2 + $0x50] sm:$0x1] %v6689
      %v6691 = vld [vmem:[#allocation2 + $0x5c] sm:$0x1]
      %v6692 = vsel %vm999, %v6631, %v6691
      %6693 = vst [vmem:[#allocation2 + $0x5c] sm:$0x1] %v6692
      %v6694 = vld [vmem:[#allocation2 + $0x68] sm:$0x1]
      %v6695 = vsel %vm999, %v6633, %v6694
      %6696 = vst [vmem:[#allocation2 + $0x68] sm:$0x1] %v6695
      %v6697 = vld [vmem:[#allocation2 + $0x74] sm:$0x1]
      %v6698 = vsel %vm999, %v6635, %v6697
      %6699 = vst [vmem:[#allocation2 + $0x74] sm:$0x1] %v6698
      %v6700 = vld [vmem:[#allocation2 + $0x80] sm:$0x1]
      %v6701 = vsel %vm999, %v6637, %v6700
      %6702 = vst [vmem:[#allocation2 + $0x80] sm:$0x1] %v6701
      %v6703 = vld [vmem:[#allocation2 + $0x8c] sm:$0x1]
      %v6704 = vsel %vm999, %v6639, %v6703
      %6705 = vst [vmem:[#allocation2 + $0x8c] sm:$0x1] %v6704
      %v6706 = vld [vmem:[#allocation2 + $0x98] sm:$0x1]
      %v6707 = vsel %vm999, %v6641, %v6706
      %6708 = vst [vmem:[#allocation2 + $0x98] sm:$0x1] %v6707
      %v6709 = vld [vmem:[#allocation2 + $0xa4] sm:$0x1]
      %v6710 = vsel %vm999, %v6643, %v6709
      %6711 = vst [vmem:[#allocation2 + $0xa4] sm:$0x1] %v6710
      %v6712 = vld [vmem:[#allocation2 + $0xb0] sm:$0x1]
      %v6713 = vsel %vm999, %v6645, %v6712
      %6714 = vst [vmem:[#allocation2 + $0xb0] sm:$0x1] %v6713
      %v6715 = vld [vmem:[#allocation2 + $0xbc] sm:$0x1]
      %v6716 = vsel %vm999, %v6647, %v6715
      %6717 = vst [vmem:[#allocation2 + $0xbc] sm:$0x1] %v6716
      %v6718 = vld [vmem:[#allocation2 + $0xc8] sm:$0x1]
      %v6719 = vsel %vm999, %v6649, %v6718
      %6720 = vst [vmem:[#allocation2 + $0xc8] sm:$0x1] %v6719
      %v6721 = vld [vmem:[#allocation2 + $0xd4] sm:$0x1]
      %v6722 = vsel %vm999, %v6651, %v6721
      %6723 = vst [vmem:[#allocation2 + $0xd4] sm:$0x1] %v6722
      %v6724 = vld [vmem:[#allocation2] sm:$0xf]
      %v6725 = vld [vmem:[#allocation2 + $0x4] sm:$0xf]
      %v6726 = vld [vmem:[#allocation2 + $0xc] sm:$0xf]
      %v6727 = vld [vmem:[#allocation2 + $0x10] sm:$0xf]
      %v6728 = vld [vmem:[#allocation2 + $0x18] sm:$0xf]
      %v6729 = vld [vmem:[#allocation2 + $0x1c] sm:$0xf]
      %v6730 = vld [vmem:[#allocation2 + $0x24] sm:$0xf]
      %v6731 = vld [vmem:[#allocation2 + $0x28] sm:$0xf]
      %v6732 = vld [vmem:[#allocation2 + $0x30] sm:$0xf]
      %v6733 = vld [vmem:[#allocation2 + $0x34] sm:$0xf]
      %v6734 = vld [vmem:[#allocation2 + $0x3c] sm:$0xf]
      %v6735 = vld [vmem:[#allocation2 + $0x40] sm:$0xf]
      %v6736 = vld [vmem:[#allocation2 + $0x48] sm:$0xf]
      %v6737 = vld [vmem:[#allocation2 + $0x4c] sm:$0xf]
      %v6738 = vld [vmem:[#allocation2 + $0x54] sm:$0xf]
      %v6739 = vld [vmem:[#allocation2 + $0x58] sm:$0xf]
      %v6740 = vld [vmem:[#allocation2 + $0x60] sm:$0xf]
      %v6741 = vld [vmem:[#allocation2 + $0x64] sm:$0xf]
      %v6742 = vld [vmem:[#allocation2 + $0x6c] sm:$0xf]
      %v6743 = vld [vmem:[#allocation2 + $0x70] sm:$0xf]
      %v6744 = vld [vmem:[#allocation2 + $0x78] sm:$0xf]
      %v6745 = vld [vmem:[#allocation2 + $0x7c] sm:$0xf]
      %v6746 = vld [vmem:[#allocation2 + $0x84] sm:$0xf]
      %v6747 = vld [vmem:[#allocation2 + $0x88] sm:$0xf]
      %v6748 = vld [vmem:[#allocation2 + $0x90] sm:$0xf]
      %v6749 = vld [vmem:[#allocation2 + $0x94] sm:$0xf]
      %v6750 = vld [vmem:[#allocation2 + $0x9c] sm:$0xf]
      %v6751 = vld [vmem:[#allocation2 + $0xa0] sm:$0xf]
      %v6752 = vld [vmem:[#allocation2 + $0xa8] sm:$0xf]
      %v6753 = vld [vmem:[#allocation2 + $0xac] sm:$0xf]
      %v6754 = vld [vmem:[#allocation2 + $0xb4] sm:$0xf]
      %v6755 = vld [vmem:[#allocation2 + $0xb8] sm:$0xf]
      %v6756 = vld [vmem:[%s2] sm:$0x3]
      %v6757 = vld [vmem:[#allocation2 + $0x8] sm:$0x1]
      %v6758 = vld [vmem:[#allocation2 + $0x14] sm:$0x1]
      %v6759 = vld [vmem:[#allocation2 + $0x20] sm:$0x1]
      %v6760 = vld [vmem:[#allocation2 + $0x2c] sm:$0x1]
      %v6761 = vld [vmem:[#allocation2 + $0x38] sm:$0x1]
      %v6762 = vld [vmem:[#allocation2 + $0x44] sm:$0x1]
      %v6763 = vld [vmem:[#allocation2 + $0x50] sm:$0x1]
      %v6764 = vld [vmem:[#allocation2 + $0x5c] sm:$0x1]
      %v6765 = vld [vmem:[#allocation2 + $0x68] sm:$0x1]
      %v6766 = vld [vmem:[#allocation2 + $0x74] sm:$0x1]
      %v6767 = vld [vmem:[#allocation2 + $0x80] sm:$0x1]
      %v6768 = vld [vmem:[#allocation2 + $0x8c] sm:$0x1]
      %v6769 = vld [vmem:[#allocation2 + $0x98] sm:$0x1]
      %v6770 = vld [vmem:[#allocation2 + $0xa4] sm:$0x1]
      %v6771 = vld [vmem:[#allocation2 + $0xb0] sm:$0x1]
      %v6772 = vld [vmem:[#allocation2 + $0xbc] sm:$0x1]
      %v6774 = vshrl.u32 %v6724, 16
      %v6776 = vrot.slane %v6774, 4
      %v6777 = vshll.u32 %v6724, 16
      %v6779 = vrot.slane %v6777, 5
      %v6780 = vor.u32 %v6776, %v6779
      %v6781 = vrot.slane %v6780, 4
      %v6783 = vshll.u32 %v6725, 16
      %v6785 = vrot.slane %v6783, 5
      %v6786 = vsel %vm1105, %v6781, %v6785
      %v6787 = vshrl.u32 %v6725, 16
      %v6789 = vrot.slane %v6787, 4
      %v6790 = vor.u32 %v6789, %v6785
      %v6791 = vrot.slane %v6790, 4
      %v6793 = vshll.u32 %v6757, 16
      %v6795 = vrot.slane %v6793, 5
      %v6796 = vsel %vm1105, %v6791, %v6795
      %v6798 = vshrl.u32 %v6726, 16
      %v6800 = vrot.slane %v6798, 4
      %v6801 = vshll.u32 %v6726, 16
      %v6803 = vrot.slane %v6801, 5
      %v6804 = vor.u32 %v6800, %v6803
      %v6805 = vrot.slane %v6804, 4
      %v6807 = vshll.u32 %v6727, 16
      %v6809 = vrot.slane %v6807, 5
      %v6810 = vsel %vm1105, %v6805, %v6809
      %v6811 = vshrl.u32 %v6727, 16
      %v6813 = vrot.slane %v6811, 4
      %v6814 = vor.u32 %v6813, %v6809
      %v6815 = vrot.slane %v6814, 4
      %v6817 = vshll.u32 %v6758, 16
      %v6819 = vrot.slane %v6817, 5
      %v6820 = vsel %vm1105, %v6815, %v6819
      %v6822 = vshrl.u32 %v6728, 16
      %v6824 = vrot.slane %v6822, 4
      %v6825 = vshll.u32 %v6728, 16
      %v6827 = vrot.slane %v6825, 5
      %v6828 = vor.u32 %v6824, %v6827
      %v6829 = vrot.slane %v6828, 4
      %v6831 = vshll.u32 %v6729, 16
      %v6833 = vrot.slane %v6831, 5
      %v6834 = vsel %vm1105, %v6829, %v6833
      %v6835 = vshrl.u32 %v6729, 16
      %v6837 = vrot.slane %v6835, 4
      %v6838 = vor.u32 %v6837, %v6833
      %v6839 = vrot.slane %v6838, 4
      %v6841 = vshll.u32 %v6759, 16
      %v6843 = vrot.slane %v6841, 5
      %v6844 = vsel %vm1105, %v6839, %v6843
      %v6846 = vshrl.u32 %v6730, 16
      %v6848 = vrot.slane %v6846, 4
      %v6849 = vshll.u32 %v6730, 16
      %v6851 = vrot.slane %v6849, 5
      %v6852 = vor.u32 %v6848, %v6851
      %v6853 = vrot.slane %v6852, 4
      %v6855 = vshll.u32 %v6731, 16
      %v6857 = vrot.slane %v6855, 5
      %v6858 = vsel %vm1105, %v6853, %v6857
      %v6859 = vshrl.u32 %v6731, 16
      %v6861 = vrot.slane %v6859, 4
      %v6862 = vor.u32 %v6861, %v6857
      %v6863 = vrot.slane %v6862, 4
      %v6865 = vshll.u32 %v6760, 16
      %v6867 = vrot.slane %v6865, 5
      %v6868 = vsel %vm1105, %v6863, %v6867
      %v6870 = vshrl.u32 %v6732, 16
      %v6872 = vrot.slane %v6870, 4
      %v6873 = vshll.u32 %v6732, 16
      %v6875 = vrot.slane %v6873, 5
      %v6876 = vor.u32 %v6872, %v6875
      %v6877 = vrot.slane %v6876, 4
      %v6879 = vshll.u32 %v6733, 16
      %v6881 = vrot.slane %v6879, 5
      %v6882 = vsel %vm1105, %v6877, %v6881
      %v6883 = vshrl.u32 %v6733, 16
      %v6885 = vrot.slane %v6883, 4
      %v6886 = vor.u32 %v6885, %v6881
      %v6887 = vrot.slane %v6886, 4
      %v6889 = vshll.u32 %v6761, 16
      %v6891 = vrot.slane %v6889, 5
      %v6892 = vsel %vm1105, %v6887, %v6891
      %v6894 = vshrl.u32 %v6734, 16
      %v6896 = vrot.slane %v6894, 4
      %v6897 = vshll.u32 %v6734, 16
      %v6899 = vrot.slane %v6897, 5
      %v6900 = vor.u32 %v6896, %v6899
      %v6901 = vrot.slane %v6900, 4
      %v6903 = vshll.u32 %v6735, 16
      %v6905 = vrot.slane %v6903, 5
      %v6906 = vsel %vm1105, %v6901, %v6905
      %v6907 = vshrl.u32 %v6735, 16
      %v6909 = vrot.slane %v6907, 4
      %v6910 = vor.u32 %v6909, %v6905
      %v6911 = vrot.slane %v6910, 4
      %v6913 = vshll.u32 %v6762, 16
      %v6915 = vrot.slane %v6913, 5
      %v6916 = vsel %vm1105, %v6911, %v6915
      %v6918 = vshrl.u32 %v6736, 16
      %v6920 = vrot.slane %v6918, 4
      %v6921 = vshll.u32 %v6736, 16
      %v6923 = vrot.slane %v6921, 5
      %v6924 = vor.u32 %v6920, %v6923
      %v6925 = vrot.slane %v6924, 4
      %v6927 = vshll.u32 %v6737, 16
      %v6929 = vrot.slane %v6927, 5
      %v6930 = vsel %vm1105, %v6925, %v6929
      %v6931 = vshrl.u32 %v6737, 16
      %v6933 = vrot.slane %v6931, 4
      %v6934 = vor.u32 %v6933, %v6929
      %v6935 = vrot.slane %v6934, 4
      %v6937 = vshll.u32 %v6763, 16
      %v6939 = vrot.slane %v6937, 5
      %v6940 = vsel %vm1105, %v6935, %v6939
      %v6942 = vshrl.u32 %v6738, 16
      %v6944 = vrot.slane %v6942, 4
      %v6945 = vshll.u32 %v6738, 16
      %v6947 = vrot.slane %v6945, 5
      %v6948 = vor.u32 %v6944, %v6947
      %v6949 = vrot.slane %v6948, 4
      %v6951 = vshll.u32 %v6739, 16
      %v6953 = vrot.slane %v6951, 5
      %v6954 = vsel %vm1105, %v6949, %v6953
      %v6955 = vshrl.u32 %v6739, 16
      %v6957 = vrot.slane %v6955, 4
      %v6958 = vor.u32 %v6957, %v6953
      %v6959 = vrot.slane %v6958, 4
      %v6961 = vshll.u32 %v6764, 16
      %v6963 = vrot.slane %v6961, 5
      %v6964 = vsel %vm1105, %v6959, %v6963
      %v6966 = vshrl.u32 %v6740, 16
      %v6968 = vrot.slane %v6966, 4
      %v6969 = vshll.u32 %v6740, 16
      %v6971 = vrot.slane %v6969, 5
      %v6972 = vor.u32 %v6968, %v6971
      %v6973 = vrot.slane %v6972, 4
      %v6975 = vshll.u32 %v6741, 16
      %v6977 = vrot.slane %v6975, 5
      %v6978 = vsel %vm1105, %v6973, %v6977
      %v6979 = vshrl.u32 %v6741, 16
      %v6981 = vrot.slane %v6979, 4
      %v6982 = vor.u32 %v6981, %v6977
      %v6983 = vrot.slane %v6982, 4
      %v6985 = vshll.u32 %v6765, 16
      %v6987 = vrot.slane %v6985, 5
      %v6988 = vsel %vm1105, %v6983, %v6987
      %v6990 = vshrl.u32 %v6742, 16
      %v6992 = vrot.slane %v6990, 4
      %v6993 = vshll.u32 %v6742, 16
      %v6995 = vrot.slane %v6993, 5
      %v6996 = vor.u32 %v6992, %v6995
      %v6997 = vrot.slane %v6996, 4
      %v6999 = vshll.u32 %v6743, 16
      %v7001 = vrot.slane %v6999, 5
      %v7002 = vsel %vm1105, %v6997, %v7001
      %v7003 = vshrl.u32 %v6743, 16
      %v7005 = vrot.slane %v7003, 4
      %v7006 = vor.u32 %v7005, %v7001
      %v7007 = vrot.slane %v7006, 4
      %v7009 = vshll.u32 %v6766, 16
      %v7011 = vrot.slane %v7009, 5
      %v7012 = vsel %vm1105, %v7007, %v7011
      %v7014 = vshrl.u32 %v6744, 16
      %v7016 = vrot.slane %v7014, 4
      %v7017 = vshll.u32 %v6744, 16
      %v7019 = vrot.slane %v7017, 5
      %v7020 = vor.u32 %v7016, %v7019
      %v7021 = vrot.slane %v7020, 4
      %v7023 = vshll.u32 %v6745, 16
      %v7025 = vrot.slane %v7023, 5
      %v7026 = vsel %vm1105, %v7021, %v7025
      %v7027 = vshrl.u32 %v6745, 16
      %v7029 = vrot.slane %v7027, 4
      %v7030 = vor.u32 %v7029, %v7025
      %v7031 = vrot.slane %v7030, 4
      %v7033 = vshll.u32 %v6767, 16
      %v7035 = vrot.slane %v7033, 5
      %v7036 = vsel %vm1105, %v7031, %v7035
      %v7038 = vshrl.u32 %v6746, 16
      %v7040 = vrot.slane %v7038, 4
      %v7041 = vshll.u32 %v6746, 16
      %v7043 = vrot.slane %v7041, 5
      %v7044 = vor.u32 %v7040, %v7043
      %v7045 = vrot.slane %v7044, 4
      %v7047 = vshll.u32 %v6747, 16
      %v7049 = vrot.slane %v7047, 5
      %v7050 = vsel %vm1105, %v7045, %v7049
      %v7051 = vshrl.u32 %v6747, 16
      %v7053 = vrot.slane %v7051, 4
      %v7054 = vor.u32 %v7053, %v7049
      %v7055 = vrot.slane %v7054, 4
      %v7057 = vshll.u32 %v6768, 16
      %v7059 = vrot.slane %v7057, 5
      %v7060 = vsel %vm1105, %v7055, %v7059
      %v7062 = vshrl.u32 %v6748, 16
      %v7064 = vrot.slane %v7062, 4
      %v7065 = vshll.u32 %v6748, 16
      %v7067 = vrot.slane %v7065, 5
      %v7068 = vor.u32 %v7064, %v7067
      %v7069 = vrot.slane %v7068, 4
      %v7071 = vshll.u32 %v6749, 16
      %v7073 = vrot.slane %v7071, 5
      %v7074 = vsel %vm1105, %v7069, %v7073
      %v7075 = vshrl.u32 %v6749, 16
      %v7077 = vrot.slane %v7075, 4
      %v7078 = vor.u32 %v7077, %v7073
      %v7079 = vrot.slane %v7078, 4
      %v7081 = vshll.u32 %v6769, 16
      %v7083 = vrot.slane %v7081, 5
      %v7084 = vsel %vm1105, %v7079, %v7083
      %v7086 = vshrl.u32 %v6750, 16
      %v7088 = vrot.slane %v7086, 4
      %v7089 = vshll.u32 %v6750, 16
      %v7091 = vrot.slane %v7089, 5
      %v7092 = vor.u32 %v7088, %v7091
      %v7093 = vrot.slane %v7092, 4
      %v7095 = vshll.u32 %v6751, 16
      %v7097 = vrot.slane %v7095, 5
      %v7098 = vsel %vm1105, %v7093, %v7097
      %v7099 = vshrl.u32 %v6751, 16
      %v7101 = vrot.slane %v7099, 4
      %v7102 = vor.u32 %v7101, %v7097
      %v7103 = vrot.slane %v7102, 4
      %v7105 = vshll.u32 %v6770, 16
      %v7107 = vrot.slane %v7105, 5
      %v7108 = vsel %vm1105, %v7103, %v7107
      %v7110 = vshrl.u32 %v6752, 16
      %v7112 = vrot.slane %v7110, 4
      %v7113 = vshll.u32 %v6752, 16
      %v7115 = vrot.slane %v7113, 5
      %v7116 = vor.u32 %v7112, %v7115
      %v7117 = vrot.slane %v7116, 4
      %v7119 = vshll.u32 %v6753, 16
      %v7121 = vrot.slane %v7119, 5
      %v7122 = vsel %vm1105, %v7117, %v7121
      %v7123 = vshrl.u32 %v6753, 16
      %v7125 = vrot.slane %v7123, 4
      %v7126 = vor.u32 %v7125, %v7121
      %v7127 = vrot.slane %v7126, 4
      %v7129 = vshll.u32 %v6771, 16
      %v7131 = vrot.slane %v7129, 5
      %v7132 = vsel %vm1105, %v7127, %v7131
      %v7134 = vshrl.u32 %v6754, 16
      %v7136 = vrot.slane %v7134, 4
      %v7137 = vshll.u32 %v6754, 16
      %v7139 = vrot.slane %v7137, 5
      %v7140 = vor.u32 %v7136, %v7139
      %v7141 = vrot.slane %v7140, 4
      %v7143 = vshll.u32 %v6755, 16
      %v7145 = vrot.slane %v7143, 5
      %v7146 = vsel %vm1105, %v7141, %v7145
      %v7147 = vshrl.u32 %v6755, 16
      %v7149 = vrot.slane %v7147, 4
      %v7150 = vor.u32 %v7149, %v7145
      %v7151 = vrot.slane %v7150, 4
      %v7153 = vshll.u32 %v6772, 16
      %v7155 = vrot.slane %v7153, 5
      %v7156 = vsel %vm1105, %v7151, %v7155
      %v7157 = vld [vmem:[%s2] sm:$0xc]
      %v7158 = vunpack.c.l.b16 %v6786
      %v7159 = vunpack.c.l.b16 %v6796
      %v7160 = vunpack.c.l.b16 %v6810
      %v7161 = vunpack.c.l.b16 %v6820
      %v7162 = vunpack.c.l.b16 %v6834
      %v7163 = vunpack.c.l.b16 %v6844
      %v7164 = vunpack.c.l.b16 %v6858
      %v7165 = vunpack.c.l.b16 %v6868
      %v7166 = vunpack.c.l.b16 %v6882
      %v7167 = vunpack.c.l.b16 %v6892
      %v7168 = vunpack.c.l.b16 %v6906
      %v7169 = vunpack.c.l.b16 %v6916
      %v7170 = vunpack.c.l.b16 %v6930
      %v7171 = vunpack.c.l.b16 %v6940
      %v7172 = vunpack.c.l.b16 %v6954
      %v7173 = vunpack.c.l.b16 %v6964
      %v7174 = vunpack.c.l.b16 %v6978
      %v7175 = vunpack.c.l.b16 %v6988
      %v7176 = vunpack.c.l.b16 %v7002
      %v7177 = vunpack.c.l.b16 %v7012
      %v7178 = vunpack.c.l.b16 %v7026
      %v7179 = vunpack.c.l.b16 %v7036
      %v7180 = vunpack.c.l.b16 %v7050
      %v7181 = vunpack.c.l.b16 %v7060
      %v7182 = vunpack.c.l.b16 %v7074
      %v7183 = vunpack.c.l.b16 %v7084
      %v7184 = vunpack.c.l.b16 %v7098
      %v7185 = vunpack.c.l.b16 %v7108
      %v7186 = vunpack.c.l.b16 %v7122
      %v7187 = vunpack.c.l.b16 %v7132
      %v7188 = vunpack.c.l.b16 %v7146
      %v7189 = vunpack.c.l.b16 %v7156
      %v7190 = vpack.c.b16 %v7159, %v7158
      %v7191 = vpack.c.b16 %v7161, %v7160
      %v7192 = vpack.c.b16 %v7163, %v7162
      %v7193 = vpack.c.b16 %v7165, %v7164
      %v7194 = vpack.c.b16 %v7167, %v7166
      %v7195 = vpack.c.b16 %v7169, %v7168
      %v7196 = vpack.c.b16 %v7171, %v7170
      %v7197 = vpack.c.b16 %v7173, %v7172
      %v7198 = vpack.c.b16 %v7175, %v7174
      %v7199 = vpack.c.b16 %v7177, %v7176
      %v7200 = vpack.c.b16 %v7179, %v7178
      %v7201 = vpack.c.b16 %v7181, %v7180
      %v7202 = vpack.c.b16 %v7183, %v7182
      %v7203 = vpack.c.b16 %v7185, %v7184
      %v7204 = vpack.c.b16 %v7187, %v7186
      %v7205 = vpack.c.b16 %v7189, %v7188
      %v7207 = vunpack.c.l.b16 %v7157
      %v7208 = vpack.c.b16 %v7207, %v7207
      %v7209 = vrot.slane %v7208, 2
      %v7211 = vsel %vm1543, %v7190, 0
      %v7214 = vsel %vm1543, %v7191, 0
      %v7217 = vsel %vm1543, %v7192, 0
      %v7220 = vsel %vm1543, %v7193, 0
      %v7223 = vsel %vm1543, %v7194, 0
      %v7226 = vsel %vm1543, %v7195, 0
      %v7229 = vsel %vm1543, %v7196, 0
      %v7232 = vsel %vm1543, %v7197, 0
      %v7235 = vsel %vm1543, %v7198, 0
      %v7238 = vsel %vm1543, %v7199, 0
      %v7241 = vsel %vm1543, %v7200, 0
      %v7244 = vsel %vm1543, %v7201, 0
      %v7247 = vsel %vm1543, %v7202, 0
      %v7250 = vsel %vm1543, %v7203, 0
      %v7253 = vsel %vm1543, %v7204, 0
      %v7256 = vsel %vm1543, %v7205, 0
      %v7259 = vsel %vm1592, %v7209, 0
      %7261 = vmatprep.subr.bf16.mxu0 0
      %7262 = vmatpush1.bf16.msra.mxu0 %v7259
      %7263 = vmatprep.subr.bf16.mxu0 0
      %7264 = vmatpush1.bf16.msra.mxu0 0
      %7265 = vmatprep.subr.bf16.mxu0 0
      %7266 = vmatpush1.bf16.msra.mxu0 0
      %7267 = vmatprep.subr.bf16.mxu0 0
      %7268 = vmatpush1.bf16.msra.mxu0 0
      %7269 = vmatprep.subr.bf16.mxu0 0
      %7270 = vmatpush1.bf16.msra.mxu0 0
      %7271 = vmatprep.subr.bf16.mxu0 0
      %7272 = vmatpush1.bf16.msra.mxu0 0
      %7273 = vmatprep.subr.bf16.mxu0 0
      %7274 = vmatpush1.bf16.msra.mxu0 0
      %7275 = vmatprep.subr.bf16.mxu0 0
      %7276 = vmatpush1.bf16.msra.mxu0 0
      %7277 = vmatprep.subr.bf16.mxu0 0
      %7278 = vmatpush1.bf16.msra.mxu0 0
      %7279 = vmatprep.subr.bf16.mxu0 0
      %7280 = vmatpush1.bf16.msra.mxu0 0
      %7281 = vmatprep.subr.bf16.mxu0 0
      %7282 = vmatpush1.bf16.msra.mxu0 0
      %7283 = vmatprep.subr.bf16.mxu0 0
      %7284 = vmatpush1.bf16.msra.mxu0 0
      %7285 = vmatprep.subr.bf16.mxu0 0
      %7286 = vmatpush1.bf16.msra.mxu0 0
      %7287 = vmatprep.subr.bf16.mxu0 0
      %7288 = vmatpush1.bf16.msra.mxu0 0
      %7289 = vmatprep.subr.bf16.mxu0 0
      %7290 = vmatpush1.bf16.msra.mxu0 0
      %7291 = vmatprep.subr.bf16.mxu0 0
      %7292 = vmatpush1.bf16.msra.mxu0 0
      %7293 = vmatprep.mubr.bf16.mxu0 0
      %7294 = vmatmul.mubr.bf16.gmra.mrb[0].mxu0 %v7211
      %v7295 = vpop.f32.mrb[0].mxu0
      %v7296 = vadd.f32 0.0, %v7295
      %v7297 = vpop.f32.mrb[0].mxu0
      %v7298 = vpop.f32.mrb[0].mxu0
      %v7299 = vadd.f32 0.0, %v7298
      %v7300 = vpop.f32.mrb[0].mxu0
      %7301 = vmatprep.mubr.bf16.mxu0 0
      %7302 = vmatmul.mubr.bf16.gmra.mrb[0].mxu0 %v7214
      %v7303 = vpop.f32.mrb[0].mxu0
      %v7304 = vadd.f32 0.0, %v7303
      %v7305 = vpop.f32.mrb[0].mxu0
      %v7306 = vpop.f32.mrb[0].mxu0
      %v7307 = vadd.f32 0.0, %v7306
      %v7308 = vpop.f32.mrb[0].mxu0
      %7309 = vmatprep.mubr.bf16.mxu0 0
      %7310 = vmatmul.mubr.bf16.gmra.mrb[0].mxu0 %v7217
      %v7311 = vpop.f32.mrb[0].mxu0
      %v7312 = vadd.f32 0.0, %v7311
      %v7313 = vpop.f32.mrb[0].mxu0
      %v7314 = vpop.f32.mrb[0].mxu0
      %v7315 = vadd.f32 0.0, %v7314
      %v7316 = vpop.f32.mrb[0].mxu0
      %7317 = vmatprep.mubr.bf16.mxu0 0
      %7318 = vmatmul.mubr.bf16.gmra.mrb[0].mxu0 %v7220
      %v7319 = vpop.f32.mrb[0].mxu0
      %v7320 = vadd.f32 0.0, %v7319
      %v7321 = vpop.f32.mrb[0].mxu0
      %v7322 = vpop.f32.mrb[0].mxu0
      %v7323 = vadd.f32 0.0, %v7322
      %v7324 = vpop.f32.mrb[0].mxu0
      %7325 = vmatprep.mubr.bf16.mxu0 0
      %7326 = vmatmul.mubr.bf16.gmra.mrb[0].mxu0 %v7223
      %v7327 = vpop.f32.mrb[0].mxu0
      %v7328 = vadd.f32 0.0, %v7327
      %v7329 = vpop.f32.mrb[0].mxu0
      %v7330 = vpop.f32.mrb[0].mxu0
      %v7331 = vadd.f32 0.0, %v7330
      %v7332 = vpop.f32.mrb[0].mxu0
      %7333 = vmatprep.mubr.bf16.mxu0 0
      %7334 = vmatmul.mubr.bf16.gmra.mrb[0].mxu0 %v7226
      %v7335 = vpop.f32.mrb[0].mxu0
      %v7336 = vadd.f32 0.0, %v7335
      %v7337 = vpop.f32.mrb[0].mxu0
      %v7338 = vpop.f32.mrb[0].mxu0
      %v7339 = vadd.f32 0.0, %v7338
      %v7340 = vpop.f32.mrb[0].mxu0
      %7341 = vmatprep.mubr.bf16.mxu0 0
      %7342 = vmatmul.mubr.bf16.gmra.mrb[0].mxu0 %v7229
      %v7343 = vpop.f32.mrb[0].mxu0
      %v7344 = vadd.f32 0.0, %v7343
      %v7345 = vpop.f32.mrb[0].mxu0
      %v7346 = vpop.f32.mrb[0].mxu0
      %v7347 = vadd.f32 0.0, %v7346
      %v7348 = vpop.f32.mrb[0].mxu0
      %7349 = vmatprep.mubr.bf16.mxu0 0
      %7350 = vmatmul.mubr.bf16.gmra.mrb[0].mxu0 %v7232
      %v7351 = vpop.f32.mrb[0].mxu0
      %v7352 = vadd.f32 0.0, %v7351
      %v7353 = vpop.f32.mrb[0].mxu0
      %v7354 = vpop.f32.mrb[0].mxu0
      %v7355 = vadd.f32 0.0, %v7354
      %v7356 = vpop.f32.mrb[0].mxu0
      %7357 = vmatprep.mubr.bf16.mxu0 0
      %7358 = vmatmul.mubr.bf16.gmra.mrb[0].mxu0 %v7235
      %v7359 = vpop.f32.mrb[0].mxu0
      %v7360 = vadd.f32 0.0, %v7359
      %v7361 = vpop.f32.mrb[0].mxu0
      %v7362 = vpop.f32.mrb[0].mxu0
      %v7363 = vadd.f32 0.0, %v7362
      %v7364 = vpop.f32.mrb[0].mxu0
      %7365 = vmatprep.mubr.bf16.mxu0 0
      %7366 = vmatmul.mubr.bf16.gmra.mrb[0].mxu0 %v7238
      %v7367 = vpop.f32.mrb[0].mxu0
      %v7368 = vadd.f32 0.0, %v7367
      %v7369 = vpop.f32.mrb[0].mxu0
      %v7370 = vpop.f32.mrb[0].mxu0
      %v7371 = vadd.f32 0.0, %v7370
      %v7372 = vpop.f32.mrb[0].mxu0
      %7373 = vmatprep.mubr.bf16.mxu0 0
      %7374 = vmatmul.mubr.bf16.gmra.mrb[0].mxu0 %v7241
      %v7375 = vpop.f32.mrb[0].mxu0
      %v7376 = vadd.f32 0.0, %v7375
      %v7377 = vpop.f32.mrb[0].mxu0
      %v7378 = vpop.f32.mrb[0].mxu0
      %v7379 = vadd.f32 0.0, %v7378
      %v7380 = vpop.f32.mrb[0].mxu0
      %7381 = vmatprep.mubr.bf16.mxu0 0
      %7382 = vmatmul.mubr.bf16.gmra.mrb[0].mxu0 %v7244
      %v7383 = vpop.f32.mrb[0].mxu0
      %v7384 = vadd.f32 0.0, %v7383
      %v7385 = vpop.f32.mrb[0].mxu0
      %v7386 = vpop.f32.mrb[0].mxu0
      %v7387 = vadd.f32 0.0, %v7386
      %v7388 = vpop.f32.mrb[0].mxu0
      %7389 = vmatprep.mubr.bf16.mxu0 0
      %7390 = vmatmul.mubr.bf16.gmra.mrb[0].mxu0 %v7247
      %v7391 = vpop.f32.mrb[0].mxu0
      %v7392 = vadd.f32 0.0, %v7391
      %v7393 = vpop.f32.mrb[0].mxu0
      %v7394 = vpop.f32.mrb[0].mxu0
      %v7395 = vadd.f32 0.0, %v7394
      %v7396 = vpop.f32.mrb[0].mxu0
      %7397 = vmatprep.mubr.bf16.mxu0 0
      %7398 = vmatmul.mubr.bf16.gmra.mrb[0].mxu0 %v7250
      %v7399 = vpop.f32.mrb[0].mxu0
      %v7400 = vadd.f32 0.0, %v7399
      %v7401 = vpop.f32.mrb[0].mxu0
      %v7402 = vpop.f32.mrb[0].mxu0
      %v7403 = vadd.f32 0.0, %v7402
      %v7404 = vpop.f32.mrb[0].mxu0
      %7405 = vmatprep.mubr.bf16.mxu0 0
      %7406 = vmatmul.mubr.bf16.gmra.mrb[0].mxu0 %v7253
      %v7407 = vpop.f32.mrb[0].mxu0
      %v7408 = vadd.f32 0.0, %v7407
      %v7409 = vpop.f32.mrb[0].mxu0
      %v7410 = vpop.f32.mrb[0].mxu0
      %v7411 = vadd.f32 0.0, %v7410
      %v7412 = vpop.f32.mrb[0].mxu0
      %7413 = vmatprep.mubr.bf16.mxu0 0
      %7414 = vmatmul.mubr.bf16.gmra.mrb[0].mxu0 %v7256
      %v7415 = vpop.f32.mrb[0].mxu0
      %v7416 = vadd.f32 0.0, %v7415
      %v7417 = vpop.f32.mrb[0].mxu0
      %v7418 = vpop.f32.mrb[0].mxu0
      %v7419 = vadd.f32 0.0, %v7418
      %v7420 = vpop.f32.mrb[0].mxu0
      %7421 = vdwg.mxu0
      %v7454 = vunpack.c.l.b16 %v6724
      %v7455 = vunpack.c.l.b16 %v6725
      %v7456 = vunpack.c.l.b16 %v6726
      %v7457 = vunpack.c.l.b16 %v6727
      %v7458 = vunpack.c.l.b16 %v6728
      %v7459 = vunpack.c.l.b16 %v6729
      %v7460 = vunpack.c.l.b16 %v6730
      %v7461 = vunpack.c.l.b16 %v6731
      %v7462 = vunpack.c.l.b16 %v6732
      %v7463 = vunpack.c.l.b16 %v6733
      %v7464 = vunpack.c.l.b16 %v6734
      %v7465 = vunpack.c.l.b16 %v6735
      %v7466 = vunpack.c.l.b16 %v6736
      %v7467 = vunpack.c.l.b16 %v6737
      %v7468 = vunpack.c.l.b16 %v6738
      %v7469 = vunpack.c.l.b16 %v6739
      %v7470 = vunpack.c.l.b16 %v6740
      %v7471 = vunpack.c.l.b16 %v6741
      %v7472 = vunpack.c.l.b16 %v6742
      %v7473 = vunpack.c.l.b16 %v6743
      %v7474 = vunpack.c.l.b16 %v6744
      %v7475 = vunpack.c.l.b16 %v6745
      %v7476 = vunpack.c.l.b16 %v6746
      %v7477 = vunpack.c.l.b16 %v6747
      %v7478 = vunpack.c.l.b16 %v6748
      %v7479 = vunpack.c.l.b16 %v6749
      %v7480 = vunpack.c.l.b16 %v6750
      %v7481 = vunpack.c.l.b16 %v6751
      %v7482 = vunpack.c.l.b16 %v6752
      %v7483 = vunpack.c.l.b16 %v6753
      %v7484 = vunpack.c.l.b16 %v6754
      %v7485 = vunpack.c.l.b16 %v6755
      %v7486 = vpack.c.b16 %v7455, %v7454
      %v7487 = vpack.c.b16 %v7457, %v7456
      %v7488 = vpack.c.b16 %v7459, %v7458
      %v7489 = vpack.c.b16 %v7461, %v7460
      %v7490 = vpack.c.b16 %v7463, %v7462
      %v7491 = vpack.c.b16 %v7465, %v7464
      %v7492 = vpack.c.b16 %v7467, %v7466
      %v7493 = vpack.c.b16 %v7469, %v7468
      %v7494 = vpack.c.b16 %v7471, %v7470
      %v7495 = vpack.c.b16 %v7473, %v7472
      %v7496 = vpack.c.b16 %v7475, %v7474
      %v7497 = vpack.c.b16 %v7477, %v7476
      %v7498 = vpack.c.b16 %v7479, %v7478
      %v7499 = vpack.c.b16 %v7481, %v7480
      %v7500 = vpack.c.b16 %v7483, %v7482
      %v7501 = vpack.c.b16 %v7485, %v7484
      %v7503 = vsel %vm1543, %v7486, 0
      %v7506 = vsel %vm1543, %v7487, 0
      %v7509 = vsel %vm1543, %v7488, 0
      %v7512 = vsel %vm1543, %v7489, 0
      %v7515 = vsel %vm1543, %v7490, 0
      %v7518 = vsel %vm1543, %v7491, 0
      %v7521 = vsel %vm1543, %v7492, 0
      %v7524 = vsel %vm1543, %v7493, 0
      %v7527 = vsel %vm1543, %v7494, 0
      %v7530 = vsel %vm1543, %v7495, 0
      %v7533 = vsel %vm1543, %v7496, 0
      %v7536 = vsel %vm1543, %v7497, 0
      %v7539 = vsel %vm1543, %v7498, 0
      %v7542 = vsel %vm1543, %v7499, 0
      %v7545 = vsel %vm1543, %v7500, 0
      %v7548 = vsel %vm1543, %v7501, 0
      %v7551 = vsel %vm1592, %v6756, 0
      %7553 = vmatprep.subr.bf16.mxu0 0
      %7554 = vmatpush1.bf16.msra.mxu0 %v7551
      %7555 = vmatprep.subr.bf16.mxu0 0
      %7556 = vmatpush1.bf16.msra.mxu0 0
      %7557 = vmatprep.subr.bf16.mxu0 0
      %7558 = vmatpush1.bf16.msra.mxu0 0
      %7559 = vmatprep.subr.bf16.mxu0 0
      %7560 = vmatpush1.bf16.msra.mxu0 0
      %7561 = vmatprep.subr.bf16.mxu0 0
      %7562 = vmatpush1.bf16.msra.mxu0 0
      %7563 = vmatprep.subr.bf16.mxu0 0
      %7564 = vmatpush1.bf16.msra.mxu0 0
      %7565 = vmatprep.subr.bf16.mxu0 0
      %7566 = vmatpush1.bf16.msra.mxu0 0
      %7567 = vmatprep.subr.bf16.mxu0 0
      %7568 = vmatpush1.bf16.msra.mxu0 0
      %7569 = vmatprep.subr.bf16.mxu0 0
      %7570 = vmatpush1.bf16.msra.mxu0 0
      %7571 = vmatprep.subr.bf16.mxu0 0
      %7572 = vmatpush1.bf16.msra.mxu0 0
      %7573 = vmatprep.subr.bf16.mxu0 0
      %7574 = vmatpush1.bf16.msra.mxu0 0
      %7575 = vmatprep.subr.bf16.mxu0 0
      %7576 = vmatpush1.bf16.msra.mxu0 0
      %7577 = vmatprep.subr.bf16.mxu0 0
      %7578 = vmatpush1.bf16.msra.mxu0 0
      %7579 = vmatprep.subr.bf16.mxu0 0
      %7580 = vmatpush1.bf16.msra.mxu0 0
      %7581 = vmatprep.subr.bf16.mxu0 0
      %7582 = vmatpush1.bf16.msra.mxu0 0
      %7583 = vmatprep.subr.bf16.mxu0 0
      %7584 = vmatpush1.bf16.msra.mxu0 0
      %7585 = vmatprep.mubr.bf16.mxu0 0
      %7586 = vmatmul.mubr.bf16.gmra.mrb[0].mxu0 %v7503
      %v7587 = vpop.f32.mrb[0].mxu0
      %v7588 = vadd.f32 %v7296, %v7587
      %v7589 = vpop.f32.mrb[0].mxu0
      %v7590 = vpop.f32.mrb[0].mxu0
      %v7591 = vadd.f32 %v7299, %v7590
      %v7592 = vpop.f32.mrb[0].mxu0
      %7593 = vmatprep.mubr.bf16.mxu0 0
      %7594 = vmatmul.mubr.bf16.gmra.mrb[0].mxu0 %v7506
      %v7595 = vpop.f32.mrb[0].mxu0
      %v7596 = vadd.f32 %v7304, %v7595
      %v7597 = vpop.f32.mrb[0].mxu0
      %v7598 = vpop.f32.mrb[0].mxu0
      %v7599 = vadd.f32 %v7307, %v7598
      %v7600 = vpop.f32.mrb[0].mxu0
      %7601 = vmatprep.mubr.bf16.mxu0 0
      %7602 = vmatmul.mubr.bf16.gmra.mrb[0].mxu0 %v7509
      %v7603 = vpop.f32.mrb[0].mxu0
      %v7604 = vadd.f32 %v7312, %v7603
      %v7605 = vpop.f32.mrb[0].mxu0
      %v7606 = vpop.f32.mrb[0].mxu0
      %v7607 = vadd.f32 %v7315, %v7606
      %v7608 = vpop.f32.mrb[0].mxu0
      %7609 = vmatprep.mubr.bf16.mxu0 0
      %7610 = vmatmul.mubr.bf16.gmra.mrb[0].mxu0 %v7512
      %v7611 = vpop.f32.mrb[0].mxu0
      %v7612 = vadd.f32 %v7320, %v7611
      %v7613 = vpop.f32.mrb[0].mxu0
      %v7614 = vpop.f32.mrb[0].mxu0
      %v7615 = vadd.f32 %v7323, %v7614
      %v7616 = vpop.f32.mrb[0].mxu0
      %7617 = vmatprep.mubr.bf16.mxu0 0
      %7618 = vmatmul.mubr.bf16.gmra.mrb[0].mxu0 %v7515
      %v7619 = vpop.f32.mrb[0].mxu0
      %v7620 = vadd.f32 %v7328, %v7619
      %v7621 = vpop.f32.mrb[0].mxu0
      %v7622 = vpop.f32.mrb[0].mxu0
      %v7623 = vadd.f32 %v7331, %v7622
      %v7624 = vpop.f32.mrb[0].mxu0
      %7625 = vmatprep.mubr.bf16.mxu0 0
      %7626 = vmatmul.mubr.bf16.gmra.mrb[0].mxu0 %v7518
      %v7627 = vpop.f32.mrb[0].mxu0
      %v7628 = vadd.f32 %v7336, %v7627
      %v7629 = vpop.f32.mrb[0].mxu0
      %v7630 = vpop.f32.mrb[0].mxu0
      %v7631 = vadd.f32 %v7339, %v7630
      %v7632 = vpop.f32.mrb[0].mxu0
      %7633 = vmatprep.mubr.bf16.mxu0 0
      %7634 = vmatmul.mubr.bf16.gmra.mrb[0].mxu0 %v7521
      %v7635 = vpop.f32.mrb[0].mxu0
      %v7636 = vadd.f32 %v7344, %v7635
      %v7637 = vpop.f32.mrb[0].mxu0
      %v7638 = vpop.f32.mrb[0].mxu0
      %v7639 = vadd.f32 %v7347, %v7638
      %v7640 = vpop.f32.mrb[0].mxu0
      %7641 = vmatprep.mubr.bf16.mxu0 0
      %7642 = vmatmul.mubr.bf16.gmra.mrb[0].mxu0 %v7524
      %v7643 = vpop.f32.mrb[0].mxu0
      %v7644 = vadd.f32 %v7352, %v7643
      %v7645 = vpop.f32.mrb[0].mxu0
      %v7646 = vpop.f32.mrb[0].mxu0
      %v7647 = vadd.f32 %v7355, %v7646
      %v7648 = vpop.f32.mrb[0].mxu0
      %7649 = vmatprep.mubr.bf16.mxu0 0
      %7650 = vmatmul.mubr.bf16.gmra.mrb[0].mxu0 %v7527
      %v7651 = vpop.f32.mrb[0].mxu0
      %v7652 = vadd.f32 %v7360, %v7651
      %v7653 = vpop.f32.mrb[0].mxu0
      %v7654 = vpop.f32.mrb[0].mxu0
      %v7655 = vadd.f32 %v7363, %v7654
      %v7656 = vpop.f32.mrb[0].mxu0
      %7657 = vmatprep.mubr.bf16.mxu0 0
      %7658 = vmatmul.mubr.bf16.gmra.mrb[0].mxu0 %v7530
      %v7659 = vpop.f32.mrb[0].mxu0
      %v7660 = vadd.f32 %v7368, %v7659
      %v7661 = vpop.f32.mrb[0].mxu0
      %v7662 = vpop.f32.mrb[0].mxu0
      %v7663 = vadd.f32 %v7371, %v7662
      %v7664 = vpop.f32.mrb[0].mxu0
      %7665 = vmatprep.mubr.bf16.mxu0 0
      %7666 = vmatmul.mubr.bf16.gmra.mrb[0].mxu0 %v7533
      %v7667 = vpop.f32.mrb[0].mxu0
      %v7668 = vadd.f32 %v7376, %v7667
      %v7669 = vpop.f32.mrb[0].mxu0
      %v7670 = vpop.f32.mrb[0].mxu0
      %v7671 = vadd.f32 %v7379, %v7670
      %v7672 = vpop.f32.mrb[0].mxu0
      %7673 = vmatprep.mubr.bf16.mxu0 0
      %7674 = vmatmul.mubr.bf16.gmra.mrb[0].mxu0 %v7536
      %v7675 = vpop.f32.mrb[0].mxu0
      %v7676 = vadd.f32 %v7384, %v7675
      %v7677 = vpop.f32.mrb[0].mxu0
      %v7678 = vpop.f32.mrb[0].mxu0
      %v7679 = vadd.f32 %v7387, %v7678
      %v7680 = vpop.f32.mrb[0].mxu0
      %7681 = vmatprep.mubr.bf16.mxu0 0
      %7682 = vmatmul.mubr.bf16.gmra.mrb[0].mxu0 %v7539
      %v7683 = vpop.f32.mrb[0].mxu0
      %v7684 = vadd.f32 %v7392, %v7683
      %v7685 = vpop.f32.mrb[0].mxu0
      %v7686 = vpop.f32.mrb[0].mxu0
      %v7687 = vadd.f32 %v7395, %v7686
      %v7688 = vpop.f32.mrb[0].mxu0
      %7689 = vmatprep.mubr.bf16.mxu0 0
      %7690 = vmatmul.mubr.bf16.gmra.mrb[0].mxu0 %v7542
      %v7691 = vpop.f32.mrb[0].mxu0
      %v7692 = vadd.f32 %v7400, %v7691
      %v7693 = vpop.f32.mrb[0].mxu0
      %v7694 = vpop.f32.mrb[0].mxu0
      %v7695 = vadd.f32 %v7403, %v7694
      %v7696 = vpop.f32.mrb[0].mxu0
      %7697 = vmatprep.mubr.bf16.mxu0 0
      %7698 = vmatmul.mubr.bf16.gmra.mrb[0].mxu0 %v7545
      %v7699 = vpop.f32.mrb[0].mxu0
      %v7700 = vadd.f32 %v7408, %v7699
      %v7701 = vpop.f32.mrb[0].mxu0
      %v7702 = vpop.f32.mrb[0].mxu0
      %v7703 = vadd.f32 %v7411, %v7702
      %v7704 = vpop.f32.mrb[0].mxu0
      %7705 = vmatprep.mubr.bf16.mxu0 0
      %7706 = vmatmul.mubr.bf16.gmra.mrb[0].mxu0 %v7548
      %v7707 = vpop.f32.mrb[0].mxu0
      %v7708 = vadd.f32 %v7416, %v7707
      %v7709 = vpop.f32.mrb[0].mxu0
      %v7710 = vpop.f32.mrb[0].mxu0
      %v7711 = vadd.f32 %v7419, %v7710
      %v7712 = vpop.f32.mrb[0].mxu0
      %7713 = vdwg.mxu0
      %v7714 = vld [vmem:[#allocation2] sm:$0xe]
      %v7715 = vld [vmem:[#allocation2 + $0xc] sm:$0xe]
      %v7716 = vld [vmem:[#allocation2 + $0x18] sm:$0xe]
      %v7717 = vld [vmem:[#allocation2 + $0x24] sm:$0xe]
      %v7718 = vld [vmem:[#allocation2 + $0x30] sm:$0xe]
      %v7719 = vld [vmem:[#allocation2 + $0x3c] sm:$0xe]
      %v7720 = vld [vmem:[#allocation2 + $0x48] sm:$0xe]
      %v7721 = vld [vmem:[#allocation2 + $0x54] sm:$0xe]
      %v7722 = vld [vmem:[#allocation2 + $0x60] sm:$0xe]
      %v7723 = vld [vmem:[#allocation2 + $0x6c] sm:$0xe]
      %v7724 = vld [vmem:[#allocation2 + $0x78] sm:$0xe]
      %v7725 = vld [vmem:[#allocation2 + $0x84] sm:$0xe]
      %v7726 = vld [vmem:[#allocation2 + $0x90] sm:$0xe]
      %v7727 = vld [vmem:[#allocation2 + $0x9c] sm:$0xe]
      %v7728 = vld [vmem:[#allocation2 + $0xa8] sm:$0xe]
      %v7729 = vld [vmem:[#allocation2 + $0xb4] sm:$0xe]
      %v7762 = vrot.slane %v7714, 5
      %v7763 = vrot.slane %v7762, 4
      %v7764 = vrot.slane %v6725, 5
      %v7765 = vsel %vm2099, %v7763, %v7764
      %v7766 = vrot.slane %v7764, 4
      %v7767 = vrot.slane %v6757, 5
      %v7768 = vsel %vm2099, %v7766, %v7767
      %v7769 = vrot.slane %v7715, 5
      %v7770 = vrot.slane %v7769, 4
      %v7771 = vrot.slane %v6727, 5
      %v7772 = vsel %vm2099, %v7770, %v7771
      %v7773 = vrot.slane %v7771, 4
      %v7774 = vrot.slane %v6758, 5
      %v7775 = vsel %vm2099, %v7773, %v7774
      %v7776 = vrot.slane %v7716, 5
      %v7777 = vrot.slane %v7776, 4
      %v7778 = vrot.slane %v6729, 5
      %v7779 = vsel %vm2099, %v7777, %v7778
      %v7780 = vrot.slane %v7778, 4
      %v7781 = vrot.slane %v6759, 5
      %v7782 = vsel %vm2099, %v7780, %v7781
      %v7783 = vrot.slane %v7717, 5
      %v7784 = vrot.slane %v7783, 4
      %v7785 = vrot.slane %v6731, 5
      %v7786 = vsel %vm2099, %v7784, %v7785
      %v7787 = vrot.slane %v7785, 4
      %v7788 = vrot.slane %v6760, 5
      %v7789 = vsel %vm2099, %v7787, %v7788
      %v7790 = vrot.slane %v7718, 5
      %v7791 = vrot.slane %v7790, 4
      %v7792 = vrot.slane %v6733, 5
      %v7793 = vsel %vm2099, %v7791, %v7792
      %v7794 = vrot.slane %v7792, 4
      %v7795 = vrot.slane %v6761, 5
      %v7796 = vsel %vm2099, %v7794, %v7795
      %v7797 = vrot.slane %v7719, 5
      %v7798 = vrot.slane %v7797, 4
      %v7799 = vrot.slane %v6735, 5
      %v7800 = vsel %vm2099, %v7798, %v7799
      %v7801 = vrot.slane %v7799, 4
      %v7802 = vrot.slane %v6762, 5
      %v7803 = vsel %vm2099, %v7801, %v7802
      %v7804 = vrot.slane %v7720, 5
      %v7805 = vrot.slane %v7804, 4
      %v7806 = vrot.slane %v6737, 5
      %v7807 = vsel %vm2099, %v7805, %v7806
      %v7808 = vrot.slane %v7806, 4
      %v7809 = vrot.slane %v6763, 5
      %v7810 = vsel %vm2099, %v7808, %v7809
      %v7811 = vrot.slane %v7721, 5
      %v7812 = vrot.slane %v7811, 4
      %v7813 = vrot.slane %v6739, 5
      %v7814 = vsel %vm2099, %v7812, %v7813
      %v7815 = vrot.slane %v7813, 4
      %v7816 = vrot.slane %v6764, 5
      %v7817 = vsel %vm2099, %v7815, %v7816
      %v7818 = vrot.slane %v7722, 5
      %v7819 = vrot.slane %v7818, 4
      %v7820 = vrot.slane %v6741, 5
      %v7821 = vsel %vm2099, %v7819, %v7820
      %v7822 = vrot.slane %v7820, 4
      %v7823 = vrot.slane %v6765, 5
      %v7824 = vsel %vm2099, %v7822, %v7823
      %v7825 = vrot.slane %v7723, 5
      %v7826 = vrot.slane %v7825, 4
      %v7827 = vrot.slane %v6743, 5
      %v7828 = vsel %vm2099, %v7826, %v7827
      %v7829 = vrot.slane %v7827, 4
      %v7830 = vrot.slane %v6766, 5
      %v7831 = vsel %vm2099, %v7829, %v7830
      %v7832 = vrot.slane %v7724, 5
      %v7833 = vrot.slane %v7832, 4
      %v7834 = vrot.slane %v6745, 5
      %v7835 = vsel %vm2099, %v7833, %v7834
      %v7836 = vrot.slane %v7834, 4
      %v7837 = vrot.slane %v6767, 5
      %v7838 = vsel %vm2099, %v7836, %v7837
      %v7839 = vrot.slane %v7725, 5
      %v7840 = vrot.slane %v7839, 4
      %v7841 = vrot.slane %v6747, 5
      %v7842 = vsel %vm2099, %v7840, %v7841
      %v7843 = vrot.slane %v7841, 4
      %v7844 = vrot.slane %v6768, 5
      %v7845 = vsel %vm2099, %v7843, %v7844
      %v7846 = vrot.slane %v7726, 5
      %v7847 = vrot.slane %v7846, 4
      %v7848 = vrot.slane %v6749, 5
      %v7849 = vsel %vm2099, %v7847, %v7848
      %v7850 = vrot.slane %v7848, 4
      %v7851 = vrot.slane %v6769, 5
      %v7852 = vsel %vm2099, %v7850, %v7851
      %v7853 = vrot.slane %v7727, 5
      %v7854 = vrot.slane %v7853, 4
      %v7855 = vrot.slane %v6751, 5
      %v7856 = vsel %vm2099, %v7854, %v7855
      %v7857 = vrot.slane %v7855, 4
      %v7858 = vrot.slane %v6770, 5
      %v7859 = vsel %vm2099, %v7857, %v7858
      %v7860 = vrot.slane %v7728, 5
      %v7861 = vrot.slane %v7860, 4
      %v7862 = vrot.slane %v6753, 5
      %v7863 = vsel %vm2099, %v7861, %v7862
      %v7864 = vrot.slane %v7862, 4
      %v7865 = vrot.slane %v6771, 5
      %v7866 = vsel %vm2099, %v7864, %v7865
      %v7867 = vrot.slane %v7729, 5
      %v7868 = vrot.slane %v7867, 4
      %v7869 = vrot.slane %v6755, 5
      %v7870 = vsel %vm2099, %v7868, %v7869
      %v7871 = vrot.slane %v7869, 4
      %v7872 = vrot.slane %v6772, 5
      %v7873 = vsel %vm2099, %v7871, %v7872
      %v7874 = vld [vmem:[%s2 + $0x4] sm:$0x3]
      %v7875 = vunpack.c.l.b16 %v7765
      %v7876 = vunpack.c.l.b16 %v7768
      %v7877 = vunpack.c.l.b16 %v7772
      %v7878 = vunpack.c.l.b16 %v7775
      %v7879 = vunpack.c.l.b16 %v7779
      %v7880 = vunpack.c.l.b16 %v7782
      %v7881 = vunpack.c.l.b16 %v7786
      %v7882 = vunpack.c.l.b16 %v7789
      %v7883 = vunpack.c.l.b16 %v7793
      %v7884 = vunpack.c.l.b16 %v7796
      %v7885 = vunpack.c.l.b16 %v7800
      %v7886 = vunpack.c.l.b16 %v7803
      %v7887 = vunpack.c.l.b16 %v7807
      %v7888 = vunpack.c.l.b16 %v7810
      %v7889 = vunpack.c.l.b16 %v7814
      %v7890 = vunpack.c.l.b16 %v7817
      %v7891 = vunpack.c.l.b16 %v7821
      %v7892 = vunpack.c.l.b16 %v7824
      %v7893 = vunpack.c.l.b16 %v7828
      %v7894 = vunpack.c.l.b16 %v7831
      %v7895 = vunpack.c.l.b16 %v7835
      %v7896 = vunpack.c.l.b16 %v7838
      %v7897 = vunpack.c.l.b16 %v7842
      %v7898 = vunpack.c.l.b16 %v7845
      %v7899 = vunpack.c.l.b16 %v7849
      %v7900 = vunpack.c.l.b16 %v7852
      %v7901 = vunpack.c.l.b16 %v7856
      %v7902 = vunpack.c.l.b16 %v7859
      %v7903 = vunpack.c.l.b16 %v7863
      %v7904 = vunpack.c.l.b16 %v7866
      %v7905 = vunpack.c.l.b16 %v7870
      %v7906 = vunpack.c.l.b16 %v7873
      %v7907 = vpack.c.b16 %v7876, %v7875
      %v7908 = vpack.c.b16 %v7878, %v7877
      %v7909 = vpack.c.b16 %v7880, %v7879
      %v7910 = vpack.c.b16 %v7882, %v7881
      %v7911 = vpack.c.b16 %v7884, %v7883
      %v7912 = vpack.c.b16 %v7886, %v7885
      %v7913 = vpack.c.b16 %v7888, %v7887
      %v7914 = vpack.c.b16 %v7890, %v7889
      %v7915 = vpack.c.b16 %v7892, %v7891
      %v7916 = vpack.c.b16 %v7894, %v7893
      %v7917 = vpack.c.b16 %v7896, %v7895
      %v7918 = vpack.c.b16 %v7898, %v7897
      %v7919 = vpack.c.b16 %v7900, %v7899
      %v7920 = vpack.c.b16 %v7902, %v7901
      %v7921 = vpack.c.b16 %v7904, %v7903
      %v7922 = vpack.c.b16 %v7906, %v7905
      %v7924 = vsel %vm1543, %v7907, 0
      %v7927 = vsel %vm1543, %v7908, 0
      %v7930 = vsel %vm1543, %v7909, 0
      %v7933 = vsel %vm1543, %v7910, 0
      %v7936 = vsel %vm1543, %v7911, 0
      %v7939 = vsel %vm1543, %v7912, 0
      %v7942 = vsel %vm1543, %v7913, 0
      %v7945 = vsel %vm1543, %v7914, 0
      %v7948 = vsel %vm1543, %v7915, 0
      %v7951 = vsel %vm1543, %v7916, 0
      %v7954 = vsel %vm1543, %v7917, 0
      %v7957 = vsel %vm1543, %v7918, 0
      %v7960 = vsel %vm1543, %v7919, 0
      %v7963 = vsel %vm1543, %v7920, 0
      %v7966 = vsel %vm1543, %v7921, 0
      %v7969 = vsel %vm1543, %v7922, 0
      %v7972 = vsel %vm1592, %v7874, 0
      %7974 = vmatprep.subr.bf16.mxu0 0
      %7975 = vmatpush1.bf16.msra.mxu0 %v7972
      %7976 = vmatprep.subr.bf16.mxu0 0
      %7977 = vmatpush1.bf16.msra.mxu0 0
      %7978 = vmatprep.subr.bf16.mxu0 0
      %7979 = vmatpush1.bf16.msra.mxu0 0
      %7980 = vmatprep.subr.bf16.mxu0 0
      %7981 = vmatpush1.bf16.msra.mxu0 0
      %7982 = vmatprep.subr.bf16.mxu0 0
      %7983 = vmatpush1.bf16.msra.mxu0 0
      %7984 = vmatprep.subr.bf16.mxu0 0
      %7985 = vmatpush1.bf16.msra.mxu0 0
      %7986 = vmatprep.subr.bf16.mxu0 0
      %7987 = vmatpush1.bf16.msra.mxu0 0
      %7988 = vmatprep.subr.bf16.mxu0 0
      %7989 = vmatpush1.bf16.msra.mxu0 0
      %7990 = vmatprep.subr.bf16.mxu0 0
      %7991 = vmatpush1.bf16.msra.mxu0 0
      %7992 = vmatprep.subr.bf16.mxu0 0
      %7993 = vmatpush1.bf16.msra.mxu0 0
      %7994 = vmatprep.subr.bf16.mxu0 0
      %7995 = vmatpush1.bf16.msra.mxu0 0
      %7996 = vmatprep.subr.bf16.mxu0 0
      %7997 = vmatpush1.bf16.msra.mxu0 0
      %7998 = vmatprep.subr.bf16.mxu0 0
      %7999 = vmatpush1.bf16.msra.mxu0 0
      %8000 = vmatprep.subr.bf16.mxu0 0
      %8001 = vmatpush1.bf16.msra.mxu0 0
      %8002 = vmatprep.subr.bf16.mxu0 0
      %8003 = vmatpush1.bf16.msra.mxu0 0
      %8004 = vmatprep.subr.bf16.mxu0 0
      %8005 = vmatpush1.bf16.msra.mxu0 0
      %8006 = vmatprep.mubr.bf16.mxu0 0
      %8007 = vmatmul.mubr.bf16.gmra.mrb[0].mxu0 %v7924
      %v8008 = vpop.f32.mrb[0].mxu0
      %v8009 = vadd.f32 0.0, %v8008
      %v8010 = vpop.f32.mrb[0].mxu0
      %v8011 = vpop.f32.mrb[0].mxu0
      %v8012 = vadd.f32 0.0, %v8011
      %v8013 = vpop.f32.mrb[0].mxu0
      %8014 = vmatprep.mubr.bf16.mxu0 0
      %8015 = vmatmul.mubr.bf16.gmra.mrb[0].mxu0 %v7927
      %v8016 = vpop.f32.mrb[0].mxu0
      %v8017 = vadd.f32 0.0, %v8016
      %v8018 = vpop.f32.mrb[0].mxu0
      %v8019 = vpop.f32.mrb[0].mxu0
      %v8020 = vadd.f32 0.0, %v8019
      %v8021 = vpop.f32.mrb[0].mxu0
      %8022 = vmatprep.mubr.bf16.mxu0 0
      %8023 = vmatmul.mubr.bf16.gmra.mrb[0].mxu0 %v7930
      %v8024 = vpop.f32.mrb[0].mxu0
      %v8025 = vadd.f32 0.0, %v8024
      %v8026 = vpop.f32.mrb[0].mxu0
      %v8027 = vpop.f32.mrb[0].mxu0
      %v8028 = vadd.f32 0.0, %v8027
      %v8029 = vpop.f32.mrb[0].mxu0
      %8030 = vmatprep.mubr.bf16.mxu0 0
      %8031 = vmatmul.mubr.bf16.gmra.mrb[0].mxu0 %v7933
      %v8032 = vpop.f32.mrb[0].mxu0
      %v8033 = vadd.f32 0.0, %v8032
      %v8034 = vpop.f32.mrb[0].mxu0
      %v8035 = vpop.f32.mrb[0].mxu0
      %v8036 = vadd.f32 0.0, %v8035
      %v8037 = vpop.f32.mrb[0].mxu0
      %8038 = vmatprep.mubr.bf16.mxu0 0
      %8039 = vmatmul.mubr.bf16.gmra.mrb[0].mxu0 %v7936
      %v8040 = vpop.f32.mrb[0].mxu0
      %v8041 = vadd.f32 0.0, %v8040
      %v8042 = vpop.f32.mrb[0].mxu0
      %v8043 = vpop.f32.mrb[0].mxu0
      %v8044 = vadd.f32 0.0, %v8043
      %v8045 = vpop.f32.mrb[0].mxu0
      %8046 = vmatprep.mubr.bf16.mxu0 0
      %8047 = vmatmul.mubr.bf16.gmra.mrb[0].mxu0 %v7939
      %v8048 = vpop.f32.mrb[0].mxu0
      %v8049 = vadd.f32 0.0, %v8048
      %v8050 = vpop.f32.mrb[0].mxu0
      %v8051 = vpop.f32.mrb[0].mxu0
      %v8052 = vadd.f32 0.0, %v8051
      %v8053 = vpop.f32.mrb[0].mxu0
      %8054 = vmatprep.mubr.bf16.mxu0 0
      %8055 = vmatmul.mubr.bf16.gmra.mrb[0].mxu0 %v7942
      %v8056 = vpop.f32.mrb[0].mxu0
      %v8057 = vadd.f32 0.0, %v8056
      %v8058 = vpop.f32.mrb[0].mxu0
      %v8059 = vpop.f32.mrb[0].mxu0
      %v8060 = vadd.f32 0.0, %v8059
      %v8061 = vpop.f32.mrb[0].mxu0
      %8062 = vmatprep.mubr.bf16.mxu0 0
      %8063 = vmatmul.mubr.bf16.gmra.mrb[0].mxu0 %v7945
      %v8064 = vpop.f32.mrb[0].mxu0
      %v8065 = vadd.f32 0.0, %v8064
      %v8066 = vpop.f32.mrb[0].mxu0
      %v8067 = vpop.f32.mrb[0].mxu0
      %v8068 = vadd.f32 0.0, %v8067
      %v8069 = vpop.f32.mrb[0].mxu0
      %8070 = vmatprep.mubr.bf16.mxu0 0
      %8071 = vmatmul.mubr.bf16.gmra.mrb[0].mxu0 %v7948
      %v8072 = vpop.f32.mrb[0].mxu0
      %v8073 = vadd.f32 0.0, %v8072
      %v8074 = vpop.f32.mrb[0].mxu0
      %v8075 = vpop.f32.mrb[0].mxu0
      %v8076 = vadd.f32 0.0, %v8075
      %v8077 = vpop.f32.mrb[0].mxu0
      %8078 = vmatprep.mubr.bf16.mxu0 0
      %8079 = vmatmul.mubr.bf16.gmra.mrb[0].mxu0 %v7951
      %v8080 = vpop.f32.mrb[0].mxu0
      %v8081 = vadd.f32 0.0, %v8080
      %v8082 = vpop.f32.mrb[0].mxu0
      %v8083 = vpop.f32.mrb[0].mxu0
      %v8084 = vadd.f32 0.0, %v8083
      %v8085 = vpop.f32.mrb[0].mxu0
      %8086 = vmatprep.mubr.bf16.mxu0 0
      %8087 = vmatmul.mubr.bf16.gmra.mrb[0].mxu0 %v7954
      %v8088 = vpop.f32.mrb[0].mxu0
      %v8089 = vadd.f32 0.0, %v8088
      %v8090 = vpop.f32.mrb[0].mxu0
      %v8091 = vpop.f32.mrb[0].mxu0
      %v8092 = vadd.f32 0.0, %v8091
      %v8093 = vpop.f32.mrb[0].mxu0
      %8094 = vmatprep.mubr.bf16.mxu0 0
      %8095 = vmatmul.mubr.bf16.gmra.mrb[0].mxu0 %v7957
      %v8096 = vpop.f32.mrb[0].mxu0
      %v8097 = vadd.f32 0.0, %v8096
      %v8098 = vpop.f32.mrb[0].mxu0
      %v8099 = vpop.f32.mrb[0].mxu0
      %v8100 = vadd.f32 0.0, %v8099
      %v8101 = vpop.f32.mrb[0].mxu0
      %8102 = vmatprep.mubr.bf16.mxu0 0
      %8103 = vmatmul.mubr.bf16.gmra.mrb[0].mxu0 %v7960
      %v8104 = vpop.f32.mrb[0].mxu0
      %v8105 = vadd.f32 0.0, %v8104
      %v8106 = vpop.f32.mrb[0].mxu0
      %v8107 = vpop.f32.mrb[0].mxu0
      %v8108 = vadd.f32 0.0, %v8107
      %v8109 = vpop.f32.mrb[0].mxu0
      %8110 = vmatprep.mubr.bf16.mxu0 0
      %8111 = vmatmul.mubr.bf16.gmra.mrb[0].mxu0 %v7963
      %v8112 = vpop.f32.mrb[0].mxu0
      %v8113 = vadd.f32 0.0, %v8112
      %v8114 = vpop.f32.mrb[0].mxu0
      %v8115 = vpop.f32.mrb[0].mxu0
      %v8116 = vadd.f32 0.0, %v8115
      %v8117 = vpop.f32.mrb[0].mxu0
      %8118 = vmatprep.mubr.bf16.mxu0 0
      %8119 = vmatmul.mubr.bf16.gmra.mrb[0].mxu0 %v7966
      %v8120 = vpop.f32.mrb[0].mxu0
      %v8121 = vadd.f32 0.0, %v8120
      %v8122 = vpop.f32.mrb[0].mxu0
      %v8123 = vpop.f32.mrb[0].mxu0
      %v8124 = vadd.f32 0.0, %v8123
      %v8125 = vpop.f32.mrb[0].mxu0
      %8126 = vmatprep.mubr.bf16.mxu0 0
      %8127 = vmatmul.mubr.bf16.gmra.mrb[0].mxu0 %v7969
      %v8128 = vpop.f32.mrb[0].mxu0
      %v8129 = vadd.f32 0.0, %v8128
      %v8130 = vpop.f32.mrb[0].mxu0
      %v8131 = vpop.f32.mrb[0].mxu0
      %v8132 = vadd.f32 0.0, %v8131
      %v8133 = vpop.f32.mrb[0].mxu0
      %8134 = vdwg.mxu0
      %v8135 = vadd.f32 %v7588, %v8009
      %v8136 = vadd.f32 %v7591, %v8012
      %v8137 = vadd.f32 %v7596, %v8017
      %v8138 = vadd.f32 %v7599, %v8020
      %v8139 = vadd.f32 %v7604, %v8025
      %v8140 = vadd.f32 %v7607, %v8028
      %v8141 = vadd.f32 %v7612, %v8033
      %v8142 = vadd.f32 %v7615, %v8036
      %v8143 = vadd.f32 %v7620, %v8041
      %v8144 = vadd.f32 %v7623, %v8044
      %v8145 = vadd.f32 %v7628, %v8049
      %v8146 = vadd.f32 %v7631, %v8052
      %v8147 = vadd.f32 %v7636, %v8057
      %v8148 = vadd.f32 %v7639, %v8060
      %v8149 = vadd.f32 %v7644, %v8065
      %v8150 = vadd.f32 %v7647, %v8068
      %v8151 = vadd.f32 %v7652, %v8073
      %v8152 = vadd.f32 %v7655, %v8076
      %v8153 = vadd.f32 %v7660, %v8081
      %v8154 = vadd.f32 %v7663, %v8084
      %v8155 = vadd.f32 %v7668, %v8089
      %v8156 = vadd.f32 %v7671, %v8092
      %v8157 = vadd.f32 %v7676, %v8097
      %v8158 = vadd.f32 %v7679, %v8100
      %v8159 = vadd.f32 %v7684, %v8105
      %v8160 = vadd.f32 %v7687, %v8108
      %v8161 = vadd.f32 %v7692, %v8113
      %v8162 = vadd.f32 %v7695, %v8116
      %v8163 = vadd.f32 %v7700, %v8121
      %v8164 = vadd.f32 %v7703, %v8124
      %v8165 = vadd.f32 %v7708, %v8129
      %v8166 = vadd.f32 %v7711, %v8132
      %v8167 = vld [vmem:[%s623] sm:$0xf]
      %v8168 = vld [vmem:[%s623 + $0x4] sm:$0xf]
      %v8169 = vld [vmem:[%s623 + $0xc] sm:$0xf]
      %v8170 = vld [vmem:[%s623 + $0x10] sm:$0xf]
      %v8171 = vld [vmem:[%s623 + $0x18] sm:$0xf]
      %v8172 = vld [vmem:[%s623 + $0x1c] sm:$0xf]
      %v8173 = vld [vmem:[%s623 + $0x24] sm:$0xf]
      %v8174 = vld [vmem:[%s623 + $0x28] sm:$0xf]
      %v8175 = vld [vmem:[%s623 + $0x30] sm:$0xf]
      %v8176 = vld [vmem:[%s623 + $0x34] sm:$0xf]
      %v8177 = vld [vmem:[%s623 + $0x3c] sm:$0xf]
      %v8178 = vld [vmem:[%s623 + $0x40] sm:$0xf]
      %v8179 = vld [vmem:[%s623 + $0x48] sm:$0xf]
      %v8180 = vld [vmem:[%s623 + $0x4c] sm:$0xf]
      %v8181 = vld [vmem:[%s623 + $0x54] sm:$0xf]
      %v8182 = vld [vmem:[%s623 + $0x58] sm:$0xf]
      %v8183 = vld [vmem:[%s623 + $0x60] sm:$0xf]
      %v8184 = vld [vmem:[%s623 + $0x64] sm:$0xf]
      %v8185 = vld [vmem:[%s623 + $0x6c] sm:$0xf]
      %v8186 = vld [vmem:[%s623 + $0x70] sm:$0xf]
      %v8187 = vld [vmem:[%s623 + $0x78] sm:$0xf]
      %v8188 = vld [vmem:[%s623 + $0x7c] sm:$0xf]
      %v8189 = vld [vmem:[%s623 + $0x84] sm:$0xf]
      %v8190 = vld [vmem:[%s623 + $0x88] sm:$0xf]
      %v8191 = vld [vmem:[%s623 + $0x90] sm:$0xf]
      %v8192 = vld [vmem:[%s623 + $0x94] sm:$0xf]
      %v8193 = vld [vmem:[%s623 + $0x9c] sm:$0xf]
      %v8194 = vld [vmem:[%s623 + $0xa0] sm:$0xf]
      %v8195 = vld [vmem:[%s623 + $0xa8] sm:$0xf]
      %v8196 = vld [vmem:[%s623 + $0xac] sm:$0xf]
      %v8197 = vld [vmem:[%s623 + $0xb4] sm:$0xf]
      %v8198 = vld [vmem:[%s623 + $0xb8] sm:$0xf]
      %v8199 = vld [vmem:[%s2 + $0x4] sm:$0xc]
      %v8232 = vunpack.c.l.b16 %v8167
      %v8233 = vunpack.c.l.b16 %v8168
      %v8234 = vunpack.c.l.b16 %v8169
      %v8235 = vunpack.c.l.b16 %v8170
      %v8236 = vunpack.c.l.b16 %v8171
      %v8237 = vunpack.c.l.b16 %v8172
      %v8238 = vunpack.c.l.b16 %v8173
      %v8239 = vunpack.c.l.b16 %v8174
      %v8240 = vunpack.c.l.b16 %v8175
      %v8241 = vunpack.c.l.b16 %v8176
      %v8242 = vunpack.c.l.b16 %v8177
      %v8243 = vunpack.c.l.b16 %v8178
      %v8244 = vunpack.c.l.b16 %v8179
      %v8245 = vunpack.c.l.b16 %v8180
      %v8246 = vunpack.c.l.b16 %v8181
      %v8247 = vunpack.c.l.b16 %v8182
      %v8248 = vunpack.c.l.b16 %v8183
      %v8249 = vunpack.c.l.b16 %v8184
      %v8250 = vunpack.c.l.b16 %v8185
      %v8251 = vunpack.c.l.b16 %v8186
      %v8252 = vunpack.c.l.b16 %v8187
      %v8253 = vunpack.c.l.b16 %v8188
      %v8254 = vunpack.c.l.b16 %v8189
      %v8255 = vunpack.c.l.b16 %v8190
      %v8256 = vunpack.c.l.b16 %v8191
      %v8257 = vunpack.c.l.b16 %v8192
      %v8258 = vunpack.c.l.b16 %v8193
      %v8259 = vunpack.c.l.b16 %v8194
      %v8260 = vunpack.c.l.b16 %v8195
      %v8261 = vunpack.c.l.b16 %v8196
      %v8262 = vunpack.c.l.b16 %v8197
      %v8263 = vunpack.c.l.b16 %v8198
      %v8264 = vpack.c.b16 %v8233, %v8232
      %v8265 = vpack.c.b16 %v8235, %v8234
      %v8266 = vpack.c.b16 %v8237, %v8236
      %v8267 = vpack.c.b16 %v8239, %v8238
      %v8268 = vpack.c.b16 %v8241, %v8240
      %v8269 = vpack.c.b16 %v8243, %v8242
      %v8270 = vpack.c.b16 %v8245, %v8244
      %v8271 = vpack.c.b16 %v8247, %v8246
      %v8272 = vpack.c.b16 %v8249, %v8248
      %v8273 = vpack.c.b16 %v8251, %v8250
      %v8274 = vpack.c.b16 %v8253, %v8252
      %v8275 = vpack.c.b16 %v8255, %v8254
      %v8276 = vpack.c.b16 %v8257, %v8256
      %v8277 = vpack.c.b16 %v8259, %v8258
      %v8278 = vpack.c.b16 %v8261, %v8260
      %v8279 = vpack.c.b16 %v8263, %v8262
      %v8281 = vunpack.c.l.b16 %v8199
      %v8282 = vpack.c.b16 %v8281, %v8281
      %v8283 = vrot.slane %v8282, 2
      %v8285 = vsel %vm1543, %v8264, 0
      %v8288 = vsel %vm1543, %v8265, 0
      %v8291 = vsel %vm1543, %v8266, 0
      %v8294 = vsel %vm1543, %v8267, 0
      %v8297 = vsel %vm1543, %v8268, 0
      %v8300 = vsel %vm1543, %v8269, 0
      %v8303 = vsel %vm1543, %v8270, 0
      %v8306 = vsel %vm1543, %v8271, 0
      %v8309 = vsel %vm1543, %v8272, 0
      %v8312 = vsel %vm1543, %v8273, 0
      %v8315 = vsel %vm1543, %v8274, 0
      %v8318 = vsel %vm1543, %v8275, 0
      %v8321 = vsel %vm1543, %v8276, 0
      %v8324 = vsel %vm1543, %v8277, 0
      %v8327 = vsel %vm1543, %v8278, 0
      %v8330 = vsel %vm1543, %v8279, 0
      %v8333 = vsel %vm1592, %v8283, 0
      %8335 = vmatprep.subr.bf16.mxu0 0
      %8336 = vmatpush1.bf16.msra.mxu0 %v8333
      %8337 = vmatprep.subr.bf16.mxu0 0
      %8338 = vmatpush1.bf16.msra.mxu0 0
      %8339 = vmatprep.subr.bf16.mxu0 0
      %8340 = vmatpush1.bf16.msra.mxu0 0
      %8341 = vmatprep.subr.bf16.mxu0 0
      %8342 = vmatpush1.bf16.msra.mxu0 0
      %8343 = vmatprep.subr.bf16.mxu0 0
      %8344 = vmatpush1.bf16.msra.mxu0 0
      %8345 = vmatprep.subr.bf16.mxu0 0
      %8346 = vmatpush1.bf16.msra.mxu0 0
      %8347 = vmatprep.subr.bf16.mxu0 0
      %8348 = vmatpush1.bf16.msra.mxu0 0
      %8349 = vmatprep.subr.bf16.mxu0 0
      %8350 = vmatpush1.bf16.msra.mxu0 0
      %8351 = vmatprep.subr.bf16.mxu0 0
      %8352 = vmatpush1.bf16.msra.mxu0 0
      %8353 = vmatprep.subr.bf16.mxu0 0
      %8354 = vmatpush1.bf16.msra.mxu0 0
      %8355 = vmatprep.subr.bf16.mxu0 0
      %8356 = vmatpush1.bf16.msra.mxu0 0
      %8357 = vmatprep.subr.bf16.mxu0 0
      %8358 = vmatpush1.bf16.msra.mxu0 0
      %8359 = vmatprep.subr.bf16.mxu0 0
      %8360 = vmatpush1.bf16.msra.mxu0 0
      %8361 = vmatprep.subr.bf16.mxu0 0
      %8362 = vmatpush1.bf16.msra.mxu0 0
      %8363 = vmatprep.subr.bf16.mxu0 0
      %8364 = vmatpush1.bf16.msra.mxu0 0
      %8365 = vmatprep.subr.bf16.mxu0 0
      %8366 = vmatpush1.bf16.msra.mxu0 0
      %8367 = vmatprep.mubr.bf16.mxu0 0
      %8368 = vmatmul.mubr.bf16.gmra.mrb[0].mxu0 %v8285
      %v8369 = vpop.f32.mrb[0].mxu0
      %v8370 = vadd.f32 0.0, %v8369
      %v8371 = vpop.f32.mrb[0].mxu0
      %v8372 = vpop.f32.mrb[0].mxu0
      %v8373 = vadd.f32 0.0, %v8372
      %v8374 = vpop.f32.mrb[0].mxu0
      %8375 = vmatprep.mubr.bf16.mxu0 0
      %8376 = vmatmul.mubr.bf16.gmra.mrb[0].mxu0 %v8288
      %v8377 = vpop.f32.mrb[0].mxu0
      %v8378 = vadd.f32 0.0, %v8377
      %v8379 = vpop.f32.mrb[0].mxu0
      %v8380 = vpop.f32.mrb[0].mxu0
      %v8381 = vadd.f32 0.0, %v8380
      %v8382 = vpop.f32.mrb[0].mxu0
      %8383 = vmatprep.mubr.bf16.mxu0 0
      %8384 = vmatmul.mubr.bf16.gmra.mrb[0].mxu0 %v8291
      %v8385 = vpop.f32.mrb[0].mxu0
      %v8386 = vadd.f32 0.0, %v8385
      %v8387 = vpop.f32.mrb[0].mxu0
      %v8388 = vpop.f32.mrb[0].mxu0
      %v8389 = vadd.f32 0.0, %v8388
      %v8390 = vpop.f32.mrb[0].mxu0
      %8391 = vmatprep.mubr.bf16.mxu0 0
      %8392 = vmatmul.mubr.bf16.gmra.mrb[0].mxu0 %v8294
      %v8393 = vpop.f32.mrb[0].mxu0
      %v8394 = vadd.f32 0.0, %v8393
      %v8395 = vpop.f32.mrb[0].mxu0
      %v8396 = vpop.f32.mrb[0].mxu0
      %v8397 = vadd.f32 0.0, %v8396
      %v8398 = vpop.f32.mrb[0].mxu0
      %8399 = vmatprep.mubr.bf16.mxu0 0
      %8400 = vmatmul.mubr.bf16.gmra.mrb[0].mxu0 %v8297
      %v8401 = vpop.f32.mrb[0].mxu0
      %v8402 = vadd.f32 0.0, %v8401
      %v8403 = vpop.f32.mrb[0].mxu0
      %v8404 = vpop.f32.mrb[0].mxu0
      %v8405 = vadd.f32 0.0, %v8404
      %v8406 = vpop.f32.mrb[0].mxu0
      %8407 = vmatprep.mubr.bf16.mxu0 0
      %8408 = vmatmul.mubr.bf16.gmra.mrb[0].mxu0 %v8300
      %v8409 = vpop.f32.mrb[0].mxu0
      %v8410 = vadd.f32 0.0, %v8409
      %v8411 = vpop.f32.mrb[0].mxu0
      %v8412 = vpop.f32.mrb[0].mxu0
      %v8413 = vadd.f32 0.0, %v8412
      %v8414 = vpop.f32.mrb[0].mxu0
      %8415 = vmatprep.mubr.bf16.mxu0 0
      %8416 = vmatmul.mubr.bf16.gmra.mrb[0].mxu0 %v8303
      %v8417 = vpop.f32.mrb[0].mxu0
      %v8418 = vadd.f32 0.0, %v8417
      %v8419 = vpop.f32.mrb[0].mxu0
      %v8420 = vpop.f32.mrb[0].mxu0
      %v8421 = vadd.f32 0.0, %v8420
      %v8422 = vpop.f32.mrb[0].mxu0
      %8423 = vmatprep.mubr.bf16.mxu0 0
      %8424 = vmatmul.mubr.bf16.gmra.mrb[0].mxu0 %v8306
      %v8425 = vpop.f32.mrb[0].mxu0
      %v8426 = vadd.f32 0.0, %v8425
      %v8427 = vpop.f32.mrb[0].mxu0
      %v8428 = vpop.f32.mrb[0].mxu0
      %v8429 = vadd.f32 0.0, %v8428
      %v8430 = vpop.f32.mrb[0].mxu0
      %8431 = vmatprep.mubr.bf16.mxu0 0
      %8432 = vmatmul.mubr.bf16.gmra.mrb[0].mxu0 %v8309
      %v8433 = vpop.f32.mrb[0].mxu0
      %v8434 = vadd.f32 0.0, %v8433
      %v8435 = vpop.f32.mrb[0].mxu0
      %v8436 = vpop.f32.mrb[0].mxu0
      %v8437 = vadd.f32 0.0, %v8436
      %v8438 = vpop.f32.mrb[0].mxu0
      %8439 = vmatprep.mubr.bf16.mxu0 0
      %8440 = vmatmul.mubr.bf16.gmra.mrb[0].mxu0 %v8312
      %v8441 = vpop.f32.mrb[0].mxu0
      %v8442 = vadd.f32 0.0, %v8441
      %v8443 = vpop.f32.mrb[0].mxu0
      %v8444 = vpop.f32.mrb[0].mxu0
      %v8445 = vadd.f32 0.0, %v8444
      %v8446 = vpop.f32.mrb[0].mxu0
      %8447 = vmatprep.mubr.bf16.mxu0 0
      %8448 = vmatmul.mubr.bf16.gmra.mrb[0].mxu0 %v8315
      %v8449 = vpop.f32.mrb[0].mxu0
      %v8450 = vadd.f32 0.0, %v8449
      %v8451 = vpop.f32.mrb[0].mxu0
      %v8452 = vpop.f32.mrb[0].mxu0
      %v8453 = vadd.f32 0.0, %v8452
      %v8454 = vpop.f32.mrb[0].mxu0
      %8455 = vmatprep.mubr.bf16.mxu0 0
      %8456 = vmatmul.mubr.bf16.gmra.mrb[0].mxu0 %v8318
      %v8457 = vpop.f32.mrb[0].mxu0
      %v8458 = vadd.f32 0.0, %v8457
      %v8459 = vpop.f32.mrb[0].mxu0
      %v8460 = vpop.f32.mrb[0].mxu0
      %v8461 = vadd.f32 0.0, %v8460
      %v8462 = vpop.f32.mrb[0].mxu0
      %8463 = vmatprep.mubr.bf16.mxu0 0
      %8464 = vmatmul.mubr.bf16.gmra.mrb[0].mxu0 %v8321
      %v8465 = vpop.f32.mrb[0].mxu0
      %v8466 = vadd.f32 0.0, %v8465
      %v8467 = vpop.f32.mrb[0].mxu0
      %v8468 = vpop.f32.mrb[0].mxu0
      %v8469 = vadd.f32 0.0, %v8468
      %v8470 = vpop.f32.mrb[0].mxu0
      %8471 = vmatprep.mubr.bf16.mxu0 0
      %8472 = vmatmul.mubr.bf16.gmra.mrb[0].mxu0 %v8324
      %v8473 = vpop.f32.mrb[0].mxu0
      %v8474 = vadd.f32 0.0, %v8473
      %v8475 = vpop.f32.mrb[0].mxu0
      %v8476 = vpop.f32.mrb[0].mxu0
      %v8477 = vadd.f32 0.0, %v8476
      %v8478 = vpop.f32.mrb[0].mxu0
      %8479 = vmatprep.mubr.bf16.mxu0 0
      %8480 = vmatmul.mubr.bf16.gmra.mrb[0].mxu0 %v8327
      %v8481 = vpop.f32.mrb[0].mxu0
      %v8482 = vadd.f32 0.0, %v8481
      %v8483 = vpop.f32.mrb[0].mxu0
      %v8484 = vpop.f32.mrb[0].mxu0
      %v8485 = vadd.f32 0.0, %v8484
      %v8486 = vpop.f32.mrb[0].mxu0
      %8487 = vmatprep.mubr.bf16.mxu0 0
      %8488 = vmatmul.mubr.bf16.gmra.mrb[0].mxu0 %v8330
      %v8489 = vpop.f32.mrb[0].mxu0
      %v8490 = vadd.f32 0.0, %v8489
      %v8491 = vpop.f32.mrb[0].mxu0
      %v8492 = vpop.f32.mrb[0].mxu0
      %v8493 = vadd.f32 0.0, %v8492
      %v8494 = vpop.f32.mrb[0].mxu0
      %8495 = vdwg.mxu0
      %v8496 = vadd.f32 %v8135, %v8370
      %v8497 = vadd.f32 %v8136, %v8373
      %v8498 = vadd.f32 %v8137, %v8378
      %v8499 = vadd.f32 %v8138, %v8381
      %v8500 = vadd.f32 %v8139, %v8386
      %v8501 = vadd.f32 %v8140, %v8389
      %v8502 = vadd.f32 %v8141, %v8394
      %v8503 = vadd.f32 %v8142, %v8397
      %v8504 = vadd.f32 %v8143, %v8402
      %v8505 = vadd.f32 %v8144, %v8405
      %v8506 = vadd.f32 %v8145, %v8410
      %v8507 = vadd.f32 %v8146, %v8413
      %v8508 = vadd.f32 %v8147, %v8418
      %v8509 = vadd.f32 %v8148, %v8421
      %v8510 = vadd.f32 %v8149, %v8426
      %v8511 = vadd.f32 %v8150, %v8429
      %v8512 = vadd.f32 %v8151, %v8434
      %v8513 = vadd.f32 %v8152, %v8437
      %v8514 = vadd.f32 %v8153, %v8442
      %v8515 = vadd.f32 %v8154, %v8445
      %v8516 = vadd.f32 %v8155, %v8450
      %v8517 = vadd.f32 %v8156, %v8453
      %v8518 = vadd.f32 %v8157, %v8458
      %v8519 = vadd.f32 %v8158, %v8461
      %v8520 = vadd.f32 %v8159, %v8466
      %v8521 = vadd.f32 %v8160, %v8469
      %v8522 = vadd.f32 %v8161, %v8474
      %v8523 = vadd.f32 %v8162, %v8477
      %v8524 = vadd.f32 %v8163, %v8482
      %v8525 = vadd.f32 %v8164, %v8485
      %v8526 = vadd.f32 %v8165, %v8490
      %v8527 = vadd.f32 %v8166, %v8493
      %v8528 = vld [vmem:[%s623] sm:$0xf]
      %v8529 = vld [vmem:[%s623 + $0x4] sm:$0xf]
      %v8530 = vld [vmem:[%s623 + $0x8] sm:$0x1]
      %v8531 = vld [vmem:[%s623 + $0xc] sm:$0xf]
      %v8532 = vld [vmem:[%s623 + $0x10] sm:$0xf]
      %v8533 = vld [vmem:[%s623 + $0x14] sm:$0x1]
      %v8534 = vld [vmem:[%s623 + $0x18] sm:$0xf]
      %v8535 = vld [vmem:[%s623 + $0x1c] sm:$0xf]
      %v8536 = vld [vmem:[%s623 + $0x20] sm:$0x1]
      %v8537 = vld [vmem:[%s623 + $0x24] sm:$0xf]
      %v8538 = vld [vmem:[%s623 + $0x28] sm:$0xf]
      %v8539 = vld [vmem:[%s623 + $0x2c] sm:$0x1]
      %v8540 = vld [vmem:[%s623 + $0x30] sm:$0xf]
      %v8541 = vld [vmem:[%s623 + $0x34] sm:$0xf]
      %v8542 = vld [vmem:[%s623 + $0x38] sm:$0x1]
      %v8543 = vld [vmem:[%s623 + $0x3c] sm:$0xf]
      %v8544 = vld [vmem:[%s623 + $0x40] sm:$0xf]
      %v8545 = vld [vmem:[%s623 + $0x44] sm:$0x1]
      %v8546 = vld [vmem:[%s623 + $0x48] sm:$0xf]
      %v8547 = vld [vmem:[%s623 + $0x4c] sm:$0xf]
      %v8548 = vld [vmem:[%s623 + $0x50] sm:$0x1]
      %v8549 = vld [vmem:[%s623 + $0x54] sm:$0xf]
      %v8550 = vld [vmem:[%s623 + $0x58] sm:$0xf]
      %v8551 = vld [vmem:[%s623 + $0x5c] sm:$0x1]
      %v8552 = vld [vmem:[%s623 + $0x60] sm:$0xf]
      %v8553 = vld [vmem:[%s623 + $0x64] sm:$0xf]
      %v8554 = vld [vmem:[%s623 + $0x68] sm:$0x1]
      %v8555 = vld [vmem:[%s623 + $0x6c] sm:$0xf]
      %v8556 = vld [vmem:[%s623 + $0x70] sm:$0xf]
      %v8557 = vld [vmem:[%s623 + $0x74] sm:$0x1]
      %v8558 = vld [vmem:[%s623 + $0x78] sm:$0xf]
      %v8559 = vld [vmem:[%s623 + $0x7c] sm:$0xf]
      %v8560 = vld [vmem:[%s623 + $0x80] sm:$0x1]
      %v8561 = vld [vmem:[%s623 + $0x84] sm:$0xf]
      %v8562 = vld [vmem:[%s623 + $0x88] sm:$0xf]
      %v8563 = vld [vmem:[%s623 + $0x8c] sm:$0x1]
      %v8564 = vld [vmem:[%s623 + $0x90] sm:$0xf]
      %v8565 = vld [vmem:[%s623 + $0x94] sm:$0xf]
      %v8566 = vld [vmem:[%s623 + $0x98] sm:$0x1]
      %v8567 = vld [vmem:[%s623 + $0x9c] sm:$0xf]
      %v8568 = vld [vmem:[%s623 + $0xa0] sm:$0xf]
      %v8569 = vld [vmem:[%s623 + $0xa4] sm:$0x1]
      %v8570 = vld [vmem:[%s623 + $0xa8] sm:$0xf]
      %v8571 = vld [vmem:[%s623 + $0xac] sm:$0xf]
      %v8572 = vld [vmem:[%s623 + $0xb0] sm:$0x1]
      %v8573 = vld [vmem:[%s623 + $0xb4] sm:$0xf]
      %v8574 = vld [vmem:[%s623 + $0xb8] sm:$0xf]
      %v8575 = vld [vmem:[%s623 + $0xbc] sm:$0x1]
      %v8577 = vshrl.u32 %v8528, 16
      %v8579 = vrot.slane %v8577, 4
      %v8580 = vshll.u32 %v8528, 16
      %v8582 = vrot.slane %v8580, 5
      %v8583 = vor.u32 %v8579, %v8582
      %v8584 = vrot.slane %v8583, 4
      %v8586 = vshll.u32 %v8529, 16
      %v8588 = vrot.slane %v8586, 5
      %v8589 = vsel %vm1105, %v8584, %v8588
      %v8590 = vshrl.u32 %v8529, 16
      %v8592 = vrot.slane %v8590, 4
      %v8593 = vor.u32 %v8592, %v8588
      %v8594 = vrot.slane %v8593, 4
      %v8596 = vshll.u32 %v8530, 16
      %v8598 = vrot.slane %v8596, 5
      %v8599 = vsel %vm1105, %v8594, %v8598
      %v8601 = vshrl.u32 %v8531, 16
      %v8603 = vrot.slane %v8601, 4
      %v8604 = vshll.u32 %v8531, 16
      %v8606 = vrot.slane %v8604, 5
      %v8607 = vor.u32 %v8603, %v8606
      %v8608 = vrot.slane %v8607, 4
      %v8610 = vshll.u32 %v8532, 16
      %v8612 = vrot.slane %v8610, 5
      %v8613 = vsel %vm1105, %v8608, %v8612
      %v8614 = vshrl.u32 %v8532, 16
      %v8616 = vrot.slane %v8614, 4
      %v8617 = vor.u32 %v8616, %v8612
      %v8618 = vrot.slane %v8617, 4
      %v8620 = vshll.u32 %v8533, 16
      %v8622 = vrot.slane %v8620, 5
      %v8623 = vsel %vm1105, %v8618, %v8622
      %v8625 = vshrl.u32 %v8534, 16
      %v8627 = vrot.slane %v8625, 4
      %v8628 = vshll.u32 %v8534, 16
      %v8630 = vrot.slane %v8628, 5
      %v8631 = vor.u32 %v8627, %v8630
      %v8632 = vrot.slane %v8631, 4
      %v8634 = vshll.u32 %v8535, 16
      %v8636 = vrot.slane %v8634, 5
      %v8637 = vsel %vm1105, %v8632, %v8636
      %v8638 = vshrl.u32 %v8535, 16
      %v8640 = vrot.slane %v8638, 4
      %v8641 = vor.u32 %v8640, %v8636
      %v8642 = vrot.slane %v8641, 4
      %v8644 = vshll.u32 %v8536, 16
      %v8646 = vrot.slane %v8644, 5
      %v8647 = vsel %vm1105, %v8642, %v8646
      %v8649 = vshrl.u32 %v8537, 16
      %v8651 = vrot.slane %v8649, 4
      %v8652 = vshll.u32 %v8537, 16
      %v8654 = vrot.slane %v8652, 5
      %v8655 = vor.u32 %v8651, %v8654
      %v8656 = vrot.slane %v8655, 4
      %v8658 = vshll.u32 %v8538, 16
      %v8660 = vrot.slane %v8658, 5
      %v8661 = vsel %vm1105, %v8656, %v8660
      %v8662 = vshrl.u32 %v8538, 16
      %v8664 = vrot.slane %v8662, 4
      %v8665 = vor.u32 %v8664, %v8660
      %v8666 = vrot.slane %v8665, 4
      %v8668 = vshll.u32 %v8539, 16
      %v8670 = vrot.slane %v8668, 5
      %v8671 = vsel %vm1105, %v8666, %v8670
      %v8673 = vshrl.u32 %v8540, 16
      %v8675 = vrot.slane %v8673, 4
      %v8676 = vshll.u32 %v8540, 16
      %v8678 = vrot.slane %v8676, 5
      %v8679 = vor.u32 %v8675, %v8678
      %v8680 = vrot.slane %v8679, 4
      %v8682 = vshll.u32 %v8541, 16
      %v8684 = vrot.slane %v8682, 5
      %v8685 = vsel %vm1105, %v8680, %v8684
      %v8686 = vshrl.u32 %v8541, 16
      %v8688 = vrot.slane %v8686, 4
      %v8689 = vor.u32 %v8688, %v8684
      %v8690 = vrot.slane %v8689, 4
      %v8692 = vshll.u32 %v8542, 16
      %v8694 = vrot.slane %v8692, 5
      %v8695 = vsel %vm1105, %v8690, %v8694
      %v8697 = vshrl.u32 %v8543, 16
      %v8699 = vrot.slane %v8697, 4
      %v8700 = vshll.u32 %v8543, 16
      %v8702 = vrot.slane %v8700, 5
      %v8703 = vor.u32 %v8699, %v8702
      %v8704 = vrot.slane %v8703, 4
      %v8706 = vshll.u32 %v8544, 16
      %v8708 = vrot.slane %v8706, 5
      %v8709 = vsel %vm1105, %v8704, %v8708
      %v8710 = vshrl.u32 %v8544, 16
      %v8712 = vrot.slane %v8710, 4
      %v8713 = vor.u32 %v8712, %v8708
      %v8714 = vrot.slane %v8713, 4
      %v8716 = vshll.u32 %v8545, 16
      %v8718 = vrot.slane %v8716, 5
      %v8719 = vsel %vm1105, %v8714, %v8718
      %v8721 = vshrl.u32 %v8546, 16
      %v8723 = vrot.slane %v8721, 4
      %v8724 = vshll.u32 %v8546, 16
      %v8726 = vrot.slane %v8724, 5
      %v8727 = vor.u32 %v8723, %v8726
      %v8728 = vrot.slane %v8727, 4
      %v8730 = vshll.u32 %v8547, 16
      %v8732 = vrot.slane %v8730, 5
      %v8733 = vsel %vm1105, %v8728, %v8732
      %v8734 = vshrl.u32 %v8547, 16
      %v8736 = vrot.slane %v8734, 4
      %v8737 = vor.u32 %v8736, %v8732
      %v8738 = vrot.slane %v8737, 4
      %v8740 = vshll.u32 %v8548, 16
      %v8742 = vrot.slane %v8740, 5
      %v8743 = vsel %vm1105, %v8738, %v8742
      %v8745 = vshrl.u32 %v8549, 16
      %v8747 = vrot.slane %v8745, 4
      %v8748 = vshll.u32 %v8549, 16
      %v8750 = vrot.slane %v8748, 5
      %v8751 = vor.u32 %v8747, %v8750
      %v8752 = vrot.slane %v8751, 4
      %v8754 = vshll.u32 %v8550, 16
      %v8756 = vrot.slane %v8754, 5
      %v8757 = vsel %vm1105, %v8752, %v8756
      %v8758 = vshrl.u32 %v8550, 16
      %v8760 = vrot.slane %v8758, 4
      %v8761 = vor.u32 %v8760, %v8756
      %v8762 = vrot.slane %v8761, 4
      %v8764 = vshll.u32 %v8551, 16
      %v8766 = vrot.slane %v8764, 5
      %v8767 = vsel %vm1105, %v8762, %v8766
      %v8769 = vshrl.u32 %v8552, 16
      %v8771 = vrot.slane %v8769, 4
      %v8772 = vshll.u32 %v8552, 16
      %v8774 = vrot.slane %v8772, 5
      %v8775 = vor.u32 %v8771, %v8774
      %v8776 = vrot.slane %v8775, 4
      %v8778 = vshll.u32 %v8553, 16
      %v8780 = vrot.slane %v8778, 5
      %v8781 = vsel %vm1105, %v8776, %v8780
      %v8782 = vshrl.u32 %v8553, 16
      %v8784 = vrot.slane %v8782, 4
      %v8785 = vor.u32 %v8784, %v8780
      %v8786 = vrot.slane %v8785, 4
      %v8788 = vshll.u32 %v8554, 16
      %v8790 = vrot.slane %v8788, 5
      %v8791 = vsel %vm1105, %v8786, %v8790
      %v8793 = vshrl.u32 %v8555, 16
      %v8795 = vrot.slane %v8793, 4
      %v8796 = vshll.u32 %v8555, 16
      %v8798 = vrot.slane %v8796, 5
      %v8799 = vor.u32 %v8795, %v8798
      %v8800 = vrot.slane %v8799, 4
      %v8802 = vshll.u32 %v8556, 16
      %v8804 = vrot.slane %v8802, 5
      %v8805 = vsel %vm1105, %v8800, %v8804
      %v8806 = vshrl.u32 %v8556, 16
      %v8808 = vrot.slane %v8806, 4
      %v8809 = vor.u32 %v8808, %v8804
      %v8810 = vrot.slane %v8809, 4
      %v8812 = vshll.u32 %v8557, 16
      %v8814 = vrot.slane %v8812, 5
      %v8815 = vsel %vm1105, %v8810, %v8814
      %v8817 = vshrl.u32 %v8558, 16
      %v8819 = vrot.slane %v8817, 4
      %v8820 = vshll.u32 %v8558, 16
      %v8822 = vrot.slane %v8820, 5
      %v8823 = vor.u32 %v8819, %v8822
      %v8824 = vrot.slane %v8823, 4
      %v8826 = vshll.u32 %v8559, 16
      %v8828 = vrot.slane %v8826, 5
      %v8829 = vsel %vm1105, %v8824, %v8828
      %v8830 = vshrl.u32 %v8559, 16
      %v8832 = vrot.slane %v8830, 4
      %v8833 = vor.u32 %v8832, %v8828
      %v8834 = vrot.slane %v8833, 4
      %v8836 = vshll.u32 %v8560, 16
      %v8838 = vrot.slane %v8836, 5
      %v8839 = vsel %vm1105, %v8834, %v8838
      %v8841 = vshrl.u32 %v8561, 16
      %v8843 = vrot.slane %v8841, 4
      %v8844 = vshll.u32 %v8561, 16
      %v8846 = vrot.slane %v8844, 5
      %v8847 = vor.u32 %v8843, %v8846
      %v8848 = vrot.slane %v8847, 4
      %v8850 = vshll.u32 %v8562, 16
      %v8852 = vrot.slane %v8850, 5
      %v8853 = vsel %vm1105, %v8848, %v8852
      %v8854 = vshrl.u32 %v8562, 16
      %v8856 = vrot.slane %v8854, 4
      %v8857 = vor.u32 %v8856, %v8852
      %v8858 = vrot.slane %v8857, 4
      %v8860 = vshll.u32 %v8563, 16
      %v8862 = vrot.slane %v8860, 5
      %v8863 = vsel %vm1105, %v8858, %v8862
      %v8865 = vshrl.u32 %v8564, 16
      %v8867 = vrot.slane %v8865, 4
      %v8868 = vshll.u32 %v8564, 16
      %v8870 = vrot.slane %v8868, 5
      %v8871 = vor.u32 %v8867, %v8870
      %v8872 = vrot.slane %v8871, 4
      %v8874 = vshll.u32 %v8565, 16
      %v8876 = vrot.slane %v8874, 5
      %v8877 = vsel %vm1105, %v8872, %v8876
      %v8878 = vshrl.u32 %v8565, 16
      %v8880 = vrot.slane %v8878, 4
      %v8881 = vor.u32 %v8880, %v8876
      %v8882 = vrot.slane %v8881, 4
      %v8884 = vshll.u32 %v8566, 16
      %v8886 = vrot.slane %v8884, 5
      %v8887 = vsel %vm1105, %v8882, %v8886
      %v8889 = vshrl.u32 %v8567, 16
      %v8891 = vrot.slane %v8889, 4
      %v8892 = vshll.u32 %v8567, 16
      %v8894 = vrot.slane %v8892, 5
      %v8895 = vor.u32 %v8891, %v8894
      %v8896 = vrot.slane %v8895, 4
      %v8898 = vshll.u32 %v8568, 16
      %v8900 = vrot.slane %v8898, 5
      %v8901 = vsel %vm1105, %v8896, %v8900
      %v8902 = vshrl.u32 %v8568, 16
      %v8904 = vrot.slane %v8902, 4
      %v8905 = vor.u32 %v8904, %v8900
      %v8906 = vrot.slane %v8905, 4
      %v8908 = vshll.u32 %v8569, 16
      %v8910 = vrot.slane %v8908, 5
      %v8911 = vsel %vm1105, %v8906, %v8910
      %v8913 = vshrl.u32 %v8570, 16
      %v8915 = vrot.slane %v8913, 4
      %v8916 = vshll.u32 %v8570, 16
      %v8918 = vrot.slane %v8916, 5
      %v8919 = vor.u32 %v8915, %v8918
      %v8920 = vrot.slane %v8919, 4
      %v8922 = vshll.u32 %v8571, 16
      %v8924 = vrot.slane %v8922, 5
      %v8925 = vsel %vm1105, %v8920, %v8924
      %v8926 = vshrl.u32 %v8571, 16
      %v8928 = vrot.slane %v8926, 4
      %v8929 = vor.u32 %v8928, %v8924
      %v8930 = vrot.slane %v8929, 4
      %v8932 = vshll.u32 %v8572, 16
      %v8934 = vrot.slane %v8932, 5
      %v8935 = vsel %vm1105, %v8930, %v8934
      %v8937 = vshrl.u32 %v8573, 16
      %v8939 = vrot.slane %v8937, 4
      %v8940 = vshll.u32 %v8573, 16
      %v8942 = vrot.slane %v8940, 5
      %v8943 = vor.u32 %v8939, %v8942
      %v8944 = vrot.slane %v8943, 4
      %v8946 = vshll.u32 %v8574, 16
      %v8948 = vrot.slane %v8946, 5
      %v8949 = vsel %vm1105, %v8944, %v8948
      %v8950 = vshrl.u32 %v8574, 16
      %v8952 = vrot.slane %v8950, 4
      %v8953 = vor.u32 %v8952, %v8948
      %v8954 = vrot.slane %v8953, 4
      %v8956 = vshll.u32 %v8575, 16
      %v8958 = vrot.slane %v8956, 5
      %v8959 = vsel %vm1105, %v8954, %v8958
      %v8960 = vld [vmem:[%s2 + $0x8] sm:$0x3]
      %v8961 = vunpack.c.l.b16 %v8589
      %v8962 = vunpack.c.l.b16 %v8599
      %v8963 = vunpack.c.l.b16 %v8613
      %v8964 = vunpack.c.l.b16 %v8623
      %v8965 = vunpack.c.l.b16 %v8637
      %v8966 = vunpack.c.l.b16 %v8647
      %v8967 = vunpack.c.l.b16 %v8661
      %v8968 = vunpack.c.l.b16 %v8671
      %v8969 = vunpack.c.l.b16 %v8685
      %v8970 = vunpack.c.l.b16 %v8695
      %v8971 = vunpack.c.l.b16 %v8709
      %v8972 = vunpack.c.l.b16 %v8719
      %v8973 = vunpack.c.l.b16 %v8733
      %v8974 = vunpack.c.l.b16 %v8743
      %v8975 = vunpack.c.l.b16 %v8757
      %v8976 = vunpack.c.l.b16 %v8767
      %v8977 = vunpack.c.l.b16 %v8781
      %v8978 = vunpack.c.l.b16 %v8791
      %v8979 = vunpack.c.l.b16 %v8805
      %v8980 = vunpack.c.l.b16 %v8815
      %v8981 = vunpack.c.l.b16 %v8829
      %v8982 = vunpack.c.l.b16 %v8839
      %v8983 = vunpack.c.l.b16 %v8853
      %v8984 = vunpack.c.l.b16 %v8863
      %v8985 = vunpack.c.l.b16 %v8877
      %v8986 = vunpack.c.l.b16 %v8887
      %v8987 = vunpack.c.l.b16 %v8901
      %v8988 = vunpack.c.l.b16 %v8911
      %v8989 = vunpack.c.l.b16 %v8925
      %v8990 = vunpack.c.l.b16 %v8935
      %v8991 = vunpack.c.l.b16 %v8949
      %v8992 = vunpack.c.l.b16 %v8959
      %v8993 = vpack.c.b16 %v8962, %v8961
      %v8994 = vpack.c.b16 %v8964, %v8963
      %v8995 = vpack.c.b16 %v8966, %v8965
      %v8996 = vpack.c.b16 %v8968, %v8967
      %v8997 = vpack.c.b16 %v8970, %v8969
      %v8998 = vpack.c.b16 %v8972, %v8971
      %v8999 = vpack.c.b16 %v8974, %v8973
      %v9000 = vpack.c.b16 %v8976, %v8975
      %v9001 = vpack.c.b16 %v8978, %v8977
      %v9002 = vpack.c.b16 %v8980, %v8979
      %v9003 = vpack.c.b16 %v8982, %v8981
      %v9004 = vpack.c.b16 %v8984, %v8983
      %v9005 = vpack.c.b16 %v8986, %v8985
      %v9006 = vpack.c.b16 %v8988, %v8987
      %v9007 = vpack.c.b16 %v8990, %v8989
      %v9008 = vpack.c.b16 %v8992, %v8991
      %v9010 = vsel %vm1543, %v8993, 0
      %v9013 = vsel %vm1543, %v8994, 0
      %v9016 = vsel %vm1543, %v8995, 0
      %v9019 = vsel %vm1543, %v8996, 0
      %v9022 = vsel %vm1543, %v8997, 0
      %v9025 = vsel %vm1543, %v8998, 0
      %v9028 = vsel %vm1543, %v8999, 0
      %v9031 = vsel %vm1543, %v9000, 0
      %v9034 = vsel %vm1543, %v9001, 0
      %v9037 = vsel %vm1543, %v9002, 0
      %v9040 = vsel %vm1543, %v9003, 0
      %v9043 = vsel %vm1543, %v9004, 0
      %v9046 = vsel %vm1543, %v9005, 0
      %v9049 = vsel %vm1543, %v9006, 0
      %v9052 = vsel %vm1543, %v9007, 0
      %v9055 = vsel %vm1543, %v9008, 0
      %v9058 = vsel %vm1592, %v8960, 0
      %9060 = vmatprep.subr.bf16.mxu0 0
      %9061 = vmatpush1.bf16.msra.mxu0 %v9058
      %9062 = vmatprep.subr.bf16.mxu0 0
      %9063 = vmatpush1.bf16.msra.mxu0 0
      %9064 = vmatprep.subr.bf16.mxu0 0
      %9065 = vmatpush1.bf16.msra.mxu0 0
      %9066 = vmatprep.subr.bf16.mxu0 0
      %9067 = vmatpush1.bf16.msra.mxu0 0
      %9068 = vmatprep.subr.bf16.mxu0 0
      %9069 = vmatpush1.bf16.msra.mxu0 0
      %9070 = vmatprep.subr.bf16.mxu0 0
      %9071 = vmatpush1.bf16.msra.mxu0 0
      %9072 = vmatprep.subr.bf16.mxu0 0
      %9073 = vmatpush1.bf16.msra.mxu0 0
      %9074 = vmatprep.subr.bf16.mxu0 0
      %9075 = vmatpush1.bf16.msra.mxu0 0
      %9076 = vmatprep.subr.bf16.mxu0 0
      %9077 = vmatpush1.bf16.msra.mxu0 0
      %9078 = vmatprep.subr.bf16.mxu0 0
      %9079 = vmatpush1.bf16.msra.mxu0 0
      %9080 = vmatprep.subr.bf16.mxu0 0
      %9081 = vmatpush1.bf16.msra.mxu0 0
      %9082 = vmatprep.subr.bf16.mxu0 0
      %9083 = vmatpush1.bf16.msra.mxu0 0
      %9084 = vmatprep.subr.bf16.mxu0 0
      %9085 = vmatpush1.bf16.msra.mxu0 0
      %9086 = vmatprep.subr.bf16.mxu0 0
      %9087 = vmatpush1.bf16.msra.mxu0 0
      %9088 = vmatprep.subr.bf16.mxu0 0
      %9089 = vmatpush1.bf16.msra.mxu0 0
      %9090 = vmatprep.subr.bf16.mxu0 0
      %9091 = vmatpush1.bf16.msra.mxu0 0
      %9092 = vmatprep.mubr.bf16.mxu0 0
      %9093 = vmatmul.mubr.bf16.gmra.mrb[0].mxu0 %v9010
      %v9094 = vpop.f32.mrb[0].mxu0
      %v9095 = vadd.f32 0.0, %v9094
      %v9096 = vpop.f32.mrb[0].mxu0
      %v9097 = vpop.f32.mrb[0].mxu0
      %v9098 = vadd.f32 0.0, %v9097
      %v9099 = vpop.f32.mrb[0].mxu0
      %9100 = vmatprep.mubr.bf16.mxu0 0
      %9101 = vmatmul.mubr.bf16.gmra.mrb[0].mxu0 %v9013
      %v9102 = vpop.f32.mrb[0].mxu0
      %v9103 = vadd.f32 0.0, %v9102
      %v9104 = vpop.f32.mrb[0].mxu0
      %v9105 = vpop.f32.mrb[0].mxu0
      %v9106 = vadd.f32 0.0, %v9105
      %v9107 = vpop.f32.mrb[0].mxu0
      %9108 = vmatprep.mubr.bf16.mxu0 0
      %9109 = vmatmul.mubr.bf16.gmra.mrb[0].mxu0 %v9016
      %v9110 = vpop.f32.mrb[0].mxu0
      %v9111 = vadd.f32 0.0, %v9110
      %v9112 = vpop.f32.mrb[0].mxu0
      %v9113 = vpop.f32.mrb[0].mxu0
      %v9114 = vadd.f32 0.0, %v9113
      %v9115 = vpop.f32.mrb[0].mxu0
      %9116 = vmatprep.mubr.bf16.mxu0 0
      %9117 = vmatmul.mubr.bf16.gmra.mrb[0].mxu0 %v9019
      %v9118 = vpop.f32.mrb[0].mxu0
      %v9119 = vadd.f32 0.0, %v9118
      %v9120 = vpop.f32.mrb[0].mxu0
      %v9121 = vpop.f32.mrb[0].mxu0
      %v9122 = vadd.f32 0.0, %v9121
      %v9123 = vpop.f32.mrb[0].mxu0
      %9124 = vmatprep.mubr.bf16.mxu0 0
      %9125 = vmatmul.mubr.bf16.gmra.mrb[0].mxu0 %v9022
      %v9126 = vpop.f32.mrb[0].mxu0
      %v9127 = vadd.f32 0.0, %v9126
      %v9128 = vpop.f32.mrb[0].mxu0
      %v9129 = vpop.f32.mrb[0].mxu0
      %v9130 = vadd.f32 0.0, %v9129
      %v9131 = vpop.f32.mrb[0].mxu0
      %9132 = vmatprep.mubr.bf16.mxu0 0
      %9133 = vmatmul.mubr.bf16.gmra.mrb[0].mxu0 %v9025
      %v9134 = vpop.f32.mrb[0].mxu0
      %v9135 = vadd.f32 0.0, %v9134
      %v9136 = vpop.f32.mrb[0].mxu0
      %v9137 = vpop.f32.mrb[0].mxu0
      %v9138 = vadd.f32 0.0, %v9137
      %v9139 = vpop.f32.mrb[0].mxu0
      %9140 = vmatprep.mubr.bf16.mxu0 0
      %9141 = vmatmul.mubr.bf16.gmra.mrb[0].mxu0 %v9028
      %v9142 = vpop.f32.mrb[0].mxu0
      %v9143 = vadd.f32 0.0, %v9142
      %v9144 = vpop.f32.mrb[0].mxu0
      %v9145 = vpop.f32.mrb[0].mxu0
      %v9146 = vadd.f32 0.0, %v9145
      %v9147 = vpop.f32.mrb[0].mxu0
      %9148 = vmatprep.mubr.bf16.mxu0 0
      %9149 = vmatmul.mubr.bf16.gmra.mrb[0].mxu0 %v9031
      %v9150 = vpop.f32.mrb[0].mxu0
      %v9151 = vadd.f32 0.0, %v9150
      %v9152 = vpop.f32.mrb[0].mxu0
      %v9153 = vpop.f32.mrb[0].mxu0
      %v9154 = vadd.f32 0.0, %v9153
      %v9155 = vpop.f32.mrb[0].mxu0
      %9156 = vmatprep.mubr.bf16.mxu0 0
      %9157 = vmatmul.mubr.bf16.gmra.mrb[0].mxu0 %v9034
      %v9158 = vpop.f32.mrb[0].mxu0
      %v9159 = vadd.f32 0.0, %v9158
      %v9160 = vpop.f32.mrb[0].mxu0
      %v9161 = vpop.f32.mrb[0].mxu0
      %v9162 = vadd.f32 0.0, %v9161
      %v9163 = vpop.f32.mrb[0].mxu0
      %9164 = vmatprep.mubr.bf16.mxu0 0
      %9165 = vmatmul.mubr.bf16.gmra.mrb[0].mxu0 %v9037
      %v9166 = vpop.f32.mrb[0].mxu0
      %v9167 = vadd.f32 0.0, %v9166
      %v9168 = vpop.f32.mrb[0].mxu0
      %v9169 = vpop.f32.mrb[0].mxu0
      %v9170 = vadd.f32 0.0, %v9169
      %v9171 = vpop.f32.mrb[0].mxu0
      %9172 = vmatprep.mubr.bf16.mxu0 0
      %9173 = vmatmul.mubr.bf16.gmra.mrb[0].mxu0 %v9040
      %v9174 = vpop.f32.mrb[0].mxu0
      %v9175 = vadd.f32 0.0, %v9174
      %v9176 = vpop.f32.mrb[0].mxu0
      %v9177 = vpop.f32.mrb[0].mxu0
      %v9178 = vadd.f32 0.0, %v9177
      %v9179 = vpop.f32.mrb[0].mxu0
      %9180 = vmatprep.mubr.bf16.mxu0 0
      %9181 = vmatmul.mubr.bf16.gmra.mrb[0].mxu0 %v9043
      %v9182 = vpop.f32.mrb[0].mxu0
      %v9183 = vadd.f32 0.0, %v9182
      %v9184 = vpop.f32.mrb[0].mxu0
      %v9185 = vpop.f32.mrb[0].mxu0
      %v9186 = vadd.f32 0.0, %v9185
      %v9187 = vpop.f32.mrb[0].mxu0
      %9188 = vmatprep.mubr.bf16.mxu0 0
      %9189 = vmatmul.mubr.bf16.gmra.mrb[0].mxu0 %v9046
      %v9190 = vpop.f32.mrb[0].mxu0
      %v9191 = vadd.f32 0.0, %v9190
      %v9192 = vpop.f32.mrb[0].mxu0
      %v9193 = vpop.f32.mrb[0].mxu0
      %v9194 = vadd.f32 0.0, %v9193
      %v9195 = vpop.f32.mrb[0].mxu0
      %9196 = vmatprep.mubr.bf16.mxu0 0
      %9197 = vmatmul.mubr.bf16.gmra.mrb[0].mxu0 %v9049
      %v9198 = vpop.f32.mrb[0].mxu0
      %v9199 = vadd.f32 0.0, %v9198
      %v9200 = vpop.f32.mrb[0].mxu0
      %v9201 = vpop.f32.mrb[0].mxu0
      %v9202 = vadd.f32 0.0, %v9201
      %v9203 = vpop.f32.mrb[0].mxu0
      %9204 = vmatprep.mubr.bf16.mxu0 0
      %9205 = vmatmul.mubr.bf16.gmra.mrb[0].mxu0 %v9052
      %v9206 = vpop.f32.mrb[0].mxu0
      %v9207 = vadd.f32 0.0, %v9206
      %v9208 = vpop.f32.mrb[0].mxu0
      %v9209 = vpop.f32.mrb[0].mxu0
      %v9210 = vadd.f32 0.0, %v9209
      %v9211 = vpop.f32.mrb[0].mxu0
      %9212 = vmatprep.mubr.bf16.mxu0 0
      %9213 = vmatmul.mubr.bf16.gmra.mrb[0].mxu0 %v9055
      %v9214 = vpop.f32.mrb[0].mxu0
      %v9215 = vadd.f32 0.0, %v9214
      %v9216 = vpop.f32.mrb[0].mxu0
      %v9217 = vpop.f32.mrb[0].mxu0
      %v9218 = vadd.f32 0.0, %v9217
      %v9219 = vpop.f32.mrb[0].mxu0
      %9220 = vdwg.mxu0
      %v9221 = vadd.f32 %v8496, %v9095
      %v9222 = vadd.f32 %v8497, %v9098
      %v9223 = vadd.f32 %v8498, %v9103
      %v9224 = vadd.f32 %v8499, %v9106
      %v9225 = vadd.f32 %v8500, %v9111
      %v9226 = vadd.f32 %v8501, %v9114
      %v9227 = vadd.f32 %v8502, %v9119
      %v9228 = vadd.f32 %v8503, %v9122
      %v9229 = vadd.f32 %v8504, %v9127
      %v9230 = vadd.f32 %v8505, %v9130
      %v9231 = vadd.f32 %v8506, %v9135
      %v9232 = vadd.f32 %v8507, %v9138
      %v9233 = vadd.f32 %v8508, %v9143
      %v9234 = vadd.f32 %v8509, %v9146
      %v9235 = vadd.f32 %v8510, %v9151
      %v9236 = vadd.f32 %v8511, %v9154
      %v9237 = vadd.f32 %v8512, %v9159
      %v9238 = vadd.f32 %v8513, %v9162
      %v9239 = vadd.f32 %v8514, %v9167
      %v9240 = vadd.f32 %v8515, %v9170
      %v9241 = vadd.f32 %v8516, %v9175
      %v9242 = vadd.f32 %v8517, %v9178
      %v9243 = vadd.f32 %v8518, %v9183
      %v9244 = vadd.f32 %v8519, %v9186
      %v9245 = vadd.f32 %v8520, %v9191
      %v9246 = vadd.f32 %v8521, %v9194
      %v9247 = vadd.f32 %v8522, %v9199
      %v9248 = vadd.f32 %v8523, %v9202
      %v9249 = vadd.f32 %v8524, %v9207
      %v9250 = vadd.f32 %v8525, %v9210
      %v9251 = vadd.f32 %v8526, %v9215
      %v9252 = vadd.f32 %v8527, %v9218
      %v9253 = vld [vmem:[%s623] sm:$0xe]
      %v9254 = vld [vmem:[%s623 + $0xc] sm:$0xe]
      %v9255 = vld [vmem:[%s623 + $0x18] sm:$0xe]
      %v9256 = vld [vmem:[%s623 + $0x24] sm:$0xe]
      %v9257 = vld [vmem:[%s623 + $0x30] sm:$0xe]
      %v9258 = vld [vmem:[%s623 + $0x3c] sm:$0xe]
      %v9259 = vld [vmem:[%s623 + $0x48] sm:$0xe]
      %v9260 = vld [vmem:[%s623 + $0x54] sm:$0xe]
      %v9261 = vld [vmem:[%s623 + $0x60] sm:$0xe]
      %v9262 = vld [vmem:[%s623 + $0x6c] sm:$0xe]
      %v9263 = vld [vmem:[%s623 + $0x78] sm:$0xe]
      %v9264 = vld [vmem:[%s623 + $0x84] sm:$0xe]
      %v9265 = vld [vmem:[%s623 + $0x90] sm:$0xe]
      %v9266 = vld [vmem:[%s623 + $0x9c] sm:$0xe]
      %v9267 = vld [vmem:[%s623 + $0xa8] sm:$0xe]
      %v9268 = vld [vmem:[%s623 + $0xb4] sm:$0xe]
      %v9317 = vrot.slane %v9253, 5
      %v9318 = vrot.slane %v9317, 4
      %v9319 = vrot.slane %v8529, 5
      %v9320 = vsel %vm2099, %v9318, %v9319
      %v9321 = vrot.slane %v9319, 4
      %v9322 = vrot.slane %v8530, 5
      %v9323 = vsel %vm2099, %v9321, %v9322
      %v9324 = vrot.slane %v9254, 5
      %v9325 = vrot.slane %v9324, 4
      %v9326 = vrot.slane %v8532, 5
      %v9327 = vsel %vm2099, %v9325, %v9326
      %v9328 = vrot.slane %v9326, 4
      %v9329 = vrot.slane %v8533, 5
      %v9330 = vsel %vm2099, %v9328, %v9329
      %v9331 = vrot.slane %v9255, 5
      %v9332 = vrot.slane %v9331, 4
      %v9333 = vrot.slane %v8535, 5
      %v9334 = vsel %vm2099, %v9332, %v9333
      %v9335 = vrot.slane %v9333, 4
      %v9336 = vrot.slane %v8536, 5
      %v9337 = vsel %vm2099, %v9335, %v9336
      %v9338 = vrot.slane %v9256, 5
      %v9339 = vrot.slane %v9338, 4
      %v9340 = vrot.slane %v8538, 5
      %v9341 = vsel %vm2099, %v9339, %v9340
      %v9342 = vrot.slane %v9340, 4
      %v9343 = vrot.slane %v8539, 5
      %v9344 = vsel %vm2099, %v9342, %v9343
      %v9345 = vrot.slane %v9257, 5
      %v9346 = vrot.slane %v9345, 4
      %v9347 = vrot.slane %v8541, 5
      %v9348 = vsel %vm2099, %v9346, %v9347
      %v9349 = vrot.slane %v9347, 4
      %v9350 = vrot.slane %v8542, 5
      %v9351 = vsel %vm2099, %v9349, %v9350
      %v9352 = vrot.slane %v9258, 5
      %v9353 = vrot.slane %v9352, 4
      %v9354 = vrot.slane %v8544, 5
      %v9355 = vsel %vm2099, %v9353, %v9354
      %v9356 = vrot.slane %v9354, 4
      %v9357 = vrot.slane %v8545, 5
      %v9358 = vsel %vm2099, %v9356, %v9357
      %v9359 = vrot.slane %v9259, 5
      %v9360 = vrot.slane %v9359, 4
      %v9361 = vrot.slane %v8547, 5
      %v9362 = vsel %vm2099, %v9360, %v9361
      %v9363 = vrot.slane %v9361, 4
      %v9364 = vrot.slane %v8548, 5
      %v9365 = vsel %vm2099, %v9363, %v9364
      %v9366 = vrot.slane %v9260, 5
      %v9367 = vrot.slane %v9366, 4
      %v9368 = vrot.slane %v8550, 5
      %v9369 = vsel %vm2099, %v9367, %v9368
      %v9370 = vrot.slane %v9368, 4
      %v9371 = vrot.slane %v8551, 5
      %v9372 = vsel %vm2099, %v9370, %v9371
      %v9373 = vrot.slane %v9261, 5
      %v9374 = vrot.slane %v9373, 4
      %v9375 = vrot.slane %v8553, 5
      %v9376 = vsel %vm2099, %v9374, %v9375
      %v9377 = vrot.slane %v9375, 4
      %v9378 = vrot.slane %v8554, 5
      %v9379 = vsel %vm2099, %v9377, %v9378
      %v9380 = vrot.slane %v9262, 5
      %v9381 = vrot.slane %v9380, 4
      %v9382 = vrot.slane %v8556, 5
      %v9383 = vsel %vm2099, %v9381, %v9382
      %v9384 = vrot.slane %v9382, 4
      %v9385 = vrot.slane %v8557, 5
      %v9386 = vsel %vm2099, %v9384, %v9385
      %v9387 = vrot.slane %v9263, 5
      %v9388 = vrot.slane %v9387, 4
      %v9389 = vrot.slane %v8559, 5
      %v9390 = vsel %vm2099, %v9388, %v9389
      %v9391 = vrot.slane %v9389, 4
      %v9392 = vrot.slane %v8560, 5
      %v9393 = vsel %vm2099, %v9391, %v9392
      %v9394 = vrot.slane %v9264, 5
      %v9395 = vrot.slane %v9394, 4
      %v9396 = vrot.slane %v8562, 5
      %v9397 = vsel %vm2099, %v9395, %v9396
      %v9398 = vrot.slane %v9396, 4
      %v9399 = vrot.slane %v8563, 5
      %v9400 = vsel %vm2099, %v9398, %v9399
      %v9401 = vrot.slane %v9265, 5
      %v9402 = vrot.slane %v9401, 4
      %v9403 = vrot.slane %v8565, 5
      %v9404 = vsel %vm2099, %v9402, %v9403
      %v9405 = vrot.slane %v9403, 4
      %v9406 = vrot.slane %v8566, 5
      %v9407 = vsel %vm2099, %v9405, %v9406
      %v9408 = vrot.slane %v9266, 5
      %v9409 = vrot.slane %v9408, 4
      %v9410 = vrot.slane %v8568, 5
      %v9411 = vsel %vm2099, %v9409, %v9410
      %v9412 = vrot.slane %v9410, 4
      %v9413 = vrot.slane %v8569, 5
      %v9414 = vsel %vm2099, %v9412, %v9413
      %v9415 = vrot.slane %v9267, 5
      %v9416 = vrot.slane %v9415, 4
      %v9417 = vrot.slane %v8571, 5
      %v9418 = vsel %vm2099, %v9416, %v9417
      %v9419 = vrot.slane %v9417, 4
      %v9420 = vrot.slane %v8572, 5
      %v9421 = vsel %vm2099, %v9419, %v9420
      %v9422 = vrot.slane %v9268, 5
      %v9423 = vrot.slane %v9422, 4
      %v9424 = vrot.slane %v8574, 5
      %v9425 = vsel %vm2099, %v9423, %v9424
      %v9426 = vrot.slane %v9424, 4
      %v9427 = vrot.slane %v8575, 5
      %v9428 = vsel %vm2099, %v9426, %v9427
      %v9429 = vld [vmem:[%s2 + $0x8] sm:$0xc]
      %v9430 = vunpack.c.l.b16 %v9320
      %v9431 = vunpack.c.l.b16 %v9323
      %v9432 = vunpack.c.l.b16 %v9327
      %v9433 = vunpack.c.l.b16 %v9330
      %v9434 = vunpack.c.l.b16 %v9334
      %v9435 = vunpack.c.l.b16 %v9337
      %v9436 = vunpack.c.l.b16 %v9341
      %v9437 = vunpack.c.l.b16 %v9344
      %v9438 = vunpack.c.l.b16 %v9348
      %v9439 = vunpack.c.l.b16 %v9351
      %v9440 = vunpack.c.l.b16 %v9355
      %v9441 = vunpack.c.l.b16 %v9358
      %v9442 = vunpack.c.l.b16 %v9362
      %v9443 = vunpack.c.l.b16 %v9365
      %v9444 = vunpack.c.l.b16 %v9369
      %v9445 = vunpack.c.l.b16 %v9372
      %v9446 = vunpack.c.l.b16 %v9376
      %v9447 = vunpack.c.l.b16 %v9379
      %v9448 = vunpack.c.l.b16 %v9383
      %v9449 = vunpack.c.l.b16 %v9386
      %v9450 = vunpack.c.l.b16 %v9390
      %v9451 = vunpack.c.l.b16 %v9393
      %v9452 = vunpack.c.l.b16 %v9397
      %v9453 = vunpack.c.l.b16 %v9400
      %v9454 = vunpack.c.l.b16 %v9404
      %v9455 = vunpack.c.l.b16 %v9407
      %v9456 = vunpack.c.l.b16 %v9411
      %v9457 = vunpack.c.l.b16 %v9414
      %v9458 = vunpack.c.l.b16 %v9418
      %v9459 = vunpack.c.l.b16 %v9421
      %v9460 = vunpack.c.l.b16 %v9425
      %v9461 = vunpack.c.l.b16 %v9428
      %v9462 = vpack.c.b16 %v9431, %v9430
      %v9463 = vpack.c.b16 %v9433, %v9432
      %v9464 = vpack.c.b16 %v9435, %v9434
      %v9465 = vpack.c.b16 %v9437, %v9436
      %v9466 = vpack.c.b16 %v9439, %v9438
      %v9467 = vpack.c.b16 %v9441, %v9440
      %v9468 = vpack.c.b16 %v9443, %v9442
      %v9469 = vpack.c.b16 %v9445, %v9444
      %v9470 = vpack.c.b16 %v9447, %v9446
      %v9471 = vpack.c.b16 %v9449, %v9448
      %v9472 = vpack.c.b16 %v9451, %v9450
      %v9473 = vpack.c.b16 %v9453, %v9452
      %v9474 = vpack.c.b16 %v9455, %v9454
      %v9475 = vpack.c.b16 %v9457, %v9456
      %v9476 = vpack.c.b16 %v9459, %v9458
      %v9477 = vpack.c.b16 %v9461, %v9460
      %v9479 = vunpack.c.l.b16 %v9429
      %v9480 = vpack.c.b16 %v9479, %v9479
      %v9481 = vrot.slane %v9480, 2
      %v9483 = vsel %vm1543, %v9462, 0
      %v9486 = vsel %vm1543, %v9463, 0
      %v9489 = vsel %vm1543, %v9464, 0
      %v9492 = vsel %vm1543, %v9465, 0
      %v9495 = vsel %vm1543, %v9466, 0
      %v9498 = vsel %vm1543, %v9467, 0
      %v9501 = vsel %vm1543, %v9468, 0
      %v9504 = vsel %vm1543, %v9469, 0
      %v9507 = vsel %vm1543, %v9470, 0
      %v9510 = vsel %vm1543, %v9471, 0
      %v9513 = vsel %vm1543, %v9472, 0
      %v9516 = vsel %vm1543, %v9473, 0
      %v9519 = vsel %vm1543, %v9474, 0
      %v9522 = vsel %vm1543, %v9475, 0
      %v9525 = vsel %vm1543, %v9476, 0
      %v9528 = vsel %vm1543, %v9477, 0
      %v9531 = vsel %vm1592, %v9481, 0
      %9533 = vmatprep.subr.bf16.mxu0 0
      %9534 = vmatpush1.bf16.msra.mxu0 %v9531
      %9535 = vmatprep.subr.bf16.mxu0 0
      %9536 = vmatpush1.bf16.msra.mxu0 0
      %9537 = vmatprep.subr.bf16.mxu0 0
      %9538 = vmatpush1.bf16.msra.mxu0 0
      %9539 = vmatprep.subr.bf16.mxu0 0
      %9540 = vmatpush1.bf16.msra.mxu0 0
      %9541 = vmatprep.subr.bf16.mxu0 0
      %9542 = vmatpush1.bf16.msra.mxu0 0
      %9543 = vmatprep.subr.bf16.mxu0 0
      %9544 = vmatpush1.bf16.msra.mxu0 0
      %9545 = vmatprep.subr.bf16.mxu0 0
      %9546 = vmatpush1.bf16.msra.mxu0 0
      %9547 = vmatprep.subr.bf16.mxu0 0
      %9548 = vmatpush1.bf16.msra.mxu0 0
      %9549 = vmatprep.subr.bf16.mxu0 0
      %9550 = vmatpush1.bf16.msra.mxu0 0
      %9551 = vmatprep.subr.bf16.mxu0 0
      %9552 = vmatpush1.bf16.msra.mxu0 0
      %9553 = vmatprep.subr.bf16.mxu0 0
      %9554 = vmatpush1.bf16.msra.mxu0 0
      %9555 = vmatprep.subr.bf16.mxu0 0
      %9556 = vmatpush1.bf16.msra.mxu0 0
      %9557 = vmatprep.subr.bf16.mxu0 0
      %9558 = vmatpush1.bf16.msra.mxu0 0
      %9559 = vmatprep.subr.bf16.mxu0 0
      %9560 = vmatpush1.bf16.msra.mxu0 0
      %9561 = vmatprep.subr.bf16.mxu0 0
      %9562 = vmatpush1.bf16.msra.mxu0 0
      %9563 = vmatprep.subr.bf16.mxu0 0
      %9564 = vmatpush1.bf16.msra.mxu0 0
      %9565 = vmatprep.mubr.bf16.mxu0 0
      %9566 = vmatmul.mubr.bf16.gmra.mrb[0].mxu0 %v9483
      %v9567 = vpop.f32.mrb[0].mxu0
      %v9568 = vadd.f32 0.0, %v9567
      %v9569 = vpop.f32.mrb[0].mxu0
      %v9570 = vpop.f32.mrb[0].mxu0
      %v9571 = vadd.f32 0.0, %v9570
      %v9572 = vpop.f32.mrb[0].mxu0
      %9573 = vmatprep.mubr.bf16.mxu0 0
      %9574 = vmatmul.mubr.bf16.gmra.mrb[0].mxu0 %v9486
      %v9575 = vpop.f32.mrb[0].mxu0
      %v9576 = vadd.f32 0.0, %v9575
      %v9577 = vpop.f32.mrb[0].mxu0
      %v9578 = vpop.f32.mrb[0].mxu0
      %v9579 = vadd.f32 0.0, %v9578
      %v9580 = vpop.f32.mrb[0].mxu0
      %9581 = vmatprep.mubr.bf16.mxu0 0
      %9582 = vmatmul.mubr.bf16.gmra.mrb[0].mxu0 %v9489
      %v9583 = vpop.f32.mrb[0].mxu0
      %v9584 = vadd.f32 0.0, %v9583
      %v9585 = vpop.f32.mrb[0].mxu0
      %v9586 = vpop.f32.mrb[0].mxu0
      %v9587 = vadd.f32 0.0, %v9586
      %v9588 = vpop.f32.mrb[0].mxu0
      %9589 = vmatprep.mubr.bf16.mxu0 0
      %9590 = vmatmul.mubr.bf16.gmra.mrb[0].mxu0 %v9492
      %v9591 = vpop.f32.mrb[0].mxu0
      %v9592 = vadd.f32 0.0, %v9591
      %v9593 = vpop.f32.mrb[0].mxu0
      %v9594 = vpop.f32.mrb[0].mxu0
      %v9595 = vadd.f32 0.0, %v9594
      %v9596 = vpop.f32.mrb[0].mxu0
      %9597 = vmatprep.mubr.bf16.mxu0 0
      %9598 = vmatmul.mubr.bf16.gmra.mrb[0].mxu0 %v9495
      %v9599 = vpop.f32.mrb[0].mxu0
      %v9600 = vadd.f32 0.0, %v9599
      %v9601 = vpop.f32.mrb[0].mxu0
      %v9602 = vpop.f32.mrb[0].mxu0
      %v9603 = vadd.f32 0.0, %v9602
      %v9604 = vpop.f32.mrb[0].mxu0
      %9605 = vmatprep.mubr.bf16.mxu0 0
      %9606 = vmatmul.mubr.bf16.gmra.mrb[0].mxu0 %v9498
      %v9607 = vpop.f32.mrb[0].mxu0
      %v9608 = vadd.f32 0.0, %v9607
      %v9609 = vpop.f32.mrb[0].mxu0
      %v9610 = vpop.f32.mrb[0].mxu0
      %v9611 = vadd.f32 0.0, %v9610
      %v9612 = vpop.f32.mrb[0].mxu0
      %9613 = vmatprep.mubr.bf16.mxu0 0
      %9614 = vmatmul.mubr.bf16.gmra.mrb[0].mxu0 %v9501
      %v9615 = vpop.f32.mrb[0].mxu0
      %v9616 = vadd.f32 0.0, %v9615
      %v9617 = vpop.f32.mrb[0].mxu0
      %v9618 = vpop.f32.mrb[0].mxu0
      %v9619 = vadd.f32 0.0, %v9618
      %v9620 = vpop.f32.mrb[0].mxu0
      %9621 = vmatprep.mubr.bf16.mxu0 0
      %9622 = vmatmul.mubr.bf16.gmra.mrb[0].mxu0 %v9504
      %v9623 = vpop.f32.mrb[0].mxu0
      %v9624 = vadd.f32 0.0, %v9623
      %v9625 = vpop.f32.mrb[0].mxu0
      %v9626 = vpop.f32.mrb[0].mxu0
      %v9627 = vadd.f32 0.0, %v9626
      %v9628 = vpop.f32.mrb[0].mxu0
      %9629 = vmatprep.mubr.bf16.mxu0 0
      %9630 = vmatmul.mubr.bf16.gmra.mrb[0].mxu0 %v9507
      %v9631 = vpop.f32.mrb[0].mxu0
      %v9632 = vadd.f32 0.0, %v9631
      %v9633 = vpop.f32.mrb[0].mxu0
      %v9634 = vpop.f32.mrb[0].mxu0
      %v9635 = vadd.f32 0.0, %v9634
      %v9636 = vpop.f32.mrb[0].mxu0
      %9637 = vmatprep.mubr.bf16.mxu0 0
      %9638 = vmatmul.mubr.bf16.gmra.mrb[0].mxu0 %v9510
      %v9639 = vpop.f32.mrb[0].mxu0
      %v9640 = vadd.f32 0.0, %v9639
      %v9641 = vpop.f32.mrb[0].mxu0
      %v9642 = vpop.f32.mrb[0].mxu0
      %v9643 = vadd.f32 0.0, %v9642
      %v9644 = vpop.f32.mrb[0].mxu0
      %9645 = vmatprep.mubr.bf16.mxu0 0
      %9646 = vmatmul.mubr.bf16.gmra.mrb[0].mxu0 %v9513
      %v9647 = vpop.f32.mrb[0].mxu0
      %v9648 = vadd.f32 0.0, %v9647
      %v9649 = vpop.f32.mrb[0].mxu0
      %v9650 = vpop.f32.mrb[0].mxu0
      %v9651 = vadd.f32 0.0, %v9650
      %v9652 = vpop.f32.mrb[0].mxu0
      %9653 = vmatprep.mubr.bf16.mxu0 0
      %9654 = vmatmul.mubr.bf16.gmra.mrb[0].mxu0 %v9516
      %v9655 = vpop.f32.mrb[0].mxu0
      %v9656 = vadd.f32 0.0, %v9655
      %v9657 = vpop.f32.mrb[0].mxu0
      %v9658 = vpop.f32.mrb[0].mxu0
      %v9659 = vadd.f32 0.0, %v9658
      %v9660 = vpop.f32.mrb[0].mxu0
      %9661 = vmatprep.mubr.bf16.mxu0 0
      %9662 = vmatmul.mubr.bf16.gmra.mrb[0].mxu0 %v9519
      %v9663 = vpop.f32.mrb[0].mxu0
      %v9664 = vadd.f32 0.0, %v9663
      %v9665 = vpop.f32.mrb[0].mxu0
      %v9666 = vpop.f32.mrb[0].mxu0
      %v9667 = vadd.f32 0.0, %v9666
      %v9668 = vpop.f32.mrb[0].mxu0
      %9669 = vmatprep.mubr.bf16.mxu0 0
      %9670 = vmatmul.mubr.bf16.gmra.mrb[0].mxu0 %v9522
      %v9671 = vpop.f32.mrb[0].mxu0
      %v9672 = vadd.f32 0.0, %v9671
      %v9673 = vpop.f32.mrb[0].mxu0
      %v9674 = vpop.f32.mrb[0].mxu0
      %v9675 = vadd.f32 0.0, %v9674
      %v9676 = vpop.f32.mrb[0].mxu0
      %9677 = vmatprep.mubr.bf16.mxu0 0
      %9678 = vmatmul.mubr.bf16.gmra.mrb[0].mxu0 %v9525
      %v9679 = vpop.f32.mrb[0].mxu0
      %v9680 = vadd.f32 0.0, %v9679
      %v9681 = vpop.f32.mrb[0].mxu0
      %v9682 = vpop.f32.mrb[0].mxu0
      %v9683 = vadd.f32 0.0, %v9682
      %v9684 = vpop.f32.mrb[0].mxu0
      %9685 = vmatprep.mubr.bf16.mxu0 0
      %9686 = vmatmul.mubr.bf16.gmra.mrb[0].mxu0 %v9528
      %v9687 = vpop.f32.mrb[0].mxu0
      %v9688 = vadd.f32 0.0, %v9687
      %v9689 = vpop.f32.mrb[0].mxu0
      %v9690 = vpop.f32.mrb[0].mxu0
      %v9691 = vadd.f32 0.0, %v9690
      %v9692 = vpop.f32.mrb[0].mxu0
      %9693 = vdwg.mxu0
      %v9694 = vadd.f32 %v9221, %v9568
      %v9695 = vadd.f32 %v9222, %v9571
      %v9696 = vadd.f32 %v9223, %v9576
      %v9697 = vadd.f32 %v9224, %v9579
      %v9698 = vadd.f32 %v9225, %v9584
      %v9699 = vadd.f32 %v9226, %v9587
      %v9700 = vadd.f32 %v9227, %v9592
      %v9701 = vadd.f32 %v9228, %v9595
      %v9702 = vadd.f32 %v9229, %v9600
      %v9703 = vadd.f32 %v9230, %v9603
      %v9704 = vadd.f32 %v9231, %v9608
      %v9705 = vadd.f32 %v9232, %v9611
      %v9706 = vadd.f32 %v9233, %v9616
      %v9707 = vadd.f32 %v9234, %v9619
      %v9708 = vadd.f32 %v9235, %v9624
      %v9709 = vadd.f32 %v9236, %v9627
      %v9710 = vadd.f32 %v9237, %v9632
      %v9711 = vadd.f32 %v9238, %v9635
      %v9712 = vadd.f32 %v9239, %v9640
      %v9713 = vadd.f32 %v9240, %v9643
      %v9714 = vadd.f32 %v9241, %v9648
      %v9715 = vadd.f32 %v9242, %v9651
      %v9716 = vadd.f32 %v9243, %v9656
      %v9717 = vadd.f32 %v9244, %v9659
      %v9718 = vadd.f32 %v9245, %v9664
      %v9719 = vadd.f32 %v9246, %v9667
      %v9720 = vadd.f32 %v9247, %v9672
      %v9721 = vadd.f32 %v9248, %v9675
      %v9722 = vadd.f32 %v9249, %v9680
      %v9723 = vadd.f32 %v9250, %v9683
      %v9724 = vadd.f32 %v9251, %v9688
      %v9725 = vadd.f32 %v9252, %v9691
      %v9726 = vld [vmem:[%s742] sm:$0xf]
      %v9727 = vld [vmem:[%s742 + $0x4] sm:$0xf]
      %v9728 = vld [vmem:[%s742 + $0xc] sm:$0xf]
      %v9729 = vld [vmem:[%s742 + $0x10] sm:$0xf]
      %v9730 = vld [vmem:[%s742 + $0x18] sm:$0xf]
      %v9731 = vld [vmem:[%s742 + $0x1c] sm:$0xf]
      %v9732 = vld [vmem:[%s742 + $0x24] sm:$0xf]
      %v9733 = vld [vmem:[%s742 + $0x28] sm:$0xf]
      %v9734 = vld [vmem:[%s742 + $0x30] sm:$0xf]
      %v9735 = vld [vmem:[%s742 + $0x34] sm:$0xf]
      %v9736 = vld [vmem:[%s742 + $0x3c] sm:$0xf]
      %v9737 = vld [vmem:[%s742 + $0x40] sm:$0xf]
      %v9738 = vld [vmem:[%s742 + $0x48] sm:$0xf]
      %v9739 = vld [vmem:[%s742 + $0x4c] sm:$0xf]
      %v9740 = vld [vmem:[%s742 + $0x54] sm:$0xf]
      %v9741 = vld [vmem:[%s742 + $0x58] sm:$0xf]
      %v9742 = vld [vmem:[%s742 + $0x60] sm:$0xf]
      %v9743 = vld [vmem:[%s742 + $0x64] sm:$0xf]
      %v9744 = vld [vmem:[%s742 + $0x6c] sm:$0xf]
      %v9745 = vld [vmem:[%s742 + $0x70] sm:$0xf]
      %v9746 = vld [vmem:[%s742 + $0x78] sm:$0xf]
      %v9747 = vld [vmem:[%s742 + $0x7c] sm:$0xf]
      %v9748 = vld [vmem:[%s742 + $0x84] sm:$0xf]
      %v9749 = vld [vmem:[%s742 + $0x88] sm:$0xf]
      %v9750 = vld [vmem:[%s742 + $0x90] sm:$0xf]
      %v9751 = vld [vmem:[%s742 + $0x94] sm:$0xf]
      %v9752 = vld [vmem:[%s742 + $0x9c] sm:$0xf]
      %v9753 = vld [vmem:[%s742 + $0xa0] sm:$0xf]
      %v9754 = vld [vmem:[%s742 + $0xa8] sm:$0xf]
      %v9755 = vld [vmem:[%s742 + $0xac] sm:$0xf]
      %v9756 = vld [vmem:[%s742 + $0xb4] sm:$0xf]
      %v9757 = vld [vmem:[%s742 + $0xb8] sm:$0xf]
      %v9758 = vld [vmem:[%s2 + $0xc] sm:$0x3]
      %v9791 = vunpack.c.l.b16 %v9726
      %v9792 = vunpack.c.l.b16 %v9727
      %v9793 = vunpack.c.l.b16 %v9728
      %v9794 = vunpack.c.l.b16 %v9729
      %v9795 = vunpack.c.l.b16 %v9730
      %v9796 = vunpack.c.l.b16 %v9731
      %v9797 = vunpack.c.l.b16 %v9732
      %v9798 = vunpack.c.l.b16 %v9733
      %v9799 = vunpack.c.l.b16 %v9734
      %v9800 = vunpack.c.l.b16 %v9735
      %v9801 = vunpack.c.l.b16 %v9736
      %v9802 = vunpack.c.l.b16 %v9737
      %v9803 = vunpack.c.l.b16 %v9738
      %v9804 = vunpack.c.l.b16 %v9739
      %v9805 = vunpack.c.l.b16 %v9740
      %v9806 = vunpack.c.l.b16 %v9741
      %v9807 = vunpack.c.l.b16 %v9742
      %v9808 = vunpack.c.l.b16 %v9743
      %v9809 = vunpack.c.l.b16 %v9744
      %v9810 = vunpack.c.l.b16 %v9745
      %v9811 = vunpack.c.l.b16 %v9746
      %v9812 = vunpack.c.l.b16 %v9747
      %v9813 = vunpack.c.l.b16 %v9748
      %v9814 = vunpack.c.l.b16 %v9749
      %v9815 = vunpack.c.l.b16 %v9750
      %v9816 = vunpack.c.l.b16 %v9751
      %v9817 = vunpack.c.l.b16 %v9752
      %v9818 = vunpack.c.l.b16 %v9753
      %v9819 = vunpack.c.l.b16 %v9754
      %v9820 = vunpack.c.l.b16 %v9755
      %v9821 = vunpack.c.l.b16 %v9756
      %v9822 = vunpack.c.l.b16 %v9757
      %v9823 = vpack.c.b16 %v9792, %v9791
      %v9824 = vpack.c.b16 %v9794, %v9793
      %v9825 = vpack.c.b16 %v9796, %v9795
      %v9826 = vpack.c.b16 %v9798, %v9797
      %v9827 = vpack.c.b16 %v9800, %v9799
      %v9828 = vpack.c.b16 %v9802, %v9801
      %v9829 = vpack.c.b16 %v9804, %v9803
      %v9830 = vpack.c.b16 %v9806, %v9805
      %v9831 = vpack.c.b16 %v9808, %v9807
      %v9832 = vpack.c.b16 %v9810, %v9809
      %v9833 = vpack.c.b16 %v9812, %v9811
      %v9834 = vpack.c.b16 %v9814, %v9813
      %v9835 = vpack.c.b16 %v9816, %v9815
      %v9836 = vpack.c.b16 %v9818, %v9817
      %v9837 = vpack.c.b16 %v9820, %v9819
      %v9838 = vpack.c.b16 %v9822, %v9821
      %v9840 = vsel %vm1543, %v9823, 0
      %v9843 = vsel %vm1543, %v9824, 0
      %v9846 = vsel %vm1543, %v9825, 0
      %v9849 = vsel %vm1543, %v9826, 0
      %v9852 = vsel %vm1543, %v9827, 0
      %v9855 = vsel %vm1543, %v9828, 0
      %v9858 = vsel %vm1543, %v9829, 0
      %v9861 = vsel %vm1543, %v9830, 0
      %v9864 = vsel %vm1543, %v9831, 0
      %v9867 = vsel %vm1543, %v9832, 0
      %v9870 = vsel %vm1543, %v9833, 0
      %v9873 = vsel %vm1543, %v9834, 0
      %v9876 = vsel %vm1543, %v9835, 0
      %v9879 = vsel %vm1543, %v9836, 0
      %v9882 = vsel %vm1543, %v9837, 0
      %v9885 = vsel %vm1543, %v9838, 0
      %v9888 = vsel %vm1592, %v9758, 0
      %9890 = vmatprep.subr.bf16.mxu0 0
      %9891 = vmatpush1.bf16.msra.mxu0 %v9888
      %9892 = vmatprep.subr.bf16.mxu0 0
      %9893 = vmatpush1.bf16.msra.mxu0 0
      %9894 = vmatprep.subr.bf16.mxu0 0
      %9895 = vmatpush1.bf16.msra.mxu0 0
      %9896 = vmatprep.subr.bf16.mxu0 0
      %9897 = vmatpush1.bf16.msra.mxu0 0
      %9898 = vmatprep.subr.bf16.mxu0 0
      %9899 = vmatpush1.bf16.msra.mxu0 0
      %9900 = vmatprep.subr.bf16.mxu0 0
      %9901 = vmatpush1.bf16.msra.mxu0 0
      %9902 = vmatprep.subr.bf16.mxu0 0
      %9903 = vmatpush1.bf16.msra.mxu0 0
      %9904 = vmatprep.subr.bf16.mxu0 0
      %9905 = vmatpush1.bf16.msra.mxu0 0
      %9906 = vmatprep.subr.bf16.mxu0 0
      %9907 = vmatpush1.bf16.msra.mxu0 0
      %9908 = vmatprep.subr.bf16.mxu0 0
      %9909 = vmatpush1.bf16.msra.mxu0 0
      %9910 = vmatprep.subr.bf16.mxu0 0
      %9911 = vmatpush1.bf16.msra.mxu0 0
      %9912 = vmatprep.subr.bf16.mxu0 0
      %9913 = vmatpush1.bf16.msra.mxu0 0
      %9914 = vmatprep.subr.bf16.mxu0 0
      %9915 = vmatpush1.bf16.msra.mxu0 0
      %9916 = vmatprep.subr.bf16.mxu0 0
      %9917 = vmatpush1.bf16.msra.mxu0 0
      %9918 = vmatprep.subr.bf16.mxu0 0
      %9919 = vmatpush1.bf16.msra.mxu0 0
      %9920 = vmatprep.subr.bf16.mxu0 0
      %9921 = vmatpush1.bf16.msra.mxu0 0
      %9922 = vmatprep.mubr.bf16.mxu0 0
      %9923 = vmatmul.mubr.bf16.gmra.mrb[0].mxu0 %v9840
      %v9924 = vpop.f32.mrb[0].mxu0
      %v9925 = vadd.f32 0.0, %v9924
      %v9926 = vpop.f32.mrb[0].mxu0
      %v9927 = vpop.f32.mrb[0].mxu0
      %v9928 = vadd.f32 0.0, %v9927
      %v9929 = vpop.f32.mrb[0].mxu0
      %9930 = vmatprep.mubr.bf16.mxu0 0
      %9931 = vmatmul.mubr.bf16.gmra.mrb[0].mxu0 %v9843
      %v9932 = vpop.f32.mrb[0].mxu0
      %v9933 = vadd.f32 0.0, %v9932
      %v9934 = vpop.f32.mrb[0].mxu0
      %v9935 = vpop.f32.mrb[0].mxu0
      %v9936 = vadd.f32 0.0, %v9935
      %v9937 = vpop.f32.mrb[0].mxu0
      %9938 = vmatprep.mubr.bf16.mxu0 0
      %9939 = vmatmul.mubr.bf16.gmra.mrb[0].mxu0 %v9846
      %v9940 = vpop.f32.mrb[0].mxu0
      %v9941 = vadd.f32 0.0, %v9940
      %v9942 = vpop.f32.mrb[0].mxu0
      %v9943 = vpop.f32.mrb[0].mxu0
      %v9944 = vadd.f32 0.0, %v9943
      %v9945 = vpop.f32.mrb[0].mxu0
      %9946 = vmatprep.mubr.bf16.mxu0 0
      %9947 = vmatmul.mubr.bf16.gmra.mrb[0].mxu0 %v9849
      %v9948 = vpop.f32.mrb[0].mxu0
      %v9949 = vadd.f32 0.0, %v9948
      %v9950 = vpop.f32.mrb[0].mxu0
      %v9951 = vpop.f32.mrb[0].mxu0
      %v9952 = vadd.f32 0.0, %v9951
      %v9953 = vpop.f32.mrb[0].mxu0
      %9954 = vmatprep.mubr.bf16.mxu0 0
      %9955 = vmatmul.mubr.bf16.gmra.mrb[0].mxu0 %v9852
      %v9956 = vpop.f32.mrb[0].mxu0
      %v9957 = vadd.f32 0.0, %v9956
      %v9958 = vpop.f32.mrb[0].mxu0
      %v9959 = vpop.f32.mrb[0].mxu0
      %v9960 = vadd.f32 0.0, %v9959
      %v9961 = vpop.f32.mrb[0].mxu0
      %9962 = vmatprep.mubr.bf16.mxu0 0
      %9963 = vmatmul.mubr.bf16.gmra.mrb[0].mxu0 %v9855
      %v9964 = vpop.f32.mrb[0].mxu0
      %v9965 = vadd.f32 0.0, %v9964
      %v9966 = vpop.f32.mrb[0].mxu0
      %v9967 = vpop.f32.mrb[0].mxu0
      %v9968 = vadd.f32 0.0, %v9967
      %v9969 = vpop.f32.mrb[0].mxu0
      %9970 = vmatprep.mubr.bf16.mxu0 0
      %9971 = vmatmul.mubr.bf16.gmra.mrb[0].mxu0 %v9858
      %v9972 = vpop.f32.mrb[0].mxu0
      %v9973 = vadd.f32 0.0, %v9972
      %v9974 = vpop.f32.mrb[0].mxu0
      %v9975 = vpop.f32.mrb[0].mxu0
      %v9976 = vadd.f32 0.0, %v9975
      %v9977 = vpop.f32.mrb[0].mxu0
      %9978 = vmatprep.mubr.bf16.mxu0 0
      %9979 = vmatmul.mubr.bf16.gmra.mrb[0].mxu0 %v9861
      %v9980 = vpop.f32.mrb[0].mxu0
      %v9981 = vadd.f32 0.0, %v9980
      %v9982 = vpop.f32.mrb[0].mxu0
      %v9983 = vpop.f32.mrb[0].mxu0
      %v9984 = vadd.f32 0.0, %v9983
      %v9985 = vpop.f32.mrb[0].mxu0
      %9986 = vmatprep.mubr.bf16.mxu0 0
      %9987 = vmatmul.mubr.bf16.gmra.mrb[0].mxu0 %v9864
      %v9988 = vpop.f32.mrb[0].mxu0
      %v9989 = vadd.f32 0.0, %v9988
      %v9990 = vpop.f32.mrb[0].mxu0
      %v9991 = vpop.f32.mrb[0].mxu0
      %v9992 = vadd.f32 0.0, %v9991
      %v9993 = vpop.f32.mrb[0].mxu0
      %9994 = vmatprep.mubr.bf16.mxu0 0
      %9995 = vmatmul.mubr.bf16.gmra.mrb[0].mxu0 %v9867
      %v9996 = vpop.f32.mrb[0].mxu0
      %v9997 = vadd.f32 0.0, %v9996
      %v9998 = vpop.f32.mrb[0].mxu0
      %v9999 = vpop.f32.mrb[0].mxu0
      %v10000 = vadd.f32 0.0, %v9999
      %v10001 = vpop.f32.mrb[0].mxu0
      %10002 = vmatprep.mubr.bf16.mxu0 0
      %10003 = vmatmul.mubr.bf16.gmra.mrb[0].mxu0 %v9870
      %v10004 = vpop.f32.mrb[0].mxu0
      %v10005 = vadd.f32 0.0, %v10004
      %v10006 = vpop.f32.mrb[0].mxu0
      %v10007 = vpop.f32.mrb[0].mxu0
      %v10008 = vadd.f32 0.0, %v10007
      %v10009 = vpop.f32.mrb[0].mxu0
      %10010 = vmatprep.mubr.bf16.mxu0 0
      %10011 = vmatmul.mubr.bf16.gmra.mrb[0].mxu0 %v9873
      %v10012 = vpop.f32.mrb[0].mxu0
      %v10013 = vadd.f32 0.0, %v10012
      %v10014 = vpop.f32.mrb[0].mxu0
      %v10015 = vpop.f32.mrb[0].mxu0
      %v10016 = vadd.f32 0.0, %v10015
      %v10017 = vpop.f32.mrb[0].mxu0
      %10018 = vmatprep.mubr.bf16.mxu0 0
      %10019 = vmatmul.mubr.bf16.gmra.mrb[0].mxu0 %v9876
      %v10020 = vpop.f32.mrb[0].mxu0
      %v10021 = vadd.f32 0.0, %v10020
      %v10022 = vpop.f32.mrb[0].mxu0
      %v10023 = vpop.f32.mrb[0].mxu0
      %v10024 = vadd.f32 0.0, %v10023
      %v10025 = vpop.f32.mrb[0].mxu0
      %10026 = vmatprep.mubr.bf16.mxu0 0
      %10027 = vmatmul.mubr.bf16.gmra.mrb[0].mxu0 %v9879
      %v10028 = vpop.f32.mrb[0].mxu0
      %v10029 = vadd.f32 0.0, %v10028
      %v10030 = vpop.f32.mrb[0].mxu0
      %v10031 = vpop.f32.mrb[0].mxu0
      %v10032 = vadd.f32 0.0, %v10031
      %v10033 = vpop.f32.mrb[0].mxu0
      %10034 = vmatprep.mubr.bf16.mxu0 0
      %10035 = vmatmul.mubr.bf16.gmra.mrb[0].mxu0 %v9882
      %v10036 = vpop.f32.mrb[0].mxu0
      %v10037 = vadd.f32 0.0, %v10036
      %v10038 = vpop.f32.mrb[0].mxu0
      %v10039 = vpop.f32.mrb[0].mxu0
      %v10040 = vadd.f32 0.0, %v10039
      %v10041 = vpop.f32.mrb[0].mxu0
      %10042 = vmatprep.mubr.bf16.mxu0 0
      %10043 = vmatmul.mubr.bf16.gmra.mrb[0].mxu0 %v9885
      %v10044 = vpop.f32.mrb[0].mxu0
      %v10045 = vadd.f32 0.0, %v10044
      %v10046 = vpop.f32.mrb[0].mxu0
      %v10047 = vpop.f32.mrb[0].mxu0
      %v10048 = vadd.f32 0.0, %v10047
      %v10049 = vpop.f32.mrb[0].mxu0
      %10050 = vdwg.mxu0
      %v10051 = vadd.f32 %v9694, %v9925
      %v10052 = vadd.f32 %v9695, %v9928
      %v10053 = vadd.f32 %v9696, %v9933
      %v10054 = vadd.f32 %v9697, %v9936
      %v10055 = vadd.f32 %v9698, %v9941
      %v10056 = vadd.f32 %v9699, %v9944
      %v10057 = vadd.f32 %v9700, %v9949
      %v10058 = vadd.f32 %v9701, %v9952
      %v10059 = vadd.f32 %v9702, %v9957
      %v10060 = vadd.f32 %v9703, %v9960
      %v10061 = vadd.f32 %v9704, %v9965
      %v10062 = vadd.f32 %v9705, %v9968
      %v10063 = vadd.f32 %v9706, %v9973
      %v10064 = vadd.f32 %v9707, %v9976
      %v10065 = vadd.f32 %v9708, %v9981
      %v10066 = vadd.f32 %v9709, %v9984
      %v10067 = vadd.f32 %v9710, %v9989
      %v10068 = vadd.f32 %v9711, %v9992
      %v10069 = vadd.f32 %v9712, %v9997
      %v10070 = vadd.f32 %v9713, %v10000
      %v10071 = vadd.f32 %v9714, %v10005
      %v10072 = vadd.f32 %v9715, %v10008
      %v10073 = vadd.f32 %v9716, %v10013
      %v10074 = vadd.f32 %v9717, %v10016
      %v10075 = vadd.f32 %v9718, %v10021
      %v10076 = vadd.f32 %v9719, %v10024
      %v10077 = vadd.f32 %v9720, %v10029
      %v10078 = vadd.f32 %v9721, %v10032
      %v10079 = vadd.f32 %v9722, %v10037
      %v10080 = vadd.f32 %v9723, %v10040
      %v10081 = vadd.f32 %v9724, %v10045
      %v10082 = vadd.f32 %v9725, %v10048
      %v10083 = vld [vmem:[%s742] sm:$0xf]
      %v10084 = vld [vmem:[%s742 + $0x4] sm:$0xf]
      %v10085 = vld [vmem:[%s742 + $0x8] sm:$0x1]
      %v10086 = vld [vmem:[%s742 + $0xc] sm:$0xf]
      %v10087 = vld [vmem:[%s742 + $0x10] sm:$0xf]
      %v10088 = vld [vmem:[%s742 + $0x14] sm:$0x1]
      %v10089 = vld [vmem:[%s742 + $0x18] sm:$0xf]
      %v10090 = vld [vmem:[%s742 + $0x1c] sm:$0xf]
      %v10091 = vld [vmem:[%s742 + $0x20] sm:$0x1]
      %v10092 = vld [vmem:[%s742 + $0x24] sm:$0xf]
      %v10093 = vld [vmem:[%s742 + $0x28] sm:$0xf]
      %v10094 = vld [vmem:[%s742 + $0x2c] sm:$0x1]
      %v10095 = vld [vmem:[%s742 + $0x30] sm:$0xf]
      %v10096 = vld [vmem:[%s742 + $0x34] sm:$0xf]
      %v10097 = vld [vmem:[%s742 + $0x38] sm:$0x1]
      %v10098 = vld [vmem:[%s742 + $0x3c] sm:$0xf]
      %v10099 = vld [vmem:[%s742 + $0x40] sm:$0xf]
      %v10100 = vld [vmem:[%s742 + $0x44] sm:$0x1]
      %v10101 = vld [vmem:[%s742 + $0x48] sm:$0xf]
      %v10102 = vld [vmem:[%s742 + $0x4c] sm:$0xf]
      %v10103 = vld [vmem:[%s742 + $0x50] sm:$0x1]
      %v10104 = vld [vmem:[%s742 + $0x54] sm:$0xf]
      %v10105 = vld [vmem:[%s742 + $0x58] sm:$0xf]
      %v10106 = vld [vmem:[%s742 + $0x5c] sm:$0x1]
      %v10107 = vld [vmem:[%s742 + $0x60] sm:$0xf]
      %v10108 = vld [vmem:[%s742 + $0x64] sm:$0xf]
      %v10109 = vld [vmem:[%s742 + $0x68] sm:$0x1]
      %v10110 = vld [vmem:[%s742 + $0x6c] sm:$0xf]
      %v10111 = vld [vmem:[%s742 + $0x70] sm:$0xf]
      %v10112 = vld [vmem:[%s742 + $0x74] sm:$0x1]
      %v10113 = vld [vmem:[%s742 + $0x78] sm:$0xf]
      %v10114 = vld [vmem:[%s742 + $0x7c] sm:$0xf]
      %v10115 = vld [vmem:[%s742 + $0x80] sm:$0x1]
      %v10116 = vld [vmem:[%s742 + $0x84] sm:$0xf]
      %v10117 = vld [vmem:[%s742 + $0x88] sm:$0xf]
      %v10118 = vld [vmem:[%s742 + $0x8c] sm:$0x1]
      %v10119 = vld [vmem:[%s742 + $0x90] sm:$0xf]
      %v10120 = vld [vmem:[%s742 + $0x94] sm:$0xf]
      %v10121 = vld [vmem:[%s742 + $0x98] sm:$0x1]
      %v10122 = vld [vmem:[%s742 + $0x9c] sm:$0xf]
      %v10123 = vld [vmem:[%s742 + $0xa0] sm:$0xf]
      %v10124 = vld [vmem:[%s742 + $0xa4] sm:$0x1]
      %v10125 = vld [vmem:[%s742 + $0xa8] sm:$0xf]
      %v10126 = vld [vmem:[%s742 + $0xac] sm:$0xf]
      %v10127 = vld [vmem:[%s742 + $0xb0] sm:$0x1]
      %v10128 = vld [vmem:[%s742 + $0xb4] sm:$0xf]
      %v10129 = vld [vmem:[%s742 + $0xb8] sm:$0xf]
      %v10130 = vld [vmem:[%s742 + $0xbc] sm:$0x1]
      %v10132 = vshrl.u32 %v10083, 16
      %v10134 = vrot.slane %v10132, 4
      %v10135 = vshll.u32 %v10083, 16
      %v10137 = vrot.slane %v10135, 5
      %v10138 = vor.u32 %v10134, %v10137
      %v10139 = vrot.slane %v10138, 4
      %v10141 = vshll.u32 %v10084, 16
      %v10143 = vrot.slane %v10141, 5
      %v10144 = vsel %vm1105, %v10139, %v10143
      %v10145 = vshrl.u32 %v10084, 16
      %v10147 = vrot.slane %v10145, 4
      %v10148 = vor.u32 %v10147, %v10143
      %v10149 = vrot.slane %v10148, 4
      %v10151 = vshll.u32 %v10085, 16
      %v10153 = vrot.slane %v10151, 5
      %v10154 = vsel %vm1105, %v10149, %v10153
      %v10156 = vshrl.u32 %v10086, 16
      %v10158 = vrot.slane %v10156, 4
      %v10159 = vshll.u32 %v10086, 16
      %v10161 = vrot.slane %v10159, 5
      %v10162 = vor.u32 %v10158, %v10161
      %v10163 = vrot.slane %v10162, 4
      %v10165 = vshll.u32 %v10087, 16
      %v10167 = vrot.slane %v10165, 5
      %v10168 = vsel %vm1105, %v10163, %v10167
      %v10169 = vshrl.u32 %v10087, 16
      %v10171 = vrot.slane %v10169, 4
      %v10172 = vor.u32 %v10171, %v10167
      %v10173 = vrot.slane %v10172, 4
      %v10175 = vshll.u32 %v10088, 16
      %v10177 = vrot.slane %v10175, 5
      %v10178 = vsel %vm1105, %v10173, %v10177
      %v10180 = vshrl.u32 %v10089, 16
      %v10182 = vrot.slane %v10180, 4
      %v10183 = vshll.u32 %v10089, 16
      %v10185 = vrot.slane %v10183, 5
      %v10186 = vor.u32 %v10182, %v10185
      %v10187 = vrot.slane %v10186, 4
      %v10189 = vshll.u32 %v10090, 16
      %v10191 = vrot.slane %v10189, 5
      %v10192 = vsel %vm1105, %v10187, %v10191
      %v10193 = vshrl.u32 %v10090, 16
      %v10195 = vrot.slane %v10193, 4
      %v10196 = vor.u32 %v10195, %v10191
      %v10197 = vrot.slane %v10196, 4
      %v10199 = vshll.u32 %v10091, 16
      %v10201 = vrot.slane %v10199, 5
      %v10202 = vsel %vm1105, %v10197, %v10201
      %v10204 = vshrl.u32 %v10092, 16
      %v10206 = vrot.slane %v10204, 4
      %v10207 = vshll.u32 %v10092, 16
      %v10209 = vrot.slane %v10207, 5
      %v10210 = vor.u32 %v10206, %v10209
      %v10211 = vrot.slane %v10210, 4
      %v10213 = vshll.u32 %v10093, 16
      %v10215 = vrot.slane %v10213, 5
      %v10216 = vsel %vm1105, %v10211, %v10215
      %v10217 = vshrl.u32 %v10093, 16
      %v10219 = vrot.slane %v10217, 4
      %v10220 = vor.u32 %v10219, %v10215
      %v10221 = vrot.slane %v10220, 4
      %v10223 = vshll.u32 %v10094, 16
      %v10225 = vrot.slane %v10223, 5
      %v10226 = vsel %vm1105, %v10221, %v10225
      %v10228 = vshrl.u32 %v10095, 16
      %v10230 = vrot.slane %v10228, 4
      %v10231 = vshll.u32 %v10095, 16
      %v10233 = vrot.slane %v10231, 5
      %v10234 = vor.u32 %v10230, %v10233
      %v10235 = vrot.slane %v10234, 4
      %v10237 = vshll.u32 %v10096, 16
      %v10239 = vrot.slane %v10237, 5
      %v10240 = vsel %vm1105, %v10235, %v10239
      %v10241 = vshrl.u32 %v10096, 16
      %v10243 = vrot.slane %v10241, 4
      %v10244 = vor.u32 %v10243, %v10239
      %v10245 = vrot.slane %v10244, 4
      %v10247 = vshll.u32 %v10097, 16
      %v10249 = vrot.slane %v10247, 5
      %v10250 = vsel %vm1105, %v10245, %v10249
      %v10252 = vshrl.u32 %v10098, 16
      %v10254 = vrot.slane %v10252, 4
      %v10255 = vshll.u32 %v10098, 16
      %v10257 = vrot.slane %v10255, 5
      %v10258 = vor.u32 %v10254, %v10257
      %v10259 = vrot.slane %v10258, 4
      %v10261 = vshll.u32 %v10099, 16
      %v10263 = vrot.slane %v10261, 5
      %v10264 = vsel %vm1105, %v10259, %v10263
      %v10265 = vshrl.u32 %v10099, 16
      %v10267 = vrot.slane %v10265, 4
      %v10268 = vor.u32 %v10267, %v10263
      %v10269 = vrot.slane %v10268, 4
      %v10271 = vshll.u32 %v10100, 16
      %v10273 = vrot.slane %v10271, 5
      %v10274 = vsel %vm1105, %v10269, %v10273
      %v10276 = vshrl.u32 %v10101, 16
      %v10278 = vrot.slane %v10276, 4
      %v10279 = vshll.u32 %v10101, 16
      %v10281 = vrot.slane %v10279, 5
      %v10282 = vor.u32 %v10278, %v10281
      %v10283 = vrot.slane %v10282, 4
      %v10285 = vshll.u32 %v10102, 16
      %v10287 = vrot.slane %v10285, 5
      %v10288 = vsel %vm1105, %v10283, %v10287
      %v10289 = vshrl.u32 %v10102, 16
      %v10291 = vrot.slane %v10289, 4
      %v10292 = vor.u32 %v10291, %v10287
      %v10293 = vrot.slane %v10292, 4
      %v10295 = vshll.u32 %v10103, 16
      %v10297 = vrot.slane %v10295, 5
      %v10298 = vsel %vm1105, %v10293, %v10297
      %v10300 = vshrl.u32 %v10104, 16
      %v10302 = vrot.slane %v10300, 4
      %v10303 = vshll.u32 %v10104, 16
      %v10305 = vrot.slane %v10303, 5
      %v10306 = vor.u32 %v10302, %v10305
      %v10307 = vrot.slane %v10306, 4
      %v10309 = vshll.u32 %v10105, 16
      %v10311 = vrot.slane %v10309, 5
      %v10312 = vsel %vm1105, %v10307, %v10311
      %v10313 = vshrl.u32 %v10105, 16
      %v10315 = vrot.slane %v10313, 4
      %v10316 = vor.u32 %v10315, %v10311
      %v10317 = vrot.slane %v10316, 4
      %v10319 = vshll.u32 %v10106, 16
      %v10321 = vrot.slane %v10319, 5
      %v10322 = vsel %vm1105, %v10317, %v10321
      %v10324 = vshrl.u32 %v10107, 16
      %v10326 = vrot.slane %v10324, 4
      %v10327 = vshll.u32 %v10107, 16
      %v10329 = vrot.slane %v10327, 5
      %v10330 = vor.u32 %v10326, %v10329
      %v10331 = vrot.slane %v10330, 4
      %v10333 = vshll.u32 %v10108, 16
      %v10335 = vrot.slane %v10333, 5
      %v10336 = vsel %vm1105, %v10331, %v10335
      %v10337 = vshrl.u32 %v10108, 16
      %v10339 = vrot.slane %v10337, 4
      %v10340 = vor.u32 %v10339, %v10335
      %v10341 = vrot.slane %v10340, 4
      %v10343 = vshll.u32 %v10109, 16
      %v10345 = vrot.slane %v10343, 5
      %v10346 = vsel %vm1105, %v10341, %v10345
      %v10348 = vshrl.u32 %v10110, 16
      %v10350 = vrot.slane %v10348, 4
      %v10351 = vshll.u32 %v10110, 16
      %v10353 = vrot.slane %v10351, 5
      %v10354 = vor.u32 %v10350, %v10353
      %v10355 = vrot.slane %v10354, 4
      %v10357 = vshll.u32 %v10111, 16
      %v10359 = vrot.slane %v10357, 5
      %v10360 = vsel %vm1105, %v10355, %v10359
      %v10361 = vshrl.u32 %v10111, 16
      %v10363 = vrot.slane %v10361, 4
      %v10364 = vor.u32 %v10363, %v10359
      %v10365 = vrot.slane %v10364, 4
      %v10367 = vshll.u32 %v10112, 16
      %v10369 = vrot.slane %v10367, 5
      %v10370 = vsel %vm1105, %v10365, %v10369
      %v10372 = vshrl.u32 %v10113, 16
      %v10374 = vrot.slane %v10372, 4
      %v10375 = vshll.u32 %v10113, 16
      %v10377 = vrot.slane %v10375, 5
      %v10378 = vor.u32 %v10374, %v10377
      %v10379 = vrot.slane %v10378, 4
      %v10381 = vshll.u32 %v10114, 16
      %v10383 = vrot.slane %v10381, 5
      %v10384 = vsel %vm1105, %v10379, %v10383
      %v10385 = vshrl.u32 %v10114, 16
      %v10387 = vrot.slane %v10385, 4
      %v10388 = vor.u32 %v10387, %v10383
      %v10389 = vrot.slane %v10388, 4
      %v10391 = vshll.u32 %v10115, 16
      %v10393 = vrot.slane %v10391, 5
      %v10394 = vsel %vm1105, %v10389, %v10393
      %v10396 = vshrl.u32 %v10116, 16
      %v10398 = vrot.slane %v10396, 4
      %v10399 = vshll.u32 %v10116, 16
      %v10401 = vrot.slane %v10399, 5
      %v10402 = vor.u32 %v10398, %v10401
      %v10403 = vrot.slane %v10402, 4
      %v10405 = vshll.u32 %v10117, 16
      %v10407 = vrot.slane %v10405, 5
      %v10408 = vsel %vm1105, %v10403, %v10407
      %v10409 = vshrl.u32 %v10117, 16
      %v10411 = vrot.slane %v10409, 4
      %v10412 = vor.u32 %v10411, %v10407
      %v10413 = vrot.slane %v10412, 4
      %v10415 = vshll.u32 %v10118, 16
      %v10417 = vrot.slane %v10415, 5
      %v10418 = vsel %vm1105, %v10413, %v10417
      %v10420 = vshrl.u32 %v10119, 16
      %v10422 = vrot.slane %v10420, 4
      %v10423 = vshll.u32 %v10119, 16
      %v10425 = vrot.slane %v10423, 5
      %v10426 = vor.u32 %v10422, %v10425
      %v10427 = vrot.slane %v10426, 4
      %v10429 = vshll.u32 %v10120, 16
      %v10431 = vrot.slane %v10429, 5
      %v10432 = vsel %vm1105, %v10427, %v10431
      %v10433 = vshrl.u32 %v10120, 16
      %v10435 = vrot.slane %v10433, 4
      %v10436 = vor.u32 %v10435, %v10431
      %v10437 = vrot.slane %v10436, 4
      %v10439 = vshll.u32 %v10121, 16
      %v10441 = vrot.slane %v10439, 5
      %v10442 = vsel %vm1105, %v10437, %v10441
      %v10444 = vshrl.u32 %v10122, 16
      %v10446 = vrot.slane %v10444, 4
      %v10447 = vshll.u32 %v10122, 16
      %v10449 = vrot.slane %v10447, 5
      %v10450 = vor.u32 %v10446, %v10449
      %v10451 = vrot.slane %v10450, 4
      %v10453 = vshll.u32 %v10123, 16
      %v10455 = vrot.slane %v10453, 5
      %v10456 = vsel %vm1105, %v10451, %v10455
      %v10457 = vshrl.u32 %v10123, 16
      %v10459 = vrot.slane %v10457, 4
      %v10460 = vor.u32 %v10459, %v10455
      %v10461 = vrot.slane %v10460, 4
      %v10463 = vshll.u32 %v10124, 16
      %v10465 = vrot.slane %v10463, 5
      %v10466 = vsel %vm1105, %v10461, %v10465
      %v10468 = vshrl.u32 %v10125, 16
      %v10470 = vrot.slane %v10468, 4
      %v10471 = vshll.u32 %v10125, 16
      %v10473 = vrot.slane %v10471, 5
      %v10474 = vor.u32 %v10470, %v10473
      %v10475 = vrot.slane %v10474, 4
      %v10477 = vshll.u32 %v10126, 16
      %v10479 = vrot.slane %v10477, 5
      %v10480 = vsel %vm1105, %v10475, %v10479
      %v10481 = vshrl.u32 %v10126, 16
      %v10483 = vrot.slane %v10481, 4
      %v10484 = vor.u32 %v10483, %v10479
      %v10485 = vrot.slane %v10484, 4
      %v10487 = vshll.u32 %v10127, 16
      %v10489 = vrot.slane %v10487, 5
      %v10490 = vsel %vm1105, %v10485, %v10489
      %v10492 = vshrl.u32 %v10128, 16
      %v10494 = vrot.slane %v10492, 4
      %v10495 = vshll.u32 %v10128, 16
      %v10497 = vrot.slane %v10495, 5
      %v10498 = vor.u32 %v10494, %v10497
      %v10499 = vrot.slane %v10498, 4
      %v10501 = vshll.u32 %v10129, 16
      %v10503 = vrot.slane %v10501, 5
      %v10504 = vsel %vm1105, %v10499, %v10503
      %v10505 = vshrl.u32 %v10129, 16
      %v10507 = vrot.slane %v10505, 4
      %v10508 = vor.u32 %v10507, %v10503
      %v10509 = vrot.slane %v10508, 4
      %v10511 = vshll.u32 %v10130, 16
      %v10513 = vrot.slane %v10511, 5
      %v10514 = vsel %vm1105, %v10509, %v10513
      %v10515 = vld [vmem:[%s2 + $0xc] sm:$0xc]
      %v10516 = vunpack.c.l.b16 %v10144
      %v10517 = vunpack.c.l.b16 %v10154
      %v10518 = vunpack.c.l.b16 %v10168
      %v10519 = vunpack.c.l.b16 %v10178
      %v10520 = vunpack.c.l.b16 %v10192
      %v10521 = vunpack.c.l.b16 %v10202
      %v10522 = vunpack.c.l.b16 %v10216
      %v10523 = vunpack.c.l.b16 %v10226
      %v10524 = vunpack.c.l.b16 %v10240
      %v10525 = vunpack.c.l.b16 %v10250
      %v10526 = vunpack.c.l.b16 %v10264
      %v10527 = vunpack.c.l.b16 %v10274
      %v10528 = vunpack.c.l.b16 %v10288
      %v10529 = vunpack.c.l.b16 %v10298
      %v10530 = vunpack.c.l.b16 %v10312
      %v10531 = vunpack.c.l.b16 %v10322
      %v10532 = vunpack.c.l.b16 %v10336
      %v10533 = vunpack.c.l.b16 %v10346
      %v10534 = vunpack.c.l.b16 %v10360
      %v10535 = vunpack.c.l.b16 %v10370
      %v10536 = vunpack.c.l.b16 %v10384
      %v10537 = vunpack.c.l.b16 %v10394
      %v10538 = vunpack.c.l.b16 %v10408
      %v10539 = vunpack.c.l.b16 %v10418
      %v10540 = vunpack.c.l.b16 %v10432
      %v10541 = vunpack.c.l.b16 %v10442
      %v10542 = vunpack.c.l.b16 %v10456
      %v10543 = vunpack.c.l.b16 %v10466
      %v10544 = vunpack.c.l.b16 %v10480
      %v10545 = vunpack.c.l.b16 %v10490
      %v10546 = vunpack.c.l.b16 %v10504
      %v10547 = vunpack.c.l.b16 %v10514
      %v10548 = vpack.c.b16 %v10517, %v10516
      %v10549 = vpack.c.b16 %v10519, %v10518
      %v10550 = vpack.c.b16 %v10521, %v10520
      %v10551 = vpack.c.b16 %v10523, %v10522
      %v10552 = vpack.c.b16 %v10525, %v10524
      %v10553 = vpack.c.b16 %v10527, %v10526
      %v10554 = vpack.c.b16 %v10529, %v10528
      %v10555 = vpack.c.b16 %v10531, %v10530
      %v10556 = vpack.c.b16 %v10533, %v10532
      %v10557 = vpack.c.b16 %v10535, %v10534
      %v10558 = vpack.c.b16 %v10537, %v10536
      %v10559 = vpack.c.b16 %v10539, %v10538
      %v10560 = vpack.c.b16 %v10541, %v10540
      %v10561 = vpack.c.b16 %v10543, %v10542
      %v10562 = vpack.c.b16 %v10545, %v10544
      %v10563 = vpack.c.b16 %v10547, %v10546
      %v10565 = vunpack.c.l.b16 %v10515
      %v10566 = vpack.c.b16 %v10565, %v10565
      %v10567 = vrot.slane %v10566, 2
      %v10569 = vsel %vm1543, %v10548, 0
      %v10572 = vsel %vm1543, %v10549, 0
      %v10575 = vsel %vm1543, %v10550, 0
      %v10578 = vsel %vm1543, %v10551, 0
      %v10581 = vsel %vm1543, %v10552, 0
      %v10584 = vsel %vm1543, %v10553, 0
      %v10587 = vsel %vm1543, %v10554, 0
      %v10590 = vsel %vm1543, %v10555, 0
      %v10593 = vsel %vm1543, %v10556, 0
      %v10596 = vsel %vm1543, %v10557, 0
      %v10599 = vsel %vm1543, %v10558, 0
      %v10602 = vsel %vm1543, %v10559, 0
      %v10605 = vsel %vm1543, %v10560, 0
      %v10608 = vsel %vm1543, %v10561, 0
      %v10611 = vsel %vm1543, %v10562, 0
      %v10614 = vsel %vm1543, %v10563, 0
      %v10617 = vsel %vm1592, %v10567, 0
      %10619 = vmatprep.subr.bf16.mxu0 0
      %10620 = vmatpush1.bf16.msra.mxu0 %v10617
      %10621 = vmatprep.subr.bf16.mxu0 0
      %10622 = vmatpush1.bf16.msra.mxu0 0
      %10623 = vmatprep.subr.bf16.mxu0 0
      %10624 = vmatpush1.bf16.msra.mxu0 0
      %10625 = vmatprep.subr.bf16.mxu0 0
      %10626 = vmatpush1.bf16.msra.mxu0 0
      %10627 = vmatprep.subr.bf16.mxu0 0
      %10628 = vmatpush1.bf16.msra.mxu0 0
      %10629 = vmatprep.subr.bf16.mxu0 0
      %10630 = vmatpush1.bf16.msra.mxu0 0
      %10631 = vmatprep.subr.bf16.mxu0 0
      %10632 = vmatpush1.bf16.msra.mxu0 0
      %10633 = vmatprep.subr.bf16.mxu0 0
      %10634 = vmatpush1.bf16.msra.mxu0 0
      %10635 = vmatprep.subr.bf16.mxu0 0
      %10636 = vmatpush1.bf16.msra.mxu0 0
      %10637 = vmatprep.subr.bf16.mxu0 0
      %10638 = vmatpush1.bf16.msra.mxu0 0
      %10639 = vmatprep.subr.bf16.mxu0 0
      %10640 = vmatpush1.bf16.msra.mxu0 0
      %10641 = vmatprep.subr.bf16.mxu0 0
      %10642 = vmatpush1.bf16.msra.mxu0 0
      %10643 = vmatprep.subr.bf16.mxu0 0
      %10644 = vmatpush1.bf16.msra.mxu0 0
      %10645 = vmatprep.subr.bf16.mxu0 0
      %10646 = vmatpush1.bf16.msra.mxu0 0
      %10647 = vmatprep.subr.bf16.mxu0 0
      %10648 = vmatpush1.bf16.msra.mxu0 0
      %10649 = vmatprep.subr.bf16.mxu0 0
      %10650 = vmatpush1.bf16.msra.mxu0 0
      %10651 = vmatprep.mubr.bf16.mxu0 0
      %10652 = vmatmul.mubr.bf16.gmra.mrb[0].mxu0 %v10569
      %v10653 = vpop.f32.mrb[0].mxu0
      %v10654 = vadd.f32 0.0, %v10653
      %v10655 = vpop.f32.mrb[0].mxu0
      %v10656 = vpop.f32.mrb[0].mxu0
      %v10657 = vadd.f32 0.0, %v10656
      %v10658 = vpop.f32.mrb[0].mxu0
      %10659 = vmatprep.mubr.bf16.mxu0 0
      %10660 = vmatmul.mubr.bf16.gmra.mrb[0].mxu0 %v10572
      %v10661 = vpop.f32.mrb[0].mxu0
      %v10662 = vadd.f32 0.0, %v10661
      %v10663 = vpop.f32.mrb[0].mxu0
      %v10664 = vpop.f32.mrb[0].mxu0
      %v10665 = vadd.f32 0.0, %v10664
      %v10666 = vpop.f32.mrb[0].mxu0
      %10667 = vmatprep.mubr.bf16.mxu0 0
      %10668 = vmatmul.mubr.bf16.gmra.mrb[0].mxu0 %v10575
      %v10669 = vpop.f32.mrb[0].mxu0
      %v10670 = vadd.f32 0.0, %v10669
      %v10671 = vpop.f32.mrb[0].mxu0
      %v10672 = vpop.f32.mrb[0].mxu0
      %v10673 = vadd.f32 0.0, %v10672
      %v10674 = vpop.f32.mrb[0].mxu0
      %10675 = vmatprep.mubr.bf16.mxu0 0
      %10676 = vmatmul.mubr.bf16.gmra.mrb[0].mxu0 %v10578
      %v10677 = vpop.f32.mrb[0].mxu0
      %v10678 = vadd.f32 0.0, %v10677
      %v10679 = vpop.f32.mrb[0].mxu0
      %v10680 = vpop.f32.mrb[0].mxu0
      %v10681 = vadd.f32 0.0, %v10680
      %v10682 = vpop.f32.mrb[0].mxu0
      %10683 = vmatprep.mubr.bf16.mxu0 0
      %10684 = vmatmul.mubr.bf16.gmra.mrb[0].mxu0 %v10581
      %v10685 = vpop.f32.mrb[0].mxu0
      %v10686 = vadd.f32 0.0, %v10685
      %v10687 = vpop.f32.mrb[0].mxu0
      %v10688 = vpop.f32.mrb[0].mxu0
      %v10689 = vadd.f32 0.0, %v10688
      %v10690 = vpop.f32.mrb[0].mxu0
      %10691 = vmatprep.mubr.bf16.mxu0 0
      %10692 = vmatmul.mubr.bf16.gmra.mrb[0].mxu0 %v10584
      %v10693 = vpop.f32.mrb[0].mxu0
      %v10694 = vadd.f32 0.0, %v10693
      %v10695 = vpop.f32.mrb[0].mxu0
      %v10696 = vpop.f32.mrb[0].mxu0
      %v10697 = vadd.f32 0.0, %v10696
      %v10698 = vpop.f32.mrb[0].mxu0
      %10699 = vmatprep.mubr.bf16.mxu0 0
      %10700 = vmatmul.mubr.bf16.gmra.mrb[0].mxu0 %v10587
      %v10701 = vpop.f32.mrb[0].mxu0
      %v10702 = vadd.f32 0.0, %v10701
      %v10703 = vpop.f32.mrb[0].mxu0
      %v10704 = vpop.f32.mrb[0].mxu0
      %v10705 = vadd.f32 0.0, %v10704
      %v10706 = vpop.f32.mrb[0].mxu0
      %10707 = vmatprep.mubr.bf16.mxu0 0
      %10708 = vmatmul.mubr.bf16.gmra.mrb[0].mxu0 %v10590
      %v10709 = vpop.f32.mrb[0].mxu0
      %v10710 = vadd.f32 0.0, %v10709
      %v10711 = vpop.f32.mrb[0].mxu0
      %v10712 = vpop.f32.mrb[0].mxu0
      %v10713 = vadd.f32 0.0, %v10712
      %v10714 = vpop.f32.mrb[0].mxu0
      %10715 = vmatprep.mubr.bf16.mxu0 0
      %10716 = vmatmul.mubr.bf16.gmra.mrb[0].mxu0 %v10593
      %v10717 = vpop.f32.mrb[0].mxu0
      %v10718 = vadd.f32 0.0, %v10717
      %v10719 = vpop.f32.mrb[0].mxu0
      %v10720 = vpop.f32.mrb[0].mxu0
      %v10721 = vadd.f32 0.0, %v10720
      %v10722 = vpop.f32.mrb[0].mxu0
      %10723 = vmatprep.mubr.bf16.mxu0 0
      %10724 = vmatmul.mubr.bf16.gmra.mrb[0].mxu0 %v10596
      %v10725 = vpop.f32.mrb[0].mxu0
      %v10726 = vadd.f32 0.0, %v10725
      %v10727 = vpop.f32.mrb[0].mxu0
      %v10728 = vpop.f32.mrb[0].mxu0
      %v10729 = vadd.f32 0.0, %v10728
      %v10730 = vpop.f32.mrb[0].mxu0
      %10731 = vmatprep.mubr.bf16.mxu0 0
      %10732 = vmatmul.mubr.bf16.gmra.mrb[0].mxu0 %v10599
      %v10733 = vpop.f32.mrb[0].mxu0
      %v10734 = vadd.f32 0.0, %v10733
      %v10735 = vpop.f32.mrb[0].mxu0
      %v10736 = vpop.f32.mrb[0].mxu0
      %v10737 = vadd.f32 0.0, %v10736
      %v10738 = vpop.f32.mrb[0].mxu0
      %10739 = vmatprep.mubr.bf16.mxu0 0
      %10740 = vmatmul.mubr.bf16.gmra.mrb[0].mxu0 %v10602
      %v10741 = vpop.f32.mrb[0].mxu0
      %v10742 = vadd.f32 0.0, %v10741
      %v10743 = vpop.f32.mrb[0].mxu0
      %v10744 = vpop.f32.mrb[0].mxu0
      %v10745 = vadd.f32 0.0, %v10744
      %v10746 = vpop.f32.mrb[0].mxu0
      %10747 = vmatprep.mubr.bf16.mxu0 0
      %10748 = vmatmul.mubr.bf16.gmra.mrb[0].mxu0 %v10605
      %v10749 = vpop.f32.mrb[0].mxu0
      %v10750 = vadd.f32 0.0, %v10749
      %v10751 = vpop.f32.mrb[0].mxu0
      %v10752 = vpop.f32.mrb[0].mxu0
      %v10753 = vadd.f32 0.0, %v10752
      %v10754 = vpop.f32.mrb[0].mxu0
      %10755 = vmatprep.mubr.bf16.mxu0 0
      %10756 = vmatmul.mubr.bf16.gmra.mrb[0].mxu0 %v10608
      %v10757 = vpop.f32.mrb[0].mxu0
      %v10758 = vadd.f32 0.0, %v10757
      %v10759 = vpop.f32.mrb[0].mxu0
      %v10760 = vpop.f32.mrb[0].mxu0
      %v10761 = vadd.f32 0.0, %v10760
      %v10762 = vpop.f32.mrb[0].mxu0
      %10763 = vmatprep.mubr.bf16.mxu0 0
      %10764 = vmatmul.mubr.bf16.gmra.mrb[0].mxu0 %v10611
      %v10765 = vpop.f32.mrb[0].mxu0
      %v10766 = vadd.f32 0.0, %v10765
      %v10767 = vpop.f32.mrb[0].mxu0
      %v10768 = vpop.f32.mrb[0].mxu0
      %v10769 = vadd.f32 0.0, %v10768
      %v10770 = vpop.f32.mrb[0].mxu0
      %10771 = vmatprep.mubr.bf16.mxu0 0
      %10772 = vmatmul.mubr.bf16.gmra.mrb[0].mxu0 %v10614
      %v10773 = vpop.f32.mrb[0].mxu0
      %v10774 = vadd.f32 0.0, %v10773
      %v10775 = vpop.f32.mrb[0].mxu0
      %v10776 = vpop.f32.mrb[0].mxu0
      %v10777 = vadd.f32 0.0, %v10776
      %v10778 = vpop.f32.mrb[0].mxu0
      %10779 = vdwg.mxu0
      %v10780 = vadd.f32 %v10051, %v10654
      %v10781 = vadd.f32 %v10052, %v10657
      %v10782 = vadd.f32 %v10053, %v10662
      %v10783 = vadd.f32 %v10054, %v10665
      %v10784 = vadd.f32 %v10055, %v10670
      %v10785 = vadd.f32 %v10056, %v10673
      %v10786 = vadd.f32 %v10057, %v10678
      %v10787 = vadd.f32 %v10058, %v10681
      %v10788 = vadd.f32 %v10059, %v10686
      %v10789 = vadd.f32 %v10060, %v10689
      %v10790 = vadd.f32 %v10061, %v10694
      %v10791 = vadd.f32 %v10062, %v10697
      %v10792 = vadd.f32 %v10063, %v10702
      %v10793 = vadd.f32 %v10064, %v10705
      %v10794 = vadd.f32 %v10065, %v10710
      %v10795 = vadd.f32 %v10066, %v10713
      %v10796 = vadd.f32 %v10067, %v10718
      %v10797 = vadd.f32 %v10068, %v10721
      %v10798 = vadd.f32 %v10069, %v10726
      %v10799 = vadd.f32 %v10070, %v10729
      %v10800 = vadd.f32 %v10071, %v10734
      %v10801 = vadd.f32 %v10072, %v10737
      %v10802 = vadd.f32 %v10073, %v10742
      %v10803 = vadd.f32 %v10074, %v10745
      %v10804 = vadd.f32 %v10075, %v10750
      %v10805 = vadd.f32 %v10076, %v10753
      %v10806 = vadd.f32 %v10077, %v10758
      %v10807 = vadd.f32 %v10078, %v10761
      %v10808 = vadd.f32 %v10079, %v10766
      %v10809 = vadd.f32 %v10080, %v10769
      %v10810 = vadd.f32 %v10081, %v10774
      %v10811 = vadd.f32 %v10082, %v10777
      %v10812 = vld [vmem:[%s742] sm:$0xe]
      %v10813 = vld [vmem:[%s742 + $0xc] sm:$0xe]
      %v10814 = vld [vmem:[%s742 + $0x18] sm:$0xe]
      %v10815 = vld [vmem:[%s742 + $0x24] sm:$0xe]
      %v10816 = vld [vmem:[%s742 + $0x30] sm:$0xe]
      %v10817 = vld [vmem:[%s742 + $0x3c] sm:$0xe]
      %v10818 = vld [vmem:[%s742 + $0x48] sm:$0xe]
      %v10819 = vld [vmem:[%s742 + $0x54] sm:$0xe]
      %v10820 = vld [vmem:[%s742 + $0x60] sm:$0xe]
      %v10821 = vld [vmem:[%s742 + $0x6c] sm:$0xe]
      %v10822 = vld [vmem:[%s742 + $0x78] sm:$0xe]
      %v10823 = vld [vmem:[%s742 + $0x84] sm:$0xe]
      %v10824 = vld [vmem:[%s742 + $0x90] sm:$0xe]
      %v10825 = vld [vmem:[%s742 + $0x9c] sm:$0xe]
      %v10826 = vld [vmem:[%s742 + $0xa8] sm:$0xe]
      %v10827 = vld [vmem:[%s742 + $0xb4] sm:$0xe]
      %v10876 = vrot.slane %v10812, 5
      %v10877 = vrot.slane %v10876, 4
      %v10878 = vrot.slane %v10084, 5
      %v10879 = vsel %vm2099, %v10877, %v10878
      %v10880 = vrot.slane %v10878, 4
      %v10881 = vrot.slane %v10085, 5
      %v10882 = vsel %vm2099, %v10880, %v10881
      %v10883 = vrot.slane %v10813, 5
      %v10884 = vrot.slane %v10883, 4
      %v10885 = vrot.slane %v10087, 5
      %v10886 = vsel %vm2099, %v10884, %v10885
      %v10887 = vrot.slane %v10885, 4
      %v10888 = vrot.slane %v10088, 5
      %v10889 = vsel %vm2099, %v10887, %v10888
      %v10890 = vrot.slane %v10814, 5
      %v10891 = vrot.slane %v10890, 4
      %v10892 = vrot.slane %v10090, 5
      %v10893 = vsel %vm2099, %v10891, %v10892
      %v10894 = vrot.slane %v10892, 4
      %v10895 = vrot.slane %v10091, 5
      %v10896 = vsel %vm2099, %v10894, %v10895
      %v10897 = vrot.slane %v10815, 5
      %v10898 = vrot.slane %v10897, 4
      %v10899 = vrot.slane %v10093, 5
      %v10900 = vsel %vm2099, %v10898, %v10899
      %v10901 = vrot.slane %v10899, 4
      %v10902 = vrot.slane %v10094, 5
      %v10903 = vsel %vm2099, %v10901, %v10902
      %v10904 = vrot.slane %v10816, 5
      %v10905 = vrot.slane %v10904, 4
      %v10906 = vrot.slane %v10096, 5
      %v10907 = vsel %vm2099, %v10905, %v10906
      %v10908 = vrot.slane %v10906, 4
      %v10909 = vrot.slane %v10097, 5
      %v10910 = vsel %vm2099, %v10908, %v10909
      %v10911 = vrot.slane %v10817, 5
      %v10912 = vrot.slane %v10911, 4
      %v10913 = vrot.slane %v10099, 5
      %v10914 = vsel %vm2099, %v10912, %v10913
      %v10915 = vrot.slane %v10913, 4
      %v10916 = vrot.slane %v10100, 5
      %v10917 = vsel %vm2099, %v10915, %v10916
      %v10918 = vrot.slane %v10818, 5
      %v10919 = vrot.slane %v10918, 4
      %v10920 = vrot.slane %v10102, 5
      %v10921 = vsel %vm2099, %v10919, %v10920
      %v10922 = vrot.slane %v10920, 4
      %v10923 = vrot.slane %v10103, 5
      %v10924 = vsel %vm2099, %v10922, %v10923
      %v10925 = vrot.slane %v10819, 5
      %v10926 = vrot.slane %v10925, 4
      %v10927 = vrot.slane %v10105, 5
      %v10928 = vsel %vm2099, %v10926, %v10927
      %v10929 = vrot.slane %v10927, 4
      %v10930 = vrot.slane %v10106, 5
      %v10931 = vsel %vm2099, %v10929, %v10930
      %v10932 = vrot.slane %v10820, 5
      %v10933 = vrot.slane %v10932, 4
      %v10934 = vrot.slane %v10108, 5
      %v10935 = vsel %vm2099, %v10933, %v10934
      %v10936 = vrot.slane %v10934, 4
      %v10937 = vrot.slane %v10109, 5
      %v10938 = vsel %vm2099, %v10936, %v10937
      %v10939 = vrot.slane %v10821, 5
      %v10940 = vrot.slane %v10939, 4
      %v10941 = vrot.slane %v10111, 5
      %v10942 = vsel %vm2099, %v10940, %v10941
      %v10943 = vrot.slane %v10941, 4
      %v10944 = vrot.slane %v10112, 5
      %v10945 = vsel %vm2099, %v10943, %v10944
      %v10946 = vrot.slane %v10822, 5
      %v10947 = vrot.slane %v10946, 4
      %v10948 = vrot.slane %v10114, 5
      %v10949 = vsel %vm2099, %v10947, %v10948
      %v10950 = vrot.slane %v10948, 4
      %v10951 = vrot.slane %v10115, 5
      %v10952 = vsel %vm2099, %v10950, %v10951
      %v10953 = vrot.slane %v10823, 5
      %v10954 = vrot.slane %v10953, 4
      %v10955 = vrot.slane %v10117, 5
      %v10956 = vsel %vm2099, %v10954, %v10955
      %v10957 = vrot.slane %v10955, 4
      %v10958 = vrot.slane %v10118, 5
      %v10959 = vsel %vm2099, %v10957, %v10958
      %v10960 = vrot.slane %v10824, 5
      %v10961 = vrot.slane %v10960, 4
      %v10962 = vrot.slane %v10120, 5
      %v10963 = vsel %vm2099, %v10961, %v10962
      %v10964 = vrot.slane %v10962, 4
      %v10965 = vrot.slane %v10121, 5
      %v10966 = vsel %vm2099, %v10964, %v10965
      %v10967 = vrot.slane %v10825, 5
      %v10968 = vrot.slane %v10967, 4
      %v10969 = vrot.slane %v10123, 5
      %v10970 = vsel %vm2099, %v10968, %v10969
      %v10971 = vrot.slane %v10969, 4
      %v10972 = vrot.slane %v10124, 5
      %v10973 = vsel %vm2099, %v10971, %v10972
      %v10974 = vrot.slane %v10826, 5
      %v10975 = vrot.slane %v10974, 4
      %v10976 = vrot.slane %v10126, 5
      %v10977 = vsel %vm2099, %v10975, %v10976
      %v10978 = vrot.slane %v10976, 4
      %v10979 = vrot.slane %v10127, 5
      %v10980 = vsel %vm2099, %v10978, %v10979
      %v10981 = vrot.slane %v10827, 5
      %v10982 = vrot.slane %v10981, 4
      %v10983 = vrot.slane %v10129, 5
      %v10984 = vsel %vm2099, %v10982, %v10983
      %v10985 = vrot.slane %v10983, 4
      %v10986 = vrot.slane %v10130, 5
      %v10987 = vsel %vm2099, %v10985, %v10986
      %v10988 = vld [vmem:[%s2 + $0x10] sm:$0x3]
      %v10989 = vunpack.c.l.b16 %v10879
      %v10990 = vunpack.c.l.b16 %v10882
      %v10991 = vunpack.c.l.b16 %v10886
      %v10992 = vunpack.c.l.b16 %v10889
      %v10993 = vunpack.c.l.b16 %v10893
      %v10994 = vunpack.c.l.b16 %v10896
      %v10995 = vunpack.c.l.b16 %v10900
      %v10996 = vunpack.c.l.b16 %v10903
      %v10997 = vunpack.c.l.b16 %v10907
      %v10998 = vunpack.c.l.b16 %v10910
      %v10999 = vunpack.c.l.b16 %v10914
      %v11000 = vunpack.c.l.b16 %v10917
      %v11001 = vunpack.c.l.b16 %v10921
      %v11002 = vunpack.c.l.b16 %v10924
      %v11003 = vunpack.c.l.b16 %v10928
      %v11004 = vunpack.c.l.b16 %v10931
      %v11005 = vunpack.c.l.b16 %v10935
      %v11006 = vunpack.c.l.b16 %v10938
      %v11007 = vunpack.c.l.b16 %v10942
      %v11008 = vunpack.c.l.b16 %v10945
      %v11009 = vunpack.c.l.b16 %v10949
      %v11010 = vunpack.c.l.b16 %v10952
      %v11011 = vunpack.c.l.b16 %v10956
      %v11012 = vunpack.c.l.b16 %v10959
      %v11013 = vunpack.c.l.b16 %v10963
      %v11014 = vunpack.c.l.b16 %v10966
      %v11015 = vunpack.c.l.b16 %v10970
      %v11016 = vunpack.c.l.b16 %v10973
      %v11017 = vunpack.c.l.b16 %v10977
      %v11018 = vunpack.c.l.b16 %v10980
      %v11019 = vunpack.c.l.b16 %v10984
      %v11020 = vunpack.c.l.b16 %v10987
      %v11021 = vpack.c.b16 %v10990, %v10989
      %v11022 = vpack.c.b16 %v10992, %v10991
      %v11023 = vpack.c.b16 %v10994, %v10993
      %v11024 = vpack.c.b16 %v10996, %v10995
      %v11025 = vpack.c.b16 %v10998, %v10997
      %v11026 = vpack.c.b16 %v11000, %v10999
      %v11027 = vpack.c.b16 %v11002, %v11001
      %v11028 = vpack.c.b16 %v11004, %v11003
      %v11029 = vpack.c.b16 %v11006, %v11005
      %v11030 = vpack.c.b16 %v11008, %v11007
      %v11031 = vpack.c.b16 %v11010, %v11009
      %v11032 = vpack.c.b16 %v11012, %v11011
      %v11033 = vpack.c.b16 %v11014, %v11013
      %v11034 = vpack.c.b16 %v11016, %v11015
      %v11035 = vpack.c.b16 %v11018, %v11017
      %v11036 = vpack.c.b16 %v11020, %v11019
      %v11038 = vsel %vm1543, %v11021, 0
      %v11041 = vsel %vm1543, %v11022, 0
      %v11044 = vsel %vm1543, %v11023, 0
      %v11047 = vsel %vm1543, %v11024, 0
      %v11050 = vsel %vm1543, %v11025, 0
      %v11053 = vsel %vm1543, %v11026, 0
      %v11056 = vsel %vm1543, %v11027, 0
      %v11059 = vsel %vm1543, %v11028, 0
      %v11062 = vsel %vm1543, %v11029, 0
      %v11065 = vsel %vm1543, %v11030, 0
      %v11068 = vsel %vm1543, %v11031, 0
      %v11071 = vsel %vm1543, %v11032, 0
      %v11074 = vsel %vm1543, %v11033, 0
      %v11077 = vsel %vm1543, %v11034, 0
      %v11080 = vsel %vm1543, %v11035, 0
      %v11083 = vsel %vm1543, %v11036, 0
      %v11086 = vsel %vm1592, %v10988, 0
      %11088 = vmatprep.subr.bf16.mxu0 0
      %11089 = vmatpush1.bf16.msra.mxu0 %v11086
      %11090 = vmatprep.subr.bf16.mxu0 0
      %11091 = vmatpush1.bf16.msra.mxu0 0
      %11092 = vmatprep.subr.bf16.mxu0 0
      %11093 = vmatpush1.bf16.msra.mxu0 0
      %11094 = vmatprep.subr.bf16.mxu0 0
      %11095 = vmatpush1.bf16.msra.mxu0 0
      %11096 = vmatprep.subr.bf16.mxu0 0
      %11097 = vmatpush1.bf16.msra.mxu0 0
      %11098 = vmatprep.subr.bf16.mxu0 0
      %11099 = vmatpush1.bf16.msra.mxu0 0
      %11100 = vmatprep.subr.bf16.mxu0 0
      %11101 = vmatpush1.bf16.msra.mxu0 0
      %11102 = vmatprep.subr.bf16.mxu0 0
      %11103 = vmatpush1.bf16.msra.mxu0 0
      %11104 = vmatprep.subr.bf16.mxu0 0
      %11105 = vmatpush1.bf16.msra.mxu0 0
      %11106 = vmatprep.subr.bf16.mxu0 0
      %11107 = vmatpush1.bf16.msra.mxu0 0
      %11108 = vmatprep.subr.bf16.mxu0 0
      %11109 = vmatpush1.bf16.msra.mxu0 0
      %11110 = vmatprep.subr.bf16.mxu0 0
      %11111 = vmatpush1.bf16.msra.mxu0 0
      %11112 = vmatprep.subr.bf16.mxu0 0
      %11113 = vmatpush1.bf16.msra.mxu0 0
      %11114 = vmatprep.subr.bf16.mxu0 0
      %11115 = vmatpush1.bf16.msra.mxu0 0
      %11116 = vmatprep.subr.bf16.mxu0 0
      %11117 = vmatpush1.bf16.msra.mxu0 0
      %11118 = vmatprep.subr.bf16.mxu0 0
      %11119 = vmatpush1.bf16.msra.mxu0 0
      %11120 = vmatprep.mubr.bf16.mxu0 0
      %11121 = vmatmul.mubr.bf16.gmra.mrb[0].mxu0 %v11038
      %v11122 = vpop.f32.mrb[0].mxu0
      %v11123 = vadd.f32 0.0, %v11122
      %v11124 = vpop.f32.mrb[0].mxu0
      %v11125 = vpop.f32.mrb[0].mxu0
      %v11126 = vadd.f32 0.0, %v11125
      %v11127 = vpop.f32.mrb[0].mxu0
      %11128 = vmatprep.mubr.bf16.mxu0 0
      %11129 = vmatmul.mubr.bf16.gmra.mrb[0].mxu0 %v11041
      %v11130 = vpop.f32.mrb[0].mxu0
      %v11131 = vadd.f32 0.0, %v11130
      %v11132 = vpop.f32.mrb[0].mxu0
      %v11133 = vpop.f32.mrb[0].mxu0
      %v11134 = vadd.f32 0.0, %v11133
      %v11135 = vpop.f32.mrb[0].mxu0
      %11136 = vmatprep.mubr.bf16.mxu0 0
      %11137 = vmatmul.mubr.bf16.gmra.mrb[0].mxu0 %v11044
      %v11138 = vpop.f32.mrb[0].mxu0
      %v11139 = vadd.f32 0.0, %v11138
      %v11140 = vpop.f32.mrb[0].mxu0
      %v11141 = vpop.f32.mrb[0].mxu0
      %v11142 = vadd.f32 0.0, %v11141
      %v11143 = vpop.f32.mrb[0].mxu0
      %11144 = vmatprep.mubr.bf16.mxu0 0
      %11145 = vmatmul.mubr.bf16.gmra.mrb[0].mxu0 %v11047
      %v11146 = vpop.f32.mrb[0].mxu0
      %v11147 = vadd.f32 0.0, %v11146
      %v11148 = vpop.f32.mrb[0].mxu0
      %v11149 = vpop.f32.mrb[0].mxu0
      %v11150 = vadd.f32 0.0, %v11149
      %v11151 = vpop.f32.mrb[0].mxu0
      %11152 = vmatprep.mubr.bf16.mxu0 0
      %11153 = vmatmul.mubr.bf16.gmra.mrb[0].mxu0 %v11050
      %v11154 = vpop.f32.mrb[0].mxu0
      %v11155 = vadd.f32 0.0, %v11154
      %v11156 = vpop.f32.mrb[0].mxu0
      %v11157 = vpop.f32.mrb[0].mxu0
      %v11158 = vadd.f32 0.0, %v11157
      %v11159 = vpop.f32.mrb[0].mxu0
      %11160 = vmatprep.mubr.bf16.mxu0 0
      %11161 = vmatmul.mubr.bf16.gmra.mrb[0].mxu0 %v11053
      %v11162 = vpop.f32.mrb[0].mxu0
      %v11163 = vadd.f32 0.0, %v11162
      %v11164 = vpop.f32.mrb[0].mxu0
      %v11165 = vpop.f32.mrb[0].mxu0
      %v11166 = vadd.f32 0.0, %v11165
      %v11167 = vpop.f32.mrb[0].mxu0
      %11168 = vmatprep.mubr.bf16.mxu0 0
      %11169 = vmatmul.mubr.bf16.gmra.mrb[0].mxu0 %v11056
      %v11170 = vpop.f32.mrb[0].mxu0
      %v11171 = vadd.f32 0.0, %v11170
      %v11172 = vpop.f32.mrb[0].mxu0
      %v11173 = vpop.f32.mrb[0].mxu0
      %v11174 = vadd.f32 0.0, %v11173
      %v11175 = vpop.f32.mrb[0].mxu0
      %11176 = vmatprep.mubr.bf16.mxu0 0
      %11177 = vmatmul.mubr.bf16.gmra.mrb[0].mxu0 %v11059
      %v11178 = vpop.f32.mrb[0].mxu0
      %v11179 = vadd.f32 0.0, %v11178
      %v11180 = vpop.f32.mrb[0].mxu0
      %v11181 = vpop.f32.mrb[0].mxu0
      %v11182 = vadd.f32 0.0, %v11181
      %v11183 = vpop.f32.mrb[0].mxu0
      %11184 = vmatprep.mubr.bf16.mxu0 0
      %11185 = vmatmul.mubr.bf16.gmra.mrb[0].mxu0 %v11062
      %v11186 = vpop.f32.mrb[0].mxu0
      %v11187 = vadd.f32 0.0, %v11186
      %v11188 = vpop.f32.mrb[0].mxu0
      %v11189 = vpop.f32.mrb[0].mxu0
      %v11190 = vadd.f32 0.0, %v11189
      %v11191 = vpop.f32.mrb[0].mxu0
      %11192 = vmatprep.mubr.bf16.mxu0 0
      %11193 = vmatmul.mubr.bf16.gmra.mrb[0].mxu0 %v11065
      %v11194 = vpop.f32.mrb[0].mxu0
      %v11195 = vadd.f32 0.0, %v11194
      %v11196 = vpop.f32.mrb[0].mxu0
      %v11197 = vpop.f32.mrb[0].mxu0
      %v11198 = vadd.f32 0.0, %v11197
      %v11199 = vpop.f32.mrb[0].mxu0
      %11200 = vmatprep.mubr.bf16.mxu0 0
      %11201 = vmatmul.mubr.bf16.gmra.mrb[0].mxu0 %v11068
      %v11202 = vpop.f32.mrb[0].mxu0
      %v11203 = vadd.f32 0.0, %v11202
      %v11204 = vpop.f32.mrb[0].mxu0
      %v11205 = vpop.f32.mrb[0].mxu0
      %v11206 = vadd.f32 0.0, %v11205
      %v11207 = vpop.f32.mrb[0].mxu0
      %11208 = vmatprep.mubr.bf16.mxu0 0
      %11209 = vmatmul.mubr.bf16.gmra.mrb[0].mxu0 %v11071
      %v11210 = vpop.f32.mrb[0].mxu0
      %v11211 = vadd.f32 0.0, %v11210
      %v11212 = vpop.f32.mrb[0].mxu0
      %v11213 = vpop.f32.mrb[0].mxu0
      %v11214 = vadd.f32 0.0, %v11213
      %v11215 = vpop.f32.mrb[0].mxu0
      %11216 = vmatprep.mubr.bf16.mxu0 0
      %11217 = vmatmul.mubr.bf16.gmra.mrb[0].mxu0 %v11074
      %v11218 = vpop.f32.mrb[0].mxu0
      %v11219 = vadd.f32 0.0, %v11218
      %v11220 = vpop.f32.mrb[0].mxu0
      %v11221 = vpop.f32.mrb[0].mxu0
      %v11222 = vadd.f32 0.0, %v11221
      %v11223 = vpop.f32.mrb[0].mxu0
      %11224 = vmatprep.mubr.bf16.mxu0 0
      %11225 = vmatmul.mubr.bf16.gmra.mrb[0].mxu0 %v11077
      %v11226 = vpop.f32.mrb[0].mxu0
      %v11227 = vadd.f32 0.0, %v11226
      %v11228 = vpop.f32.mrb[0].mxu0
      %v11229 = vpop.f32.mrb[0].mxu0
      %v11230 = vadd.f32 0.0, %v11229
      %v11231 = vpop.f32.mrb[0].mxu0
      %11232 = vmatprep.mubr.bf16.mxu0 0
      %11233 = vmatmul.mubr.bf16.gmra.mrb[0].mxu0 %v11080
      %v11234 = vpop.f32.mrb[0].mxu0
      %v11235 = vadd.f32 0.0, %v11234
      %v11236 = vpop.f32.mrb[0].mxu0
      %v11237 = vpop.f32.mrb[0].mxu0
      %v11238 = vadd.f32 0.0, %v11237
      %v11239 = vpop.f32.mrb[0].mxu0
      %11240 = vmatprep.mubr.bf16.mxu0 0
      %11241 = vmatmul.mubr.bf16.gmra.mrb[0].mxu0 %v11083
      %v11242 = vpop.f32.mrb[0].mxu0
      %v11243 = vadd.f32 0.0, %v11242
      %v11244 = vpop.f32.mrb[0].mxu0
      %v11245 = vpop.f32.mrb[0].mxu0
      %v11246 = vadd.f32 0.0, %v11245
      %v11247 = vpop.f32.mrb[0].mxu0
      %11248 = vdwg.mxu0
      %v11249 = vadd.f32 %v10780, %v11123
      %v11250 = vadd.f32 %v10781, %v11126
      %v11251 = vadd.f32 %v10782, %v11131
      %v11252 = vadd.f32 %v10783, %v11134
      %v11253 = vadd.f32 %v10784, %v11139
      %v11254 = vadd.f32 %v10785, %v11142
      %v11255 = vadd.f32 %v10786, %v11147
      %v11256 = vadd.f32 %v10787, %v11150
      %v11257 = vadd.f32 %v10788, %v11155
      %v11258 = vadd.f32 %v10789, %v11158
      %v11259 = vadd.f32 %v10790, %v11163
      %v11260 = vadd.f32 %v10791, %v11166
      %v11261 = vadd.f32 %v10792, %v11171
      %v11262 = vadd.f32 %v10793, %v11174
      %v11263 = vadd.f32 %v10794, %v11179
      %v11264 = vadd.f32 %v10795, %v11182
      %v11265 = vadd.f32 %v10796, %v11187
      %v11266 = vadd.f32 %v10797, %v11190
      %v11267 = vadd.f32 %v10798, %v11195
      %v11268 = vadd.f32 %v10799, %v11198
      %v11269 = vadd.f32 %v10800, %v11203
      %v11270 = vadd.f32 %v10801, %v11206
      %v11271 = vadd.f32 %v10802, %v11211
      %v11272 = vadd.f32 %v10803, %v11214
      %v11273 = vadd.f32 %v10804, %v11219
      %v11274 = vadd.f32 %v10805, %v11222
      %v11275 = vadd.f32 %v10806, %v11227
      %v11276 = vadd.f32 %v10807, %v11230
      %v11277 = vadd.f32 %v10808, %v11235
      %v11278 = vadd.f32 %v10809, %v11238
      %v11279 = vadd.f32 %v10810, %v11243
      %v11280 = vadd.f32 %v10811, %v11246
      %v11281 = vsel %vm1543, %v11249, 0.0
      %v11282 = vsel %vm1543, %v11250, 0.0
      %v11283 = vadd.f32 %v11281, %v11282
      %v11284 = vsel %vm1543, %v11251, 0.0
      %v11285 = vadd.f32 %v11283, %v11284
      %v11286 = vsel %vm1543, %v11252, 0.0
      %v11287 = vadd.f32 %v11285, %v11286
      %v11288 = vsel %vm1543, %v11253, 0.0
      %v11289 = vadd.f32 %v11287, %v11288
      %v11290 = vsel %vm1543, %v11254, 0.0
      %v11291 = vadd.f32 %v11289, %v11290
      %v11292 = vsel %vm1543, %v11255, 0.0
      %v11293 = vadd.f32 %v11291, %v11292
      %v11294 = vsel %vm1543, %v11256, 0.0
      %v11295 = vadd.f32 %v11293, %v11294
      %v11296 = vsel %vm1543, %v11257, 0.0
      %v11297 = vadd.f32 %v11295, %v11296
      %v11298 = vsel %vm1543, %v11258, 0.0
      %v11299 = vadd.f32 %v11297, %v11298
      %v11300 = vsel %vm1543, %v11259, 0.0
      %v11301 = vadd.f32 %v11299, %v11300
      %v11302 = vsel %vm1543, %v11260, 0.0
      %v11303 = vadd.f32 %v11301, %v11302
      %v11304 = vsel %vm1543, %v11261, 0.0
      %v11305 = vadd.f32 %v11303, %v11304
      %v11306 = vsel %vm1543, %v11262, 0.0
      %v11307 = vadd.f32 %v11305, %v11306
      %v11308 = vsel %vm1543, %v11263, 0.0
      %v11309 = vadd.f32 %v11307, %v11308
      %v11310 = vsel %vm1543, %v11264, 0.0
      %v11311 = vadd.f32 %v11309, %v11310
      %v11312 = vsel %vm1543, %v11265, 0.0
      %v11313 = vadd.f32 %v11311, %v11312
      %v11314 = vsel %vm1543, %v11266, 0.0
      %v11315 = vadd.f32 %v11313, %v11314
      %v11316 = vsel %vm1543, %v11267, 0.0
      %v11317 = vadd.f32 %v11315, %v11316
      %v11318 = vsel %vm1543, %v11268, 0.0
      %v11319 = vadd.f32 %v11317, %v11318
      %v11320 = vsel %vm1543, %v11269, 0.0
      %v11321 = vadd.f32 %v11319, %v11320
      %v11322 = vsel %vm1543, %v11270, 0.0
      %v11323 = vadd.f32 %v11321, %v11322
      %v11324 = vsel %vm1543, %v11271, 0.0
      %v11325 = vadd.f32 %v11323, %v11324
      %v11326 = vsel %vm1543, %v11272, 0.0
      %v11327 = vadd.f32 %v11325, %v11326
      %v11328 = vsel %vm1543, %v11273, 0.0
      %v11329 = vadd.f32 %v11327, %v11328
      %v11330 = vsel %vm1543, %v11274, 0.0
      %v11331 = vadd.f32 %v11329, %v11330
      %v11332 = vsel %vm1543, %v11275, 0.0
      %v11333 = vadd.f32 %v11331, %v11332
      %v11334 = vsel %vm1543, %v11276, 0.0
      %v11335 = vadd.f32 %v11333, %v11334
      %v11336 = vsel %vm1543, %v11277, 0.0
      %v11337 = vadd.f32 %v11335, %v11336
      %v11338 = vsel %vm1543, %v11278, 0.0
      %v11339 = vadd.f32 %v11337, %v11338
      %v11340 = vsel %vm1543, %v11279, 0.0
      %v11341 = vadd.f32 %v11339, %v11340
      %v11342 = vsel %vm1543, %v11280, 0.0
      %v11343 = vadd.f32 %v11341, %v11342
      %v11344 = vrot.slane %v11343, 4
      %v11345 = vadd.f32 %v11343, %v11344
      %v11346 = vrot.slane %v11345, 2
      %v11347 = vadd.f32 %v11345, %v11346
      %v11348 = vrot.slane %v11347, 1
      %v11349 = vadd.f32 %v11347, %v11348
      %v11350 = vmul.f32 %v11349, 0.00390625
      %v11351 = vsub.f32 %v11249, %v11350
      %v11352 = vsub.f32 %v11250, %v11350
      %v11353 = vsub.f32 %v11251, %v11350
      %v11354 = vsub.f32 %v11252, %v11350
      %v11355 = vsub.f32 %v11253, %v11350
      %v11356 = vsub.f32 %v11254, %v11350
      %v11357 = vsub.f32 %v11255, %v11350
      %v11358 = vsub.f32 %v11256, %v11350
      %v11359 = vsub.f32 %v11257, %v11350
      %v11360 = vsub.f32 %v11258, %v11350
      %v11361 = vsub.f32 %v11259, %v11350
      %v11362 = vsub.f32 %v11260, %v11350
      %v11363 = vsub.f32 %v11261, %v11350
      %v11364 = vsub.f32 %v11262, %v11350
      %v11365 = vsub.f32 %v11263, %v11350
      %v11366 = vsub.f32 %v11264, %v11350
      %v11367 = vsub.f32 %v11265, %v11350
      %v11368 = vsub.f32 %v11266, %v11350
      %v11369 = vsub.f32 %v11267, %v11350
      %v11370 = vsub.f32 %v11268, %v11350
      %v11371 = vsub.f32 %v11269, %v11350
      %v11372 = vsub.f32 %v11270, %v11350
      %v11373 = vsub.f32 %v11271, %v11350
      %v11374 = vsub.f32 %v11272, %v11350
      %v11375 = vsub.f32 %v11273, %v11350
      %v11376 = vsub.f32 %v11274, %v11350
      %v11377 = vsub.f32 %v11275, %v11350
      %v11378 = vsub.f32 %v11276, %v11350
      %v11379 = vsub.f32 %v11277, %v11350
      %v11380 = vsub.f32 %v11278, %v11350
      %v11381 = vsub.f32 %v11279, %v11350
      %v11382 = vsub.f32 %v11280, %v11350
      %v11383 = vmul.f32 %v11351, %v11351
      %v11384 = vmul.f32 %v11352, %v11352
      %v11385 = vmul.f32 %v11353, %v11353
      %v11386 = vmul.f32 %v11354, %v11354
      %v11387 = vmul.f32 %v11355, %v11355
      %v11388 = vmul.f32 %v11356, %v11356
      %v11389 = vmul.f32 %v11357, %v11357
      %v11390 = vmul.f32 %v11358, %v11358
      %v11391 = vmul.f32 %v11359, %v11359
      %v11392 = vmul.f32 %v11360, %v11360
      %v11393 = vmul.f32 %v11361, %v11361
      %v11394 = vmul.f32 %v11362, %v11362
      %v11395 = vmul.f32 %v11363, %v11363
      %v11396 = vmul.f32 %v11364, %v11364
      %v11397 = vmul.f32 %v11365, %v11365
      %v11398 = vmul.f32 %v11366, %v11366
      %v11399 = vmul.f32 %v11367, %v11367
      %v11400 = vmul.f32 %v11368, %v11368
      %v11401 = vmul.f32 %v11369, %v11369
      %v11402 = vmul.f32 %v11370, %v11370
      %v11403 = vmul.f32 %v11371, %v11371
      %v11404 = vmul.f32 %v11372, %v11372
      %v11405 = vmul.f32 %v11373, %v11373
      %v11406 = vmul.f32 %v11374, %v11374
      %v11407 = vmul.f32 %v11375, %v11375
      %v11408 = vmul.f32 %v11376, %v11376
      %v11409 = vmul.f32 %v11377, %v11377
      %v11410 = vmul.f32 %v11378, %v11378
      %v11411 = vmul.f32 %v11379, %v11379
      %v11412 = vmul.f32 %v11380, %v11380
      %v11413 = vmul.f32 %v11381, %v11381
      %v11414 = vmul.f32 %v11382, %v11382
      %v11415 = vsel %vm1543, %v11383, 0.0
      %v11416 = vsel %vm1543, %v11384, 0.0
      %v11417 = vadd.f32 %v11415, %v11416
      %v11418 = vsel %vm1543, %v11385, 0.0
      %v11419 = vadd.f32 %v11417, %v11418
      %v11420 = vsel %vm1543, %v11386, 0.0
      %v11421 = vadd.f32 %v11419, %v11420
      %v11422 = vsel %vm1543, %v11387, 0.0
      %v11423 = vadd.f32 %v11421, %v11422
      %v11424 = vsel %vm1543, %v11388, 0.0
      %v11425 = vadd.f32 %v11423, %v11424
      %v11426 = vsel %vm1543, %v11389, 0.0
      %v11427 = vadd.f32 %v11425, %v11426
      %v11428 = vsel %vm1543, %v11390, 0.0
      %v11429 = vadd.f32 %v11427, %v11428
      %v11430 = vsel %vm1543, %v11391, 0.0
      %v11431 = vadd.f32 %v11429, %v11430
      %v11432 = vsel %vm1543, %v11392, 0.0
      %v11433 = vadd.f32 %v11431, %v11432
      %v11434 = vsel %vm1543, %v11393, 0.0
      %v11435 = vadd.f32 %v11433, %v11434
      %v11436 = vsel %vm1543, %v11394, 0.0
      %v11437 = vadd.f32 %v11435, %v11436
      %v11438 = vsel %vm1543, %v11395, 0.0
      %v11439 = vadd.f32 %v11437, %v11438
      %v11440 = vsel %vm1543, %v11396, 0.0
      %v11441 = vadd.f32 %v11439, %v11440
      %v11442 = vsel %vm1543, %v11397, 0.0
      %v11443 = vadd.f32 %v11441, %v11442
      %v11444 = vsel %vm1543, %v11398, 0.0
      %v11445 = vadd.f32 %v11443, %v11444
      %v11446 = vsel %vm1543, %v11399, 0.0
      %v11447 = vadd.f32 %v11445, %v11446
      %v11448 = vsel %vm1543, %v11400, 0.0
      %v11449 = vadd.f32 %v11447, %v11448
      %v11450 = vsel %vm1543, %v11401, 0.0
      %v11451 = vadd.f32 %v11449, %v11450
      %v11452 = vsel %vm1543, %v11402, 0.0
      %v11453 = vadd.f32 %v11451, %v11452
      %v11454 = vsel %vm1543, %v11403, 0.0
      %v11455 = vadd.f32 %v11453, %v11454
      %v11456 = vsel %vm1543, %v11404, 0.0
      %v11457 = vadd.f32 %v11455, %v11456
      %v11458 = vsel %vm1543, %v11405, 0.0
      %v11459 = vadd.f32 %v11457, %v11458
      %v11460 = vsel %vm1543, %v11406, 0.0
      %v11461 = vadd.f32 %v11459, %v11460
      %v11462 = vsel %vm1543, %v11407, 0.0
      %v11463 = vadd.f32 %v11461, %v11462
      %v11464 = vsel %vm1543, %v11408, 0.0
      %v11465 = vadd.f32 %v11463, %v11464
      %v11466 = vsel %vm1543, %v11409, 0.0
      %v11467 = vadd.f32 %v11465, %v11466
      %v11468 = vsel %vm1543, %v11410, 0.0
      %v11469 = vadd.f32 %v11467, %v11468
      %v11470 = vsel %vm1543, %v11411, 0.0
      %v11471 = vadd.f32 %v11469, %v11470
      %v11472 = vsel %vm1543, %v11412, 0.0
      %v11473 = vadd.f32 %v11471, %v11472
      %v11474 = vsel %vm1543, %v11413, 0.0
      %v11475 = vadd.f32 %v11473, %v11474
      %v11476 = vsel %vm1543, %v11414, 0.0
      %v11477 = vadd.f32 %v11475, %v11476
      %v11478 = vrot.slane %v11477, 4
      %v11479 = vadd.f32 %v11477, %v11478
      %v11480 = vrot.slane %v11479, 2
      %v11481 = vadd.f32 %v11479, %v11480
      %v11482 = vrot.slane %v11481, 1
      %v11483 = vadd.f32 %v11481, %v11482
      %v11484 = vmul.f32 %v11483, 0.00390625
      %v11485 = vadd.f32 %v11484, 1e-05
      %v11486 = vrsqrt.pop %v11485
      %v11487 = vmul.f32 %v11351, %v11486
      %v11488 = vmul.f32 %v11352, %v11486
      %v11489 = vmul.f32 %v11353, %v11486
      %v11490 = vmul.f32 %v11354, %v11486
      %v11491 = vmul.f32 %v11355, %v11486
      %v11492 = vmul.f32 %v11356, %v11486
      %v11493 = vmul.f32 %v11357, %v11486
      %v11494 = vmul.f32 %v11358, %v11486
      %v11495 = vmul.f32 %v11359, %v11486
      %v11496 = vmul.f32 %v11360, %v11486
      %v11497 = vmul.f32 %v11361, %v11486
      %v11498 = vmul.f32 %v11362, %v11486
      %v11499 = vmul.f32 %v11363, %v11486
      %v11500 = vmul.f32 %v11364, %v11486
      %v11501 = vmul.f32 %v11365, %v11486
      %v11502 = vmul.f32 %v11366, %v11486
      %v11503 = vmul.f32 %v11367, %v11486
      %v11504 = vmul.f32 %v11368, %v11486
      %v11505 = vmul.f32 %v11369, %v11486
      %v11506 = vmul.f32 %v11370, %v11486
      %v11507 = vmul.f32 %v11371, %v11486
      %v11508 = vmul.f32 %v11372, %v11486
      %v11509 = vmul.f32 %v11373, %v11486
      %v11510 = vmul.f32 %v11374, %v11486
      %v11511 = vmul.f32 %v11375, %v11486
      %v11512 = vmul.f32 %v11376, %v11486
      %v11513 = vmul.f32 %v11377, %v11486
      %v11514 = vmul.f32 %v11378, %v11486
      %v11515 = vmul.f32 %v11379, %v11486
      %v11516 = vmul.f32 %v11380, %v11486
      %v11517 = vmul.f32 %v11381, %v11486
      %v11518 = vmul.f32 %v11382, %v11486
      %v11519 = vld [vmem:[%s165] sm:$0xff]
      %v11520 = vld [vmem:[%s165 + $0x8] sm:$0xff]
      %v11521 = vld [vmem:[%s165 + $0x10] sm:$0xff]
      %v11522 = vld [vmem:[%s165 + $0x18] sm:$0xff]
      %v11523 = vld [vmem:[%s165 + $0x20] sm:$0xff]
      %v11524 = vld [vmem:[%s165 + $0x28] sm:$0xff]
      %v11525 = vld [vmem:[%s165 + $0x30] sm:$0xff]
      %v11526 = vld [vmem:[%s165 + $0x38] sm:$0xff]
      %v11527 = vld [vmem:[%s165 + $0x40] sm:$0xff]
      %v11528 = vld [vmem:[%s165 + $0x48] sm:$0xff]
      %v11529 = vld [vmem:[%s165 + $0x50] sm:$0xff]
      %v11530 = vld [vmem:[%s165 + $0x58] sm:$0xff]
      %v11531 = vld [vmem:[%s165 + $0x60] sm:$0xff]
      %v11532 = vld [vmem:[%s165 + $0x68] sm:$0xff]
      %v11533 = vld [vmem:[%s165 + $0x70] sm:$0xff]
      %v11534 = vld [vmem:[%s165 + $0x78] sm:$0xff]
      %v11535 = vld [vmem:[%s165 + $0x80] sm:$0xff]
      %v11536 = vld [vmem:[%s165 + $0x88] sm:$0xff]
      %v11537 = vld [vmem:[%s165 + $0x90] sm:$0xff]
      %v11538 = vld [vmem:[%s165 + $0x98] sm:$0xff]
      %v11539 = vld [vmem:[%s165 + $0xa0] sm:$0xff]
      %v11540 = vld [vmem:[%s165 + $0xa8] sm:$0xff]
      %v11541 = vld [vmem:[%s165 + $0xb0] sm:$0xff]
      %v11542 = vld [vmem:[%s165 + $0xb8] sm:$0xff]
      %v11543 = vld [vmem:[%s165 + $0xc0] sm:$0xff]
      %v11544 = vld [vmem:[%s165 + $0xc8] sm:$0xff]
      %v11545 = vld [vmem:[%s165 + $0xd0] sm:$0xff]
      %v11546 = vld [vmem:[%s165 + $0xd8] sm:$0xff]
      %v11547 = vld [vmem:[%s165 + $0xe0] sm:$0xff]
      %v11548 = vld [vmem:[%s165 + $0xe8] sm:$0xff]
      %v11549 = vld [vmem:[%s165 + $0xf0] sm:$0xff]
      %v11550 = vld [vmem:[%s165 + $0xf8] sm:$0xff]
      %v11551 = vadd.f32 %v11519, %v11487
      %v11552 = vadd.f32 %v11520, %v11488
      %v11553 = vadd.f32 %v11521, %v11489
      %v11554 = vadd.f32 %v11522, %v11490
      %v11555 = vadd.f32 %v11523, %v11491
      %v11556 = vadd.f32 %v11524, %v11492
      %v11557 = vadd.f32 %v11525, %v11493
      %v11558 = vadd.f32 %v11526, %v11494
      %v11559 = vadd.f32 %v11527, %v11495
      %v11560 = vadd.f32 %v11528, %v11496
      %v11561 = vadd.f32 %v11529, %v11497
      %v11562 = vadd.f32 %v11530, %v11498
      %v11563 = vadd.f32 %v11531, %v11499
      %v11564 = vadd.f32 %v11532, %v11500
      %v11565 = vadd.f32 %v11533, %v11501
      %v11566 = vadd.f32 %v11534, %v11502
      %v11567 = vadd.f32 %v11535, %v11503
      %v11568 = vadd.f32 %v11536, %v11504
      %v11569 = vadd.f32 %v11537, %v11505
      %v11570 = vadd.f32 %v11538, %v11506
      %v11571 = vadd.f32 %v11539, %v11507
      %v11572 = vadd.f32 %v11540, %v11508
      %v11573 = vadd.f32 %v11541, %v11509
      %v11574 = vadd.f32 %v11542, %v11510
      %v11575 = vadd.f32 %v11543, %v11511
      %v11576 = vadd.f32 %v11544, %v11512
      %v11577 = vadd.f32 %v11545, %v11513
      %v11578 = vadd.f32 %v11546, %v11514
      %v11579 = vadd.f32 %v11547, %v11515
      %v11580 = vadd.f32 %v11548, %v11516
      %v11581 = vadd.f32 %v11549, %v11517
      %v11582 = vadd.f32 %v11550, %v11518
      %11583 = vst.msk [vmem:[%s170] sm:$0xff] %vm1543, %v11551
      %11584 = vst.msk [vmem:[%s170 + $0x8] sm:$0xff] %vm1543, %v11552
      %11585 = vst.msk [vmem:[%s170 + $0x10] sm:$0xff] %vm1543, %v11553
      %11586 = vst.msk [vmem:[%s170 + $0x18] sm:$0xff] %vm1543, %v11554
      %11587 = vst.msk [vmem:[%s170 + $0x20] sm:$0xff] %vm1543, %v11555
      %11588 = vst.msk [vmem:[%s170 + $0x28] sm:$0xff] %vm1543, %v11556
      %11589 = vst.msk [vmem:[%s170 + $0x30] sm:$0xff] %vm1543, %v11557
      %11590 = vst.msk [vmem:[%s170 + $0x38] sm:$0xff] %vm1543, %v11558
      %11591 = vst.msk [vmem:[%s170 + $0x40] sm:$0xff] %vm1543, %v11559
      %11592 = vst.msk [vmem:[%s170 + $0x48] sm:$0xff] %vm1543, %v11560
      %11593 = vst.msk [vmem:[%s170 + $0x50] sm:$0xff] %vm1543, %v11561
      %11594 = vst.msk [vmem:[%s170 + $0x58] sm:$0xff] %vm1543, %v11562
      %11595 = vst.msk [vmem:[%s170 + $0x60] sm:$0xff] %vm1543, %v11563
      %11596 = vst.msk [vmem:[%s170 + $0x68] sm:$0xff] %vm1543, %v11564
      %11597 = vst.msk [vmem:[%s170 + $0x70] sm:$0xff] %vm1543, %v11565
      %11598 = vst.msk [vmem:[%s170 + $0x78] sm:$0xff] %vm1543, %v11566
      %11599 = vst.msk [vmem:[%s170 + $0x80] sm:$0xff] %vm1543, %v11567
      %11600 = vst.msk [vmem:[%s170 + $0x88] sm:$0xff] %vm1543, %v11568
      %11601 = vst.msk [vmem:[%s170 + $0x90] sm:$0xff] %vm1543, %v11569
      %11602 = vst.msk [vmem:[%s170 + $0x98] sm:$0xff] %vm1543, %v11570
      %11603 = vst.msk [vmem:[%s170 + $0xa0] sm:$0xff] %vm1543, %v11571
      %11604 = vst.msk [vmem:[%s170 + $0xa8] sm:$0xff] %vm1543, %v11572
      %11605 = vst.msk [vmem:[%s170 + $0xb0] sm:$0xff] %vm1543, %v11573
      %11606 = vst.msk [vmem:[%s170 + $0xb8] sm:$0xff] %vm1543, %v11574
      %11607 = vst.msk [vmem:[%s170 + $0xc0] sm:$0xff] %vm1543, %v11575
      %11608 = vst.msk [vmem:[%s170 + $0xc8] sm:$0xff] %vm1543, %v11576
      %11609 = vst.msk [vmem:[%s170 + $0xd0] sm:$0xff] %vm1543, %v11577
      %11610 = vst.msk [vmem:[%s170 + $0xd8] sm:$0xff] %vm1543, %v11578
      %11611 = vst.msk [vmem:[%s170 + $0xe0] sm:$0xff] %vm1543, %v11579
      %11612 = vst.msk [vmem:[%s170 + $0xe8] sm:$0xff] %vm1543, %v11580
      %11613 = vst.msk [vmem:[%s170 + $0xf0] sm:$0xff] %vm1543, %v11581
      %11614 = vst.msk [vmem:[%s170 + $0xf8] sm:$0xff] %vm1543, %v11582
      %p11615 = scmp.lt.s32.totalorder %s14, 1
      %s11616 = scalar_select %p11615, %s14, 1
      %s11617 = smul.addr %s11616, 32
      %s11618 = smul.addr %s11617, 8
      %s11619 = scalar_lea.vmem %s3, %s11618
      // Predicated region
      $region33: #{tpu_custom_call.1} parent=31 // pred_check
        %p11620 = pneg %p100
      $region34: #{tpu_custom_call.1} parent=31 // pred_check_branch
        %11622 = sbr.rel (%p11620) target = $region36
      $region35: #{tpu_custom_call.1} parent=31 // pred_region
        _
      $region36: #{tpu_custom_call.1} parent=31 // pred_fallthru
        _
    $region32: #{tpu_custom_call.1} parent=5 // pred_fallthru
      _
    %p11623 = scmp.le.s32.totalorder 2, %s9
    // Predicated region
    $region37: #{tpu_custom_call.1} parent=5 // pred_check
      %p11624 = pneg %p11623
    $region38: #{tpu_custom_call.1} parent=5 // pred_check_branch
      %11626 = sbr.rel (%p11624) target = $region40
    $region39: #{tpu_custom_call.1} parent=5 // pred_region
      %s11627 = ssub.s32 %s9, 2
      // Predicated region
      $region41: #{tpu_custom_call.1} parent=39 // pred_check
        %p11628 = pneg %p106
      $region42: #{tpu_custom_call.1} parent=39 // pred_check_branch
        %11630 = sbr.rel (%p11628) target = $region44
      $region43: #{tpu_custom_call.1} parent=39 // pred_region
        %p11631 = scmp.lt.s32.totalorder %s15, 1
        %s11632 = scalar_select %p11631, %s15, 1
        %s11633 = smul.addr %s11632, 32
        %s11634 = smul.addr %s11633, 8
        %s11635 = scalar_lea.vmem %s3, %s11634
      $region44: #{tpu_custom_call.1} parent=39 // pred_fallthru
        _
    $region40: #{tpu_custom_call.1} parent=5 // pred_fallthru
      _
  $region6: #{tpu_custom_call.1} parent=0 // loop_footer
    %s13 = sadd.s32 1, %s9
  $region7: #{tpu_custom_call.1} parent=0 // loop_footer_branch
    %8 = sbr.rel target = $region3
  $region8: #{tpu_custom_call.1} parent=0 // loop_exit
    _

</llo_original>
